<compile_context>
chip_gen: v6e
topology: v6e:2x2x1
jax: 0.10.0
libtpu: 0.0.40
codegen_flags: <defaults>
</compile_context>

<pallas_src>
import functools

import jax
import jax.numpy as jnp
from jax import lax
from jax.experimental import pallas as pl
from jax.experimental.pallas import tpu as pltpu


# ---------------------------------------------------------------------------
# Down block: fused Conv2d(k=2,s=2) + BN(eval) + LeakyReLU(0.1), lane-dense.
# ---------------------------------------------------------------------------
def _down_kernel(p_ref, w_ref, shift_ref, o_ref):
    # p_ref: (K, tm) patches, w_ref: (OC, K) BN-scale-folded, shift: (OC, 1)
    acc = jnp.dot(w_ref[...], p_ref[...], preferred_element_type=jnp.float32)
    y = acc + shift_ref[...]
    o_ref[...] = jnp.where(y >= 0.0, y, 0.1 * y)      # LeakyReLU(0.1)


def _down(patches_t, w_folded, shift, *, tm):
    K, M = patches_t.shape
    OC = w_folded.shape[0]
    tm_eff = min(tm, pl.cdiv(M, 128) * 128)           # big tiles, lane-aligned
    m_pad = pl.cdiv(M, tm_eff) * tm_eff
    if m_pad != M:
        patches_t = jnp.pad(patches_t, ((0, 0), (0, m_pad - M)))
    out = pl.pallas_call(
        _down_kernel,
        out_shape=jax.ShapeDtypeStruct((OC, m_pad), jnp.float32),
        grid=(m_pad // tm_eff,),
        in_specs=[
            pl.BlockSpec((K, tm_eff), lambda i: (0, i)),
            pl.BlockSpec((OC, K), lambda i: (0, 0)),
            pl.BlockSpec((OC, 1), lambda i: (0, 0)),
        ],
        out_specs=pl.BlockSpec((OC, tm_eff), lambda i: (0, i)),
        compiler_params=pltpu.CompilerParams(
            dimension_semantics=("parallel",)),
    )(patches_t, w_folded, shift)
    return out[:, :M]


# ---------------------------------------------------------------------------
# ConvGRU scan: one pallas_call per direction, grid over time.
# Images live as (C, L) with L = B * (Ho+2) * (Wo+2): per-image zero-padded
# planes, flattened, so a 3x3 conv = 9 shifted (C_out, C_in) @ (C_in, L) matmuls.
# x_seq carries an extra G-lane halo on both ends so shifted reads stay in-bounds.
# ---------------------------------------------------------------------------
def _gru_scan_kernel(x_ref, wrz_ref, brz_ref, wo_ref, bo_ref, mask_ref,
                     hseq_ref, h_sc, cat_sc, *, C, G, L, Wp):
    t = pl.program_id(0)
    x_ext = x_ref[0]                                   # (C, Lext)

    @pl.when(t == 0)
    def _init():
        h_sc[...] = x_ext[:, G:G + L]                  # h0 = first processed frame
        cat_sc[...] = jnp.zeros_like(cat_sc)           # zero the halo columns once

    h = h_sc[...]
    cat_sc[0:C, :] = x_ext                             # x rows (halo already zero)
    cat_sc[C:, G:G + L] = h                            # hidden rows

    def conv3x3(w_ref, rows):
        acc = jnp.zeros((rows, L), jnp.float32)
        for k in range(9):
            off = (k // 3 - 1) * Wp + (k % 3 - 1)
            acc = acc + jnp.dot(w_ref[k], cat_sc[:, G + off:G + off + L],
                                preferred_element_type=jnp.float32)
        return acc

    rz = jax.nn.sigmoid(conv3x3(wrz_ref, 2 * C) + brz_ref[...])
    r, z = rz[0:C], rz[C:]
    cat_sc[C:, G:G + L] = r * h                        # reset_hidden
    o = jnp.tanh(conv3x3(wo_ref, C) + bo_ref[...])
    h_new = ((1.0 - z) * o + z * h) * mask_ref[...]    # re-zero padded border
    h_sc[...] = h_new
    hseq_ref[0] = h_new


def _gru_scan(x_seq, wrz, brz, wo9, bo1, mask, *, reverse, Wp, G, L):
    S, C, Lext = x_seq.shape
    C2 = 2 * C
    if reverse:
        imap = lambda t: (S - 1 - t, 0, 0)
    else:
        imap = lambda t: (t, 0, 0)
    kern = functools.partial(_gru_scan_kernel, C=C, G=G, L=L, Wp=Wp)
    return pl.pallas_call(
        kern,
        out_shape=jax.ShapeDtypeStruct((S, C, L), jnp.float32),
        grid=(S,),
        in_specs=[
            pl.BlockSpec((1, C, Lext), imap),
            pl.BlockSpec((9, C2, C2), lambda t: (0, 0, 0)),
            pl.BlockSpec((C2, 1), lambda t: (0, 0)),
            pl.BlockSpec((9, C, C2), lambda t: (0, 0, 0)),
            pl.BlockSpec((C, 1), lambda t: (0, 0)),
            pl.BlockSpec((1, L), lambda t: (0, 0)),
        ],
        out_specs=pl.BlockSpec((1, C, L), imap),
        scratch_shapes=[pltpu.VMEM((C, L), jnp.float32),
                        pltpu.VMEM((C2, Lext), jnp.float32)],
        compiler_params=pltpu.CompilerParams(
            dimension_semantics=("arbitrary",)),       # sequential recurrence
    )(x_seq, wrz, brz, wo9, bo1, mask)


# ---------------------------------------------------------------------------
# Bidirection 3x3 conv + tanh + running max over time (accumulator output).
# ---------------------------------------------------------------------------
def _bidir_kernel(f_ref, b_ref, w_ref, bias_ref, mask_ref,
                  seq_ref, max_ref, cat_sc, *, C, G, L, Wp):
    t = pl.program_id(0)

    @pl.when(t == 0)
    def _init():
        cat_sc[...] = jnp.zeros_like(cat_sc)

    cat_sc[0:C, G:G + L] = f_ref[0]
    cat_sc[C:, G:G + L] = b_ref[0]

    acc = jnp.zeros((C, L), jnp.float32)
    for k in range(9):
        off = (k // 3 - 1) * Wp + (k % 3 - 1)
        acc = acc + jnp.dot(w_ref[k], cat_sc[:, G + off:G + off + L],
                            preferred_element_type=jnp.float32)
    y = jnp.tanh(acc + bias_ref[...]) * mask_ref[...]
    seq_ref[0] = y

    @pl.when(t == 0)
    def _first():
        max_ref[...] = y

    @pl.when(t > 0)
    def _rest():
        max_ref[...] = jnp.maximum(max_ref[...], y)


def _bidir(f_seq, b_seq, wbi, bbi, mask, *, G, L, Wp):
    S, C, _ = f_seq.shape
    C2 = 2 * C
    Lext = L + 2 * G
    kern = functools.partial(_bidir_kernel, C=C, G=G, L=L, Wp=Wp)
    return pl.pallas_call(
        kern,
        out_shape=(jax.ShapeDtypeStruct((S, C, L), jnp.float32),
                   jax.ShapeDtypeStruct((C, L), jnp.float32)),
        grid=(S,),
        in_specs=[
            pl.BlockSpec((1, C, L), lambda t: (t, 0, 0)),
            pl.BlockSpec((1, C, L), lambda t: (t, 0, 0)),
            pl.BlockSpec((9, C, C2), lambda t: (0, 0, 0)),
            pl.BlockSpec((C, 1), lambda t: (0, 0)),
            pl.BlockSpec((1, L), lambda t: (0, 0)),
        ],
        out_specs=(pl.BlockSpec((1, C, L), lambda t: (t, 0, 0)),
                   pl.BlockSpec((C, L), lambda t: (0, 0))),
        scratch_shapes=[pltpu.VMEM((C2, Lext), jnp.float32)],
        compiler_params=pltpu.CompilerParams(
            dimension_semantics=("arbitrary",)),       # running-max accumulator
    )(f_seq, b_seq, wbi, bbi, mask)


# ---------------------------------------------------------------------------
# Full BiConvGRU forward wrapper.
# ---------------------------------------------------------------------------
def _fold_conv3x3(w, b):
    # (O, I, 3, 3) -> (9, O, I) with tap index k = dh*3 + dw ; bias -> (O, 1)
    return w.transpose(2, 3, 0, 1).reshape(9, w.shape[0], w.shape[1]), b.reshape(-1, 1)


@functools.partial(jax.jit, static_argnames=("tm",))
def biconvgru_forward(x, s, params, *, tm=2048):
    """x: (B, S, C_in, H, W), s: (B, S, D, Hs, Ws) -> (sequences, last_sequence)."""
    B, S, C_in, H, W = x.shape
    C2 = 2 * C_in
    C_h = params["down_w"].shape[0]
    Ho, Wo = H // 2, W // 2
    Hp, Wp = Ho + 2, Wo + 2
    L = B * Hp * Wp
    G = Wp + 1
    eps = 1e-5

    # --- F.interpolate(s, (C_in, H, W), 'trilinear', align_corners=False) ----
    # TODO(synk): trilinear resize is done with jax.image.resize (half-pixel
    # centers == align_corners=False) in plain JAX, not as a Pallas kernel.
    s_i = jax.image.resize(s, (B, S, C_in, H, W), method="trilinear")
    cat_in = jnp.concatenate([s_i, x], axis=2)         # (B, S, 2*C_in, H, W)

    # --- Sequence_down: space-to-depth -> lane-dense fused matmul kernel -----
    K = C2 * 4
    p = cat_in.reshape(B, S, C2, Ho, 2, Wo, 2)
    p = p.transpose(2, 4, 6, 0, 1, 3, 5).reshape(K, B * S * Ho * Wo)

    bn_scale = params["bn_gamma"] / jnp.sqrt(params["bn_var"] + eps)
    w_folded = params["down_w"].reshape(C_h, K) * bn_scale[:, None]
    shift = (params["bn_beta"] - params["bn_mean"] * bn_scale).reshape(C_h, 1)
    # TODO(synk): Dropout2d / BatchNorm are eval-mode only; training-mode
    # channel dropout and the is_BN=False InstanceNorm2d path are not implemented.

    d = _down(p, w_folded, shift, tm=tm)               # (C_h, B*S*Ho*Wo)

    # --- repack the (4x smaller) down output into the padded GRU layout ------
    d = d.reshape(C_h, B, S, Ho, Wo).transpose(2, 0, 1, 3, 4)   # (S,C_h,B,Ho,Wo)
    d = jnp.pad(d, ((0, 0), (0, 0), (0, 0), (1, 1), (1, 1)))    # zero 3x3 border
    d = d.reshape(S, C_h, L)
    x_seq = jnp.pad(d, ((0, 0), (0, 0), (G, G)))                # (S,C_h,L+2G)

    plane = jnp.zeros((Hp, Wp), jnp.float32).at[1:1 + Ho, 1:1 + Wo].set(1.0)
    mask = jnp.tile(plane.reshape(-1), B).reshape(1, L)

    # --- forward / backward ConvGRU scans -------------------------------------
    def gate_params(prefix):
        wrz = jnp.concatenate([params[prefix + "_wr"], params[prefix + "_wz"]], 0)
        brz = jnp.concatenate([params[prefix + "_br"], params[prefix + "_bz"]], 0)
        wrz9, brz1 = _fold_conv3x3(wrz, brz)
        wo9, bo1 = _fold_conv3x3(params[prefix + "_wo"], params[prefix + "_bo"])
        return wrz9, brz1, wo9, bo1

    fwd_seq = _gru_scan(x_seq, *gate_params("fwd"), mask,
                        reverse=False, Wp=Wp, G=G, L=L)
    bwd_seq = _gru_scan(x_seq, *gate_params("bwd"), mask,
                        reverse=True, Wp=Wp, G=G, L=L)

    # --- bidirectional conv + tanh + max over time ----------------------------
    wbi9, bbi1 = _fold_conv3x3(params["bi_w"], params["bi_b"])
    seq_flat, max_flat = _bidir(fwd_seq, bwd_seq, wbi9, bbi1, mask,
                                G=G, L=L, Wp=Wp)

    # --- crop zero borders, return PyTorch-shaped tensors ---------------------
    seq = seq_flat.reshape(S, C_h, B, Hp, Wp)[:, :, :, 1:1 + Ho, 1:1 + Wo]
    sequences = seq.transpose(2, 0, 1, 3, 4)                    # (B,S,C_h,Ho,Wo)
    last = max_flat.reshape(C_h, B, Hp, Wp)[:, :, 1:1 + Ho, 1:1 + Wo]
    last_sequence = last.transpose(1, 0, 2, 3)                  # (B,C_h,Ho,Wo)
    return sequences, last_sequence


# ---------------------------------------------------------------------------
# Pure-JAX reference for verification.
# ---------------------------------------------------------------------------
def _ref_conv3x3(x, w, b):
    y = lax.conv_general_dilated(x, w, (1, 1), ((1, 1), (1, 1)),
                                 dimension_numbers=("NCHW", "OIHW", "NCHW"),
                                 precision=lax.Precision.HIGHEST)
    return y + b[None, :, None, None]


def _ref_cell(x, h, wr, br, wz, bz, wo, bo):
    inp = jnp.concatenate([x, h], axis=1)
    r = jax.nn.sigmoid(_ref_conv3x3(inp, wr, br))
    z = jax.nn.sigmoid(_ref_conv3x3(inp, wz, bz))
    o = jnp.tanh(_ref_conv3x3(jnp.concatenate([x, r * h], axis=1), wo, bo))
    return (1.0 - z) * o + z * h


def _reference(x, s, params):
    B, S, C_in, H, W = x.shape
    s_i = jax.image.resize(s, (B, S, C_in, H, W), method="trilinear")
    cat = jnp.concatenate([s_i, x], axis=2)
    eps = 1e-5
    sc = params["bn_gamma"] / jnp.sqrt(params["bn_var"] + eps)
    sh = params["bn_beta"] - params["bn_mean"] * sc
    frames = []
    for i in range(S):
        y = lax.conv_general_dilated(cat[:, i], params["down_w"], (2, 2), "VALID",
                                     dimension_numbers=("NCHW", "OIHW", "NCHW"),
                                     precision=lax.Precision.HIGHEST)
        y = y * sc[None, :, None, None] + sh[None, :, None, None]
        frames.append(jnp.where(y >= 0, y, 0.1 * y))
    xd = jnp.stack(frames, axis=1)                     # (B, S, C_h, Ho, Wo)

    seq_f, img = [], xd[:, 0]
    for i in range(S):
        img = _ref_cell(xd[:, i], img, params["fwd_wr"], params["fwd_br"],
                        params["fwd_wz"], params["fwd_bz"],
                        params["fwd_wo"], params["fwd_bo"])
        seq_f.append(img)
    seq_b, img = [], xd[:, -1]
    for i in range(S):
        img = _ref_cell(xd[:, S - 1 - i], img, params["bwd_wr"], params["bwd_br"],
                        params["bwd_wz"], params["bwd_bz"],
                        params["bwd_wo"], params["bwd_bo"])
        seq_b.append(img)
    seq_b = seq_b[::-1]
    outs = [jnp.tanh(_ref_conv3x3(jnp.concatenate([seq_f[i], seq_b[i]], axis=1),
                                  params["bi_w"], params["bi_b"]))
            for i in range(S)]
    seqs = jnp.stack(outs, axis=1)
    return seqs, jnp.max(seqs, axis=1)


if __name__ == "__main__":
    B, S, C_in, H, W = 2, 4, 4, 16, 16     # BiConvGRU(input_channels=4, output_channels=8)
    C_h = 8

    key = jax.random.PRNGKey(0)
    kit = iter(jax.random.split(key, 24))

    def nrm(shape, scale=1.0):
        return scale * jax.random.normal(next(kit), shape, dtype=jnp.float32)

    x = nrm((B, S, C_in, H, W))
    s = nrm((B, S, 3, 8, 8))

    params = {
        "down_w": nrm((C_h, 2 * C_in, 2, 2), 0.25),
        "bn_gamma": 1.0 + 0.1 * nrm((C_h,)),
        "bn_beta": 0.05 * nrm((C_h,)),
        "bn_mean": 0.1 * nrm((C_h,)),
        "bn_var": 1.0 + 0.1 * jax.random.uniform(next(kit), (C_h,), dtype=jnp.float32),
    }
    for prefix in ("fwd", "bwd"):
        for gate in ("r", "z", "o"):
            params[f"{prefix}_w{gate}"] = nrm((C_h, 2 * C_h, 3, 3), 0.1)
            params[f"{prefix}_b{gate}"] = nrm((C_h,), 0.05)
    params["bi_w"] = nrm((C_h, 2 * C_h, 3, 3), 0.1)
    params["bi_b"] = nrm((C_h,), 0.05)

    sequences, last = biconvgru_forward(x, s, params)
    sequences, last = jax.block_until_ready((sequences, last))

    ref_seq, ref_last = _reference(x, s, params)
    assert sequences.shape == (B, S, C_h, H // 2, W // 2)
    assert last.shape == (B, C_h, H // 2, W // 2)
    assert jnp.max(jnp.abs(sequences - ref_seq)) < 5e-3, "sequences mismatch"
    assert jnp.max(jnp.abs(last - ref_last)) < 5e-3, "last_sequence mismatch"

    print("KERNEL_OK")
</pallas_src>

<mosaic_0001>
module attributes {stable_mosaic.version = 11 : i64} {
  func.func @_down_kernel(%arg0: i32, %arg1: memref<32x512xf32, #tpu.memory_space<vmem>>, %arg2: memref<8x32xf32, #tpu.memory_space<vmem>>, %arg3: memref<8x1xf32, #tpu.memory_space<vmem>>, %arg4: memref<8x512xf32, #tpu.memory_space<vmem>>) attributes {dimension_semantics = [#tpu.dimension_semantics<parallel>], iteration_bounds = array<i64: 1>, scalar_prefetch = 0 : i64, scratch_operands = 0 : i64, tpu.core_type = #tpu.core_type<tc>, window_params = [{transform_indices = @transform_0, window_bounds = array<i64: 32, 512>}, {pipeline_mode = #tpu.pipeline_mode<synchronous>, transform_indices = @transform_1, window_bounds = array<i64: 8, 32>}, {pipeline_mode = #tpu.pipeline_mode<synchronous>, transform_indices = @transform_2, window_bounds = array<i64: 8, 1>}, {transform_indices = @transform_3, window_bounds = array<i64: 8, 512>}]} {
    %c0 = arith.constant 0 : index
    %c0_0 = arith.constant 0 : index
    %0 = vector.load %arg2[%c0, %c0_0] : memref<8x32xf32, #tpu.memory_space<vmem>>, vector<8x32xf32>
    %c0_1 = arith.constant 0 : index
    %c0_2 = arith.constant 0 : index
    %1 = vector.load %arg1[%c0_1, %c0_2] : memref<32x512xf32, #tpu.memory_space<vmem>>, vector<32x512xf32>
    %cst = arith.constant dense<0.000000e+00> : vector<8x512xf32>
    %2 = tpu.matmul %0, %1, %cst {dimension_numbers = #tpu.dot_dimension_numbers<[1], [0], [0], [1], [0, 0, 1, 1], [], []>} : vector<8x32xf32>, vector<32x512xf32>, vector<8x512xf32> -> vector<8x512xf32>
    %c0_3 = arith.constant 0 : index
    %c0_4 = arith.constant 0 : index
    %3 = vector.load %arg3[%c0_3, %c0_4] : memref<8x1xf32, #tpu.memory_space<vmem>>, vector<8x1xf32>
    %4 = vector.broadcast %3 : vector<8x1xf32> to vector<8x512xf32>
    %5 = arith.addf %2, %4 : vector<8x512xf32>
    %cst_5 = arith.constant 0.000000e+00 : f32
    %6 = vector.broadcast %cst_5 : f32 to vector<8x512xf32>
    %7 = arith.cmpf oge, %5, %6 : vector<8x512xf32>
    %cst_6 = arith.constant 1.000000e-01 : f32
    %8 = vector.broadcast %cst_6 : f32 to vector<8x512xf32>
    %9 = arith.mulf %8, %5 : vector<8x512xf32>
    %10 = arith.select %7, %5, %9 : vector<8x512xi1>, vector<8x512xf32>
    %c0_7 = arith.constant 0 : index
    %c0_8 = arith.constant 0 : index
    %11 = vector.load %arg4[%c0_7, %c0_8] : memref<8x512xf32, #tpu.memory_space<vmem>>, vector<8x512xf32>
    tpu.vector_store %arg4[%c0_7, %c0_8], %10 {strides = array<i32>} : memref<8x512xf32, #tpu.memory_space<vmem>>, vector<8x512xf32>,
    return
  }
  func.func @transform_0(%arg0: i32) -> (i32, i32) {
    %c0_i32 = arith.constant 0 : i32
    %c0_i32_0 = arith.constant 0 : i32
    return %c0_i32, %arg0 : i32, i32
  }
  func.func @transform_1(%arg0: i32) -> (i32, i32) {
    %c0_i32 = arith.constant 0 : i32
    %c0_i32_0 = arith.constant 0 : i32
    %c0_i32_1 = arith.constant 0 : i32
    return %c0_i32, %c0_i32_0 : i32, i32
  }
  func.func @transform_2(%arg0: i32) -> (i32, i32) {
    %c0_i32 = arith.constant 0 : i32
    %c0_i32_0 = arith.constant 0 : i32
    %c0_i32_1 = arith.constant 0 : i32
    return %c0_i32, %c0_i32_0 : i32, i32
  }
  func.func @transform_3(%arg0: i32) -> (i32, i32) {
    %c0_i32 = arith.constant 0 : i32
    %c0_i32_0 = arith.constant 0 : i32
    return %c0_i32, %arg0 : i32, i32
  }
}

module attributes {stable_mosaic.version = 11 : i64} {
  func.func @_gru_scan_kernel(%arg0: i32, %arg1: memref<1x8x222xf32, #tpu.memory_space<vmem>>, %arg2: memref<9x16x16xf32, #tpu.memory_space<vmem>>, %arg3: memref<16x1xf32, #tpu.memory_space<vmem>>, %arg4: memref<9x8x16xf32, #tpu.memory_space<vmem>>, %arg5: memref<8x1xf32, #tpu.memory_space<vmem>>, %arg6: memref<1x200xf32, #tpu.memory_space<vmem>>, %arg7: memref<1x8x200xf32, #tpu.memory_space<vmem>>, %arg8: memref<8x200xf32, #tpu.memory_space<vmem>>, %arg9: memref<16x222xf32, #tpu.memory_space<vmem>>) attributes {dimension_semantics = [#tpu.dimension_semantics<arbitrary>], iteration_bounds = array<i64: 4>, scalar_prefetch = 0 : i64, scratch_operands = 2 : i64, tpu.core_type = #tpu.core_type<tc>, window_params = [{transform_indices = @transform_0, window_bounds = array<i64: 1, 8, 222>}, {pipeline_mode = #tpu.pipeline_mode<synchronous>, transform_indices = @transform_1, window_bounds = array<i64: 9, 16, 16>}, {pipeline_mode = #tpu.pipeline_mode<synchronous>, transform_indices = @transform_2, window_bounds = array<i64: 16, 1>}, {pipeline_mode = #tpu.pipeline_mode<synchronous>, transform_indices = @transform_3, window_bounds = array<i64: 9, 8, 16>}, {pipeline_mode = #tpu.pipeline_mode<synchronous>, transform_indices = @transform_4, window_bounds = array<i64: 8, 1>}, {pipeline_mode = #tpu.pipeline_mode<synchronous>, transform_indices = @transform_5, window_bounds = array<i64: 1, 200>}, {transform_indices = @transform_6, window_bounds = array<i64: 1, 8, 200>}]} {
    %c0 = arith.constant 0 : index
    %c0_0 = arith.constant 0 : index
    %c0_1 = arith.constant 0 : index
    %0 = vector.load %arg1[%c0, %c0_0, %c0_1] : memref<1x8x222xf32, #tpu.memory_space<vmem>>, vector<1x8x222xf32>
    %1 = vector.shape_cast %0 : vector<1x8x222xf32> to vector<8x222xf32>
    %c0_i32 = arith.constant 0 : i32
    %2 = arith.cmpi eq, %arg0, %c0_i32 : i32
    %3 = arith.extui %2 : i1 to i32
    %c0_i32_2 = arith.constant 0 : i32
    %4 = arith.cmpi ne, %3, %c0_i32_2 : i32
    scf.if %4 {
      %128 = vector.extract_strided_slice %1 {offsets = [0, 11], sizes = [8, 200], strides = [1, 1]} : vector<8x222xf32> to vector<8x200xf32>
      %c0_119 = arith.constant 0 : index
      %c0_120 = arith.constant 0 : index
      %129 = vector.load %arg8[%c0_119, %c0_120] : memref<8x200xf32, #tpu.memory_space<vmem>>, vector<8x200xf32>
      tpu.vector_store %arg8[%c0_119, %c0_120], %128 {strides = array<i32>} : memref<8x200xf32, #tpu.memory_space<vmem>>, vector<8x200xf32>,
      %cst_121 = arith.constant 0.000000e+00 : f32
      %130 = vector.broadcast %cst_121 : f32 to vector<16x222xf32>
      %c0_122 = arith.constant 0 : index
      %c0_123 = arith.constant 0 : index
      %131 = vector.load %arg9[%c0_122, %c0_123] : memref<16x222xf32, #tpu.memory_space<vmem>>, vector<16x222xf32>
      tpu.vector_store %arg9[%c0_122, %c0_123], %130 {strides = array<i32>} : memref<16x222xf32, #tpu.memory_space<vmem>>, vector<16x222xf32>,
    } else {
    }
    %c0_3 = arith.constant 0 : index
    %c0_4 = arith.constant 0 : index
    %5 = vector.load %arg8[%c0_3, %c0_4] : memref<8x200xf32, #tpu.memory_space<vmem>>, vector<8x200xf32>
    %c0_5 = arith.constant 0 : index
    %c0_6 = arith.constant 0 : index
    %6 = vector.load %arg9[%c0_5, %c0_6] : memref<16x222xf32, #tpu.memory_space<vmem>>, vector<8x222xf32>
    tpu.vector_store %arg9[%c0_5, %c0_6], %1 {strides = array<i32>} : memref<16x222xf32, #tpu.memory_space<vmem>>, vector<8x222xf32>,
    %c8 = arith.constant 8 : index
    %c11 = arith.constant 11 : index
    %7 = vector.load %arg9[%c8, %c11] : memref<16x222xf32, #tpu.memory_space<vmem>>, vector<8x200xf32>
    tpu.vector_store %arg9[%c8, %c11], %5 {strides = array<i32>} : memref<16x222xf32, #tpu.memory_space<vmem>>, vector<8x200xf32>,
    %cst = arith.constant 0.000000e+00 : f32
    %8 = vector.broadcast %cst : f32 to vector<16x200xf32>
    %c0_7 = arith.constant 0 : index
    %c0_8 = arith.constant 0 : index
    %c0_9 = arith.constant 0 : index
    %9 = vector.load %arg2[%c0_7, %c0_8, %c0_9] : memref<9x16x16xf32, #tpu.memory_space<vmem>>, vector<1x16x16xf32>
    %10 = vector.shape_cast %9 : vector<1x16x16xf32> to vector<16x16xf32>
    %c0_10 = arith.constant 0 : index
    %c0_11 = arith.constant 0 : index
    %11 = vector.load %arg9[%c0_10, %c0_11] : memref<16x222xf32, #tpu.memory_space<vmem>>, vector<16x200xf32>
    %cst_12 = arith.constant dense<0.000000e+00> : vector<16x200xf32>
    %12 = tpu.matmul %10, %11, %cst_12 {dimension_numbers = #tpu.dot_dimension_numbers<[1], [0], [0], [1], [0, 0, 1, 1], [], []>} : vector<16x16xf32>, vector<16x200xf32>, vector<16x200xf32> -> vector<16x200xf32>
    %13 = arith.addf %8, %12 : vector<16x200xf32>
    %c1 = arith.constant 1 : index
    %c0_13 = arith.constant 0 : index
    %c0_14 = arith.constant 0 : index
    %14 = vector.load %arg2[%c1, %c0_13, %c0_14] : memref<9x16x16xf32, #tpu.memory_space<vmem>>, vector<1x16x16xf32>
    %15 = vector.shape_cast %14 : vector<1x16x16xf32> to vector<16x16xf32>
    %c0_15 = arith.constant 0 : index
    %c1_16 = arith.constant 1 : index
    %16 = vector.load %arg9[%c0_15, %c1_16] : memref<16x222xf32, #tpu.memory_space<vmem>>, vector<16x200xf32>
    %cst_17 = arith.constant dense<0.000000e+00> : vector<16x200xf32>
    %17 = tpu.matmul %15, %16, %cst_17 {dimension_numbers = #tpu.dot_dimension_numbers<[1], [0], [0], [1], [0, 0, 1, 1], [], []>} : vector<16x16xf32>, vector<16x200xf32>, vector<16x200xf32> -> vector<16x200xf32>
    %18 = arith.addf %13, %17 : vector<16x200xf32>
    %c2 = arith.constant 2 : index
    %c0_18 = arith.constant 0 : index
    %c0_19 = arith.constant 0 : index
    %19 = vector.load %arg2[%c2, %c0_18, %c0_19] : memref<9x16x16xf32, #tpu.memory_space<vmem>>, vector<1x16x16xf32>
    %20 = vector.shape_cast %19 : vector<1x16x16xf32> to vector<16x16xf32>
    %c0_20 = arith.constant 0 : index
    %c2_21 = arith.constant 2 : index
    %21 = vector.load %arg9[%c0_20, %c2_21] : memref<16x222xf32, #tpu.memory_space<vmem>>, vector<16x200xf32>
    %cst_22 = arith.constant dense<0.000000e+00> : vector<16x200xf32>
    %22 = tpu.matmul %20, %21, %cst_22 {dimension_numbers = #tpu.dot_dimension_numbers<[1], [0], [0], [1], [0, 0, 1, 1], [], []>} : vector<16x16xf32>, vector<16x200xf32>, vector<16x200xf32> -> vector<16x200xf32>
    %23 = arith.addf %18, %22 : vector<16x200xf32>
    %c3 = arith.constant 3 : index
    %c0_23 = arith.constant 0 : index
    %c0_24 = arith.constant 0 : index
    %24 = vector.load %arg2[%c3, %c0_23, %c0_24] : memref<9x16x16xf32, #tpu.memory_space<vmem>>, vector<1x16x16xf32>
    %25 = vector.shape_cast %24 : vector<1x16x16xf32> to vector<16x16xf32>
    %c0_25 = arith.constant 0 : index
    %c10 = arith.constant 10 : index
    %26 = vector.load %arg9[%c0_25, %c10] : memref<16x222xf32, #tpu.memory_space<vmem>>, vector<16x200xf32>
    %cst_26 = arith.constant dense<0.000000e+00> : vector<16x200xf32>
    %27 = tpu.matmul %25, %26, %cst_26 {dimension_numbers = #tpu.dot_dimension_numbers<[1], [0], [0], [1], [0, 0, 1, 1], [], []>} : vector<16x16xf32>, vector<16x200xf32>, vector<16x200xf32> -> vector<16x200xf32>
    %28 = arith.addf %23, %27 : vector<16x200xf32>
    %c4 = arith.constant 4 : index
    %c0_27 = arith.constant 0 : index
    %c0_28 = arith.constant 0 : index
    %29 = vector.load %arg2[%c4, %c0_27, %c0_28] : memref<9x16x16xf32, #tpu.memory_space<vmem>>, vector<1x16x16xf32>
    %30 = vector.shape_cast %29 : vector<1x16x16xf32> to vector<16x16xf32>
    %c0_29 = arith.constant 0 : index
    %c11_30 = arith.constant 11 : index
    %31 = vector.load %arg9[%c0_29, %c11_30] : memref<16x222xf32, #tpu.memory_space<vmem>>, vector<16x200xf32>
    %cst_31 = arith.constant dense<0.000000e+00> : vector<16x200xf32>
    %32 = tpu.matmul %30, %31, %cst_31 {dimension_numbers = #tpu.dot_dimension_numbers<[1], [0], [0], [1], [0, 0, 1, 1], [], []>} : vector<16x16xf32>, vector<16x200xf32>, vector<16x200xf32> -> vector<16x200xf32>
    %33 = arith.addf %28, %32 : vector<16x200xf32>
    %c5 = arith.constant 5 : index
    %c0_32 = arith.constant 0 : index
    %c0_33 = arith.constant 0 : index
    %34 = vector.load %arg2[%c5, %c0_32, %c0_33] : memref<9x16x16xf32, #tpu.memory_space<vmem>>, vector<1x16x16xf32>
    %35 = vector.shape_cast %34 : vector<1x16x16xf32> to vector<16x16xf32>
    %c0_34 = arith.constant 0 : index
    %c12 = arith.constant 12 : index
    %36 = vector.load %arg9[%c0_34, %c12] : memref<16x222xf32, #tpu.memory_space<vmem>>, vector<16x200xf32>
    %cst_35 = arith.constant dense<0.000000e+00> : vector<16x200xf32>
    %37 = tpu.matmul %35, %36, %cst_35 {dimension_numbers = #tpu.dot_dimension_numbers<[1], [0], [0], [1], [0, 0, 1, 1], [], []>} : vector<16x16xf32>, vector<16x200xf32>, vector<16x200xf32> -> vector<16x200xf32>
    %38 = arith.addf %33, %37 : vector<16x200xf32>
    %c6 = arith.constant 6 : index
    %c0_36 = arith.constant 0 : index
    %c0_37 = arith.constant 0 : index
    %39 = vector.load %arg2[%c6, %c0_36, %c0_37] : memref<9x16x16xf32, #tpu.memory_space<vmem>>, vector<1x16x16xf32>
    %40 = vector.shape_cast %39 : vector<1x16x16xf32> to vector<16x16xf32>
    %c0_38 = arith.constant 0 : index
    %c20 = arith.constant 20 : index
    %41 = vector.load %arg9[%c0_38, %c20] : memref<16x222xf32, #tpu.memory_space<vmem>>, vector<16x200xf32>
    %cst_39 = arith.constant dense<0.000000e+00> : vector<16x200xf32>
    %42 = tpu.matmul %40, %41, %cst_39 {dimension_numbers = #tpu.dot_dimension_numbers<[1], [0], [0], [1], [0, 0, 1, 1], [], []>} : vector<16x16xf32>, vector<16x200xf32>, vector<16x200xf32> -> vector<16x200xf32>
    %43 = arith.addf %38, %42 : vector<16x200xf32>
    %c7 = arith.constant 7 : index
    %c0_40 = arith.constant 0 : index
    %c0_41 = arith.constant 0 : index
    %44 = vector.load %arg2[%c7, %c0_40, %c0_41] : memref<9x16x16xf32, #tpu.memory_space<vmem>>, vector<1x16x16xf32>
    %45 = vector.shape_cast %44 : vector<1x16x16xf32> to vector<16x16xf32>
    %c0_42 = arith.constant 0 : index
    %c21 = arith.constant 21 : index
    %46 = vector.load %arg9[%c0_42, %c21] : memref<16x222xf32, #tpu.memory_space<vmem>>, vector<16x200xf32>
    %cst_43 = arith.constant dense<0.000000e+00> : vector<16x200xf32>
    %47 = tpu.matmul %45, %46, %cst_43 {dimension_numbers = #tpu.dot_dimension_numbers<[1], [0], [0], [1], [0, 0, 1, 1], [], []>} : vector<16x16xf32>, vector<16x200xf32>, vector<16x200xf32> -> vector<16x200xf32>
    %48 = arith.addf %43, %47 : vector<16x200xf32>
    %c8_44 = arith.constant 8 : index
    %c0_45 = arith.constant 0 : index
    %c0_46 = arith.constant 0 : index
    %49 = vector.load %arg2[%c8_44, %c0_45, %c0_46] : memref<9x16x16xf32, #tpu.memory_space<vmem>>, vector<1x16x16xf32>
    %50 = vector.shape_cast %49 : vector<1x16x16xf32> to vector<16x16xf32>
    %c0_47 = arith.constant 0 : index
    %c22 = arith.constant 22 : index
    %51 = vector.load %arg9[%c0_47, %c22] : memref<16x222xf32, #tpu.memory_space<vmem>>, vector<16x200xf32>
    %cst_48 = arith.constant dense<0.000000e+00> : vector<16x200xf32>
    %52 = tpu.matmul %50, %51, %cst_48 {dimension_numbers = #tpu.dot_dimension_numbers<[1], [0], [0], [1], [0, 0, 1, 1], [], []>} : vector<16x16xf32>, vector<16x200xf32>, vector<16x200xf32> -> vector<16x200xf32>
    %53 = arith.addf %48, %52 : vector<16x200xf32>
    %c0_49 = arith.constant 0 : index
    %c0_50 = arith.constant 0 : index
    %54 = vector.load %arg3[%c0_49, %c0_50] : memref<16x1xf32, #tpu.memory_space<vmem>>, vector<16x1xf32>
    %55 = vector.broadcast %54 : vector<16x1xf32> to vector<16x200xf32>
    %56 = arith.addf %53, %55 : vector<16x200xf32>
    %57 = arith.negf %56 : vector<16x200xf32>
    %58 = math.exp %57 : vector<16x200xf32>
    %cst_51 = arith.constant 1.000000e+00 : f32
    %59 = vector.broadcast %cst_51 : f32 to vector<16x200xf32>
    %60 = arith.addf %59, %58 : vector<16x200xf32>
    %61 = arith.divf %59, %60 : vector<16x200xf32>
    %62 = vector.extract_strided_slice %61 {offsets = [0, 0], sizes = [8, 200], strides = [1, 1]} : vector<16x200xf32> to vector<8x200xf32>
    %63 = vector.extract_strided_slice %61 {offsets = [8, 0], sizes = [8, 200], strides = [1, 1]} : vector<16x200xf32> to vector<8x200xf32>
    %64 = arith.mulf %62, %5 : vector<8x200xf32>
    %c8_52 = arith.constant 8 : index
    %c11_53 = arith.constant 11 : index
    %65 = vector.load %arg9[%c8_52, %c11_53] : memref<16x222xf32, #tpu.memory_space<vmem>>, vector<8x200xf32>
    tpu.vector_store %arg9[%c8_52, %c11_53], %64 {strides = array<i32>} : memref<16x222xf32, #tpu.memory_space<vmem>>, vector<8x200xf32>,
    %cst_54 = arith.constant 0.000000e+00 : f32
    %66 = vector.broadcast %cst_54 : f32 to vector<8x200xf32>
    %c0_55 = arith.constant 0 : index
    %c0_56 = arith.constant 0 : index
    %c0_57 = arith.constant 0 : index
    %67 = vector.load %arg4[%c0_55, %c0_56, %c0_57] : memref<9x8x16xf32, #tpu.memory_space<vmem>>, vector<1x8x16xf32>
    %68 = vector.shape_cast %67 : vector<1x8x16xf32> to vector<8x16xf32>
    %c0_58 = arith.constant 0 : index
    %c0_59 = arith.constant 0 : index
    %69 = vector.load %arg9[%c0_58, %c0_59] : memref<16x222xf32, #tpu.memory_space<vmem>>, vector<16x200xf32>
    %cst_60 = arith.constant dense<0.000000e+00> : vector<8x200xf32>
    %70 = tpu.matmul %68, %69, %cst_60 {dimension_numbers = #tpu.dot_dimension_numbers<[1], [0], [0], [1], [0, 0, 1, 1], [], []>} : vector<8x16xf32>, vector<16x200xf32>, vector<8x200xf32> -> vector<8x200xf32>
    %71 = arith.addf %66, %70 : vector<8x200xf32>
    %c1_61 = arith.constant 1 : index
    %c0_62 = arith.constant 0 : index
    %c0_63 = arith.constant 0 : index
    %72 = vector.load %arg4[%c1_61, %c0_62, %c0_63] : memref<9x8x16xf32, #tpu.memory_space<vmem>>, vector<1x8x16xf32>
    %73 = vector.shape_cast %72 : vector<1x8x16xf32> to vector<8x16xf32>
    %c0_64 = arith.constant 0 : index
    %c1_65 = arith.constant 1 : index
    %74 = vector.load %arg9[%c0_64, %c1_65] : memref<16x222xf32, #tpu.memory_space<vmem>>, vector<16x200xf32>
    %cst_66 = arith.constant dense<0.000000e+00> : vector<8x200xf32>
    %75 = tpu.matmul %73, %74, %cst_66 {dimension_numbers = #tpu.dot_dimension_numbers<[1], [0], [0], [1], [0, 0, 1, 1], [], []>} : vector<8x16xf32>, vector<16x200xf32>, vector<8x200xf32> -> vector<8x200xf32>
    %76 = arith.addf %71, %75 : vector<8x200xf32>
    %c2_67 = arith.constant 2 : index
    %c0_68 = arith.constant 0 : index
    %c0_69 = arith.constant 0 : index
    %77 = vector.load %arg4[%c2_67, %c0_68, %c0_69] : memref<9x8x16xf32, #tpu.memory_space<vmem>>, vector<1x8x16xf32>
    %78 = vector.shape_cast %77 : vector<1x8x16xf32> to vector<8x16xf32>
    %c0_70 = arith.constant 0 : index
    %c2_71 = arith.constant 2 : index
    %79 = vector.load %arg9[%c0_70, %c2_71] : memref<16x222xf32, #tpu.memory_space<vmem>>, vector<16x200xf32>
    %cst_72 = arith.constant dense<0.000000e+00> : vector<8x200xf32>
    %80 = tpu.matmul %78, %79, %cst_72 {dimension_numbers = #tpu.dot_dimension_numbers<[1], [0], [0], [1], [0, 0, 1, 1], [], []>} : vector<8x16xf32>, vector<16x200xf32>, vector<8x200xf32> -> vector<8x200xf32>
    %81 = arith.addf %76, %80 : vector<8x200xf32>
    %c3_73 = arith.constant 3 : index
    %c0_74 = arith.constant 0 : index
    %c0_75 = arith.constant 0 : index
    %82 = vector.load %arg4[%c3_73, %c0_74, %c0_75] : memref<9x8x16xf32, #tpu.memory_space<vmem>>, vector<1x8x16xf32>
    %83 = vector.shape_cast %82 : vector<1x8x16xf32> to vector<8x16xf32>
    %c0_76 = arith.constant 0 : index
    %c10_77 = arith.constant 10 : index
    %84 = vector.load %arg9[%c0_76, %c10_77] : memref<16x222xf32, #tpu.memory_space<vmem>>, vector<16x200xf32>
    %cst_78 = arith.constant dense<0.000000e+00> : vector<8x200xf32>
    %85 = tpu.matmul %83, %84, %cst_78 {dimension_numbers = #tpu.dot_dimension_numbers<[1], [0], [0], [1], [0, 0, 1, 1], [], []>} : vector<8x16xf32>, vector<16x200xf32>, vector<8x200xf32> -> vector<8x200xf32>
    %86 = arith.addf %81, %85 : vector<8x200xf32>
    %c4_79 = arith.constant 4 : index
    %c0_80 = arith.constant 0 : index
    %c0_81 = arith.constant 0 : index
    %87 = vector.load %arg4[%c4_79, %c0_80, %c0_81] : memref<9x8x16xf32, #tpu.memory_space<vmem>>, vector<1x8x16xf32>
    %88 = vector.shape_cast %87 : vector<1x8x16xf32> to vector<8x16xf32>
    %c0_82 = arith.constant 0 : index
    %c11_83 = arith.constant 11 : index
    %89 = vector.load %arg9[%c0_82, %c11_83] : memref<16x222xf32, #tpu.memory_space<vmem>>, vector<16x200xf32>
    %cst_84 = arith.constant dense<0.000000e+00> : vector<8x200xf32>
    %90 = tpu.matmul %88, %89, %cst_84 {dimension_numbers = #tpu.dot_dimension_numbers<[1], [0], [0], [1], [0, 0, 1, 1], [], []>} : vector<8x16xf32>, vector<16x200xf32>, vector<8x200xf32> -> vector<8x200xf32>
    %91 = arith.addf %86, %90 : vector<8x200xf32>
    %c5_85 = arith.constant 5 : index
    %c0_86 = arith.constant 0 : index
    %c0_87 = arith.constant 0 : index
    %92 = vector.load %arg4[%c5_85, %c0_86, %c0_87] : memref<9x8x16xf32, #tpu.memory_space<vmem>>, vector<1x8x16xf32>
    %93 = vector.shape_cast %92 : vector<1x8x16xf32> to vector<8x16xf32>
    %c0_88 = arith.constant 0 : index
    %c12_89 = arith.constant 12 : index
    %94 = vector.load %arg9[%c0_88, %c12_89] : memref<16x222xf32, #tpu.memory_space<vmem>>, vector<16x200xf32>
    %cst_90 = arith.constant dense<0.000000e+00> : vector<8x200xf32>
    %95 = tpu.matmul %93, %94, %cst_90 {dimension_numbers = #tpu.dot_dimension_numbers<[1], [0], [0], [1], [0, 0, 1, 1], [], []>} : vector<8x16xf32>, vector<16x200xf32>, vector<8x200xf32> -> vector<8x200xf32>
    %96 = arith.addf %91, %95 : vector<8x200xf32>
    %c6_91 = arith.constant 6 : index
    %c0_92 = arith.constant 0 : index
    %c0_93 = arith.constant 0 : index
    %97 = vector.load %arg4[%c6_91, %c0_92, %c0_93] : memref<9x8x16xf32, #tpu.memory_space<vmem>>, vector<1x8x16xf32>
    %98 = vector.shape_cast %97 : vector<1x8x16xf32> to vector<8x16xf32>
    %c0_94 = arith.constant 0 : index
    %c20_95 = arith.constant 20 : index
    %99 = vector.load %arg9[%c0_94, %c20_95] : memref<16x222xf32, #tpu.memory_space<vmem>>, vector<16x200xf32>
    %cst_96 = arith.constant dense<0.000000e+00> : vector<8x200xf32>
    %100 = tpu.matmul %98, %99, %cst_96 {dimension_numbers = #tpu.dot_dimension_numbers<[1], [0], [0], [1], [0, 0, 1, 1], [], []>} : vector<8x16xf32>, vector<16x200xf32>, vector<8x200xf32> -> vector<8x200xf32>
    %101 = arith.addf %96, %100 : vector<8x200xf32>
    %c7_97 = arith.constant 7 : index
    %c0_98 = arith.constant 0 : index
    %c0_99 = arith.constant 0 : index
    %102 = vector.load %arg4[%c7_97, %c0_98, %c0_99] : memref<9x8x16xf32, #tpu.memory_space<vmem>>, vector<1x8x16xf32>
    %103 = vector.shape_cast %102 : vector<1x8x16xf32> to vector<8x16xf32>
    %c0_100 = arith.constant 0 : index
    %c21_101 = arith.constant 21 : index
    %104 = vector.load %arg9[%c0_100, %c21_101] : memref<16x222xf32, #tpu.memory_space<vmem>>, vector<16x200xf32>
    %cst_102 = arith.constant dense<0.000000e+00> : vector<8x200xf32>
    %105 = tpu.matmul %103, %104, %cst_102 {dimension_numbers = #tpu.dot_dimension_numbers<[1], [0], [0], [1], [0, 0, 1, 1], [], []>} : vector<8x16xf32>, vector<16x200xf32>, vector<8x200xf32> -> vector<8x200xf32>
    %106 = arith.addf %101, %105 : vector<8x200xf32>
    %c8_103 = arith.constant 8 : index
    %c0_104 = arith.constant 0 : index
    %c0_105 = arith.constant 0 : index
    %107 = vector.load %arg4[%c8_103, %c0_104, %c0_105] : memref<9x8x16xf32, #tpu.memory_space<vmem>>, vector<1x8x16xf32>
    %108 = vector.shape_cast %107 : vector<1x8x16xf32> to vector<8x16xf32>
    %c0_106 = arith.constant 0 : index
    %c22_107 = arith.constant 22 : index
    %109 = vector.load %arg9[%c0_106, %c22_107] : memref<16x222xf32, #tpu.memory_space<vmem>>, vector<16x200xf32>
    %cst_108 = arith.constant dense<0.000000e+00> : vector<8x200xf32>
    %110 = tpu.matmul %108, %109, %cst_108 {dimension_numbers = #tpu.dot_dimension_numbers<[1], [0], [0], [1], [0, 0, 1, 1], [], []>} : vector<8x16xf32>, vector<16x200xf32>, vector<8x200xf32> -> vector<8x200xf32>
    %111 = arith.addf %106, %110 : vector<8x200xf32>
    %c0_109 = arith.constant 0 : index
    %c0_110 = arith.constant 0 : index
    %112 = vector.load %arg5[%c0_109, %c0_110] : memref<8x1xf32, #tpu.memory_space<vmem>>, vector<8x1xf32>
    %113 = vector.broadcast %112 : vector<8x1xf32> to vector<8x200xf32>
    %114 = arith.addf %111, %113 : vector<8x200xf32>
    %115 = math.tanh %114 : vector<8x200xf32>
    %cst_111 = arith.constant 1.000000e+00 : f32
    %116 = vector.broadcast %cst_111 : f32 to vector<8x200xf32>
    %117 = arith.subf %116, %63 : vector<8x200xf32>
    %118 = arith.mulf %117, %115 : vector<8x200xf32>
    %119 = arith.mulf %63, %5 : vector<8x200xf32>
    %120 = arith.addf %118, %119 : vector<8x200xf32>
    %c0_112 = arith.constant 0 : index
    %c0_113 = arith.constant 0 : index
    %121 = vector.load %arg6[%c0_112, %c0_113] : memref<1x200xf32, #tpu.memory_space<vmem>>, vector<1x200xf32>
    %122 = vector.broadcast %121 : vector<1x200xf32> to vector<8x200xf32>
    %123 = arith.mulf %120, %122 : vector<8x200xf32>
    %c0_114 = arith.constant 0 : index
    %c0_115 = arith.constant 0 : index
    %124 = vector.load %arg8[%c0_114, %c0_115] : memref<8x200xf32, #tpu.memory_space<vmem>>, vector<8x200xf32>
    tpu.vector_store %arg8[%c0_114, %c0_115], %123 {strides = array<i32>} : memref<8x200xf32, #tpu.memory_space<vmem>>, vector<8x200xf32>,
    %c0_116 = arith.constant 0 : index
    %c0_117 = arith.constant 0 : index
    %c0_118 = arith.constant 0 : index
    %125 = vector.load %arg7[%c0_116, %c0_117, %c0_118] : memref<1x8x200xf32, #tpu.memory_space<vmem>>, vector<1x8x200xf32>
    %126 = vector.shape_cast %125 : vector<1x8x200xf32> to vector<8x200xf32>
    %127 = vector.shape_cast %123 : vector<8x200xf32> to vector<1x8x200xf32>
    tpu.vector_store %arg7[%c0_116, %c0_117, %c0_118], %127 {strides = array<i32>} : memref<1x8x200xf32, #tpu.memory_space<vmem>>, vector<1x8x200xf32>,
    return
  }
  func.func @transform_0(%arg0: i32) -> (i32, i32, i32) {
    %c0_i32 = arith.constant 0 : i32
    %c0_i32_0 = arith.constant 0 : i32
    %c0_i32_1 = arith.constant 0 : i32
    return %arg0, %c0_i32, %c0_i32_0 : i32, i32, i32
  }
  func.func @transform_1(%arg0: i32) -> (i32, i32, i32) {
    %c0_i32 = arith.constant 0 : i32
    %c0_i32_0 = arith.constant 0 : i32
    %c0_i32_1 = arith.constant 0 : i32
    %c0_i32_2 = arith.constant 0 : i32
    return %c0_i32, %c0_i32_0, %c0_i32_1 : i32, i32, i32
  }
  func.func @transform_2(%arg0: i32) -> (i32, i32) {
    %c0_i32 = arith.constant 0 : i32
    %c0_i32_0 = arith.constant 0 : i32
    %c0_i32_1 = arith.constant 0 : i32
    return %c0_i32, %c0_i32_0 : i32, i32
  }
  func.func @transform_3(%arg0: i32) -> (i32, i32, i32) {
    %c0_i32 = arith.constant 0 : i32
    %c0_i32_0 = arith.constant 0 : i32
    %c0_i32_1 = arith.constant 0 : i32
    %c0_i32_2 = arith.constant 0 : i32
    return %c0_i32, %c0_i32_0, %c0_i32_1 : i32, i32, i32
  }
  func.func @transform_4(%arg0: i32) -> (i32, i32) {
    %c0_i32 = arith.constant 0 : i32
    %c0_i32_0 = arith.constant 0 : i32
    %c0_i32_1 = arith.constant 0 : i32
    return %c0_i32, %c0_i32_0 : i32, i32
  }
  func.func @transform_5(%arg0: i32) -> (i32, i32) {
    %c0_i32 = arith.constant 0 : i32
    %c0_i32_0 = arith.constant 0 : i32
    %c0_i32_1 = arith.constant 0 : i32
    return %c0_i32, %c0_i32_0 : i32, i32
  }
  func.func @transform_6(%arg0: i32) -> (i32, i32, i32) {
    %c0_i32 = arith.constant 0 : i32
    %c0_i32_0 = arith.constant 0 : i32
    %c0_i32_1 = arith.constant 0 : i32
    return %arg0, %c0_i32, %c0_i32_0 : i32, i32, i32
  }
}

module attributes {stable_mosaic.version = 11 : i64} {
  func.func @_gru_scan_kernel(%arg0: i32, %arg1: memref<1x8x222xf32, #tpu.memory_space<vmem>>, %arg2: memref<9x16x16xf32, #tpu.memory_space<vmem>>, %arg3: memref<16x1xf32, #tpu.memory_space<vmem>>, %arg4: memref<9x8x16xf32, #tpu.memory_space<vmem>>, %arg5: memref<8x1xf32, #tpu.memory_space<vmem>>, %arg6: memref<1x200xf32, #tpu.memory_space<vmem>>, %arg7: memref<1x8x200xf32, #tpu.memory_space<vmem>>, %arg8: memref<8x200xf32, #tpu.memory_space<vmem>>, %arg9: memref<16x222xf32, #tpu.memory_space<vmem>>) attributes {dimension_semantics = [#tpu.dimension_semantics<arbitrary>], iteration_bounds = array<i64: 4>, scalar_prefetch = 0 : i64, scratch_operands = 2 : i64, tpu.core_type = #tpu.core_type<tc>, window_params = [{transform_indices = @transform_0, window_bounds = array<i64: 1, 8, 222>}, {pipeline_mode = #tpu.pipeline_mode<synchronous>, transform_indices = @transform_1, window_bounds = array<i64: 9, 16, 16>}, {pipeline_mode = #tpu.pipeline_mode<synchronous>, transform_indices = @transform_2, window_bounds = array<i64: 16, 1>}, {pipeline_mode = #tpu.pipeline_mode<synchronous>, transform_indices = @transform_3, window_bounds = array<i64: 9, 8, 16>}, {pipeline_mode = #tpu.pipeline_mode<synchronous>, transform_indices = @transform_4, window_bounds = array<i64: 8, 1>}, {pipeline_mode = #tpu.pipeline_mode<synchronous>, transform_indices = @transform_5, window_bounds = array<i64: 1, 200>}, {transform_indices = @transform_6, window_bounds = array<i64: 1, 8, 200>}]} {
    %c0 = arith.constant 0 : index
    %c0_0 = arith.constant 0 : index
    %c0_1 = arith.constant 0 : index
    %0 = vector.load %arg1[%c0, %c0_0, %c0_1] : memref<1x8x222xf32, #tpu.memory_space<vmem>>, vector<1x8x222xf32>
    %1 = vector.shape_cast %0 : vector<1x8x222xf32> to vector<8x222xf32>
    %c0_i32 = arith.constant 0 : i32
    %2 = arith.cmpi eq, %arg0, %c0_i32 : i32
    %3 = arith.extui %2 : i1 to i32
    %c0_i32_2 = arith.constant 0 : i32
    %4 = arith.cmpi ne, %3, %c0_i32_2 : i32
    scf.if %4 {
      %128 = vector.extract_strided_slice %1 {offsets = [0, 11], sizes = [8, 200], strides = [1, 1]} : vector<8x222xf32> to vector<8x200xf32>
      %c0_119 = arith.constant 0 : index
      %c0_120 = arith.constant 0 : index
      %129 = vector.load %arg8[%c0_119, %c0_120] : memref<8x200xf32, #tpu.memory_space<vmem>>, vector<8x200xf32>
      tpu.vector_store %arg8[%c0_119, %c0_120], %128 {strides = array<i32>} : memref<8x200xf32, #tpu.memory_space<vmem>>, vector<8x200xf32>,
      %cst_121 = arith.constant 0.000000e+00 : f32
      %130 = vector.broadcast %cst_121 : f32 to vector<16x222xf32>
      %c0_122 = arith.constant 0 : index
      %c0_123 = arith.constant 0 : index
      %131 = vector.load %arg9[%c0_122, %c0_123] : memref<16x222xf32, #tpu.memory_space<vmem>>, vector<16x222xf32>
      tpu.vector_store %arg9[%c0_122, %c0_123], %130 {strides = array<i32>} : memref<16x222xf32, #tpu.memory_space<vmem>>, vector<16x222xf32>,
    } else {
    }
    %c0_3 = arith.constant 0 : index
    %c0_4 = arith.constant 0 : index
    %5 = vector.load %arg8[%c0_3, %c0_4] : memref<8x200xf32, #tpu.memory_space<vmem>>, vector<8x200xf32>
    %c0_5 = arith.constant 0 : index
    %c0_6 = arith.constant 0 : index
    %6 = vector.load %arg9[%c0_5, %c0_6] : memref<16x222xf32, #tpu.memory_space<vmem>>, vector<8x222xf32>
    tpu.vector_store %arg9[%c0_5, %c0_6], %1 {strides = array<i32>} : memref<16x222xf32, #tpu.memory_space<vmem>>, vector<8x222xf32>,
    %c8 = arith.constant 8 : index
    %c11 = arith.constant 11 : index
    %7 = vector.load %arg9[%c8, %c11] : memref<16x222xf32, #tpu.memory_space<vmem>>, vector<8x200xf32>
    tpu.vector_store %arg9[%c8, %c11], %5 {strides = array<i32>} : memref<16x222xf32, #tpu.memory_space<vmem>>, vector<8x200xf32>,
    %cst = arith.constant 0.000000e+00 : f32
    %8 = vector.broadcast %cst : f32 to vector<16x200xf32>
    %c0_7 = arith.constant 0 : index
    %c0_8 = arith.constant 0 : index
    %c0_9 = arith.constant 0 : index
    %9 = vector.load %arg2[%c0_7, %c0_8, %c0_9] : memref<9x16x16xf32, #tpu.memory_space<vmem>>, vector<1x16x16xf32>
    %10 = vector.shape_cast %9 : vector<1x16x16xf32> to vector<16x16xf32>
    %c0_10 = arith.constant 0 : index
    %c0_11 = arith.constant 0 : index
    %11 = vector.load %arg9[%c0_10, %c0_11] : memref<16x222xf32, #tpu.memory_space<vmem>>, vector<16x200xf32>
    %cst_12 = arith.constant dense<0.000000e+00> : vector<16x200xf32>
    %12 = tpu.matmul %10, %11, %cst_12 {dimension_numbers = #tpu.dot_dimension_numbers<[1], [0], [0], [1], [0, 0, 1, 1], [], []>} : vector<16x16xf32>, vector<16x200xf32>, vector<16x200xf32> -> vector<16x200xf32>
    %13 = arith.addf %8, %12 : vector<16x200xf32>
    %c1 = arith.constant 1 : index
    %c0_13 = arith.constant 0 : index
    %c0_14 = arith.constant 0 : index
    %14 = vector.load %arg2[%c1, %c0_13, %c0_14] : memref<9x16x16xf32, #tpu.memory_space<vmem>>, vector<1x16x16xf32>
    %15 = vector.shape_cast %14 : vector<1x16x16xf32> to vector<16x16xf32>
    %c0_15 = arith.constant 0 : index
    %c1_16 = arith.constant 1 : index
    %16 = vector.load %arg9[%c0_15, %c1_16] : memref<16x222xf32, #tpu.memory_space<vmem>>, vector<16x200xf32>
    %cst_17 = arith.constant dense<0.000000e+00> : vector<16x200xf32>
    %17 = tpu.matmul %15, %16, %cst_17 {dimension_numbers = #tpu.dot_dimension_numbers<[1], [0], [0], [1], [0, 0, 1, 1], [], []>} : vector<16x16xf32>, vector<16x200xf32>, vector<16x200xf32> -> vector<16x200xf32>
    %18 = arith.addf %13, %17 : vector<16x200xf32>
    %c2 = arith.constant 2 : index
    %c0_18 = arith.constant 0 : index
    %c0_19 = arith.constant 0 : index
    %19 = vector.load %arg2[%c2, %c0_18, %c0_19] : memref<9x16x16xf32, #tpu.memory_space<vmem>>, vector<1x16x16xf32>
    %20 = vector.shape_cast %19 : vector<1x16x16xf32> to vector<16x16xf32>
    %c0_20 = arith.constant 0 : index
    %c2_21 = arith.constant 2 : index
    %21 = vector.load %arg9[%c0_20, %c2_21] : memref<16x222xf32, #tpu.memory_space<vmem>>, vector<16x200xf32>
    %cst_22 = arith.constant dense<0.000000e+00> : vector<16x200xf32>
    %22 = tpu.matmul %20, %21, %cst_22 {dimension_numbers = #tpu.dot_dimension_numbers<[1], [0], [0], [1], [0, 0, 1, 1], [], []>} : vector<16x16xf32>, vector<16x200xf32>, vector<16x200xf32> -> vector<16x200xf32>
    %23 = arith.addf %18, %22 : vector<16x200xf32>
    %c3 = arith.constant 3 : index
    %c0_23 = arith.constant 0 : index
    %c0_24 = arith.constant 0 : index
    %24 = vector.load %arg2[%c3, %c0_23, %c0_24] : memref<9x16x16xf32, #tpu.memory_space<vmem>>, vector<1x16x16xf32>
    %25 = vector.shape_cast %24 : vector<1x16x16xf32> to vector<16x16xf32>
    %c0_25 = arith.constant 0 : index
    %c10 = arith.constant 10 : index
    %26 = vector.load %arg9[%c0_25, %c10] : memref<16x222xf32, #tpu.memory_space<vmem>>, vector<16x200xf32>
    %cst_26 = arith.constant dense<0.000000e+00> : vector<16x200xf32>
    %27 = tpu.matmul %25, %26, %cst_26 {dimension_numbers = #tpu.dot_dimension_numbers<[1], [0], [0], [1], [0, 0, 1, 1], [], []>} : vector<16x16xf32>, vector<16x200xf32>, vector<16x200xf32> -> vector<16x200xf32>
    %28 = arith.addf %23, %27 : vector<16x200xf32>
    %c4 = arith.constant 4 : index
    %c0_27 = arith.constant 0 : index
    %c0_28 = arith.constant 0 : index
    %29 = vector.load %arg2[%c4, %c0_27, %c0_28] : memref<9x16x16xf32, #tpu.memory_space<vmem>>, vector<1x16x16xf32>
    %30 = vector.shape_cast %29 : vector<1x16x16xf32> to vector<16x16xf32>
    %c0_29 = arith.constant 0 : index
    %c11_30 = arith.constant 11 : index
    %31 = vector.load %arg9[%c0_29, %c11_30] : memref<16x222xf32, #tpu.memory_space<vmem>>, vector<16x200xf32>
    %cst_31 = arith.constant dense<0.000000e+00> : vector<16x200xf32>
    %32 = tpu.matmul %30, %31, %cst_31 {dimension_numbers = #tpu.dot_dimension_numbers<[1], [0], [0], [1], [0, 0, 1, 1], [], []>} : vector<16x16xf32>, vector<16x200xf32>, vector<16x200xf32> -> vector<16x200xf32>
    %33 = arith.addf %28, %32 : vector<16x200xf32>
    %c5 = arith.constant 5 : index
    %c0_32 = arith.constant 0 : index
    %c0_33 = arith.constant 0 : index
    %34 = vector.load %arg2[%c5, %c0_32, %c0_33] : memref<9x16x16xf32, #tpu.memory_space<vmem>>, vector<1x16x16xf32>
    %35 = vector.shape_cast %34 : vector<1x16x16xf32> to vector<16x16xf32>
    %c0_34 = arith.constant 0 : index
    %c12 = arith.constant 12 : index
    %36 = vector.load %arg9[%c0_34, %c12] : memref<16x222xf32, #tpu.memory_space<vmem>>, vector<16x200xf32>
    %cst_35 = arith.constant dense<0.000000e+00> : vector<16x200xf32>
    %37 = tpu.matmul %35, %36, %cst_35 {dimension_numbers = #tpu.dot_dimension_numbers<[1], [0], [0], [1], [0, 0, 1, 1], [], []>} : vector<16x16xf32>, vector<16x200xf32>, vector<16x200xf32> -> vector<16x200xf32>
    %38 = arith.addf %33, %37 : vector<16x200xf32>
    %c6 = arith.constant 6 : index
    %c0_36 = arith.constant 0 : index
    %c0_37 = arith.constant 0 : index
    %39 = vector.load %arg2[%c6, %c0_36, %c0_37] : memref<9x16x16xf32, #tpu.memory_space<vmem>>, vector<1x16x16xf32>
    %40 = vector.shape_cast %39 : vector<1x16x16xf32> to vector<16x16xf32>
    %c0_38 = arith.constant 0 : index
    %c20 = arith.constant 20 : index
    %41 = vector.load %arg9[%c0_38, %c20] : memref<16x222xf32, #tpu.memory_space<vmem>>, vector<16x200xf32>
    %cst_39 = arith.constant dense<0.000000e+00> : vector<16x200xf32>
    %42 = tpu.matmul %40, %41, %cst_39 {dimension_numbers = #tpu.dot_dimension_numbers<[1], [0], [0], [1], [0, 0, 1, 1], [], []>} : vector<16x16xf32>, vector<16x200xf32>, vector<16x200xf32> -> vector<16x200xf32>
    %43 = arith.addf %38, %42 : vector<16x200xf32>
    %c7 = arith.constant 7 : index
    %c0_40 = arith.constant 0 : index
    %c0_41 = arith.constant 0 : index
    %44 = vector.load %arg2[%c7, %c0_40, %c0_41] : memref<9x16x16xf32, #tpu.memory_space<vmem>>, vector<1x16x16xf32>
    %45 = vector.shape_cast %44 : vector<1x16x16xf32> to vector<16x16xf32>
    %c0_42 = arith.constant 0 : index
    %c21 = arith.constant 21 : index
    %46 = vector.load %arg9[%c0_42, %c21] : memref<16x222xf32, #tpu.memory_space<vmem>>, vector<16x200xf32>
    %cst_43 = arith.constant dense<0.000000e+00> : vector<16x200xf32>
    %47 = tpu.matmul %45, %46, %cst_43 {dimension_numbers = #tpu.dot_dimension_numbers<[1], [0], [0], [1], [0, 0, 1, 1], [], []>} : vector<16x16xf32>, vector<16x200xf32>, vector<16x200xf32> -> vector<16x200xf32>
    %48 = arith.addf %43, %47 : vector<16x200xf32>
    %c8_44 = arith.constant 8 : index
    %c0_45 = arith.constant 0 : index
    %c0_46 = arith.constant 0 : index
    %49 = vector.load %arg2[%c8_44, %c0_45, %c0_46] : memref<9x16x16xf32, #tpu.memory_space<vmem>>, vector<1x16x16xf32>
    %50 = vector.shape_cast %49 : vector<1x16x16xf32> to vector<16x16xf32>
    %c0_47 = arith.constant 0 : index
    %c22 = arith.constant 22 : index
    %51 = vector.load %arg9[%c0_47, %c22] : memref<16x222xf32, #tpu.memory_space<vmem>>, vector<16x200xf32>
    %cst_48 = arith.constant dense<0.000000e+00> : vector<16x200xf32>
    %52 = tpu.matmul %50, %51, %cst_48 {dimension_numbers = #tpu.dot_dimension_numbers<[1], [0], [0], [1], [0, 0, 1, 1], [], []>} : vector<16x16xf32>, vector<16x200xf32>, vector<16x200xf32> -> vector<16x200xf32>
    %53 = arith.addf %48, %52 : vector<16x200xf32>
    %c0_49 = arith.constant 0 : index
    %c0_50 = arith.constant 0 : index
    %54 = vector.load %arg3[%c0_49, %c0_50] : memref<16x1xf32, #tpu.memory_space<vmem>>, vector<16x1xf32>
    %55 = vector.broadcast %54 : vector<16x1xf32> to vector<16x200xf32>
    %56 = arith.addf %53, %55 : vector<16x200xf32>
    %57 = arith.negf %56 : vector<16x200xf32>
    %58 = math.exp %57 : vector<16x200xf32>
    %cst_51 = arith.constant 1.000000e+00 : f32
    %59 = vector.broadcast %cst_51 : f32 to vector<16x200xf32>
    %60 = arith.addf %59, %58 : vector<16x200xf32>
    %61 = arith.divf %59, %60 : vector<16x200xf32>
    %62 = vector.extract_strided_slice %61 {offsets = [0, 0], sizes = [8, 200], strides = [1, 1]} : vector<16x200xf32> to vector<8x200xf32>
    %63 = vector.extract_strided_slice %61 {offsets = [8, 0], sizes = [8, 200], strides = [1, 1]} : vector<16x200xf32> to vector<8x200xf32>
    %64 = arith.mulf %62, %5 : vector<8x200xf32>
    %c8_52 = arith.constant 8 : index
    %c11_53 = arith.constant 11 : index
    %65 = vector.load %arg9[%c8_52, %c11_53] : memref<16x222xf32, #tpu.memory_space<vmem>>, vector<8x200xf32>
    tpu.vector_store %arg9[%c8_52, %c11_53], %64 {strides = array<i32>} : memref<16x222xf32, #tpu.memory_space<vmem>>, vector<8x200xf32>,
    %cst_54 = arith.constant 0.000000e+00 : f32
    %66 = vector.broadcast %cst_54 : f32 to vector<8x200xf32>
    %c0_55 = arith.constant 0 : index
    %c0_56 = arith.constant 0 : index
    %c0_57 = arith.constant 0 : index
    %67 = vector.load %arg4[%c0_55, %c0_56, %c0_57] : memref<9x8x16xf32, #tpu.memory_space<vmem>>, vector<1x8x16xf32>
    %68 = vector.shape_cast %67 : vector<1x8x16xf32> to vector<8x16xf32>
    %c0_58 = arith.constant 0 : index
    %c0_59 = arith.constant 0 : index
    %69 = vector.load %arg9[%c0_58, %c0_59] : memref<16x222xf32, #tpu.memory_space<vmem>>, vector<16x200xf32>
    %cst_60 = arith.constant dense<0.000000e+00> : vector<8x200xf32>
    %70 = tpu.matmul %68, %69, %cst_60 {dimension_numbers = #tpu.dot_dimension_numbers<[1], [0], [0], [1], [0, 0, 1, 1], [], []>} : vector<8x16xf32>, vector<16x200xf32>, vector<8x200xf32> -> vector<8x200xf32>
    %71 = arith.addf %66, %70 : vector<8x200xf32>
    %c1_61 = arith.constant 1 : index
    %c0_62 = arith.constant 0 : index
    %c0_63 = arith.constant 0 : index
    %72 = vector.load %arg4[%c1_61, %c0_62, %c0_63] : memref<9x8x16xf32, #tpu.memory_space<vmem>>, vector<1x8x16xf32>
    %73 = vector.shape_cast %72 : vector<1x8x16xf32> to vector<8x16xf32>
    %c0_64 = arith.constant 0 : index
    %c1_65 = arith.constant 1 : index
    %74 = vector.load %arg9[%c0_64, %c1_65] : memref<16x222xf32, #tpu.memory_space<vmem>>, vector<16x200xf32>
    %cst_66 = arith.constant dense<0.000000e+00> : vector<8x200xf32>
    %75 = tpu.matmul %73, %74, %cst_66 {dimension_numbers = #tpu.dot_dimension_numbers<[1], [0], [0], [1], [0, 0, 1, 1], [], []>} : vector<8x16xf32>, vector<16x200xf32>, vector<8x200xf32> -> vector<8x200xf32>
    %76 = arith.addf %71, %75 : vector<8x200xf32>
    %c2_67 = arith.constant 2 : index
    %c0_68 = arith.constant 0 : index
    %c0_69 = arith.constant 0 : index
    %77 = vector.load %arg4[%c2_67, %c0_68, %c0_69] : memref<9x8x16xf32, #tpu.memory_space<vmem>>, vector<1x8x16xf32>
    %78 = vector.shape_cast %77 : vector<1x8x16xf32> to vector<8x16xf32>
    %c0_70 = arith.constant 0 : index
    %c2_71 = arith.constant 2 : index
    %79 = vector.load %arg9[%c0_70, %c2_71] : memref<16x222xf32, #tpu.memory_space<vmem>>, vector<16x200xf32>
    %cst_72 = arith.constant dense<0.000000e+00> : vector<8x200xf32>
    %80 = tpu.matmul %78, %79, %cst_72 {dimension_numbers = #tpu.dot_dimension_numbers<[1], [0], [0], [1], [0, 0, 1, 1], [], []>} : vector<8x16xf32>, vector<16x200xf32>, vector<8x200xf32> -> vector<8x200xf32>
    %81 = arith.addf %76, %80 : vector<8x200xf32>
    %c3_73 = arith.constant 3 : index
    %c0_74 = arith.constant 0 : index
    %c0_75 = arith.constant 0 : index
    %82 = vector.load %arg4[%c3_73, %c0_74, %c0_75] : memref<9x8x16xf32, #tpu.memory_space<vmem>>, vector<1x8x16xf32>
    %83 = vector.shape_cast %82 : vector<1x8x16xf32> to vector<8x16xf32>
    %c0_76 = arith.constant 0 : index
    %c10_77 = arith.constant 10 : index
    %84 = vector.load %arg9[%c0_76, %c10_77] : memref<16x222xf32, #tpu.memory_space<vmem>>, vector<16x200xf32>
    %cst_78 = arith.constant dense<0.000000e+00> : vector<8x200xf32>
    %85 = tpu.matmul %83, %84, %cst_78 {dimension_numbers = #tpu.dot_dimension_numbers<[1], [0], [0], [1], [0, 0, 1, 1], [], []>} : vector<8x16xf32>, vector<16x200xf32>, vector<8x200xf32> -> vector<8x200xf32>
    %86 = arith.addf %81, %85 : vector<8x200xf32>
    %c4_79 = arith.constant 4 : index
    %c0_80 = arith.constant 0 : index
    %c0_81 = arith.constant 0 : index
    %87 = vector.load %arg4[%c4_79, %c0_80, %c0_81] : memref<9x8x16xf32, #tpu.memory_space<vmem>>, vector<1x8x16xf32>
    %88 = vector.shape_cast %87 : vector<1x8x16xf32> to vector<8x16xf32>
    %c0_82 = arith.constant 0 : index
    %c11_83 = arith.constant 11 : index
    %89 = vector.load %arg9[%c0_82, %c11_83] : memref<16x222xf32, #tpu.memory_space<vmem>>, vector<16x200xf32>
    %cst_84 = arith.constant dense<0.000000e+00> : vector<8x200xf32>
    %90 = tpu.matmul %88, %89, %cst_84 {dimension_numbers = #tpu.dot_dimension_numbers<[1], [0], [0], [1], [0, 0, 1, 1], [], []>} : vector<8x16xf32>, vector<16x200xf32>, vector<8x200xf32> -> vector<8x200xf32>
    %91 = arith.addf %86, %90 : vector<8x200xf32>
    %c5_85 = arith.constant 5 : index
    %c0_86 = arith.constant 0 : index
    %c0_87 = arith.constant 0 : index
    %92 = vector.load %arg4[%c5_85, %c0_86, %c0_87] : memref<9x8x16xf32, #tpu.memory_space<vmem>>, vector<1x8x16xf32>
    %93 = vector.shape_cast %92 : vector<1x8x16xf32> to vector<8x16xf32>
    %c0_88 = arith.constant 0 : index
    %c12_89 = arith.constant 12 : index
    %94 = vector.load %arg9[%c0_88, %c12_89] : memref<16x222xf32, #tpu.memory_space<vmem>>, vector<16x200xf32>
    %cst_90 = arith.constant dense<0.000000e+00> : vector<8x200xf32>
    %95 = tpu.matmul %93, %94, %cst_90 {dimension_numbers = #tpu.dot_dimension_numbers<[1], [0], [0], [1], [0, 0, 1, 1], [], []>} : vector<8x16xf32>, vector<16x200xf32>, vector<8x200xf32> -> vector<8x200xf32>
    %96 = arith.addf %91, %95 : vector<8x200xf32>
    %c6_91 = arith.constant 6 : index
    %c0_92 = arith.constant 0 : index
    %c0_93 = arith.constant 0 : index
    %97 = vector.load %arg4[%c6_91, %c0_92, %c0_93] : memref<9x8x16xf32, #tpu.memory_space<vmem>>, vector<1x8x16xf32>
    %98 = vector.shape_cast %97 : vector<1x8x16xf32> to vector<8x16xf32>
    %c0_94 = arith.constant 0 : index
    %c20_95 = arith.constant 20 : index
    %99 = vector.load %arg9[%c0_94, %c20_95] : memref<16x222xf32, #tpu.memory_space<vmem>>, vector<16x200xf32>
    %cst_96 = arith.constant dense<0.000000e+00> : vector<8x200xf32>
    %100 = tpu.matmul %98, %99, %cst_96 {dimension_numbers = #tpu.dot_dimension_numbers<[1], [0], [0], [1], [0, 0, 1, 1], [], []>} : vector<8x16xf32>, vector<16x200xf32>, vector<8x200xf32> -> vector<8x200xf32>
    %101 = arith.addf %96, %100 : vector<8x200xf32>
    %c7_97 = arith.constant 7 : index
    %c0_98 = arith.constant 0 : index
    %c0_99 = arith.constant 0 : index
    %102 = vector.load %arg4[%c7_97, %c0_98, %c0_99] : memref<9x8x16xf32, #tpu.memory_space<vmem>>, vector<1x8x16xf32>
    %103 = vector.shape_cast %102 : vector<1x8x16xf32> to vector<8x16xf32>
    %c0_100 = arith.constant 0 : index
    %c21_101 = arith.constant 21 : index
    %104 = vector.load %arg9[%c0_100, %c21_101] : memref<16x222xf32, #tpu.memory_space<vmem>>, vector<16x200xf32>
    %cst_102 = arith.constant dense<0.000000e+00> : vector<8x200xf32>
    %105 = tpu.matmul %103, %104, %cst_102 {dimension_numbers = #tpu.dot_dimension_numbers<[1], [0], [0], [1], [0, 0, 1, 1], [], []>} : vector<8x16xf32>, vector<16x200xf32>, vector<8x200xf32> -> vector<8x200xf32>
    %106 = arith.addf %101, %105 : vector<8x200xf32>
    %c8_103 = arith.constant 8 : index
    %c0_104 = arith.constant 0 : index
    %c0_105 = arith.constant 0 : index
    %107 = vector.load %arg4[%c8_103, %c0_104, %c0_105] : memref<9x8x16xf32, #tpu.memory_space<vmem>>, vector<1x8x16xf32>
    %108 = vector.shape_cast %107 : vector<1x8x16xf32> to vector<8x16xf32>
    %c0_106 = arith.constant 0 : index
    %c22_107 = arith.constant 22 : index
    %109 = vector.load %arg9[%c0_106, %c22_107] : memref<16x222xf32, #tpu.memory_space<vmem>>, vector<16x200xf32>
    %cst_108 = arith.constant dense<0.000000e+00> : vector<8x200xf32>
    %110 = tpu.matmul %108, %109, %cst_108 {dimension_numbers = #tpu.dot_dimension_numbers<[1], [0], [0], [1], [0, 0, 1, 1], [], []>} : vector<8x16xf32>, vector<16x200xf32>, vector<8x200xf32> -> vector<8x200xf32>
    %111 = arith.addf %106, %110 : vector<8x200xf32>
    %c0_109 = arith.constant 0 : index
    %c0_110 = arith.constant 0 : index
    %112 = vector.load %arg5[%c0_109, %c0_110] : memref<8x1xf32, #tpu.memory_space<vmem>>, vector<8x1xf32>
    %113 = vector.broadcast %112 : vector<8x1xf32> to vector<8x200xf32>
    %114 = arith.addf %111, %113 : vector<8x200xf32>
    %115 = math.tanh %114 : vector<8x200xf32>
    %cst_111 = arith.constant 1.000000e+00 : f32
    %116 = vector.broadcast %cst_111 : f32 to vector<8x200xf32>
    %117 = arith.subf %116, %63 : vector<8x200xf32>
    %118 = arith.mulf %117, %115 : vector<8x200xf32>
    %119 = arith.mulf %63, %5 : vector<8x200xf32>
    %120 = arith.addf %118, %119 : vector<8x200xf32>
    %c0_112 = arith.constant 0 : index
    %c0_113 = arith.constant 0 : index
    %121 = vector.load %arg6[%c0_112, %c0_113] : memref<1x200xf32, #tpu.memory_space<vmem>>, vector<1x200xf32>
    %122 = vector.broadcast %121 : vector<1x200xf32> to vector<8x200xf32>
    %123 = arith.mulf %120, %122 : vector<8x200xf32>
    %c0_114 = arith.constant 0 : index
    %c0_115 = arith.constant 0 : index
    %124 = vector.load %arg8[%c0_114, %c0_115] : memref<8x200xf32, #tpu.memory_space<vmem>>, vector<8x200xf32>
    tpu.vector_store %arg8[%c0_114, %c0_115], %123 {strides = array<i32>} : memref<8x200xf32, #tpu.memory_space<vmem>>, vector<8x200xf32>,
    %c0_116 = arith.constant 0 : index
    %c0_117 = arith.constant 0 : index
    %c0_118 = arith.constant 0 : index
    %125 = vector.load %arg7[%c0_116, %c0_117, %c0_118] : memref<1x8x200xf32, #tpu.memory_space<vmem>>, vector<1x8x200xf32>
    %126 = vector.shape_cast %125 : vector<1x8x200xf32> to vector<8x200xf32>
    %127 = vector.shape_cast %123 : vector<8x200xf32> to vector<1x8x200xf32>
    tpu.vector_store %arg7[%c0_116, %c0_117, %c0_118], %127 {strides = array<i32>} : memref<1x8x200xf32, #tpu.memory_space<vmem>>, vector<1x8x200xf32>,
    return
  }
  func.func @transform_0(%arg0: i32) -> (i32, i32, i32) {
    %c3_i32 = arith.constant 3 : i32
    %0 = arith.subi %c3_i32, %arg0 : i32
    %c0_i32 = arith.constant 0 : i32
    %c0_i32_0 = arith.constant 0 : i32
    %c0_i32_1 = arith.constant 0 : i32
    return %0, %c0_i32, %c0_i32_0 : i32, i32, i32
  }
  func.func @transform_1(%arg0: i32) -> (i32, i32, i32) {
    %c0_i32 = arith.constant 0 : i32
    %c0_i32_0 = arith.constant 0 : i32
    %c0_i32_1 = arith.constant 0 : i32
    %c0_i32_2 = arith.constant 0 : i32
    return %c0_i32, %c0_i32_0, %c0_i32_1 : i32, i32, i32
  }
  func.func @transform_2(%arg0: i32) -> (i32, i32) {
    %c0_i32 = arith.constant 0 : i32
    %c0_i32_0 = arith.constant 0 : i32
    %c0_i32_1 = arith.constant 0 : i32
    return %c0_i32, %c0_i32_0 : i32, i32
  }
  func.func @transform_3(%arg0: i32) -> (i32, i32, i32) {
    %c0_i32 = arith.constant 0 : i32
    %c0_i32_0 = arith.constant 0 : i32
    %c0_i32_1 = arith.constant 0 : i32
    %c0_i32_2 = arith.constant 0 : i32
    return %c0_i32, %c0_i32_0, %c0_i32_1 : i32, i32, i32
  }
  func.func @transform_4(%arg0: i32) -> (i32, i32) {
    %c0_i32 = arith.constant 0 : i32
    %c0_i32_0 = arith.constant 0 : i32
    %c0_i32_1 = arith.constant 0 : i32
    return %c0_i32, %c0_i32_0 : i32, i32
  }
  func.func @transform_5(%arg0: i32) -> (i32, i32) {
    %c0_i32 = arith.constant 0 : i32
    %c0_i32_0 = arith.constant 0 : i32
    %c0_i32_1 = arith.constant 0 : i32
    return %c0_i32, %c0_i32_0 : i32, i32
  }
  func.func @transform_6(%arg0: i32) -> (i32, i32, i32) {
    %c3_i32 = arith.constant 3 : i32
    %0 = arith.subi %c3_i32, %arg0 : i32
    %c0_i32 = arith.constant 0 : i32
    %c0_i32_0 = arith.constant 0 : i32
    %c0_i32_1 = arith.constant 0 : i32
    return %0, %c0_i32, %c0_i32_0 : i32, i32, i32
  }
}

module attributes {stable_mosaic.version = 11 : i64} {
  func.func @_bidir_kernel(%arg0: i32, %arg1: memref<1x8x200xf32, #tpu.memory_space<vmem>>, %arg2: memref<1x8x200xf32, #tpu.memory_space<vmem>>, %arg3: memref<9x8x16xf32, #tpu.memory_space<vmem>>, %arg4: memref<8x1xf32, #tpu.memory_space<vmem>>, %arg5: memref<1x200xf32, #tpu.memory_space<vmem>>, %arg6: memref<1x8x200xf32, #tpu.memory_space<vmem>>, %arg7: memref<8x200xf32, #tpu.memory_space<vmem>>, %arg8: memref<16x222xf32, #tpu.memory_space<vmem>>) attributes {dimension_semantics = [#tpu.dimension_semantics<arbitrary>], iteration_bounds = array<i64: 4>, scalar_prefetch = 0 : i64, scratch_operands = 1 : i64, tpu.core_type = #tpu.core_type<tc>, window_params = [{transform_indices = @transform_0, window_bounds = array<i64: 1, 8, 200>}, {transform_indices = @transform_1, window_bounds = array<i64: 1, 8, 200>}, {pipeline_mode = #tpu.pipeline_mode<synchronous>, transform_indices = @transform_2, window_bounds = array<i64: 9, 8, 16>}, {pipeline_mode = #tpu.pipeline_mode<synchronous>, transform_indices = @transform_3, window_bounds = array<i64: 8, 1>}, {pipeline_mode = #tpu.pipeline_mode<synchronous>, transform_indices = @transform_4, window_bounds = array<i64: 1, 200>}, {transform_indices = @transform_5, window_bounds = array<i64: 1, 8, 200>}, {pipeline_mode = #tpu.pipeline_mode<synchronous>, transform_indices = @transform_6, window_bounds = array<i64: 8, 200>}]} {
    %c0_i32 = arith.constant 0 : i32
    %0 = arith.cmpi eq, %arg0, %c0_i32 : i32
    %1 = arith.extui %0 : i1 to i32
    %c0_i32_0 = arith.constant 0 : i32
    %2 = arith.cmpi ne, %1, %c0_i32_0 : i32
    scf.if %2 {
      %cst_61 = arith.constant 0.000000e+00 : f32
      %71 = vector.broadcast %cst_61 : f32 to vector<16x222xf32>
      %c0_62 = arith.constant 0 : index
      %c0_63 = arith.constant 0 : index
      %72 = vector.load %arg8[%c0_62, %c0_63] : memref<16x222xf32, #tpu.memory_space<vmem>>, vector<16x222xf32>
      tpu.vector_store %arg8[%c0_62, %c0_63], %71 {strides = array<i32>} : memref<16x222xf32, #tpu.memory_space<vmem>>, vector<16x222xf32>,
    } else {
    }
    %c0 = arith.constant 0 : index
    %c0_1 = arith.constant 0 : index
    %c0_2 = arith.constant 0 : index
    %3 = vector.load %arg1[%c0, %c0_1, %c0_2] : memref<1x8x200xf32, #tpu.memory_space<vmem>>, vector<1x8x200xf32>
    %4 = vector.shape_cast %3 : vector<1x8x200xf32> to vector<8x200xf32>
    %c0_3 = arith.constant 0 : index
    %c11 = arith.constant 11 : index
    %5 = vector.load %arg8[%c0_3, %c11] : memref<16x222xf32, #tpu.memory_space<vmem>>, vector<8x200xf32>
    tpu.vector_store %arg8[%c0_3, %c11], %4 {strides = array<i32>} : memref<16x222xf32, #tpu.memory_space<vmem>>, vector<8x200xf32>,
    %c0_4 = arith.constant 0 : index
    %c0_5 = arith.constant 0 : index
    %c0_6 = arith.constant 0 : index
    %6 = vector.load %arg2[%c0_4, %c0_5, %c0_6] : memref<1x8x200xf32, #tpu.memory_space<vmem>>, vector<1x8x200xf32>
    %7 = vector.shape_cast %6 : vector<1x8x200xf32> to vector<8x200xf32>
    %c8 = arith.constant 8 : index
    %c11_7 = arith.constant 11 : index
    %8 = vector.load %arg8[%c8, %c11_7] : memref<16x222xf32, #tpu.memory_space<vmem>>, vector<8x200xf32>
    tpu.vector_store %arg8[%c8, %c11_7], %7 {strides = array<i32>} : memref<16x222xf32, #tpu.memory_space<vmem>>, vector<8x200xf32>,
    %cst = arith.constant 0.000000e+00 : f32
    %9 = vector.broadcast %cst : f32 to vector<8x200xf32>
    %c0_8 = arith.constant 0 : index
    %c0_9 = arith.constant 0 : index
    %c0_10 = arith.constant 0 : index
    %10 = vector.load %arg3[%c0_8, %c0_9, %c0_10] : memref<9x8x16xf32, #tpu.memory_space<vmem>>, vector<1x8x16xf32>
    %11 = vector.shape_cast %10 : vector<1x8x16xf32> to vector<8x16xf32>
    %c0_11 = arith.constant 0 : index
    %c0_12 = arith.constant 0 : index
    %12 = vector.load %arg8[%c0_11, %c0_12] : memref<16x222xf32, #tpu.memory_space<vmem>>, vector<16x200xf32>
    %cst_13 = arith.constant dense<0.000000e+00> : vector<8x200xf32>
    %13 = tpu.matmul %11, %12, %cst_13 {dimension_numbers = #tpu.dot_dimension_numbers<[1], [0], [0], [1], [0, 0, 1, 1], [], []>} : vector<8x16xf32>, vector<16x200xf32>, vector<8x200xf32> -> vector<8x200xf32>
    %14 = arith.addf %9, %13 : vector<8x200xf32>
    %c1 = arith.constant 1 : index
    %c0_14 = arith.constant 0 : index
    %c0_15 = arith.constant 0 : index
    %15 = vector.load %arg3[%c1, %c0_14, %c0_15] : memref<9x8x16xf32, #tpu.memory_space<vmem>>, vector<1x8x16xf32>
    %16 = vector.shape_cast %15 : vector<1x8x16xf32> to vector<8x16xf32>
    %c0_16 = arith.constant 0 : index
    %c1_17 = arith.constant 1 : index
    %17 = vector.load %arg8[%c0_16, %c1_17] : memref<16x222xf32, #tpu.memory_space<vmem>>, vector<16x200xf32>
    %cst_18 = arith.constant dense<0.000000e+00> : vector<8x200xf32>
    %18 = tpu.matmul %16, %17, %cst_18 {dimension_numbers = #tpu.dot_dimension_numbers<[1], [0], [0], [1], [0, 0, 1, 1], [], []>} : vector<8x16xf32>, vector<16x200xf32>, vector<8x200xf32> -> vector<8x200xf32>
    %19 = arith.addf %14, %18 : vector<8x200xf32>
    %c2 = arith.constant 2 : index
    %c0_19 = arith.constant 0 : index
    %c0_20 = arith.constant 0 : index
    %20 = vector.load %arg3[%c2, %c0_19, %c0_20] : memref<9x8x16xf32, #tpu.memory_space<vmem>>, vector<1x8x16xf32>
    %21 = vector.shape_cast %20 : vector<1x8x16xf32> to vector<8x16xf32>
    %c0_21 = arith.constant 0 : index
    %c2_22 = arith.constant 2 : index
    %22 = vector.load %arg8[%c0_21, %c2_22] : memref<16x222xf32, #tpu.memory_space<vmem>>, vector<16x200xf32>
    %cst_23 = arith.constant dense<0.000000e+00> : vector<8x200xf32>
    %23 = tpu.matmul %21, %22, %cst_23 {dimension_numbers = #tpu.dot_dimension_numbers<[1], [0], [0], [1], [0, 0, 1, 1], [], []>} : vector<8x16xf32>, vector<16x200xf32>, vector<8x200xf32> -> vector<8x200xf32>
    %24 = arith.addf %19, %23 : vector<8x200xf32>
    %c3 = arith.constant 3 : index
    %c0_24 = arith.constant 0 : index
    %c0_25 = arith.constant 0 : index
    %25 = vector.load %arg3[%c3, %c0_24, %c0_25] : memref<9x8x16xf32, #tpu.memory_space<vmem>>, vector<1x8x16xf32>
    %26 = vector.shape_cast %25 : vector<1x8x16xf32> to vector<8x16xf32>
    %c0_26 = arith.constant 0 : index
    %c10 = arith.constant 10 : index
    %27 = vector.load %arg8[%c0_26, %c10] : memref<16x222xf32, #tpu.memory_space<vmem>>, vector<16x200xf32>
    %cst_27 = arith.constant dense<0.000000e+00> : vector<8x200xf32>
    %28 = tpu.matmul %26, %27, %cst_27 {dimension_numbers = #tpu.dot_dimension_numbers<[1], [0], [0], [1], [0, 0, 1, 1], [], []>} : vector<8x16xf32>, vector<16x200xf32>, vector<8x200xf32> -> vector<8x200xf32>
    %29 = arith.addf %24, %28 : vector<8x200xf32>
    %c4 = arith.constant 4 : index
    %c0_28 = arith.constant 0 : index
    %c0_29 = arith.constant 0 : index
    %30 = vector.load %arg3[%c4, %c0_28, %c0_29] : memref<9x8x16xf32, #tpu.memory_space<vmem>>, vector<1x8x16xf32>
    %31 = vector.shape_cast %30 : vector<1x8x16xf32> to vector<8x16xf32>
    %c0_30 = arith.constant 0 : index
    %c11_31 = arith.constant 11 : index
    %32 = vector.load %arg8[%c0_30, %c11_31] : memref<16x222xf32, #tpu.memory_space<vmem>>, vector<16x200xf32>
    %cst_32 = arith.constant dense<0.000000e+00> : vector<8x200xf32>
    %33 = tpu.matmul %31, %32, %cst_32 {dimension_numbers = #tpu.dot_dimension_numbers<[1], [0], [0], [1], [0, 0, 1, 1], [], []>} : vector<8x16xf32>, vector<16x200xf32>, vector<8x200xf32> -> vector<8x200xf32>
    %34 = arith.addf %29, %33 : vector<8x200xf32>
    %c5 = arith.constant 5 : index
    %c0_33 = arith.constant 0 : index
    %c0_34 = arith.constant 0 : index
    %35 = vector.load %arg3[%c5, %c0_33, %c0_34] : memref<9x8x16xf32, #tpu.memory_space<vmem>>, vector<1x8x16xf32>
    %36 = vector.shape_cast %35 : vector<1x8x16xf32> to vector<8x16xf32>
    %c0_35 = arith.constant 0 : index
    %c12 = arith.constant 12 : index
    %37 = vector.load %arg8[%c0_35, %c12] : memref<16x222xf32, #tpu.memory_space<vmem>>, vector<16x200xf32>
    %cst_36 = arith.constant dense<0.000000e+00> : vector<8x200xf32>
    %38 = tpu.matmul %36, %37, %cst_36 {dimension_numbers = #tpu.dot_dimension_numbers<[1], [0], [0], [1], [0, 0, 1, 1], [], []>} : vector<8x16xf32>, vector<16x200xf32>, vector<8x200xf32> -> vector<8x200xf32>
    %39 = arith.addf %34, %38 : vector<8x200xf32>
    %c6 = arith.constant 6 : index
    %c0_37 = arith.constant 0 : index
    %c0_38 = arith.constant 0 : index
    %40 = vector.load %arg3[%c6, %c0_37, %c0_38] : memref<9x8x16xf32, #tpu.memory_space<vmem>>, vector<1x8x16xf32>
    %41 = vector.shape_cast %40 : vector<1x8x16xf32> to vector<8x16xf32>
    %c0_39 = arith.constant 0 : index
    %c20 = arith.constant 20 : index
    %42 = vector.load %arg8[%c0_39, %c20] : memref<16x222xf32, #tpu.memory_space<vmem>>, vector<16x200xf32>
    %cst_40 = arith.constant dense<0.000000e+00> : vector<8x200xf32>
    %43 = tpu.matmul %41, %42, %cst_40 {dimension_numbers = #tpu.dot_dimension_numbers<[1], [0], [0], [1], [0, 0, 1, 1], [], []>} : vector<8x16xf32>, vector<16x200xf32>, vector<8x200xf32> -> vector<8x200xf32>
    %44 = arith.addf %39, %43 : vector<8x200xf32>
    %c7 = arith.constant 7 : index
    %c0_41 = arith.constant 0 : index
    %c0_42 = arith.constant 0 : index
    %45 = vector.load %arg3[%c7, %c0_41, %c0_42] : memref<9x8x16xf32, #tpu.memory_space<vmem>>, vector<1x8x16xf32>
    %46 = vector.shape_cast %45 : vector<1x8x16xf32> to vector<8x16xf32>
    %c0_43 = arith.constant 0 : index
    %c21 = arith.constant 21 : index
    %47 = vector.load %arg8[%c0_43, %c21] : memref<16x222xf32, #tpu.memory_space<vmem>>, vector<16x200xf32>
    %cst_44 = arith.constant dense<0.000000e+00> : vector<8x200xf32>
    %48 = tpu.matmul %46, %47, %cst_44 {dimension_numbers = #tpu.dot_dimension_numbers<[1], [0], [0], [1], [0, 0, 1, 1], [], []>} : vector<8x16xf32>, vector<16x200xf32>, vector<8x200xf32> -> vector<8x200xf32>
    %49 = arith.addf %44, %48 : vector<8x200xf32>
    %c8_45 = arith.constant 8 : index
    %c0_46 = arith.constant 0 : index
    %c0_47 = arith.constant 0 : index
    %50 = vector.load %arg3[%c8_45, %c0_46, %c0_47] : memref<9x8x16xf32, #tpu.memory_space<vmem>>, vector<1x8x16xf32>
    %51 = vector.shape_cast %50 : vector<1x8x16xf32> to vector<8x16xf32>
    %c0_48 = arith.constant 0 : index
    %c22 = arith.constant 22 : index
    %52 = vector.load %arg8[%c0_48, %c22] : memref<16x222xf32, #tpu.memory_space<vmem>>, vector<16x200xf32>
    %cst_49 = arith.constant dense<0.000000e+00> : vector<8x200xf32>
    %53 = tpu.matmul %51, %52, %cst_49 {dimension_numbers = #tpu.dot_dimension_numbers<[1], [0], [0], [1], [0, 0, 1, 1], [], []>} : vector<8x16xf32>, vector<16x200xf32>, vector<8x200xf32> -> vector<8x200xf32>
    %54 = arith.addf %49, %53 : vector<8x200xf32>
    %c0_50 = arith.constant 0 : index
    %c0_51 = arith.constant 0 : index
    %55 = vector.load %arg4[%c0_50, %c0_51] : memref<8x1xf32, #tpu.memory_space<vmem>>, vector<8x1xf32>
    %56 = vector.broadcast %55 : vector<8x1xf32> to vector<8x200xf32>
    %57 = arith.addf %54, %56 : vector<8x200xf32>
    %58 = math.tanh %57 : vector<8x200xf32>
    %c0_52 = arith.constant 0 : index
    %c0_53 = arith.constant 0 : index
    %59 = vector.load %arg5[%c0_52, %c0_53] : memref<1x200xf32, #tpu.memory_space<vmem>>, vector<1x200xf32>
    %60 = vector.broadcast %59 : vector<1x200xf32> to vector<8x200xf32>
    %61 = arith.mulf %58, %60 : vector<8x200xf32>
    %c0_54 = arith.constant 0 : index
    %c0_55 = arith.constant 0 : index
    %c0_56 = arith.constant 0 : index
    %62 = vector.load %arg6[%c0_54, %c0_55, %c0_56] : memref<1x8x200xf32, #tpu.memory_space<vmem>>, vector<1x8x200xf32>
    %63 = vector.shape_cast %62 : vector<1x8x200xf32> to vector<8x200xf32>
    %64 = vector.shape_cast %61 : vector<8x200xf32> to vector<1x8x200xf32>
    tpu.vector_store %arg6[%c0_54, %c0_55, %c0_56], %64 {strides = array<i32>} : memref<1x8x200xf32, #tpu.memory_space<vmem>>, vector<1x8x200xf32>,
    %c0_i32_57 = arith.constant 0 : i32
    %65 = arith.cmpi eq, %arg0, %c0_i32_57 : i32
    %66 = arith.extui %65 : i1 to i32
    %c0_i32_58 = arith.constant 0 : i32
    %67 = arith.cmpi ne, %66, %c0_i32_58 : i32
    scf.if %67 {
      %c0_61 = arith.constant 0 : index
      %c0_62 = arith.constant 0 : index
      %71 = vector.load %arg7[%c0_61, %c0_62] : memref<8x200xf32, #tpu.memory_space<vmem>>, vector<8x200xf32>
      tpu.vector_store %arg7[%c0_61, %c0_62], %61 {strides = array<i32>} : memref<8x200xf32, #tpu.memory_space<vmem>>, vector<8x200xf32>,
    } else {
    }
    %c0_i32_59 = arith.constant 0 : i32
    %68 = arith.cmpi sgt, %arg0, %c0_i32_59 : i32
    %69 = arith.extui %68 : i1 to i32
    %c0_i32_60 = arith.constant 0 : i32
    %70 = arith.cmpi ne, %69, %c0_i32_60 : i32
    scf.if %70 {
      %c0_61 = arith.constant 0 : index
      %c0_62 = arith.constant 0 : index
      %71 = vector.load %arg7[%c0_61, %c0_62] : memref<8x200xf32, #tpu.memory_space<vmem>>, vector<8x200xf32>
      %72 = arith.maximumf %71, %61 : vector<8x200xf32>
      %c0_63 = arith.constant 0 : index
      %c0_64 = arith.constant 0 : index
      %73 = vector.load %arg7[%c0_63, %c0_64] : memref<8x200xf32, #tpu.memory_space<vmem>>, vector<8x200xf32>
      tpu.vector_store %arg7[%c0_63, %c0_64], %72 {strides = array<i32>} : memref<8x200xf32, #tpu.memory_space<vmem>>, vector<8x200xf32>,
    } else {
    }
    return
  }
  func.func @transform_0(%arg0: i32) -> (i32, i32, i32) {
    %c0_i32 = arith.constant 0 : i32
    %c0_i32_0 = arith.constant 0 : i32
    %c0_i32_1 = arith.constant 0 : i32
    return %arg0, %c0_i32, %c0_i32_0 : i32, i32, i32
  }
  func.func @transform_1(%arg0: i32) -> (i32, i32, i32) {
    %c0_i32 = arith.constant 0 : i32
    %c0_i32_0 = arith.constant 0 : i32
    %c0_i32_1 = arith.constant 0 : i32
    return %arg0, %c0_i32, %c0_i32_0 : i32, i32, i32
  }
  func.func @transform_2(%arg0: i32) -> (i32, i32, i32) {
    %c0_i32 = arith.constant 0 : i32
    %c0_i32_0 = arith.constant 0 : i32
    %c0_i32_1 = arith.constant 0 : i32
    %c0_i32_2 = arith.constant 0 : i32
    return %c0_i32, %c0_i32_0, %c0_i32_1 : i32, i32, i32
  }
  func.func @transform_3(%arg0: i32) -> (i32, i32) {
    %c0_i32 = arith.constant 0 : i32
    %c0_i32_0 = arith.constant 0 : i32
    %c0_i32_1 = arith.constant 0 : i32
    return %c0_i32, %c0_i32_0 : i32, i32
  }
  func.func @transform_4(%arg0: i32) -> (i32, i32) {
    %c0_i32 = arith.constant 0 : i32
    %c0_i32_0 = arith.constant 0 : i32
    %c0_i32_1 = arith.constant 0 : i32
    return %c0_i32, %c0_i32_0 : i32, i32
  }
  func.func @transform_5(%arg0: i32) -> (i32, i32, i32) {
    %c0_i32 = arith.constant 0 : i32
    %c0_i32_0 = arith.constant 0 : i32
    %c0_i32_1 = arith.constant 0 : i32
    return %arg0, %c0_i32, %c0_i32_0 : i32, i32, i32
  }
  func.func @transform_6(%arg0: i32) -> (i32, i32) {
    %c0_i32 = arith.constant 0 : i32
    %c0_i32_0 = arith.constant 0 : i32
    %c0_i32_1 = arith.constant 0 : i32
    return %c0_i32, %c0_i32_0 : i32, i32
  }
}

</mosaic_0001>

<llo_original>
// kernel: biconvgru_forward.4
$region0: #{biconvgru_forward.4}
  #allocation0 [shape = 'u32[]', space=smem, size = 0x4, offset = 0x4, fixed_abs, tag = 'smem constant byte address 0x4 - core index']
  #allocation1 [shape = 'u32[144,128]{1,0:T(1,128)}', space=vmem, size = 0x12000, scoped, tag = 'internal scratch']
  %s0 = inlined_call_operand.vmem [shape: f32[32,512], index: 0, kind: input, shape index: {}]
  %s1 = inlined_call_operand.vmem [shape: f32[8,32], index: 1, kind: input, shape index: {}]
  %s2 = inlined_call_operand.vmem [shape: f32[8,1], index: 2, kind: input, shape index: {}]
  %s3 = inlined_call_operand.vmem [shape: f32[8,512], index: 3, kind: output, shape index: {}]
  %s4 = sld [smem:[#allocation0]]
  $region22: #{biconvgru_forward.4} parent=0
    _
  %s6 = ssub.s32 1, %s4
  %s7 = scalar_select 0, %s6, %s4
  // Predicated region
  $region2: #{biconvgru_forward.4} parent=0 // pred_check
    _
  $region3: #{biconvgru_forward.4} parent=0 // pred_check_branch
    %9 = sbr.rel (0) target = $region5
  $region4: #{biconvgru_forward.4} parent=0 // pred_region
    _
  $region5: #{biconvgru_forward.4} parent=0 // pred_fallthru
    _
  // Predicated region
  $region6: #{biconvgru_forward.4} parent=0 // pred_check
    _
  $region7: #{biconvgru_forward.4} parent=0 // pred_check_branch
    %11 = sbr.rel (0) target = $region9
  $region8: #{biconvgru_forward.4} parent=0 // pred_region
    _
  $region9: #{biconvgru_forward.4} parent=0 // pred_fallthru
    _
  // Predicated region
  $region10: #{biconvgru_forward.4} parent=0 // pred_check
    _
  $region11: #{biconvgru_forward.4} parent=0 // pred_check_branch
    %13 = sbr.rel (0) target = $region13
  $region12: #{biconvgru_forward.4} parent=0 // pred_region
    _
  $region13: #{biconvgru_forward.4} parent=0 // pred_fallthru
    _
  %v14 = vld [vmem:[%s1] sm:$0xff]
  %v15 = vld [vmem:[%s0] sm:$0xff]
  %v16 = vld [vmem:[%s0 + $0x8] sm:$0xff]
  %v17 = vld [vmem:[%s0 + $0x10] sm:$0xff]
  %v18 = vld [vmem:[%s0 + $0x18] sm:$0xff]
  %v19 = vld [vmem:[%s0 + $0x20] sm:$0xff]
  %v20 = vld [vmem:[%s0 + $0x28] sm:$0xff]
  %v21 = vld [vmem:[%s0 + $0x30] sm:$0xff]
  %v22 = vld [vmem:[%s0 + $0x38] sm:$0xff]
  %v23 = vld [vmem:[%s0 + $0x40] sm:$0xff]
  %v24 = vld [vmem:[%s0 + $0x48] sm:$0xff]
  %v25 = vld [vmem:[%s0 + $0x50] sm:$0xff]
  %v26 = vld [vmem:[%s0 + $0x58] sm:$0xff]
  %v27 = vld [vmem:[%s0 + $0x60] sm:$0xff]
  %v28 = vld [vmem:[%s0 + $0x68] sm:$0xff]
  %v29 = vld [vmem:[%s0 + $0x70] sm:$0xff]
  %v30 = vld [vmem:[%s0 + $0x78] sm:$0xff]
  %v31 = vld [vmem:[%s2] sm:$0xff]
  %33 = vset.pattern.permute.xlu0 0
  %34 = vperm.xlu0 %33, %v31
  %v35 = vpop.permute.xlu0 %34
  %vm37 = vcmask 261120
  %v39 = vsel %vm37, %v14, 0
  %41 = vmatprep.subr.mxu0 0.0
  %42 = vmatpush1.msra.mxu0 0.0
  %43 = vmatprep.subr.mxu0 0.0
  %44 = vmatpush1.msra.mxu0 0.0
  %45 = vmatprep.subr.mxu0 0.0
  %46 = vmatpush1.msra.mxu0 0.0
  %47 = vmatprep.subr.mxu0 0.0
  %48 = vmatpush1.msra.mxu0 0.0
  %49 = vmatprep.subr.mxu0 0.0
  %50 = vmatpush1.msra.mxu0 0.0
  %51 = vmatprep.subr.mxu0 0.0
  %52 = vmatpush1.msra.mxu0 0.0
  %53 = vmatprep.subr.mxu0 0.0
  %54 = vmatpush1.msra.mxu0 0.0
  %55 = vmatprep.subr.mxu0 0.0
  %56 = vmatpush1.msra.mxu0 0.0
  %57 = vmatprep.subr.mxu0 0.0
  %58 = vmatpush1.msra.mxu0 0.0
  %59 = vmatprep.subr.mxu0 0.0
  %60 = vmatpush1.msra.mxu0 0.0
  %61 = vmatprep.subr.mxu0 0.0
  %62 = vmatpush1.msra.mxu0 0.0
  %63 = vmatprep.subr.mxu0 0.0
  %64 = vmatpush1.msra.mxu0 0.0
  %65 = vmatprep.subr.mxu0 %v28
  %66 = vmatpush1.msra.mxu0 %v27
  %67 = vmatprep.subr.mxu0 %v24
  %68 = vmatpush1.msra.mxu0 %v23
  %69 = vmatprep.subr.mxu0 %v20
  %70 = vmatpush1.msra.mxu0 %v19
  %71 = vmatprep.subr.mxu0 %v16
  %72 = vmatpush1.msra.mxu0 %v15
  %73 = vmatprep.subr.mxu0 0.0
  %74 = vmatpush2.msra.mxu0 0.0
  %75 = vmatprep.subr.mxu0 0.0
  %76 = vmatpush2.msra.mxu0 0.0
  %77 = vmatprep.subr.mxu0 0.0
  %78 = vmatpush2.msra.mxu0 0.0
  %79 = vmatprep.subr.mxu0 0.0
  %80 = vmatpush2.msra.mxu0 0.0
  %81 = vmatprep.subr.mxu0 0.0
  %82 = vmatpush2.msra.mxu0 0.0
  %83 = vmatprep.subr.mxu0 0.0
  %84 = vmatpush2.msra.mxu0 0.0
  %85 = vmatprep.subr.mxu0 0.0
  %86 = vmatpush2.msra.mxu0 0.0
  %87 = vmatprep.subr.mxu0 0.0
  %88 = vmatpush2.msra.mxu0 0.0
  %89 = vmatprep.subr.mxu0 0.0
  %90 = vmatpush2.msra.mxu0 0.0
  %91 = vmatprep.subr.mxu0 0.0
  %92 = vmatpush2.msra.mxu0 0.0
  %93 = vmatprep.subr.mxu0 0.0
  %94 = vmatpush2.msra.mxu0 0.0
  %95 = vmatprep.subr.mxu0 0.0
  %96 = vmatpush2.msra.mxu0 0.0
  %97 = vmatprep.subr.mxu0 0.0
  %98 = vmatpush2.msra.mxu0 0.0
  %99 = vmatprep.subr.mxu0 0.0
  %100 = vmatpush2.msra.mxu0 0.0
  %101 = vmatprep.subr.mxu0 0.0
  %102 = vmatpush2.msra.mxu0 0.0
  %103 = vmatprep.subr.mxu0 0.0
  %104 = vmatpush2.msra.mxu0 0.0
  %105 = vmatprep.mubr.f32.mxu0 0.0
  %106 = vmatmul.mubr.f32.gmra.mxu0 %v39
  %v107 = vpop.f32.mrf.mxu0
  %v108 = vadd.f32 %v35, %v107
  %v109 = vpop.f32.mrf.mxu0
  %v110 = vadd.f32 %v35, %v109
  %111 = vdwg.mxu0
  %112 = vmatprep.subr.mxu0 0.0
  %113 = vmatpush1.msra.mxu0 0.0
  %114 = vmatprep.subr.mxu0 0.0
  %115 = vmatpush1.msra.mxu0 0.0
  %116 = vmatprep.subr.mxu0 0.0
  %117 = vmatpush1.msra.mxu0 0.0
  %118 = vmatprep.subr.mxu0 0.0
  %119 = vmatpush1.msra.mxu0 0.0
  %120 = vmatprep.subr.mxu0 0.0
  %121 = vmatpush1.msra.mxu0 0.0
  %122 = vmatprep.subr.mxu0 0.0
  %123 = vmatpush1.msra.mxu0 0.0
  %124 = vmatprep.subr.mxu0 0.0
  %125 = vmatpush1.msra.mxu0 0.0
  %126 = vmatprep.subr.mxu0 0.0
  %127 = vmatpush1.msra.mxu0 0.0
  %128 = vmatprep.subr.mxu0 0.0
  %129 = vmatpush1.msra.mxu0 0.0
  %130 = vmatprep.subr.mxu0 0.0
  %131 = vmatpush1.msra.mxu0 0.0
  %132 = vmatprep.subr.mxu0 0.0
  %133 = vmatpush1.msra.mxu0 0.0
  %134 = vmatprep.subr.mxu0 0.0
  %135 = vmatpush1.msra.mxu0 0.0
  %136 = vmatprep.subr.mxu0 %v30
  %137 = vmatpush1.msra.mxu0 %v29
  %138 = vmatprep.subr.mxu0 %v26
  %139 = vmatpush1.msra.mxu0 %v25
  %140 = vmatprep.subr.mxu0 %v22
  %141 = vmatpush1.msra.mxu0 %v21
  %142 = vmatprep.subr.mxu0 %v18
  %143 = vmatpush1.msra.mxu0 %v17
  %144 = vmatprep.subr.mxu0 0.0
  %145 = vmatpush2.msra.mxu0 0.0
  %146 = vmatprep.subr.mxu0 0.0
  %147 = vmatpush2.msra.mxu0 0.0
  %148 = vmatprep.subr.mxu0 0.0
  %149 = vmatpush2.msra.mxu0 0.0
  %150 = vmatprep.subr.mxu0 0.0
  %151 = vmatpush2.msra.mxu0 0.0
  %152 = vmatprep.subr.mxu0 0.0
  %153 = vmatpush2.msra.mxu0 0.0
  %154 = vmatprep.subr.mxu0 0.0
  %155 = vmatpush2.msra.mxu0 0.0
  %156 = vmatprep.subr.mxu0 0.0
  %157 = vmatpush2.msra.mxu0 0.0
  %158 = vmatprep.subr.mxu0 0.0
  %159 = vmatpush2.msra.mxu0 0.0
  %160 = vmatprep.subr.mxu0 0.0
  %161 = vmatpush2.msra.mxu0 0.0
  %162 = vmatprep.subr.mxu0 0.0
  %163 = vmatpush2.msra.mxu0 0.0
  %164 = vmatprep.subr.mxu0 0.0
  %165 = vmatpush2.msra.mxu0 0.0
  %166 = vmatprep.subr.mxu0 0.0
  %167 = vmatpush2.msra.mxu0 0.0
  %168 = vmatprep.subr.mxu0 0.0
  %169 = vmatpush2.msra.mxu0 0.0
  %170 = vmatprep.subr.mxu0 0.0
  %171 = vmatpush2.msra.mxu0 0.0
  %172 = vmatprep.subr.mxu0 0.0
  %173 = vmatpush2.msra.mxu0 0.0
  %174 = vmatprep.subr.mxu0 0.0
  %175 = vmatpush2.msra.mxu0 0.0
  %176 = vmatprep.mubr.f32.mxu0 0.0
  %177 = vmatmul.mubr.f32.gmra.mxu0 %v39
  %v178 = vpop.f32.mrf.mxu0
  %v179 = vadd.f32 %v35, %v178
  %v180 = vpop.f32.mrf.mxu0
  %v181 = vadd.f32 %v35, %v180
  %182 = vdwg.mxu0
  %vm183 = vcmp.ge.f32.partialorder %v108, 0.0
  %vm184 = vcmp.ge.f32.partialorder %v110, 0.0
  %vm185 = vcmp.ge.f32.partialorder %v179, 0.0
  %vm186 = vcmp.ge.f32.partialorder %v181, 0.0
  %v187 = vmul.f32 %v108, 0.1
  %v188 = vmul.f32 %v110, 0.1
  %v189 = vmul.f32 %v179, 0.1
  %v190 = vmul.f32 %v181, 0.1
  %v191 = vsel %vm183, %v108, %v187
  %v192 = vsel %vm184, %v110, %v188
  %v193 = vsel %vm185, %v179, %v189
  %v194 = vsel %vm186, %v181, %v190
  %195 = vst [vmem:[%s3] sm:$0xff] %v191
  %196 = vst [vmem:[%s3 + $0x8] sm:$0xff] %v192
  %197 = vst [vmem:[%s3 + $0x10] sm:$0xff] %v193
  %198 = vst [vmem:[%s3 + $0x18] sm:$0xff] %v194
  // Predicated region
  $region14: #{biconvgru_forward.4} parent=0 // pred_check
    _
  $region15: #{biconvgru_forward.4} parent=0 // pred_check_branch
    %200 = sbr.rel (0) target = $region17
  $region16: #{biconvgru_forward.4} parent=0 // pred_region
    _
  $region17: #{biconvgru_forward.4} parent=0 // pred_fallthru
    _
  // Predicated region
  $region18: #{biconvgru_forward.4} parent=0 // pred_check
    _
  $region19: #{biconvgru_forward.4} parent=0 // pred_check_branch
    %202 = sbr.rel (0) target = $region21
  $region20: #{biconvgru_forward.4} parent=0 // pred_region
    _
  $region21: #{biconvgru_forward.4} parent=0 // pred_fallthru
    _

// kernel: tile.5
$region0: #{tile.5}
  %s0 = inlined_call_operand.vmem [shape: f32[10,10], index: 0, kind: input, shape index: {}]
  %s1 = inlined_call_operand.vmem [shape: f32[100], index: 1, kind: output, shape index: {}]
  $region1: #{tile.5} parent=0
    #allocation0 [shape = 'u8[4096]{0}', space=vmem, size = 0x1000, scoped, tag = 'scoped mem for output reshape']
    %v2 = vld [vmem:[%s0] sm:$0x1]
    %vm3 = vcmask 80896
    %4 = vst.msk [vmem:[#allocation0] sm:$0x1] %vm3, %v2
    %s5 = scalar_lea.vmem %s0, 9
    %v6 = vld [vmem:[%s5] sm:$0x1]
    %7 = vrot.lane.b32.xlu0 %v6, 90
    %v8 = vpop.permute.xlu0 %7
    %vm9 = vcmask 818896
    %10 = vst.msk [vmem:[#allocation0] sm:$0x1] %vm9, %v8
    %s11 = scalar_lea.vmem %s0, 8
    %v12 = vld [vmem:[%s11] sm:$0x1]
    %13 = vrot.lane.b32.xlu0 %v12, 80
    %v14 = vpop.permute.xlu0 %13
    %vm15 = vcmask 736896
    %16 = vst.msk [vmem:[#allocation0] sm:$0x1] %vm15, %v14
    %s17 = scalar_lea.vmem %s0, 7
    %v18 = vld [vmem:[%s17] sm:$0x1]
    %19 = vrot.lane.b32.xlu0 %v18, 70
    %v20 = vpop.permute.xlu0 %19
    %vm21 = vcmask 654896
    %22 = vst.msk [vmem:[#allocation0] sm:$0x1] %vm21, %v20
    %s23 = scalar_lea.vmem %s0, 6
    %v24 = vld [vmem:[%s23] sm:$0x1]
    %25 = vrot.lane.b32.xlu0 %v24, 60
    %v26 = vpop.permute.xlu0 %25
    %vm27 = vcmask 572896
    %28 = vst.msk [vmem:[#allocation0] sm:$0x1] %vm27, %v26
    %s29 = scalar_lea.vmem %s0, 5
    %v30 = vld [vmem:[%s29] sm:$0x1]
    %31 = vrot.lane.b32.xlu0 %v30, 50
    %v32 = vpop.permute.xlu0 %31
    %vm33 = vcmask 490896
    %34 = vst.msk [vmem:[#allocation0] sm:$0x1] %vm33, %v32
    %s35 = scalar_lea.vmem %s0, 4
    %v36 = vld [vmem:[%s35] sm:$0x1]
    %37 = vrot.lane.b32.xlu0 %v36, 40
    %v38 = vpop.permute.xlu0 %37
    %vm39 = vcmask 408896
    %40 = vst.msk [vmem:[#allocation0] sm:$0x1] %vm39, %v38
    %s41 = scalar_lea.vmem %s0, 3
    %v42 = vld [vmem:[%s41] sm:$0x1]
    %43 = vrot.lane.b32.xlu0 %v42, 30
    %v44 = vpop.permute.xlu0 %43
    %vm45 = vcmask 326896
    %46 = vst.msk [vmem:[#allocation0] sm:$0x1] %vm45, %v44
    %s47 = scalar_lea.vmem %s0, 2
    %v48 = vld [vmem:[%s47] sm:$0x1]
    %49 = vrot.lane.b32.xlu0 %v48, 20
    %v50 = vpop.permute.xlu0 %49
    %vm51 = vcmask 244896
    %52 = vst.msk [vmem:[#allocation0] sm:$0x1] %vm51, %v50
    %s53 = scalar_lea.vmem %s0, 1
    %v54 = vld [vmem:[%s53] sm:$0x1]
    %55 = vrot.lane.b32.xlu0 %v54, 10
    %v56 = vpop.permute.xlu0 %55
    %vm57 = vcmask 162896
    %58 = vst.msk [vmem:[#allocation0] sm:$0x1] %vm57, %v56
    %s60 = sshll.u32 1, 1
    %s61 = ssub.s32 %s60, 1
    %v63 = vld [vmem:[#allocation0] sm:%s61]
    %s64 = sshll.u32 1, 1
    %s65 = ssub.s32 %s64, 1
    %66 = vst [vmem:[%s1] sm:%s65] %v63

// kernel: tile.6
$region0: #{tile.6}
  #allocation0 [shape = 's32[1]{0}', space=sflag, size = 0x4, scoped, tag = 'scoped memory for tile.6']
  %s0 = inlined_call_operand.vmem [shape: f32[100], index: 0, kind: input, shape index: {}]
  %s1 = inlined_call_operand.vmem [shape: f32[2,100], index: 1, kind: output, shape index: {}]
  // Predicated region
  $region2: #{tile.6} parent=0 // pred_check
    _
  $region3: #{tile.6} parent=0 // pred_check_branch
    %3 = sbr.rel (0) target = $region5
  $region4: #{tile.6} parent=0 // pred_region
    _
  $region5: #{tile.6} parent=0 // pred_fallthru
    _
  %v4 = vld [vmem:[%s0] ss:$0 sm:$0xff]
  %5 = vst [vmem:[%s1] sm:$0x3] %v4

// kernel: tile.7
$region0: #{tile.7}
  %s0 = inlined_call_operand.vmem [shape: f32[2,100], index: 0, kind: input, shape index: {}]
  %s1 = inlined_call_operand.vmem [shape: f32[1,200], index: 1, kind: output, shape index: {}]
  $region1: #{tile.7} parent=0
    #allocation0 [shape = 'u8[8192]{0}', space=vmem, size = 0x2000, scoped, tag = 'scoped mem for output reshape']
    #allocation1 [shape = 'u8[4096]{0}', space=vmem, size = 0x1000, scoped, tag = 'scoped mem for input reshape']
    %s3 = sshll.u32 1, 2
    %s4 = ssub.s32 %s3, 1
    %v5 = vld [vmem:[%s0] sm:%s4]
    %6 = vst [vmem:[#allocation1] sm:%s4] %v5
    %v7 = vld [vmem:[#allocation1] sm:$0x1]
    %vm8 = vcmask 818176
    %9 = vst.msk [vmem:[#allocation0] sm:$0x1] %vm8, %v7
    %s10 = scalar_lea.vmem [#allocation1], 1
    %v11 = vld [vmem:[%s10] sm:$0x1]
    %s12 = scalar_lea.vmem [#allocation1], 1
    %v13 = vld [vmem:[%s12] sm:$0x1]
    %vm14 = vcmask 228352
    %v15 = vsel %vm14, %v13, %v11
    %16 = vrot.lane.b32.xlu0 %v15, 100
    %v17 = vpop.permute.xlu0 %16
    %vm18 = vcmask 588800
    %s19 = scalar_lea.vmem [#allocation0], 8
    %20 = vst.msk [vmem:[%s19] sm:$0x1] %vm18, %v17
    %vm21 = vcmask 1048352
    %22 = vst.msk [vmem:[#allocation0] sm:$0x1] %vm21, %v17
    %s24 = sshll.u32 1, 1
    %s25 = ssub.s32 %s24, 1
    %v27 = vld [vmem:[#allocation0] sm:%s25]
    %s28 = sshll.u32 1, 1
    %s29 = ssub.s32 %s28, 1
    %30 = vst [vmem:[%s1] sm:%s29] %v27
    %s31 = scalar_lea.vmem [#allocation0], 8
    %v32 = vld [vmem:[%s31] sm:%s25]
    %s33 = sshll.u32 1, 1
    %s34 = ssub.s32 %s33, 1
    %s35 = scalar_lea.vmem %s1, 1
    %36 = vst [vmem:[%s35] sm:%s34] %v32

// kernel: biconvgru_forward.5
$region0: #{biconvgru_forward.5}
  #allocation0 [shape = 'u32[]', space=smem, size = 0x4, offset = 0x4, fixed_abs, tag = 'smem constant byte address 0x4 - core index']
  #allocation1 [shape = 'u32[144,128]{1,0:T(1,128)}', space=vmem, size = 0x12000, scoped, tag = 'internal scratch']
  #allocation2 [shape = 'f32[8,200]{1,0:T(8,128)}', space=vmem, size = 0x2000, scoped, tag = 'scratch operand']
  #allocation3 [shape = 'f32[16,222]{1,0:T(8,128)}', space=vmem, size = 0x4000, scoped, tag = 'scratch operand']
  %s0 = inlined_call_operand.vmem [shape: f32[4,8,222], index: 0, kind: input, shape index: {}]
  %s1 = inlined_call_operand.vmem [shape: f32[9,16,16], index: 1, kind: input, shape index: {}]
  %s2 = inlined_call_operand.vmem [shape: f32[16,1], index: 2, kind: input, shape index: {}]
  %s3 = inlined_call_operand.vmem [shape: f32[9,8,16], index: 3, kind: input, shape index: {}]
  %s4 = inlined_call_operand.vmem [shape: f32[8,1], index: 4, kind: input, shape index: {}]
  %s5 = inlined_call_operand.vmem [shape: f32[1,200], index: 5, kind: input, shape index: {}]
  %s6 = inlined_call_operand.vmem [shape: f32[4,8,200], index: 6, kind: output, shape index: {}]
  %s7 = sld [smem:[#allocation0]]
  $region61: #{biconvgru_forward.5} parent=0
    _
  %s9 = ssub.s32 1, %s7
  %s10 = scalar_select 0, %s9, %s7
  loop: start=0, step=1, limit=6
  $region2: #{biconvgru_forward.5} parent=0 // loop_pre_header
    _
  $region3: #{biconvgru_forward.5} parent=0 // loop_header
    %s12 = sphi 0, %s16
    %p13 = scmp.ge.s32.totalorder %s12, 6
    %s22 = sphi 0, %s24
    %s25 = sphi 0, %s22
    %s26 = sphi 0, %s25
    %s42 = sphi 0, %s26
    %s46 = sphi 0, %s46
    %s48 = sphi 0, %s46
    %s49 = sphi 0, %s48
    %s63 = sphi 0, %s49
    %s67 = sphi 0, %s67
    %s69 = sphi 0, %s67
    %s70 = sphi 0, %s69
    %s84 = sphi 0, %s70
    %s88 = sphi 0, %s88
    %s90 = sphi 0, %s88
    %s91 = sphi 0, %s90
    %s105 = sphi 0, %s91
    %s109 = sphi 0, %s109
    %s111 = sphi 0, %s109
    %s112 = sphi 0, %s111
    %s126 = sphi 0, %s112
    %s130 = sphi 0, %s130
    %s132 = sphi 0, %s130
    %s133 = sphi 0, %s132
    %s147 = sphi 0, %s133
    %s153 = sphi 0, %s155
    %s156 = sphi 0, %s153
    %s157 = sphi 0, %s156
    %s173 = sphi 0, %s157
  $region4: #{biconvgru_forward.5} parent=0 // loop_header_branch
    %15 = sbr.rel (%p13) target = $region8
  $region5: #{biconvgru_forward.5} parent=0 // loop_body
    %s17 = ssub.s32 %s12, 1
    %s18 = ssub.s32 %s12, 2
    %s19 = sadd.s32 %s12, 1
    %s20 = ssub.s32 %s12, %s19
    %p21 = scmp.eq.s32.totalorder %s20, 0
    %s23 = sadd.s32 %s22, 1
    %s24 = scalar_select %p21, %s22, %s23
    %p27 = pneg %p21
    %p28 = scmp.eq.s32.totalorder %s12, 3
    %p29 = por %p27, %p28
    %p30 = scmp.ne.s32.totalorder %s22, %s25
    %p31 = scmp.eq.s32.totalorder %s12, 0
    %p32 = por %p30, %p31
    %p33 = scmp.ne.s32.totalorder %s22, %s25
    %p34 = scmp.eq.s32.totalorder %s17, 3
    %p35 = por %p33, %p34
    %p36 = scmp.ne.s32.totalorder %s25, %s26
    %p37 = scmp.eq.s32.totalorder %s17, 0
    %p38 = por %p36, %p37
    %p39 = scmp.ne.s32.totalorder %s25, %s26
    %p40 = scmp.eq.s32.totalorder %s18, 3
    %p41 = por %p39, %p40
    %p43 = scmp.ne.s32.totalorder %s26, %s42
    %p44 = scmp.eq.s32.totalorder %s18, 0
    %p45 = por %p43, %p44
    %s47 = sadd.s32 %s46, 1
    %p50 = scmp.eq.s32.totalorder %s12, 3
    %p51 = scmp.ne.s32.totalorder %s46, %s48
    %p52 = scmp.eq.s32.totalorder %s12, 0
    %p53 = por %p51, %p52
    %p54 = scmp.ne.s32.totalorder %s46, %s48
    %p55 = scmp.eq.s32.totalorder %s17, 3
    %p56 = por %p54, %p55
    %p57 = scmp.ne.s32.totalorder %s48, %s49
    %p58 = scmp.eq.s32.totalorder %s17, 0
    %p59 = por %p57, %p58
    %p60 = scmp.ne.s32.totalorder %s48, %s49
    %p61 = scmp.eq.s32.totalorder %s18, 3
    %p62 = por %p60, %p61
    %p64 = scmp.ne.s32.totalorder %s49, %s63
    %p65 = scmp.eq.s32.totalorder %s18, 0
    %p66 = por %p64, %p65
    %s68 = sadd.s32 %s67, 1
    %p71 = scmp.eq.s32.totalorder %s12, 3
    %p72 = scmp.ne.s32.totalorder %s67, %s69
    %p73 = scmp.eq.s32.totalorder %s12, 0
    %p74 = por %p72, %p73
    %p75 = scmp.ne.s32.totalorder %s67, %s69
    %p76 = scmp.eq.s32.totalorder %s17, 3
    %p77 = por %p75, %p76
    %p78 = scmp.ne.s32.totalorder %s69, %s70
    %p79 = scmp.eq.s32.totalorder %s17, 0
    %p80 = por %p78, %p79
    %p81 = scmp.ne.s32.totalorder %s69, %s70
    %p82 = scmp.eq.s32.totalorder %s18, 3
    %p83 = por %p81, %p82
    %p85 = scmp.ne.s32.totalorder %s70, %s84
    %p86 = scmp.eq.s32.totalorder %s18, 0
    %p87 = por %p85, %p86
    %s89 = sadd.s32 %s88, 1
    %p92 = scmp.eq.s32.totalorder %s12, 3
    %p93 = scmp.ne.s32.totalorder %s88, %s90
    %p94 = scmp.eq.s32.totalorder %s12, 0
    %p95 = por %p93, %p94
    %p96 = scmp.ne.s32.totalorder %s88, %s90
    %p97 = scmp.eq.s32.totalorder %s17, 3
    %p98 = por %p96, %p97
    %p99 = scmp.ne.s32.totalorder %s90, %s91
    %p100 = scmp.eq.s32.totalorder %s17, 0
    %p101 = por %p99, %p100
    %p102 = scmp.ne.s32.totalorder %s90, %s91
    %p103 = scmp.eq.s32.totalorder %s18, 3
    %p104 = por %p102, %p103
    %p106 = scmp.ne.s32.totalorder %s91, %s105
    %p107 = scmp.eq.s32.totalorder %s18, 0
    %p108 = por %p106, %p107
    %s110 = sadd.s32 %s109, 1
    %p113 = scmp.eq.s32.totalorder %s12, 3
    %p114 = scmp.ne.s32.totalorder %s109, %s111
    %p115 = scmp.eq.s32.totalorder %s12, 0
    %p116 = por %p114, %p115
    %p117 = scmp.ne.s32.totalorder %s109, %s111
    %p118 = scmp.eq.s32.totalorder %s17, 3
    %p119 = por %p117, %p118
    %p120 = scmp.ne.s32.totalorder %s111, %s112
    %p121 = scmp.eq.s32.totalorder %s17, 0
    %p122 = por %p120, %p121
    %p123 = scmp.ne.s32.totalorder %s111, %s112
    %p124 = scmp.eq.s32.totalorder %s18, 3
    %p125 = por %p123, %p124
    %p127 = scmp.ne.s32.totalorder %s112, %s126
    %p128 = scmp.eq.s32.totalorder %s18, 0
    %p129 = por %p127, %p128
    %s131 = sadd.s32 %s130, 1
    %p134 = scmp.eq.s32.totalorder %s12, 3
    %p135 = scmp.ne.s32.totalorder %s130, %s132
    %p136 = scmp.eq.s32.totalorder %s12, 0
    %p137 = por %p135, %p136
    %p138 = scmp.ne.s32.totalorder %s130, %s132
    %p139 = scmp.eq.s32.totalorder %s17, 3
    %p140 = por %p138, %p139
    %p141 = scmp.ne.s32.totalorder %s132, %s133
    %p142 = scmp.eq.s32.totalorder %s17, 0
    %p143 = por %p141, %p142
    %p144 = scmp.ne.s32.totalorder %s132, %s133
    %p145 = scmp.eq.s32.totalorder %s18, 3
    %p146 = por %p144, %p145
    %p148 = scmp.ne.s32.totalorder %s133, %s147
    %p149 = scmp.eq.s32.totalorder %s18, 0
    %p150 = por %p148, %p149
    %s151 = ssub.s32 %s12, %s19
    %p152 = scmp.eq.s32.totalorder %s151, 0
    %s154 = sadd.s32 %s153, 1
    %s155 = scalar_select %p152, %s153, %s154
    %p158 = pneg %p152
    %p159 = scmp.eq.s32.totalorder %s12, 3
    %p160 = por %p158, %p159
    %p161 = scmp.ne.s32.totalorder %s153, %s156
    %p162 = scmp.eq.s32.totalorder %s12, 0
    %p163 = por %p161, %p162
    %p164 = scmp.ne.s32.totalorder %s153, %s156
    %p165 = scmp.eq.s32.totalorder %s17, 3
    %p166 = por %p164, %p165
    %p167 = scmp.ne.s32.totalorder %s156, %s157
    %p168 = scmp.eq.s32.totalorder %s17, 0
    %p169 = por %p167, %p168
    %p170 = scmp.ne.s32.totalorder %s156, %s157
    %p171 = scmp.eq.s32.totalorder %s18, 3
    %p172 = por %p170, %p171
    %p174 = scmp.ne.s32.totalorder %s157, %s173
    %p175 = scmp.eq.s32.totalorder %s18, 0
    %p176 = por %p174, %p175
    %p177 = scmp.le.s32.totalorder 1, %s12
    %p178 = scmp.lt.s32.totalorder %s12, 5
    %p179 = pnand %p177, %p178
    %p180 = pneg %p179
    // Predicated region
    $region9: #{biconvgru_forward.5} parent=5 // pred_check
      _
    $region10: #{biconvgru_forward.5} parent=5 // pred_check_branch
      %182 = sbr.rel (%p179) target = $region12
    $region11: #{biconvgru_forward.5} parent=5 // pred_region
      %s183 = ssub.s32 %s12, 1
      // Predicated region
      $region13: #{biconvgru_forward.5} parent=11 // pred_check
        %p184 = pneg %p59
      $region14: #{biconvgru_forward.5} parent=11 // pred_check_branch
        %186 = sbr.rel (%p184) target = $region16
      $region15: #{biconvgru_forward.5} parent=11 // pred_region
        _
      $region16: #{biconvgru_forward.5} parent=11 // pred_fallthru
        _
      // Predicated region
      $region17: #{biconvgru_forward.5} parent=11 // pred_check
        %p187 = pneg %p80
      $region18: #{biconvgru_forward.5} parent=11 // pred_check_branch
        %189 = sbr.rel (%p187) target = $region20
      $region19: #{biconvgru_forward.5} parent=11 // pred_region
        _
      $region20: #{biconvgru_forward.5} parent=11 // pred_fallthru
        _
      // Predicated region
      $region21: #{biconvgru_forward.5} parent=11 // pred_check
        %p190 = pneg %p101
      $region22: #{biconvgru_forward.5} parent=11 // pred_check_branch
        %192 = sbr.rel (%p190) target = $region24
      $region23: #{biconvgru_forward.5} parent=11 // pred_region
        _
      $region24: #{biconvgru_forward.5} parent=11 // pred_fallthru
        _
      // Predicated region
      $region25: #{biconvgru_forward.5} parent=11 // pred_check
        %p193 = pneg %p122
      $region26: #{biconvgru_forward.5} parent=11 // pred_check_branch
        %195 = sbr.rel (%p193) target = $region28
      $region27: #{biconvgru_forward.5} parent=11 // pred_region
        _
      $region28: #{biconvgru_forward.5} parent=11 // pred_fallthru
        _
      // Predicated region
      $region29: #{biconvgru_forward.5} parent=11 // pred_check
        %p196 = pneg %p143
      $region30: #{biconvgru_forward.5} parent=11 // pred_check_branch
        %198 = sbr.rel (%p196) target = $region32
      $region31: #{biconvgru_forward.5} parent=11 // pred_region
        _
      $region32: #{biconvgru_forward.5} parent=11 // pred_fallthru
        _
    $region12: #{biconvgru_forward.5} parent=5 // pred_fallthru
      _
    %p199 = scmp.lt.s32.totalorder %s12, 4
    // Predicated region
    $region33: #{biconvgru_forward.5} parent=5 // pred_check
      %p200 = pneg %p199
    $region34: #{biconvgru_forward.5} parent=5 // pred_check_branch
      %202 = sbr.rel (%p200) target = $region36
    $region35: #{biconvgru_forward.5} parent=5 // pred_region
      // Predicated region
      $region37: #{biconvgru_forward.5} parent=35 // pred_check
        %p203 = pneg %p32
      $region38: #{biconvgru_forward.5} parent=35 // pred_check_branch
        %205 = sbr.rel (%p203) target = $region40
      $region39: #{biconvgru_forward.5} parent=35 // pred_region
        %p206 = scmp.lt.s32.totalorder %s12, 3
        %s207 = scalar_select %p206, %s12, 3
        %s208 = smul.addr %s207, 2
        %s209 = smul.addr %s208, 8
        %s210 = scalar_lea.vmem %s0, %s209
      $region40: #{biconvgru_forward.5} parent=35 // pred_fallthru
        _
    $region36: #{biconvgru_forward.5} parent=5 // pred_fallthru
      _
    %p211 = scmp.le.s32.totalorder 1, %s12
    %p212 = scmp.lt.s32.totalorder %s12, 5
    %p213 = pnand %p211, %p212
    %p214 = pneg %p213
    // Predicated region
    $region41: #{biconvgru_forward.5} parent=5 // pred_check
      _
    $region42: #{biconvgru_forward.5} parent=5 // pred_check_branch
      %216 = sbr.rel (%p213) target = $region44
    $region43: #{biconvgru_forward.5} parent=5 // pred_region
      %s217 = ssub.s32 %s12, 1
      %p218 = scmp.lt.s32.totalorder %s17, 3
      %s219 = scalar_select %p218, %s17, 3
      %s220 = smul.addr %s219, 2
      %s221 = smul.addr %s220, 8
      %s222 = scalar_lea.vmem %s0, %s221
      %p223 = pneg %p38
      %p224 = pneg %p35
      %p225 = pneg %p59
      %p226 = pneg %p56
      %p227 = pneg %p80
      %p228 = pneg %p77
      %p229 = pneg %p101
      %p230 = pneg %p98
      %p231 = pneg %p122
      %p232 = pneg %p119
      %p233 = pneg %p143
      %p234 = pneg %p140
      %p235 = pneg %p169
      %p236 = pneg %p166
      %p237 = scmp.lt.s32.totalorder %s17, 3
      %s238 = scalar_select %p237, %s17, 3
      %s239 = smul.addr %s238, 2
      %s240 = smul.addr %s239, 8
      %s241 = scalar_lea.vmem %s6, %s240
      %p242 = scmp.lt.s32.totalorder %s17, 3
      %s243 = scalar_select %p242, %s17, 3
      %s244 = smul.addr %s243, 2
      %s245 = smul.addr %s244, 8
      %s246 = scalar_lea.vmem %s0, %s245
      %p247 = scmp.lt.s32.totalorder %s17, 3
      %s248 = scalar_select %p247, %s17, 3
      %s249 = smul.addr %s248, 2
      %s250 = smul.addr %s249, 8
      %s251 = scalar_lea.vmem %s6, %s250
      %v252 = vld [vmem:[%s246] sm:$0xff]
      %v253 = vld [vmem:[%s246 + $0x8] sm:$0xff]
      %p254 = scmp.eq.s32.totalorder %s17, 0
      // Predicated region
      $region45: #{biconvgru_forward.5} parent=43 // pred_check
        %p255 = pneg %p254
      $region46: #{biconvgru_forward.5} parent=43 // pred_check_branch
        %257 = sbr.rel (%p255) target = $region48
      $region47: #{biconvgru_forward.5} parent=43 // pred_region
        %260 = vrot.lane.b32.xlu0 %v252, 117
        %v261 = vpop.permute.xlu0 %260
        %262 = vrot.lane.b32.xlu0 %v253, 117
        %v263 = vpop.permute.xlu0 %262
        %vm264 = vcmask 957440
        %v265 = vsel %vm264, %v261, %v263
        %268 = vst [vmem:[#allocation2] sm:$0xff] %v265
        %vm269 = vcmask 588800
        %270 = vst.msk [vmem:[#allocation2 + $0x8] sm:$0xff] %vm269, %v263
        %271 = vst [vmem:[#allocation3] sm:$0xff] 0.0
        %vm272 = vcmask 769024
        %273 = vst.msk [vmem:[#allocation3 + $0x8] sm:$0xff] %vm272, 0.0
        %274 = vst [vmem:[#allocation3 + $0x10] sm:$0xff] 0.0
        %275 = vst.msk [vmem:[#allocation3 + $0x18] sm:$0xff] %vm272, 0.0
      $region48: #{biconvgru_forward.5} parent=43 // pred_fallthru
        _
      %v276 = vld [vmem:[#allocation2] sm:$0xff]
      %v277 = vld [vmem:[#allocation2 + $0x8] sm:$0xff]
      %278 = vst [vmem:[#allocation3] sm:$0xff] %v252
      %vm279 = vcmask 769024
      %280 = vst.msk [vmem:[#allocation3 + $0x8] sm:$0xff] %vm279, %v253
      %283 = vrot.lane.b32.xlu0 %v276, 11
      %v284 = vpop.permute.xlu0 %283
      %285 = vrot.lane.b32.xlu0 %v277, 11
      %v286 = vpop.permute.xlu0 %285
      %vm287 = vcmask 89088
      %v288 = vsel %vm287, %v284, %v286
      %vm291 = vcmask 1047640
      %292 = vst.msk [vmem:[#allocation3 + $0x10] sm:$0xff] %vm291, %v284
      %vm293 = vcmask 678912
      %294 = vst.msk [vmem:[#allocation3 + $0x18] sm:$0xff] %vm293, %v288
      %v295 = vld [vmem:[%s1] sm:$0xff]
      %v296 = vld [vmem:[%s1 + $0x8] sm:$0xff]
      %v297 = vld [vmem:[#allocation3] sm:$0xff]
      %v298 = vld [vmem:[#allocation3 + $0x8] sm:$0xff]
      %v299 = vld [vmem:[#allocation3 + $0x10] sm:$0xff]
      %v300 = vld [vmem:[#allocation3 + $0x18] sm:$0xff]
      %s301 = scalar_lea.vmem %s1, 16
      %v302 = vld [vmem:[%s301] sm:$0xff]
      %v303 = vld [vmem:[%s301 + $0x8] sm:$0xff]
      %308 = vrot.lane.b32.xlu0 %v297, 127
      %v309 = vpop.permute.xlu0 %308
      %310 = vrot.lane.b32.xlu0 %v298, 127
      %v311 = vpop.permute.xlu0 %310
      %312 = vrot.lane.b32.xlu0 %v299, 127
      %v313 = vpop.permute.xlu0 %312
      %314 = vrot.lane.b32.xlu0 %v300, 127
      %v315 = vpop.permute.xlu0 %314
      %vm316 = vcmask 1039360
      %v317 = vsel %vm316, %v309, %v311
      %v318 = vsel %vm316, %v313, %v315
      %vm323 = vcmask 130048
      %v325 = vsel %vm323, %v302, 0
      %v328 = vsel %vm323, %v303, 0
      %330 = vmatprep.subr.mxu0 0.0
      %331 = vmatpush1.msra.mxu0 0.0
      %332 = vmatprep.subr.mxu0 0.0
      %333 = vmatpush1.msra.mxu0 0.0
      %334 = vmatprep.subr.mxu0 0.0
      %335 = vmatpush1.msra.mxu0 0.0
      %336 = vmatprep.subr.mxu0 0.0
      %337 = vmatpush1.msra.mxu0 0.0
      %338 = vmatprep.subr.mxu0 0.0
      %339 = vmatpush1.msra.mxu0 0.0
      %340 = vmatprep.subr.mxu0 0.0
      %341 = vmatpush1.msra.mxu0 0.0
      %342 = vmatprep.subr.mxu0 0.0
      %343 = vmatpush1.msra.mxu0 0.0
      %344 = vmatprep.subr.mxu0 0.0
      %345 = vmatpush1.msra.mxu0 0.0
      %346 = vmatprep.subr.mxu0 0.0
      %347 = vmatpush1.msra.mxu0 0.0
      %348 = vmatprep.subr.mxu0 0.0
      %349 = vmatpush1.msra.mxu0 0.0
      %350 = vmatprep.subr.mxu0 0.0
      %351 = vmatpush1.msra.mxu0 0.0
      %352 = vmatprep.subr.mxu0 0.0
      %353 = vmatpush1.msra.mxu0 0.0
      %354 = vmatprep.subr.mxu0 0.0
      %355 = vmatpush1.msra.mxu0 0.0
      %356 = vmatprep.subr.mxu0 0.0
      %357 = vmatpush1.msra.mxu0 0.0
      %358 = vmatprep.subr.mxu0 %v315
      %359 = vmatpush1.msra.mxu0 %v318
      %360 = vmatprep.subr.mxu0 %v311
      %361 = vmatpush1.msra.mxu0 %v317
      %362 = vmatprep.subr.mxu0 0.0
      %363 = vmatpush2.msra.mxu0 0.0
      %364 = vmatprep.subr.mxu0 0.0
      %365 = vmatpush2.msra.mxu0 0.0
      %366 = vmatprep.subr.mxu0 0.0
      %367 = vmatpush2.msra.mxu0 0.0
      %368 = vmatprep.subr.mxu0 0.0
      %369 = vmatpush2.msra.mxu0 0.0
      %370 = vmatprep.subr.mxu0 0.0
      %371 = vmatpush2.msra.mxu0 0.0
      %372 = vmatprep.subr.mxu0 0.0
      %373 = vmatpush2.msra.mxu0 0.0
      %374 = vmatprep.subr.mxu0 0.0
      %375 = vmatpush2.msra.mxu0 0.0
      %376 = vmatprep.subr.mxu0 0.0
      %377 = vmatpush2.msra.mxu0 0.0
      %378 = vmatprep.subr.mxu0 0.0
      %379 = vmatpush2.msra.mxu0 0.0
      %380 = vmatprep.subr.mxu0 0.0
      %381 = vmatpush2.msra.mxu0 0.0
      %382 = vmatprep.subr.mxu0 0.0
      %383 = vmatpush2.msra.mxu0 0.0
      %384 = vmatprep.subr.mxu0 0.0
      %385 = vmatpush2.msra.mxu0 0.0
      %386 = vmatprep.subr.mxu0 0.0
      %387 = vmatpush2.msra.mxu0 0.0
      %388 = vmatprep.subr.mxu0 0.0
      %389 = vmatpush2.msra.mxu0 0.0
      %390 = vmatprep.subr.mxu0 0.0
      %391 = vmatpush2.msra.mxu0 0.0
      %392 = vmatprep.subr.mxu0 0.0
      %393 = vmatpush2.msra.mxu0 0.0
      %394 = vmatprep.mubr.f32.mxu0 0.0
      %395 = vmatmul.mubr.f32.gmra.mxu0 %v325
      %v396 = vpop.f32.mrf.mxu0
      %v397 = vadd.f32 0.0, %v396
      %v398 = vpop.f32.mrf.mxu0
      %v399 = vadd.f32 0.0, %v398
      %400 = vmatprep.mubr.f32.mxu0 0.0
      %401 = vmatmul.mubr.f32.gmra.mxu0 %v328
      %v402 = vpop.f32.mrf.mxu0
      %v403 = vadd.f32 0.0, %v402
      %v404 = vpop.f32.mrf.mxu0
      %v405 = vadd.f32 0.0, %v404
      %406 = vdwg.mxu0
      %v408 = vsel %vm323, %v295, 0
      %v411 = vsel %vm323, %v296, 0
      %413 = vmatprep.subr.mxu0 0.0
      %414 = vmatpush1.msra.mxu0 0.0
      %415 = vmatprep.subr.mxu0 0.0
      %416 = vmatpush1.msra.mxu0 0.0
      %417 = vmatprep.subr.mxu0 0.0
      %418 = vmatpush1.msra.mxu0 0.0
      %419 = vmatprep.subr.mxu0 0.0
      %420 = vmatpush1.msra.mxu0 0.0
      %421 = vmatprep.subr.mxu0 0.0
      %422 = vmatpush1.msra.mxu0 0.0
      %423 = vmatprep.subr.mxu0 0.0
      %424 = vmatpush1.msra.mxu0 0.0
      %425 = vmatprep.subr.mxu0 0.0
      %426 = vmatpush1.msra.mxu0 0.0
      %427 = vmatprep.subr.mxu0 0.0
      %428 = vmatpush1.msra.mxu0 0.0
      %429 = vmatprep.subr.mxu0 0.0
      %430 = vmatpush1.msra.mxu0 0.0
      %431 = vmatprep.subr.mxu0 0.0
      %432 = vmatpush1.msra.mxu0 0.0
      %433 = vmatprep.subr.mxu0 0.0
      %434 = vmatpush1.msra.mxu0 0.0
      %435 = vmatprep.subr.mxu0 0.0
      %436 = vmatpush1.msra.mxu0 0.0
      %437 = vmatprep.subr.mxu0 0.0
      %438 = vmatpush1.msra.mxu0 0.0
      %439 = vmatprep.subr.mxu0 0.0
      %440 = vmatpush1.msra.mxu0 0.0
      %441 = vmatprep.subr.mxu0 %v300
      %442 = vmatpush1.msra.mxu0 %v299
      %443 = vmatprep.subr.mxu0 %v298
      %444 = vmatpush1.msra.mxu0 %v297
      %445 = vmatprep.subr.mxu0 0.0
      %446 = vmatpush2.msra.mxu0 0.0
      %447 = vmatprep.subr.mxu0 0.0
      %448 = vmatpush2.msra.mxu0 0.0
      %449 = vmatprep.subr.mxu0 0.0
      %450 = vmatpush2.msra.mxu0 0.0
      %451 = vmatprep.subr.mxu0 0.0
      %452 = vmatpush2.msra.mxu0 0.0
      %453 = vmatprep.subr.mxu0 0.0
      %454 = vmatpush2.msra.mxu0 0.0
      %455 = vmatprep.subr.mxu0 0.0
      %456 = vmatpush2.msra.mxu0 0.0
      %457 = vmatprep.subr.mxu0 0.0
      %458 = vmatpush2.msra.mxu0 0.0
      %459 = vmatprep.subr.mxu0 0.0
      %460 = vmatpush2.msra.mxu0 0.0
      %461 = vmatprep.subr.mxu0 0.0
      %462 = vmatpush2.msra.mxu0 0.0
      %463 = vmatprep.subr.mxu0 0.0
      %464 = vmatpush2.msra.mxu0 0.0
      %465 = vmatprep.subr.mxu0 0.0
      %466 = vmatpush2.msra.mxu0 0.0
      %467 = vmatprep.subr.mxu0 0.0
      %468 = vmatpush2.msra.mxu0 0.0
      %469 = vmatprep.subr.mxu0 0.0
      %470 = vmatpush2.msra.mxu0 0.0
      %471 = vmatprep.subr.mxu0 0.0
      %472 = vmatpush2.msra.mxu0 0.0
      %473 = vmatprep.subr.mxu0 0.0
      %474 = vmatpush2.msra.mxu0 0.0
      %475 = vmatprep.subr.mxu0 0.0
      %476 = vmatpush2.msra.mxu0 0.0
      %477 = vmatprep.mubr.f32.mxu0 0.0
      %478 = vmatmul.mubr.f32.gmra.mxu0 %v408
      %v479 = vpop.f32.mrf.mxu0
      %v480 = vadd.f32 %v397, %v479
      %v481 = vpop.f32.mrf.mxu0
      %v482 = vadd.f32 %v399, %v481
      %483 = vmatprep.mubr.f32.mxu0 0.0
      %484 = vmatmul.mubr.f32.gmra.mxu0 %v411
      %v485 = vpop.f32.mrf.mxu0
      %v486 = vadd.f32 %v403, %v485
      %v487 = vpop.f32.mrf.mxu0
      %v488 = vadd.f32 %v405, %v487
      %489 = vdwg.mxu0
      %s490 = scalar_lea.vmem %s1, 32
      %v491 = vld [vmem:[%s490] sm:$0xff]
      %v492 = vld [vmem:[%s490 + $0x8] sm:$0xff]
      %493 = vrot.lane.b32.xlu0 %v297, 126
      %v494 = vpop.permute.xlu0 %493
      %495 = vrot.lane.b32.xlu0 %v298, 126
      %v496 = vpop.permute.xlu0 %495
      %497 = vrot.lane.b32.xlu0 %v299, 126
      %v498 = vpop.permute.xlu0 %497
      %499 = vrot.lane.b32.xlu0 %v300, 126
      %v500 = vpop.permute.xlu0 %499
      %vm501 = vcmask 1031168
      %v502 = vsel %vm501, %v494, %v496
      %v503 = vsel %vm501, %v498, %v500
      %v509 = vsel %vm323, %v491, 0
      %v512 = vsel %vm323, %v492, 0
      %514 = vmatprep.subr.mxu0 0.0
      %515 = vmatpush1.msra.mxu0 0.0
      %516 = vmatprep.subr.mxu0 0.0
      %517 = vmatpush1.msra.mxu0 0.0
      %518 = vmatprep.subr.mxu0 0.0
      %519 = vmatpush1.msra.mxu0 0.0
      %520 = vmatprep.subr.mxu0 0.0
      %521 = vmatpush1.msra.mxu0 0.0
      %522 = vmatprep.subr.mxu0 0.0
      %523 = vmatpush1.msra.mxu0 0.0
      %524 = vmatprep.subr.mxu0 0.0
      %525 = vmatpush1.msra.mxu0 0.0
      %526 = vmatprep.subr.mxu0 0.0
      %527 = vmatpush1.msra.mxu0 0.0
      %528 = vmatprep.subr.mxu0 0.0
      %529 = vmatpush1.msra.mxu0 0.0
      %530 = vmatprep.subr.mxu0 0.0
      %531 = vmatpush1.msra.mxu0 0.0
      %532 = vmatprep.subr.mxu0 0.0
      %533 = vmatpush1.msra.mxu0 0.0
      %534 = vmatprep.subr.mxu0 0.0
      %535 = vmatpush1.msra.mxu0 0.0
      %536 = vmatprep.subr.mxu0 0.0
      %537 = vmatpush1.msra.mxu0 0.0
      %538 = vmatprep.subr.mxu0 0.0
      %539 = vmatpush1.msra.mxu0 0.0
      %540 = vmatprep.subr.mxu0 0.0
      %541 = vmatpush1.msra.mxu0 0.0
      %542 = vmatprep.subr.mxu0 %v500
      %543 = vmatpush1.msra.mxu0 %v503
      %544 = vmatprep.subr.mxu0 %v496
      %545 = vmatpush1.msra.mxu0 %v502
      %546 = vmatprep.subr.mxu0 0.0
      %547 = vmatpush2.msra.mxu0 0.0
      %548 = vmatprep.subr.mxu0 0.0
      %549 = vmatpush2.msra.mxu0 0.0
      %550 = vmatprep.subr.mxu0 0.0
      %551 = vmatpush2.msra.mxu0 0.0
      %552 = vmatprep.subr.mxu0 0.0
      %553 = vmatpush2.msra.mxu0 0.0
      %554 = vmatprep.subr.mxu0 0.0
      %555 = vmatpush2.msra.mxu0 0.0
      %556 = vmatprep.subr.mxu0 0.0
      %557 = vmatpush2.msra.mxu0 0.0
      %558 = vmatprep.subr.mxu0 0.0
      %559 = vmatpush2.msra.mxu0 0.0
      %560 = vmatprep.subr.mxu0 0.0
      %561 = vmatpush2.msra.mxu0 0.0
      %562 = vmatprep.subr.mxu0 0.0
      %563 = vmatpush2.msra.mxu0 0.0
      %564 = vmatprep.subr.mxu0 0.0
      %565 = vmatpush2.msra.mxu0 0.0
      %566 = vmatprep.subr.mxu0 0.0
      %567 = vmatpush2.msra.mxu0 0.0
      %568 = vmatprep.subr.mxu0 0.0
      %569 = vmatpush2.msra.mxu0 0.0
      %570 = vmatprep.subr.mxu0 0.0
      %571 = vmatpush2.msra.mxu0 0.0
      %572 = vmatprep.subr.mxu0 0.0
      %573 = vmatpush2.msra.mxu0 0.0
      %574 = vmatprep.subr.mxu0 0.0
      %575 = vmatpush2.msra.mxu0 0.0
      %576 = vmatprep.subr.mxu0 0.0
      %577 = vmatpush2.msra.mxu0 0.0
      %578 = vmatprep.mubr.f32.mxu0 0.0
      %579 = vmatmul.mubr.f32.gmra.mxu0 %v509
      %v580 = vpop.f32.mrf.mxu0
      %v581 = vadd.f32 0.0, %v580
      %v582 = vpop.f32.mrf.mxu0
      %v583 = vadd.f32 0.0, %v582
      %584 = vmatprep.mubr.f32.mxu0 0.0
      %585 = vmatmul.mubr.f32.gmra.mxu0 %v512
      %v586 = vpop.f32.mrf.mxu0
      %v587 = vadd.f32 0.0, %v586
      %v588 = vpop.f32.mrf.mxu0
      %v589 = vadd.f32 0.0, %v588
      %590 = vdwg.mxu0
      %v591 = vadd.f32 %v480, %v581
      %v592 = vadd.f32 %v482, %v583
      %v593 = vadd.f32 %v486, %v587
      %v594 = vadd.f32 %v488, %v589
      %s595 = scalar_lea.vmem %s1, 48
      %v596 = vld [vmem:[%s595] sm:$0xff]
      %v597 = vld [vmem:[%s595 + $0x8] sm:$0xff]
      %598 = vrot.lane.b32.xlu0 %v297, 118
      %v599 = vpop.permute.xlu0 %598
      %600 = vrot.lane.b32.xlu0 %v298, 118
      %v601 = vpop.permute.xlu0 %600
      %602 = vrot.lane.b32.xlu0 %v299, 118
      %v603 = vpop.permute.xlu0 %602
      %604 = vrot.lane.b32.xlu0 %v300, 118
      %v605 = vpop.permute.xlu0 %604
      %vm606 = vcmask 965632
      %v607 = vsel %vm606, %v599, %v601
      %v608 = vsel %vm606, %v603, %v605
      %v614 = vsel %vm323, %v596, 0
      %v617 = vsel %vm323, %v597, 0
      %619 = vmatprep.subr.mxu0 0.0
      %620 = vmatpush1.msra.mxu0 0.0
      %621 = vmatprep.subr.mxu0 0.0
      %622 = vmatpush1.msra.mxu0 0.0
      %623 = vmatprep.subr.mxu0 0.0
      %624 = vmatpush1.msra.mxu0 0.0
      %625 = vmatprep.subr.mxu0 0.0
      %626 = vmatpush1.msra.mxu0 0.0
      %627 = vmatprep.subr.mxu0 0.0
      %628 = vmatpush1.msra.mxu0 0.0
      %629 = vmatprep.subr.mxu0 0.0
      %630 = vmatpush1.msra.mxu0 0.0
      %631 = vmatprep.subr.mxu0 0.0
      %632 = vmatpush1.msra.mxu0 0.0
      %633 = vmatprep.subr.mxu0 0.0
      %634 = vmatpush1.msra.mxu0 0.0
      %635 = vmatprep.subr.mxu0 0.0
      %636 = vmatpush1.msra.mxu0 0.0
      %637 = vmatprep.subr.mxu0 0.0
      %638 = vmatpush1.msra.mxu0 0.0
      %639 = vmatprep.subr.mxu0 0.0
      %640 = vmatpush1.msra.mxu0 0.0
      %641 = vmatprep.subr.mxu0 0.0
      %642 = vmatpush1.msra.mxu0 0.0
      %643 = vmatprep.subr.mxu0 0.0
      %644 = vmatpush1.msra.mxu0 0.0
      %645 = vmatprep.subr.mxu0 0.0
      %646 = vmatpush1.msra.mxu0 0.0
      %647 = vmatprep.subr.mxu0 %v605
      %648 = vmatpush1.msra.mxu0 %v608
      %649 = vmatprep.subr.mxu0 %v601
      %650 = vmatpush1.msra.mxu0 %v607
      %651 = vmatprep.subr.mxu0 0.0
      %652 = vmatpush2.msra.mxu0 0.0
      %653 = vmatprep.subr.mxu0 0.0
      %654 = vmatpush2.msra.mxu0 0.0
      %655 = vmatprep.subr.mxu0 0.0
      %656 = vmatpush2.msra.mxu0 0.0
      %657 = vmatprep.subr.mxu0 0.0
      %658 = vmatpush2.msra.mxu0 0.0
      %659 = vmatprep.subr.mxu0 0.0
      %660 = vmatpush2.msra.mxu0 0.0
      %661 = vmatprep.subr.mxu0 0.0
      %662 = vmatpush2.msra.mxu0 0.0
      %663 = vmatprep.subr.mxu0 0.0
      %664 = vmatpush2.msra.mxu0 0.0
      %665 = vmatprep.subr.mxu0 0.0
      %666 = vmatpush2.msra.mxu0 0.0
      %667 = vmatprep.subr.mxu0 0.0
      %668 = vmatpush2.msra.mxu0 0.0
      %669 = vmatprep.subr.mxu0 0.0
      %670 = vmatpush2.msra.mxu0 0.0
      %671 = vmatprep.subr.mxu0 0.0
      %672 = vmatpush2.msra.mxu0 0.0
      %673 = vmatprep.subr.mxu0 0.0
      %674 = vmatpush2.msra.mxu0 0.0
      %675 = vmatprep.subr.mxu0 0.0
      %676 = vmatpush2.msra.mxu0 0.0
      %677 = vmatprep.subr.mxu0 0.0
      %678 = vmatpush2.msra.mxu0 0.0
      %679 = vmatprep.subr.mxu0 0.0
      %680 = vmatpush2.msra.mxu0 0.0
      %681 = vmatprep.subr.mxu0 0.0
      %682 = vmatpush2.msra.mxu0 0.0
      %683 = vmatprep.mubr.f32.mxu0 0.0
      %684 = vmatmul.mubr.f32.gmra.mxu0 %v614
      %v685 = vpop.f32.mrf.mxu0
      %v686 = vadd.f32 0.0, %v685
      %v687 = vpop.f32.mrf.mxu0
      %v688 = vadd.f32 0.0, %v687
      %689 = vmatprep.mubr.f32.mxu0 0.0
      %690 = vmatmul.mubr.f32.gmra.mxu0 %v617
      %v691 = vpop.f32.mrf.mxu0
      %v692 = vadd.f32 0.0, %v691
      %v693 = vpop.f32.mrf.mxu0
      %v694 = vadd.f32 0.0, %v693
      %695 = vdwg.mxu0
      %v696 = vadd.f32 %v591, %v686
      %v697 = vadd.f32 %v592, %v688
      %v698 = vadd.f32 %v593, %v692
      %v699 = vadd.f32 %v594, %v694
      %s700 = scalar_lea.vmem %s1, 64
      %v701 = vld [vmem:[%s700] sm:$0xff]
      %v702 = vld [vmem:[%s700 + $0x8] sm:$0xff]
      %703 = vrot.lane.b32.xlu0 %v297, 117
      %v704 = vpop.permute.xlu0 %703
      %705 = vrot.lane.b32.xlu0 %v298, 117
      %v706 = vpop.permute.xlu0 %705
      %707 = vrot.lane.b32.xlu0 %v299, 117
      %v708 = vpop.permute.xlu0 %707
      %709 = vrot.lane.b32.xlu0 %v300, 117
      %v710 = vpop.permute.xlu0 %709
      %vm711 = vcmask 957440
      %v712 = vsel %vm711, %v704, %v706
      %v713 = vsel %vm711, %v708, %v710
      %v719 = vsel %vm323, %v701, 0
      %v722 = vsel %vm323, %v702, 0
      %724 = vmatprep.subr.mxu0 0.0
      %725 = vmatpush1.msra.mxu0 0.0
      %726 = vmatprep.subr.mxu0 0.0
      %727 = vmatpush1.msra.mxu0 0.0
      %728 = vmatprep.subr.mxu0 0.0
      %729 = vmatpush1.msra.mxu0 0.0
      %730 = vmatprep.subr.mxu0 0.0
      %731 = vmatpush1.msra.mxu0 0.0
      %732 = vmatprep.subr.mxu0 0.0
      %733 = vmatpush1.msra.mxu0 0.0
      %734 = vmatprep.subr.mxu0 0.0
      %735 = vmatpush1.msra.mxu0 0.0
      %736 = vmatprep.subr.mxu0 0.0
      %737 = vmatpush1.msra.mxu0 0.0
      %738 = vmatprep.subr.mxu0 0.0
      %739 = vmatpush1.msra.mxu0 0.0
      %740 = vmatprep.subr.mxu0 0.0
      %741 = vmatpush1.msra.mxu0 0.0
      %742 = vmatprep.subr.mxu0 0.0
      %743 = vmatpush1.msra.mxu0 0.0
      %744 = vmatprep.subr.mxu0 0.0
      %745 = vmatpush1.msra.mxu0 0.0
      %746 = vmatprep.subr.mxu0 0.0
      %747 = vmatpush1.msra.mxu0 0.0
      %748 = vmatprep.subr.mxu0 0.0
      %749 = vmatpush1.msra.mxu0 0.0
      %750 = vmatprep.subr.mxu0 0.0
      %751 = vmatpush1.msra.mxu0 0.0
      %752 = vmatprep.subr.mxu0 %v710
      %753 = vmatpush1.msra.mxu0 %v713
      %754 = vmatprep.subr.mxu0 %v706
      %755 = vmatpush1.msra.mxu0 %v712
      %756 = vmatprep.subr.mxu0 0.0
      %757 = vmatpush2.msra.mxu0 0.0
      %758 = vmatprep.subr.mxu0 0.0
      %759 = vmatpush2.msra.mxu0 0.0
      %760 = vmatprep.subr.mxu0 0.0
      %761 = vmatpush2.msra.mxu0 0.0
      %762 = vmatprep.subr.mxu0 0.0
      %763 = vmatpush2.msra.mxu0 0.0
      %764 = vmatprep.subr.mxu0 0.0
      %765 = vmatpush2.msra.mxu0 0.0
      %766 = vmatprep.subr.mxu0 0.0
      %767 = vmatpush2.msra.mxu0 0.0
      %768 = vmatprep.subr.mxu0 0.0
      %769 = vmatpush2.msra.mxu0 0.0
      %770 = vmatprep.subr.mxu0 0.0
      %771 = vmatpush2.msra.mxu0 0.0
      %772 = vmatprep.subr.mxu0 0.0
      %773 = vmatpush2.msra.mxu0 0.0
      %774 = vmatprep.subr.mxu0 0.0
      %775 = vmatpush2.msra.mxu0 0.0
      %776 = vmatprep.subr.mxu0 0.0
      %777 = vmatpush2.msra.mxu0 0.0
      %778 = vmatprep.subr.mxu0 0.0
      %779 = vmatpush2.msra.mxu0 0.0
      %780 = vmatprep.subr.mxu0 0.0
      %781 = vmatpush2.msra.mxu0 0.0
      %782 = vmatprep.subr.mxu0 0.0
      %783 = vmatpush2.msra.mxu0 0.0
      %784 = vmatprep.subr.mxu0 0.0
      %785 = vmatpush2.msra.mxu0 0.0
      %786 = vmatprep.subr.mxu0 0.0
      %787 = vmatpush2.msra.mxu0 0.0
      %788 = vmatprep.mubr.f32.mxu0 0.0
      %789 = vmatmul.mubr.f32.gmra.mxu0 %v719
      %v790 = vpop.f32.mrf.mxu0
      %v791 = vadd.f32 0.0, %v790
      %v792 = vpop.f32.mrf.mxu0
      %v793 = vadd.f32 0.0, %v792
      %794 = vmatprep.mubr.f32.mxu0 0.0
      %795 = vmatmul.mubr.f32.gmra.mxu0 %v722
      %v796 = vpop.f32.mrf.mxu0
      %v797 = vadd.f32 0.0, %v796
      %v798 = vpop.f32.mrf.mxu0
      %v799 = vadd.f32 0.0, %v798
      %800 = vdwg.mxu0
      %v801 = vadd.f32 %v696, %v791
      %v802 = vadd.f32 %v697, %v793
      %v803 = vadd.f32 %v698, %v797
      %v804 = vadd.f32 %v699, %v799
      %s805 = scalar_lea.vmem %s1, 80
      %v806 = vld [vmem:[%s805] sm:$0xff]
      %v807 = vld [vmem:[%s805 + $0x8] sm:$0xff]
      %808 = vrot.lane.b32.xlu0 %v297, 116
      %v809 = vpop.permute.xlu0 %808
      %810 = vrot.lane.b32.xlu0 %v298, 116
      %v811 = vpop.permute.xlu0 %810
      %812 = vrot.lane.b32.xlu0 %v299, 116
      %v813 = vpop.permute.xlu0 %812
      %814 = vrot.lane.b32.xlu0 %v300, 116
      %v815 = vpop.permute.xlu0 %814
      %vm816 = vcmask 949248
      %v817 = vsel %vm816, %v809, %v811
      %v818 = vsel %vm816, %v813, %v815
      %v824 = vsel %vm323, %v806, 0
      %v827 = vsel %vm323, %v807, 0
      %829 = vmatprep.subr.mxu0 0.0
      %830 = vmatpush1.msra.mxu0 0.0
      %831 = vmatprep.subr.mxu0 0.0
      %832 = vmatpush1.msra.mxu0 0.0
      %833 = vmatprep.subr.mxu0 0.0
      %834 = vmatpush1.msra.mxu0 0.0
      %835 = vmatprep.subr.mxu0 0.0
      %836 = vmatpush1.msra.mxu0 0.0
      %837 = vmatprep.subr.mxu0 0.0
      %838 = vmatpush1.msra.mxu0 0.0
      %839 = vmatprep.subr.mxu0 0.0
      %840 = vmatpush1.msra.mxu0 0.0
      %841 = vmatprep.subr.mxu0 0.0
      %842 = vmatpush1.msra.mxu0 0.0
      %843 = vmatprep.subr.mxu0 0.0
      %844 = vmatpush1.msra.mxu0 0.0
      %845 = vmatprep.subr.mxu0 0.0
      %846 = vmatpush1.msra.mxu0 0.0
      %847 = vmatprep.subr.mxu0 0.0
      %848 = vmatpush1.msra.mxu0 0.0
      %849 = vmatprep.subr.mxu0 0.0
      %850 = vmatpush1.msra.mxu0 0.0
      %851 = vmatprep.subr.mxu0 0.0
      %852 = vmatpush1.msra.mxu0 0.0
      %853 = vmatprep.subr.mxu0 0.0
      %854 = vmatpush1.msra.mxu0 0.0
      %855 = vmatprep.subr.mxu0 0.0
      %856 = vmatpush1.msra.mxu0 0.0
      %857 = vmatprep.subr.mxu0 %v815
      %858 = vmatpush1.msra.mxu0 %v818
      %859 = vmatprep.subr.mxu0 %v811
      %860 = vmatpush1.msra.mxu0 %v817
      %861 = vmatprep.subr.mxu0 0.0
      %862 = vmatpush2.msra.mxu0 0.0
      %863 = vmatprep.subr.mxu0 0.0
      %864 = vmatpush2.msra.mxu0 0.0
      %865 = vmatprep.subr.mxu0 0.0
      %866 = vmatpush2.msra.mxu0 0.0
      %867 = vmatprep.subr.mxu0 0.0
      %868 = vmatpush2.msra.mxu0 0.0
      %869 = vmatprep.subr.mxu0 0.0
      %870 = vmatpush2.msra.mxu0 0.0
      %871 = vmatprep.subr.mxu0 0.0
      %872 = vmatpush2.msra.mxu0 0.0
      %873 = vmatprep.subr.mxu0 0.0
      %874 = vmatpush2.msra.mxu0 0.0
      %875 = vmatprep.subr.mxu0 0.0
      %876 = vmatpush2.msra.mxu0 0.0
      %877 = vmatprep.subr.mxu0 0.0
      %878 = vmatpush2.msra.mxu0 0.0
      %879 = vmatprep.subr.mxu0 0.0
      %880 = vmatpush2.msra.mxu0 0.0
      %881 = vmatprep.subr.mxu0 0.0
      %882 = vmatpush2.msra.mxu0 0.0
      %883 = vmatprep.subr.mxu0 0.0
      %884 = vmatpush2.msra.mxu0 0.0
      %885 = vmatprep.subr.mxu0 0.0
      %886 = vmatpush2.msra.mxu0 0.0
      %887 = vmatprep.subr.mxu0 0.0
      %888 = vmatpush2.msra.mxu0 0.0
      %889 = vmatprep.subr.mxu0 0.0
      %890 = vmatpush2.msra.mxu0 0.0
      %891 = vmatprep.subr.mxu0 0.0
      %892 = vmatpush2.msra.mxu0 0.0
      %893 = vmatprep.mubr.f32.mxu0 0.0
      %894 = vmatmul.mubr.f32.gmra.mxu0 %v824
      %v895 = vpop.f32.mrf.mxu0
      %v896 = vadd.f32 0.0, %v895
      %v897 = vpop.f32.mrf.mxu0
      %v898 = vadd.f32 0.0, %v897
      %899 = vmatprep.mubr.f32.mxu0 0.0
      %900 = vmatmul.mubr.f32.gmra.mxu0 %v827
      %v901 = vpop.f32.mrf.mxu0
      %v902 = vadd.f32 0.0, %v901
      %v903 = vpop.f32.mrf.mxu0
      %v904 = vadd.f32 0.0, %v903
      %905 = vdwg.mxu0
      %v906 = vadd.f32 %v801, %v896
      %v907 = vadd.f32 %v802, %v898
      %v908 = vadd.f32 %v803, %v902
      %v909 = vadd.f32 %v804, %v904
      %s910 = scalar_lea.vmem %s1, 96
      %v911 = vld [vmem:[%s910] sm:$0xff]
      %v912 = vld [vmem:[%s910 + $0x8] sm:$0xff]
      %913 = vrot.lane.b32.xlu0 %v297, 108
      %v914 = vpop.permute.xlu0 %913
      %915 = vrot.lane.b32.xlu0 %v298, 108
      %v916 = vpop.permute.xlu0 %915
      %917 = vrot.lane.b32.xlu0 %v299, 108
      %v918 = vpop.permute.xlu0 %917
      %919 = vrot.lane.b32.xlu0 %v300, 108
      %v920 = vpop.permute.xlu0 %919
      %vm921 = vcmask 883712
      %v922 = vsel %vm921, %v914, %v916
      %v923 = vsel %vm921, %v918, %v920
      %v929 = vsel %vm323, %v911, 0
      %v932 = vsel %vm323, %v912, 0
      %934 = vmatprep.subr.mxu0 0.0
      %935 = vmatpush1.msra.mxu0 0.0
      %936 = vmatprep.subr.mxu0 0.0
      %937 = vmatpush1.msra.mxu0 0.0
      %938 = vmatprep.subr.mxu0 0.0
      %939 = vmatpush1.msra.mxu0 0.0
      %940 = vmatprep.subr.mxu0 0.0
      %941 = vmatpush1.msra.mxu0 0.0
      %942 = vmatprep.subr.mxu0 0.0
      %943 = vmatpush1.msra.mxu0 0.0
      %944 = vmatprep.subr.mxu0 0.0
      %945 = vmatpush1.msra.mxu0 0.0
      %946 = vmatprep.subr.mxu0 0.0
      %947 = vmatpush1.msra.mxu0 0.0
      %948 = vmatprep.subr.mxu0 0.0
      %949 = vmatpush1.msra.mxu0 0.0
      %950 = vmatprep.subr.mxu0 0.0
      %951 = vmatpush1.msra.mxu0 0.0
      %952 = vmatprep.subr.mxu0 0.0
      %953 = vmatpush1.msra.mxu0 0.0
      %954 = vmatprep.subr.mxu0 0.0
      %955 = vmatpush1.msra.mxu0 0.0
      %956 = vmatprep.subr.mxu0 0.0
      %957 = vmatpush1.msra.mxu0 0.0
      %958 = vmatprep.subr.mxu0 0.0
      %959 = vmatpush1.msra.mxu0 0.0
      %960 = vmatprep.subr.mxu0 0.0
      %961 = vmatpush1.msra.mxu0 0.0
      %962 = vmatprep.subr.mxu0 %v920
      %963 = vmatpush1.msra.mxu0 %v923
      %964 = vmatprep.subr.mxu0 %v916
      %965 = vmatpush1.msra.mxu0 %v922
      %966 = vmatprep.subr.mxu0 0.0
      %967 = vmatpush2.msra.mxu0 0.0
      %968 = vmatprep.subr.mxu0 0.0
      %969 = vmatpush2.msra.mxu0 0.0
      %970 = vmatprep.subr.mxu0 0.0
      %971 = vmatpush2.msra.mxu0 0.0
      %972 = vmatprep.subr.mxu0 0.0
      %973 = vmatpush2.msra.mxu0 0.0
      %974 = vmatprep.subr.mxu0 0.0
      %975 = vmatpush2.msra.mxu0 0.0
      %976 = vmatprep.subr.mxu0 0.0
      %977 = vmatpush2.msra.mxu0 0.0
      %978 = vmatprep.subr.mxu0 0.0
      %979 = vmatpush2.msra.mxu0 0.0
      %980 = vmatprep.subr.mxu0 0.0
      %981 = vmatpush2.msra.mxu0 0.0
      %982 = vmatprep.subr.mxu0 0.0
      %983 = vmatpush2.msra.mxu0 0.0
      %984 = vmatprep.subr.mxu0 0.0
      %985 = vmatpush2.msra.mxu0 0.0
      %986 = vmatprep.subr.mxu0 0.0
      %987 = vmatpush2.msra.mxu0 0.0
      %988 = vmatprep.subr.mxu0 0.0
      %989 = vmatpush2.msra.mxu0 0.0
      %990 = vmatprep.subr.mxu0 0.0
      %991 = vmatpush2.msra.mxu0 0.0
      %992 = vmatprep.subr.mxu0 0.0
      %993 = vmatpush2.msra.mxu0 0.0
      %994 = vmatprep.subr.mxu0 0.0
      %995 = vmatpush2.msra.mxu0 0.0
      %996 = vmatprep.subr.mxu0 0.0
      %997 = vmatpush2.msra.mxu0 0.0
      %998 = vmatprep.mubr.f32.mxu0 0.0
      %999 = vmatmul.mubr.f32.gmra.mxu0 %v929
      %v1000 = vpop.f32.mrf.mxu0
      %v1001 = vadd.f32 0.0, %v1000
      %v1002 = vpop.f32.mrf.mxu0
      %v1003 = vadd.f32 0.0, %v1002
      %1004 = vmatprep.mubr.f32.mxu0 0.0
      %1005 = vmatmul.mubr.f32.gmra.mxu0 %v932
      %v1006 = vpop.f32.mrf.mxu0
      %v1007 = vadd.f32 0.0, %v1006
      %v1008 = vpop.f32.mrf.mxu0
      %v1009 = vadd.f32 0.0, %v1008
      %1010 = vdwg.mxu0
      %v1011 = vadd.f32 %v906, %v1001
      %v1012 = vadd.f32 %v907, %v1003
      %v1013 = vadd.f32 %v908, %v1007
      %v1014 = vadd.f32 %v909, %v1009
      %s1015 = scalar_lea.vmem %s1, 112
      %v1016 = vld [vmem:[%s1015] sm:$0xff]
      %v1017 = vld [vmem:[%s1015 + $0x8] sm:$0xff]
      %1018 = vrot.lane.b32.xlu0 %v297, 107
      %v1019 = vpop.permute.xlu0 %1018
      %1020 = vrot.lane.b32.xlu0 %v298, 107
      %v1021 = vpop.permute.xlu0 %1020
      %1022 = vrot.lane.b32.xlu0 %v299, 107
      %v1023 = vpop.permute.xlu0 %1022
      %1024 = vrot.lane.b32.xlu0 %v300, 107
      %v1025 = vpop.permute.xlu0 %1024
      %vm1026 = vcmask 875520
      %v1027 = vsel %vm1026, %v1019, %v1021
      %v1028 = vsel %vm1026, %v1023, %v1025
      %v1034 = vsel %vm323, %v1016, 0
      %v1037 = vsel %vm323, %v1017, 0
      %1039 = vmatprep.subr.mxu0 0.0
      %1040 = vmatpush1.msra.mxu0 0.0
      %1041 = vmatprep.subr.mxu0 0.0
      %1042 = vmatpush1.msra.mxu0 0.0
      %1043 = vmatprep.subr.mxu0 0.0
      %1044 = vmatpush1.msra.mxu0 0.0
      %1045 = vmatprep.subr.mxu0 0.0
      %1046 = vmatpush1.msra.mxu0 0.0
      %1047 = vmatprep.subr.mxu0 0.0
      %1048 = vmatpush1.msra.mxu0 0.0
      %1049 = vmatprep.subr.mxu0 0.0
      %1050 = vmatpush1.msra.mxu0 0.0
      %1051 = vmatprep.subr.mxu0 0.0
      %1052 = vmatpush1.msra.mxu0 0.0
      %1053 = vmatprep.subr.mxu0 0.0
      %1054 = vmatpush1.msra.mxu0 0.0
      %1055 = vmatprep.subr.mxu0 0.0
      %1056 = vmatpush1.msra.mxu0 0.0
      %1057 = vmatprep.subr.mxu0 0.0
      %1058 = vmatpush1.msra.mxu0 0.0
      %1059 = vmatprep.subr.mxu0 0.0
      %1060 = vmatpush1.msra.mxu0 0.0
      %1061 = vmatprep.subr.mxu0 0.0
      %1062 = vmatpush1.msra.mxu0 0.0
      %1063 = vmatprep.subr.mxu0 0.0
      %1064 = vmatpush1.msra.mxu0 0.0
      %1065 = vmatprep.subr.mxu0 0.0
      %1066 = vmatpush1.msra.mxu0 0.0
      %1067 = vmatprep.subr.mxu0 %v1025
      %1068 = vmatpush1.msra.mxu0 %v1028
      %1069 = vmatprep.subr.mxu0 %v1021
      %1070 = vmatpush1.msra.mxu0 %v1027
      %1071 = vmatprep.subr.mxu0 0.0
      %1072 = vmatpush2.msra.mxu0 0.0
      %1073 = vmatprep.subr.mxu0 0.0
      %1074 = vmatpush2.msra.mxu0 0.0
      %1075 = vmatprep.subr.mxu0 0.0
      %1076 = vmatpush2.msra.mxu0 0.0
      %1077 = vmatprep.subr.mxu0 0.0
      %1078 = vmatpush2.msra.mxu0 0.0
      %1079 = vmatprep.subr.mxu0 0.0
      %1080 = vmatpush2.msra.mxu0 0.0
      %1081 = vmatprep.subr.mxu0 0.0
      %1082 = vmatpush2.msra.mxu0 0.0
      %1083 = vmatprep.subr.mxu0 0.0
      %1084 = vmatpush2.msra.mxu0 0.0
      %1085 = vmatprep.subr.mxu0 0.0
      %1086 = vmatpush2.msra.mxu0 0.0
      %1087 = vmatprep.subr.mxu0 0.0
      %1088 = vmatpush2.msra.mxu0 0.0
      %1089 = vmatprep.subr.mxu0 0.0
      %1090 = vmatpush2.msra.mxu0 0.0
      %1091 = vmatprep.subr.mxu0 0.0
      %1092 = vmatpush2.msra.mxu0 0.0
      %1093 = vmatprep.subr.mxu0 0.0
      %1094 = vmatpush2.msra.mxu0 0.0
      %1095 = vmatprep.subr.mxu0 0.0
      %1096 = vmatpush2.msra.mxu0 0.0
      %1097 = vmatprep.subr.mxu0 0.0
      %1098 = vmatpush2.msra.mxu0 0.0
      %1099 = vmatprep.subr.mxu0 0.0
      %1100 = vmatpush2.msra.mxu0 0.0
      %1101 = vmatprep.subr.mxu0 0.0
      %1102 = vmatpush2.msra.mxu0 0.0
      %1103 = vmatprep.mubr.f32.mxu0 0.0
      %1104 = vmatmul.mubr.f32.gmra.mxu0 %v1034
      %v1105 = vpop.f32.mrf.mxu0
      %v1106 = vadd.f32 0.0, %v1105
      %v1107 = vpop.f32.mrf.mxu0
      %v1108 = vadd.f32 0.0, %v1107
      %1109 = vmatprep.mubr.f32.mxu0 0.0
      %1110 = vmatmul.mubr.f32.gmra.mxu0 %v1037
      %v1111 = vpop.f32.mrf.mxu0
      %v1112 = vadd.f32 0.0, %v1111
      %v1113 = vpop.f32.mrf.mxu0
      %v1114 = vadd.f32 0.0, %v1113
      %1115 = vdwg.mxu0
      %v1116 = vadd.f32 %v1011, %v1106
      %v1117 = vadd.f32 %v1012, %v1108
      %v1118 = vadd.f32 %v1013, %v1112
      %v1119 = vadd.f32 %v1014, %v1114
      %s1120 = scalar_lea.vmem %s1, 128
      %v1121 = vld [vmem:[%s1120] sm:$0xff]
      %v1122 = vld [vmem:[%s1120 + $0x8] sm:$0xff]
      %1123 = vrot.lane.b32.xlu0 %v297, 106
      %v1124 = vpop.permute.xlu0 %1123
      %1125 = vrot.lane.b32.xlu0 %v298, 106
      %v1126 = vpop.permute.xlu0 %1125
      %1127 = vrot.lane.b32.xlu0 %v299, 106
      %v1128 = vpop.permute.xlu0 %1127
      %1129 = vrot.lane.b32.xlu0 %v300, 106
      %v1130 = vpop.permute.xlu0 %1129
      %vm1131 = vcmask 867328
      %v1132 = vsel %vm1131, %v1124, %v1126
      %v1133 = vsel %vm1131, %v1128, %v1130
      %v1139 = vsel %vm323, %v1121, 0
      %v1142 = vsel %vm323, %v1122, 0
      %1144 = vmatprep.subr.mxu0 0.0
      %1145 = vmatpush1.msra.mxu0 0.0
      %1146 = vmatprep.subr.mxu0 0.0
      %1147 = vmatpush1.msra.mxu0 0.0
      %1148 = vmatprep.subr.mxu0 0.0
      %1149 = vmatpush1.msra.mxu0 0.0
      %1150 = vmatprep.subr.mxu0 0.0
      %1151 = vmatpush1.msra.mxu0 0.0
      %1152 = vmatprep.subr.mxu0 0.0
      %1153 = vmatpush1.msra.mxu0 0.0
      %1154 = vmatprep.subr.mxu0 0.0
      %1155 = vmatpush1.msra.mxu0 0.0
      %1156 = vmatprep.subr.mxu0 0.0
      %1157 = vmatpush1.msra.mxu0 0.0
      %1158 = vmatprep.subr.mxu0 0.0
      %1159 = vmatpush1.msra.mxu0 0.0
      %1160 = vmatprep.subr.mxu0 0.0
      %1161 = vmatpush1.msra.mxu0 0.0
      %1162 = vmatprep.subr.mxu0 0.0
      %1163 = vmatpush1.msra.mxu0 0.0
      %1164 = vmatprep.subr.mxu0 0.0
      %1165 = vmatpush1.msra.mxu0 0.0
      %1166 = vmatprep.subr.mxu0 0.0
      %1167 = vmatpush1.msra.mxu0 0.0
      %1168 = vmatprep.subr.mxu0 0.0
      %1169 = vmatpush1.msra.mxu0 0.0
      %1170 = vmatprep.subr.mxu0 0.0
      %1171 = vmatpush1.msra.mxu0 0.0
      %1172 = vmatprep.subr.mxu0 %v1130
      %1173 = vmatpush1.msra.mxu0 %v1133
      %1174 = vmatprep.subr.mxu0 %v1126
      %1175 = vmatpush1.msra.mxu0 %v1132
      %1176 = vmatprep.subr.mxu0 0.0
      %1177 = vmatpush2.msra.mxu0 0.0
      %1178 = vmatprep.subr.mxu0 0.0
      %1179 = vmatpush2.msra.mxu0 0.0
      %1180 = vmatprep.subr.mxu0 0.0
      %1181 = vmatpush2.msra.mxu0 0.0
      %1182 = vmatprep.subr.mxu0 0.0
      %1183 = vmatpush2.msra.mxu0 0.0
      %1184 = vmatprep.subr.mxu0 0.0
      %1185 = vmatpush2.msra.mxu0 0.0
      %1186 = vmatprep.subr.mxu0 0.0
      %1187 = vmatpush2.msra.mxu0 0.0
      %1188 = vmatprep.subr.mxu0 0.0
      %1189 = vmatpush2.msra.mxu0 0.0
      %1190 = vmatprep.subr.mxu0 0.0
      %1191 = vmatpush2.msra.mxu0 0.0
      %1192 = vmatprep.subr.mxu0 0.0
      %1193 = vmatpush2.msra.mxu0 0.0
      %1194 = vmatprep.subr.mxu0 0.0
      %1195 = vmatpush2.msra.mxu0 0.0
      %1196 = vmatprep.subr.mxu0 0.0
      %1197 = vmatpush2.msra.mxu0 0.0
      %1198 = vmatprep.subr.mxu0 0.0
      %1199 = vmatpush2.msra.mxu0 0.0
      %1200 = vmatprep.subr.mxu0 0.0
      %1201 = vmatpush2.msra.mxu0 0.0
      %1202 = vmatprep.subr.mxu0 0.0
      %1203 = vmatpush2.msra.mxu0 0.0
      %1204 = vmatprep.subr.mxu0 0.0
      %1205 = vmatpush2.msra.mxu0 0.0
      %1206 = vmatprep.subr.mxu0 0.0
      %1207 = vmatpush2.msra.mxu0 0.0
      %1208 = vmatprep.mubr.f32.mxu0 0.0
      %1209 = vmatmul.mubr.f32.gmra.mxu0 %v1139
      %v1210 = vpop.f32.mrf.mxu0
      %v1211 = vadd.f32 0.0, %v1210
      %v1212 = vpop.f32.mrf.mxu0
      %v1213 = vadd.f32 0.0, %v1212
      %1214 = vmatprep.mubr.f32.mxu0 0.0
      %1215 = vmatmul.mubr.f32.gmra.mxu0 %v1142
      %v1216 = vpop.f32.mrf.mxu0
      %v1217 = vadd.f32 0.0, %v1216
      %v1218 = vpop.f32.mrf.mxu0
      %v1219 = vadd.f32 0.0, %v1218
      %1220 = vdwg.mxu0
      %v1221 = vadd.f32 %v1116, %v1211
      %v1222 = vadd.f32 %v1117, %v1213
      %v1223 = vadd.f32 %v1118, %v1217
      %v1224 = vadd.f32 %v1119, %v1219
      %v1225 = vld [vmem:[%s2] sm:$0xff]
      %v1226 = vld [vmem:[%s2 + $0x8] sm:$0xff]
      %1228 = vset.pattern.permute.xlu0 0
      %1229 = vperm.xlu0 %1228, %v1225
      %v1230 = vpop.permute.xlu0 %1229
      %1233 = vset.pattern.permute.xlu0 0
      %1234 = vperm.xlu0 %1233, %v1226
      %v1235 = vpop.permute.xlu0 %1234
      %v1237 = vadd.f32 %v1221, %v1230
      %v1238 = vadd.f32 %v1222, %v1230
      %v1239 = vadd.f32 %v1223, %v1235
      %v1240 = vadd.f32 %v1224, %v1235
      %v1241 = vxor.u32 %v1237, 2147483648
      %v1242 = vxor.u32 %v1238, 2147483648
      %v1243 = vxor.u32 %v1239, 2147483648
      %v1244 = vxor.u32 %v1240, 2147483648
      %v1245 = vmul.f32 %v1241, 1.442695
      %v1246 = vpow.pop %v1245
      %v1247 = vmul.f32 %v1242, 1.442695
      %v1248 = vpow.pop %v1247
      %v1249 = vmul.f32 %v1243, 1.442695
      %v1250 = vpow.pop %v1249
      %v1251 = vmul.f32 %v1244, 1.442695
      %v1252 = vpow.pop %v1251
      %v1253 = vadd.f32 %v1246, 1.0
      %v1254 = vadd.f32 %v1248, 1.0
      %v1255 = vadd.f32 %v1250, 1.0
      %v1256 = vadd.f32 %v1252, 1.0
      %v1257 = vrcp.pop %v1253
      %v1258 = vmul.f32 1.0, %v1257
      %v1259 = vrcp.pop %v1254
      %v1260 = vmul.f32 1.0, %v1259
      %v1261 = vrcp.pop %v1255
      %v1262 = vmul.f32 1.0, %v1261
      %v1263 = vrcp.pop %v1256
      %v1264 = vmul.f32 1.0, %v1263
      %v1265 = vmul.f32 %v1258, %v276
      %v1266 = vmul.f32 %v1260, %v277
      %1269 = vrot.lane.b32.xlu0 %v1265, 11
      %v1270 = vpop.permute.xlu0 %1269
      %1271 = vrot.lane.b32.xlu0 %v1266, 11
      %v1272 = vpop.permute.xlu0 %1271
      %v1273 = vsel %vm287, %v1270, %v1272
      %1276 = vst.msk [vmem:[#allocation3 + $0x10] sm:$0xff] %vm291, %v1270
      %1277 = vst.msk [vmem:[#allocation3 + $0x18] sm:$0xff] %vm293, %v1273
      %v1278 = vld [vmem:[%s3] sm:$0xff]
      %v1279 = vld [vmem:[#allocation3] sm:$0xff]
      %v1280 = vld [vmem:[#allocation3 + $0x8] sm:$0xff]
      %v1281 = vld [vmem:[#allocation3 + $0x10] sm:$0xff]
      %v1282 = vld [vmem:[#allocation3 + $0x18] sm:$0xff]
      %s1283 = scalar_lea.vmem %s3, 8
      %v1284 = vld [vmem:[%s1283] sm:$0xff]
      %1289 = vrot.lane.b32.xlu0 %v1279, 127
      %v1290 = vpop.permute.xlu0 %1289
      %1291 = vrot.lane.b32.xlu0 %v1280, 127
      %v1292 = vpop.permute.xlu0 %1291
      %1293 = vrot.lane.b32.xlu0 %v1281, 127
      %v1294 = vpop.permute.xlu0 %1293
      %1295 = vrot.lane.b32.xlu0 %v1282, 127
      %v1296 = vpop.permute.xlu0 %1295
      %v1297 = vsel %vm316, %v1290, %v1292
      %v1298 = vsel %vm316, %v1294, %v1296
      %v1304 = vsel %vm323, %v1284, 0
      %1306 = vmatprep.subr.mxu0 0.0
      %1307 = vmatpush1.msra.mxu0 0.0
      %1308 = vmatprep.subr.mxu0 0.0
      %1309 = vmatpush1.msra.mxu0 0.0
      %1310 = vmatprep.subr.mxu0 0.0
      %1311 = vmatpush1.msra.mxu0 0.0
      %1312 = vmatprep.subr.mxu0 0.0
      %1313 = vmatpush1.msra.mxu0 0.0
      %1314 = vmatprep.subr.mxu0 0.0
      %1315 = vmatpush1.msra.mxu0 0.0
      %1316 = vmatprep.subr.mxu0 0.0
      %1317 = vmatpush1.msra.mxu0 0.0
      %1318 = vmatprep.subr.mxu0 0.0
      %1319 = vmatpush1.msra.mxu0 0.0
      %1320 = vmatprep.subr.mxu0 0.0
      %1321 = vmatpush1.msra.mxu0 0.0
      %1322 = vmatprep.subr.mxu0 0.0
      %1323 = vmatpush1.msra.mxu0 0.0
      %1324 = vmatprep.subr.mxu0 0.0
      %1325 = vmatpush1.msra.mxu0 0.0
      %1326 = vmatprep.subr.mxu0 0.0
      %1327 = vmatpush1.msra.mxu0 0.0
      %1328 = vmatprep.subr.mxu0 0.0
      %1329 = vmatpush1.msra.mxu0 0.0
      %1330 = vmatprep.subr.mxu0 0.0
      %1331 = vmatpush1.msra.mxu0 0.0
      %1332 = vmatprep.subr.mxu0 0.0
      %1333 = vmatpush1.msra.mxu0 0.0
      %1334 = vmatprep.subr.mxu0 %v1296
      %1335 = vmatpush1.msra.mxu0 %v1298
      %1336 = vmatprep.subr.mxu0 %v1292
      %1337 = vmatpush1.msra.mxu0 %v1297
      %1338 = vmatprep.subr.mxu0 0.0
      %1339 = vmatpush2.msra.mxu0 0.0
      %1340 = vmatprep.subr.mxu0 0.0
      %1341 = vmatpush2.msra.mxu0 0.0
      %1342 = vmatprep.subr.mxu0 0.0
      %1343 = vmatpush2.msra.mxu0 0.0
      %1344 = vmatprep.subr.mxu0 0.0
      %1345 = vmatpush2.msra.mxu0 0.0
      %1346 = vmatprep.subr.mxu0 0.0
      %1347 = vmatpush2.msra.mxu0 0.0
      %1348 = vmatprep.subr.mxu0 0.0
      %1349 = vmatpush2.msra.mxu0 0.0
      %1350 = vmatprep.subr.mxu0 0.0
      %1351 = vmatpush2.msra.mxu0 0.0
      %1352 = vmatprep.subr.mxu0 0.0
      %1353 = vmatpush2.msra.mxu0 0.0
      %1354 = vmatprep.subr.mxu0 0.0
      %1355 = vmatpush2.msra.mxu0 0.0
      %1356 = vmatprep.subr.mxu0 0.0
      %1357 = vmatpush2.msra.mxu0 0.0
      %1358 = vmatprep.subr.mxu0 0.0
      %1359 = vmatpush2.msra.mxu0 0.0
      %1360 = vmatprep.subr.mxu0 0.0
      %1361 = vmatpush2.msra.mxu0 0.0
      %1362 = vmatprep.subr.mxu0 0.0
      %1363 = vmatpush2.msra.mxu0 0.0
      %1364 = vmatprep.subr.mxu0 0.0
      %1365 = vmatpush2.msra.mxu0 0.0
      %1366 = vmatprep.subr.mxu0 0.0
      %1367 = vmatpush2.msra.mxu0 0.0
      %1368 = vmatprep.subr.mxu0 0.0
      %1369 = vmatpush2.msra.mxu0 0.0
      %1370 = vmatprep.mubr.f32.mxu0 0.0
      %1371 = vmatmul.mubr.f32.gmra.mxu0 %v1304
      %v1372 = vpop.f32.mrf.mxu0
      %v1373 = vadd.f32 0.0, %v1372
      %v1374 = vpop.f32.mrf.mxu0
      %v1375 = vadd.f32 0.0, %v1374
      %1376 = vdwg.mxu0
      %v1378 = vsel %vm323, %v1278, 0
      %1380 = vmatprep.subr.mxu0 0.0
      %1381 = vmatpush1.msra.mxu0 0.0
      %1382 = vmatprep.subr.mxu0 0.0
      %1383 = vmatpush1.msra.mxu0 0.0
      %1384 = vmatprep.subr.mxu0 0.0
      %1385 = vmatpush1.msra.mxu0 0.0
      %1386 = vmatprep.subr.mxu0 0.0
      %1387 = vmatpush1.msra.mxu0 0.0
      %1388 = vmatprep.subr.mxu0 0.0
      %1389 = vmatpush1.msra.mxu0 0.0
      %1390 = vmatprep.subr.mxu0 0.0
      %1391 = vmatpush1.msra.mxu0 0.0
      %1392 = vmatprep.subr.mxu0 0.0
      %1393 = vmatpush1.msra.mxu0 0.0
      %1394 = vmatprep.subr.mxu0 0.0
      %1395 = vmatpush1.msra.mxu0 0.0
      %1396 = vmatprep.subr.mxu0 0.0
      %1397 = vmatpush1.msra.mxu0 0.0
      %1398 = vmatprep.subr.mxu0 0.0
      %1399 = vmatpush1.msra.mxu0 0.0
      %1400 = vmatprep.subr.mxu0 0.0
      %1401 = vmatpush1.msra.mxu0 0.0
      %1402 = vmatprep.subr.mxu0 0.0
      %1403 = vmatpush1.msra.mxu0 0.0
      %1404 = vmatprep.subr.mxu0 0.0
      %1405 = vmatpush1.msra.mxu0 0.0
      %1406 = vmatprep.subr.mxu0 0.0
      %1407 = vmatpush1.msra.mxu0 0.0
      %1408 = vmatprep.subr.mxu0 %v1282
      %1409 = vmatpush1.msra.mxu0 %v1281
      %1410 = vmatprep.subr.mxu0 %v1280
      %1411 = vmatpush1.msra.mxu0 %v1279
      %1412 = vmatprep.subr.mxu0 0.0
      %1413 = vmatpush2.msra.mxu0 0.0
      %1414 = vmatprep.subr.mxu0 0.0
      %1415 = vmatpush2.msra.mxu0 0.0
      %1416 = vmatprep.subr.mxu0 0.0
      %1417 = vmatpush2.msra.mxu0 0.0
      %1418 = vmatprep.subr.mxu0 0.0
      %1419 = vmatpush2.msra.mxu0 0.0
      %1420 = vmatprep.subr.mxu0 0.0
      %1421 = vmatpush2.msra.mxu0 0.0
      %1422 = vmatprep.subr.mxu0 0.0
      %1423 = vmatpush2.msra.mxu0 0.0
      %1424 = vmatprep.subr.mxu0 0.0
      %1425 = vmatpush2.msra.mxu0 0.0
      %1426 = vmatprep.subr.mxu0 0.0
      %1427 = vmatpush2.msra.mxu0 0.0
      %1428 = vmatprep.subr.mxu0 0.0
      %1429 = vmatpush2.msra.mxu0 0.0
      %1430 = vmatprep.subr.mxu0 0.0
      %1431 = vmatpush2.msra.mxu0 0.0
      %1432 = vmatprep.subr.mxu0 0.0
      %1433 = vmatpush2.msra.mxu0 0.0
      %1434 = vmatprep.subr.mxu0 0.0
      %1435 = vmatpush2.msra.mxu0 0.0
      %1436 = vmatprep.subr.mxu0 0.0
      %1437 = vmatpush2.msra.mxu0 0.0
      %1438 = vmatprep.subr.mxu0 0.0
      %1439 = vmatpush2.msra.mxu0 0.0
      %1440 = vmatprep.subr.mxu0 0.0
      %1441 = vmatpush2.msra.mxu0 0.0
      %1442 = vmatprep.subr.mxu0 0.0
      %1443 = vmatpush2.msra.mxu0 0.0
      %1444 = vmatprep.mubr.f32.mxu0 0.0
      %1445 = vmatmul.mubr.f32.gmra.mxu0 %v1378
      %v1446 = vpop.f32.mrf.mxu0
      %v1447 = vadd.f32 %v1373, %v1446
      %v1448 = vpop.f32.mrf.mxu0
      %v1449 = vadd.f32 %v1375, %v1448
      %1450 = vdwg.mxu0
      %s1451 = scalar_lea.vmem %s3, 16
      %v1452 = vld [vmem:[%s1451] sm:$0xff]
      %1453 = vrot.lane.b32.xlu0 %v1279, 126
      %v1454 = vpop.permute.xlu0 %1453
      %1455 = vrot.lane.b32.xlu0 %v1280, 126
      %v1456 = vpop.permute.xlu0 %1455
      %1457 = vrot.lane.b32.xlu0 %v1281, 126
      %v1458 = vpop.permute.xlu0 %1457
      %1459 = vrot.lane.b32.xlu0 %v1282, 126
      %v1460 = vpop.permute.xlu0 %1459
      %v1461 = vsel %vm501, %v1454, %v1456
      %v1462 = vsel %vm501, %v1458, %v1460
      %v1468 = vsel %vm323, %v1452, 0
      %1470 = vmatprep.subr.mxu0 0.0
      %1471 = vmatpush1.msra.mxu0 0.0
      %1472 = vmatprep.subr.mxu0 0.0
      %1473 = vmatpush1.msra.mxu0 0.0
      %1474 = vmatprep.subr.mxu0 0.0
      %1475 = vmatpush1.msra.mxu0 0.0
      %1476 = vmatprep.subr.mxu0 0.0
      %1477 = vmatpush1.msra.mxu0 0.0
      %1478 = vmatprep.subr.mxu0 0.0
      %1479 = vmatpush1.msra.mxu0 0.0
      %1480 = vmatprep.subr.mxu0 0.0
      %1481 = vmatpush1.msra.mxu0 0.0
      %1482 = vmatprep.subr.mxu0 0.0
      %1483 = vmatpush1.msra.mxu0 0.0
      %1484 = vmatprep.subr.mxu0 0.0
      %1485 = vmatpush1.msra.mxu0 0.0
      %1486 = vmatprep.subr.mxu0 0.0
      %1487 = vmatpush1.msra.mxu0 0.0
      %1488 = vmatprep.subr.mxu0 0.0
      %1489 = vmatpush1.msra.mxu0 0.0
      %1490 = vmatprep.subr.mxu0 0.0
      %1491 = vmatpush1.msra.mxu0 0.0
      %1492 = vmatprep.subr.mxu0 0.0
      %1493 = vmatpush1.msra.mxu0 0.0
      %1494 = vmatprep.subr.mxu0 0.0
      %1495 = vmatpush1.msra.mxu0 0.0
      %1496 = vmatprep.subr.mxu0 0.0
      %1497 = vmatpush1.msra.mxu0 0.0
      %1498 = vmatprep.subr.mxu0 %v1460
      %1499 = vmatpush1.msra.mxu0 %v1462
      %1500 = vmatprep.subr.mxu0 %v1456
      %1501 = vmatpush1.msra.mxu0 %v1461
      %1502 = vmatprep.subr.mxu0 0.0
      %1503 = vmatpush2.msra.mxu0 0.0
      %1504 = vmatprep.subr.mxu0 0.0
      %1505 = vmatpush2.msra.mxu0 0.0
      %1506 = vmatprep.subr.mxu0 0.0
      %1507 = vmatpush2.msra.mxu0 0.0
      %1508 = vmatprep.subr.mxu0 0.0
      %1509 = vmatpush2.msra.mxu0 0.0
      %1510 = vmatprep.subr.mxu0 0.0
      %1511 = vmatpush2.msra.mxu0 0.0
      %1512 = vmatprep.subr.mxu0 0.0
      %1513 = vmatpush2.msra.mxu0 0.0
      %1514 = vmatprep.subr.mxu0 0.0
      %1515 = vmatpush2.msra.mxu0 0.0
      %1516 = vmatprep.subr.mxu0 0.0
      %1517 = vmatpush2.msra.mxu0 0.0
      %1518 = vmatprep.subr.mxu0 0.0
      %1519 = vmatpush2.msra.mxu0 0.0
      %1520 = vmatprep.subr.mxu0 0.0
      %1521 = vmatpush2.msra.mxu0 0.0
      %1522 = vmatprep.subr.mxu0 0.0
      %1523 = vmatpush2.msra.mxu0 0.0
      %1524 = vmatprep.subr.mxu0 0.0
      %1525 = vmatpush2.msra.mxu0 0.0
      %1526 = vmatprep.subr.mxu0 0.0
      %1527 = vmatpush2.msra.mxu0 0.0
      %1528 = vmatprep.subr.mxu0 0.0
      %1529 = vmatpush2.msra.mxu0 0.0
      %1530 = vmatprep.subr.mxu0 0.0
      %1531 = vmatpush2.msra.mxu0 0.0
      %1532 = vmatprep.subr.mxu0 0.0
      %1533 = vmatpush2.msra.mxu0 0.0
      %1534 = vmatprep.mubr.f32.mxu0 0.0
      %1535 = vmatmul.mubr.f32.gmra.mxu0 %v1468
      %v1536 = vpop.f32.mrf.mxu0
      %v1537 = vadd.f32 0.0, %v1536
      %v1538 = vpop.f32.mrf.mxu0
      %v1539 = vadd.f32 0.0, %v1538
      %1540 = vdwg.mxu0
      %v1541 = vadd.f32 %v1447, %v1537
      %v1542 = vadd.f32 %v1449, %v1539
      %s1543 = scalar_lea.vmem %s3, 24
      %v1544 = vld [vmem:[%s1543] sm:$0xff]
      %1545 = vrot.lane.b32.xlu0 %v1279, 118
      %v1546 = vpop.permute.xlu0 %1545
      %1547 = vrot.lane.b32.xlu0 %v1280, 118
      %v1548 = vpop.permute.xlu0 %1547
      %1549 = vrot.lane.b32.xlu0 %v1281, 118
      %v1550 = vpop.permute.xlu0 %1549
      %1551 = vrot.lane.b32.xlu0 %v1282, 118
      %v1552 = vpop.permute.xlu0 %1551
      %v1553 = vsel %vm606, %v1546, %v1548
      %v1554 = vsel %vm606, %v1550, %v1552
      %v1560 = vsel %vm323, %v1544, 0
      %1562 = vmatprep.subr.mxu0 0.0
      %1563 = vmatpush1.msra.mxu0 0.0
      %1564 = vmatprep.subr.mxu0 0.0
      %1565 = vmatpush1.msra.mxu0 0.0
      %1566 = vmatprep.subr.mxu0 0.0
      %1567 = vmatpush1.msra.mxu0 0.0
      %1568 = vmatprep.subr.mxu0 0.0
      %1569 = vmatpush1.msra.mxu0 0.0
      %1570 = vmatprep.subr.mxu0 0.0
      %1571 = vmatpush1.msra.mxu0 0.0
      %1572 = vmatprep.subr.mxu0 0.0
      %1573 = vmatpush1.msra.mxu0 0.0
      %1574 = vmatprep.subr.mxu0 0.0
      %1575 = vmatpush1.msra.mxu0 0.0
      %1576 = vmatprep.subr.mxu0 0.0
      %1577 = vmatpush1.msra.mxu0 0.0
      %1578 = vmatprep.subr.mxu0 0.0
      %1579 = vmatpush1.msra.mxu0 0.0
      %1580 = vmatprep.subr.mxu0 0.0
      %1581 = vmatpush1.msra.mxu0 0.0
      %1582 = vmatprep.subr.mxu0 0.0
      %1583 = vmatpush1.msra.mxu0 0.0
      %1584 = vmatprep.subr.mxu0 0.0
      %1585 = vmatpush1.msra.mxu0 0.0
      %1586 = vmatprep.subr.mxu0 0.0
      %1587 = vmatpush1.msra.mxu0 0.0
      %1588 = vmatprep.subr.mxu0 0.0
      %1589 = vmatpush1.msra.mxu0 0.0
      %1590 = vmatprep.subr.mxu0 %v1552
      %1591 = vmatpush1.msra.mxu0 %v1554
      %1592 = vmatprep.subr.mxu0 %v1548
      %1593 = vmatpush1.msra.mxu0 %v1553
      %1594 = vmatprep.subr.mxu0 0.0
      %1595 = vmatpush2.msra.mxu0 0.0
      %1596 = vmatprep.subr.mxu0 0.0
      %1597 = vmatpush2.msra.mxu0 0.0
      %1598 = vmatprep.subr.mxu0 0.0
      %1599 = vmatpush2.msra.mxu0 0.0
      %1600 = vmatprep.subr.mxu0 0.0
      %1601 = vmatpush2.msra.mxu0 0.0
      %1602 = vmatprep.subr.mxu0 0.0
      %1603 = vmatpush2.msra.mxu0 0.0
      %1604 = vmatprep.subr.mxu0 0.0
      %1605 = vmatpush2.msra.mxu0 0.0
      %1606 = vmatprep.subr.mxu0 0.0
      %1607 = vmatpush2.msra.mxu0 0.0
      %1608 = vmatprep.subr.mxu0 0.0
      %1609 = vmatpush2.msra.mxu0 0.0
      %1610 = vmatprep.subr.mxu0 0.0
      %1611 = vmatpush2.msra.mxu0 0.0
      %1612 = vmatprep.subr.mxu0 0.0
      %1613 = vmatpush2.msra.mxu0 0.0
      %1614 = vmatprep.subr.mxu0 0.0
      %1615 = vmatpush2.msra.mxu0 0.0
      %1616 = vmatprep.subr.mxu0 0.0
      %1617 = vmatpush2.msra.mxu0 0.0
      %1618 = vmatprep.subr.mxu0 0.0
      %1619 = vmatpush2.msra.mxu0 0.0
      %1620 = vmatprep.subr.mxu0 0.0
      %1621 = vmatpush2.msra.mxu0 0.0
      %1622 = vmatprep.subr.mxu0 0.0
      %1623 = vmatpush2.msra.mxu0 0.0
      %1624 = vmatprep.subr.mxu0 0.0
      %1625 = vmatpush2.msra.mxu0 0.0
      %1626 = vmatprep.mubr.f32.mxu0 0.0
      %1627 = vmatmul.mubr.f32.gmra.mxu0 %v1560
      %v1628 = vpop.f32.mrf.mxu0
      %v1629 = vadd.f32 0.0, %v1628
      %v1630 = vpop.f32.mrf.mxu0
      %v1631 = vadd.f32 0.0, %v1630
      %1632 = vdwg.mxu0
      %v1633 = vadd.f32 %v1541, %v1629
      %v1634 = vadd.f32 %v1542, %v1631
      %s1635 = scalar_lea.vmem %s3, 32
      %v1636 = vld [vmem:[%s1635] sm:$0xff]
      %1637 = vrot.lane.b32.xlu0 %v1279, 117
      %v1638 = vpop.permute.xlu0 %1637
      %1639 = vrot.lane.b32.xlu0 %v1280, 117
      %v1640 = vpop.permute.xlu0 %1639
      %1641 = vrot.lane.b32.xlu0 %v1281, 117
      %v1642 = vpop.permute.xlu0 %1641
      %1643 = vrot.lane.b32.xlu0 %v1282, 117
      %v1644 = vpop.permute.xlu0 %1643
      %v1645 = vsel %vm711, %v1638, %v1640
      %v1646 = vsel %vm711, %v1642, %v1644
      %v1652 = vsel %vm323, %v1636, 0
      %1654 = vmatprep.subr.mxu0 0.0
      %1655 = vmatpush1.msra.mxu0 0.0
      %1656 = vmatprep.subr.mxu0 0.0
      %1657 = vmatpush1.msra.mxu0 0.0
      %1658 = vmatprep.subr.mxu0 0.0
      %1659 = vmatpush1.msra.mxu0 0.0
      %1660 = vmatprep.subr.mxu0 0.0
      %1661 = vmatpush1.msra.mxu0 0.0
      %1662 = vmatprep.subr.mxu0 0.0
      %1663 = vmatpush1.msra.mxu0 0.0
      %1664 = vmatprep.subr.mxu0 0.0
      %1665 = vmatpush1.msra.mxu0 0.0
      %1666 = vmatprep.subr.mxu0 0.0
      %1667 = vmatpush1.msra.mxu0 0.0
      %1668 = vmatprep.subr.mxu0 0.0
      %1669 = vmatpush1.msra.mxu0 0.0
      %1670 = vmatprep.subr.mxu0 0.0
      %1671 = vmatpush1.msra.mxu0 0.0
      %1672 = vmatprep.subr.mxu0 0.0
      %1673 = vmatpush1.msra.mxu0 0.0
      %1674 = vmatprep.subr.mxu0 0.0
      %1675 = vmatpush1.msra.mxu0 0.0
      %1676 = vmatprep.subr.mxu0 0.0
      %1677 = vmatpush1.msra.mxu0 0.0
      %1678 = vmatprep.subr.mxu0 0.0
      %1679 = vmatpush1.msra.mxu0 0.0
      %1680 = vmatprep.subr.mxu0 0.0
      %1681 = vmatpush1.msra.mxu0 0.0
      %1682 = vmatprep.subr.mxu0 %v1644
      %1683 = vmatpush1.msra.mxu0 %v1646
      %1684 = vmatprep.subr.mxu0 %v1640
      %1685 = vmatpush1.msra.mxu0 %v1645
      %1686 = vmatprep.subr.mxu0 0.0
      %1687 = vmatpush2.msra.mxu0 0.0
      %1688 = vmatprep.subr.mxu0 0.0
      %1689 = vmatpush2.msra.mxu0 0.0
      %1690 = vmatprep.subr.mxu0 0.0
      %1691 = vmatpush2.msra.mxu0 0.0
      %1692 = vmatprep.subr.mxu0 0.0
      %1693 = vmatpush2.msra.mxu0 0.0
      %1694 = vmatprep.subr.mxu0 0.0
      %1695 = vmatpush2.msra.mxu0 0.0
      %1696 = vmatprep.subr.mxu0 0.0
      %1697 = vmatpush2.msra.mxu0 0.0
      %1698 = vmatprep.subr.mxu0 0.0
      %1699 = vmatpush2.msra.mxu0 0.0
      %1700 = vmatprep.subr.mxu0 0.0
      %1701 = vmatpush2.msra.mxu0 0.0
      %1702 = vmatprep.subr.mxu0 0.0
      %1703 = vmatpush2.msra.mxu0 0.0
      %1704 = vmatprep.subr.mxu0 0.0
      %1705 = vmatpush2.msra.mxu0 0.0
      %1706 = vmatprep.subr.mxu0 0.0
      %1707 = vmatpush2.msra.mxu0 0.0
      %1708 = vmatprep.subr.mxu0 0.0
      %1709 = vmatpush2.msra.mxu0 0.0
      %1710 = vmatprep.subr.mxu0 0.0
      %1711 = vmatpush2.msra.mxu0 0.0
      %1712 = vmatprep.subr.mxu0 0.0
      %1713 = vmatpush2.msra.mxu0 0.0
      %1714 = vmatprep.subr.mxu0 0.0
      %1715 = vmatpush2.msra.mxu0 0.0
      %1716 = vmatprep.subr.mxu0 0.0
      %1717 = vmatpush2.msra.mxu0 0.0
      %1718 = vmatprep.mubr.f32.mxu0 0.0
      %1719 = vmatmul.mubr.f32.gmra.mxu0 %v1652
      %v1720 = vpop.f32.mrf.mxu0
      %v1721 = vadd.f32 0.0, %v1720
      %v1722 = vpop.f32.mrf.mxu0
      %v1723 = vadd.f32 0.0, %v1722
      %1724 = vdwg.mxu0
      %v1725 = vadd.f32 %v1633, %v1721
      %v1726 = vadd.f32 %v1634, %v1723
      %s1727 = scalar_lea.vmem %s3, 40
      %v1728 = vld [vmem:[%s1727] sm:$0xff]
      %1729 = vrot.lane.b32.xlu0 %v1279, 116
      %v1730 = vpop.permute.xlu0 %1729
      %1731 = vrot.lane.b32.xlu0 %v1280, 116
      %v1732 = vpop.permute.xlu0 %1731
      %1733 = vrot.lane.b32.xlu0 %v1281, 116
      %v1734 = vpop.permute.xlu0 %1733
      %1735 = vrot.lane.b32.xlu0 %v1282, 116
      %v1736 = vpop.permute.xlu0 %1735
      %v1737 = vsel %vm816, %v1730, %v1732
      %v1738 = vsel %vm816, %v1734, %v1736
      %v1744 = vsel %vm323, %v1728, 0
      %1746 = vmatprep.subr.mxu0 0.0
      %1747 = vmatpush1.msra.mxu0 0.0
      %1748 = vmatprep.subr.mxu0 0.0
      %1749 = vmatpush1.msra.mxu0 0.0
      %1750 = vmatprep.subr.mxu0 0.0
      %1751 = vmatpush1.msra.mxu0 0.0
      %1752 = vmatprep.subr.mxu0 0.0
      %1753 = vmatpush1.msra.mxu0 0.0
      %1754 = vmatprep.subr.mxu0 0.0
      %1755 = vmatpush1.msra.mxu0 0.0
      %1756 = vmatprep.subr.mxu0 0.0
      %1757 = vmatpush1.msra.mxu0 0.0
      %1758 = vmatprep.subr.mxu0 0.0
      %1759 = vmatpush1.msra.mxu0 0.0
      %1760 = vmatprep.subr.mxu0 0.0
      %1761 = vmatpush1.msra.mxu0 0.0
      %1762 = vmatprep.subr.mxu0 0.0
      %1763 = vmatpush1.msra.mxu0 0.0
      %1764 = vmatprep.subr.mxu0 0.0
      %1765 = vmatpush1.msra.mxu0 0.0
      %1766 = vmatprep.subr.mxu0 0.0
      %1767 = vmatpush1.msra.mxu0 0.0
      %1768 = vmatprep.subr.mxu0 0.0
      %1769 = vmatpush1.msra.mxu0 0.0
      %1770 = vmatprep.subr.mxu0 0.0
      %1771 = vmatpush1.msra.mxu0 0.0
      %1772 = vmatprep.subr.mxu0 0.0
      %1773 = vmatpush1.msra.mxu0 0.0
      %1774 = vmatprep.subr.mxu0 %v1736
      %1775 = vmatpush1.msra.mxu0 %v1738
      %1776 = vmatprep.subr.mxu0 %v1732
      %1777 = vmatpush1.msra.mxu0 %v1737
      %1778 = vmatprep.subr.mxu0 0.0
      %1779 = vmatpush2.msra.mxu0 0.0
      %1780 = vmatprep.subr.mxu0 0.0
      %1781 = vmatpush2.msra.mxu0 0.0
      %1782 = vmatprep.subr.mxu0 0.0
      %1783 = vmatpush2.msra.mxu0 0.0
      %1784 = vmatprep.subr.mxu0 0.0
      %1785 = vmatpush2.msra.mxu0 0.0
      %1786 = vmatprep.subr.mxu0 0.0
      %1787 = vmatpush2.msra.mxu0 0.0
      %1788 = vmatprep.subr.mxu0 0.0
      %1789 = vmatpush2.msra.mxu0 0.0
      %1790 = vmatprep.subr.mxu0 0.0
      %1791 = vmatpush2.msra.mxu0 0.0
      %1792 = vmatprep.subr.mxu0 0.0
      %1793 = vmatpush2.msra.mxu0 0.0
      %1794 = vmatprep.subr.mxu0 0.0
      %1795 = vmatpush2.msra.mxu0 0.0
      %1796 = vmatprep.subr.mxu0 0.0
      %1797 = vmatpush2.msra.mxu0 0.0
      %1798 = vmatprep.subr.mxu0 0.0
      %1799 = vmatpush2.msra.mxu0 0.0
      %1800 = vmatprep.subr.mxu0 0.0
      %1801 = vmatpush2.msra.mxu0 0.0
      %1802 = vmatprep.subr.mxu0 0.0
      %1803 = vmatpush2.msra.mxu0 0.0
      %1804 = vmatprep.subr.mxu0 0.0
      %1805 = vmatpush2.msra.mxu0 0.0
      %1806 = vmatprep.subr.mxu0 0.0
      %1807 = vmatpush2.msra.mxu0 0.0
      %1808 = vmatprep.subr.mxu0 0.0
      %1809 = vmatpush2.msra.mxu0 0.0
      %1810 = vmatprep.mubr.f32.mxu0 0.0
      %1811 = vmatmul.mubr.f32.gmra.mxu0 %v1744
      %v1812 = vpop.f32.mrf.mxu0
      %v1813 = vadd.f32 0.0, %v1812
      %v1814 = vpop.f32.mrf.mxu0
      %v1815 = vadd.f32 0.0, %v1814
      %1816 = vdwg.mxu0
      %v1817 = vadd.f32 %v1725, %v1813
      %v1818 = vadd.f32 %v1726, %v1815
      %s1819 = scalar_lea.vmem %s3, 48
      %v1820 = vld [vmem:[%s1819] sm:$0xff]
      %1821 = vrot.lane.b32.xlu0 %v1279, 108
      %v1822 = vpop.permute.xlu0 %1821
      %1823 = vrot.lane.b32.xlu0 %v1280, 108
      %v1824 = vpop.permute.xlu0 %1823
      %1825 = vrot.lane.b32.xlu0 %v1281, 108
      %v1826 = vpop.permute.xlu0 %1825
      %1827 = vrot.lane.b32.xlu0 %v1282, 108
      %v1828 = vpop.permute.xlu0 %1827
      %v1829 = vsel %vm921, %v1822, %v1824
      %v1830 = vsel %vm921, %v1826, %v1828
      %v1836 = vsel %vm323, %v1820, 0
      %1838 = vmatprep.subr.mxu0 0.0
      %1839 = vmatpush1.msra.mxu0 0.0
      %1840 = vmatprep.subr.mxu0 0.0
      %1841 = vmatpush1.msra.mxu0 0.0
      %1842 = vmatprep.subr.mxu0 0.0
      %1843 = vmatpush1.msra.mxu0 0.0
      %1844 = vmatprep.subr.mxu0 0.0
      %1845 = vmatpush1.msra.mxu0 0.0
      %1846 = vmatprep.subr.mxu0 0.0
      %1847 = vmatpush1.msra.mxu0 0.0
      %1848 = vmatprep.subr.mxu0 0.0
      %1849 = vmatpush1.msra.mxu0 0.0
      %1850 = vmatprep.subr.mxu0 0.0
      %1851 = vmatpush1.msra.mxu0 0.0
      %1852 = vmatprep.subr.mxu0 0.0
      %1853 = vmatpush1.msra.mxu0 0.0
      %1854 = vmatprep.subr.mxu0 0.0
      %1855 = vmatpush1.msra.mxu0 0.0
      %1856 = vmatprep.subr.mxu0 0.0
      %1857 = vmatpush1.msra.mxu0 0.0
      %1858 = vmatprep.subr.mxu0 0.0
      %1859 = vmatpush1.msra.mxu0 0.0
      %1860 = vmatprep.subr.mxu0 0.0
      %1861 = vmatpush1.msra.mxu0 0.0
      %1862 = vmatprep.subr.mxu0 0.0
      %1863 = vmatpush1.msra.mxu0 0.0
      %1864 = vmatprep.subr.mxu0 0.0
      %1865 = vmatpush1.msra.mxu0 0.0
      %1866 = vmatprep.subr.mxu0 %v1828
      %1867 = vmatpush1.msra.mxu0 %v1830
      %1868 = vmatprep.subr.mxu0 %v1824
      %1869 = vmatpush1.msra.mxu0 %v1829
      %1870 = vmatprep.subr.mxu0 0.0
      %1871 = vmatpush2.msra.mxu0 0.0
      %1872 = vmatprep.subr.mxu0 0.0
      %1873 = vmatpush2.msra.mxu0 0.0
      %1874 = vmatprep.subr.mxu0 0.0
      %1875 = vmatpush2.msra.mxu0 0.0
      %1876 = vmatprep.subr.mxu0 0.0
      %1877 = vmatpush2.msra.mxu0 0.0
      %1878 = vmatprep.subr.mxu0 0.0
      %1879 = vmatpush2.msra.mxu0 0.0
      %1880 = vmatprep.subr.mxu0 0.0
      %1881 = vmatpush2.msra.mxu0 0.0
      %1882 = vmatprep.subr.mxu0 0.0
      %1883 = vmatpush2.msra.mxu0 0.0
      %1884 = vmatprep.subr.mxu0 0.0
      %1885 = vmatpush2.msra.mxu0 0.0
      %1886 = vmatprep.subr.mxu0 0.0
      %1887 = vmatpush2.msra.mxu0 0.0
      %1888 = vmatprep.subr.mxu0 0.0
      %1889 = vmatpush2.msra.mxu0 0.0
      %1890 = vmatprep.subr.mxu0 0.0
      %1891 = vmatpush2.msra.mxu0 0.0
      %1892 = vmatprep.subr.mxu0 0.0
      %1893 = vmatpush2.msra.mxu0 0.0
      %1894 = vmatprep.subr.mxu0 0.0
      %1895 = vmatpush2.msra.mxu0 0.0
      %1896 = vmatprep.subr.mxu0 0.0
      %1897 = vmatpush2.msra.mxu0 0.0
      %1898 = vmatprep.subr.mxu0 0.0
      %1899 = vmatpush2.msra.mxu0 0.0
      %1900 = vmatprep.subr.mxu0 0.0
      %1901 = vmatpush2.msra.mxu0 0.0
      %1902 = vmatprep.mubr.f32.mxu0 0.0
      %1903 = vmatmul.mubr.f32.gmra.mxu0 %v1836
      %v1904 = vpop.f32.mrf.mxu0
      %v1905 = vadd.f32 0.0, %v1904
      %v1906 = vpop.f32.mrf.mxu0
      %v1907 = vadd.f32 0.0, %v1906
      %1908 = vdwg.mxu0
      %v1909 = vadd.f32 %v1817, %v1905
      %v1910 = vadd.f32 %v1818, %v1907
      %s1911 = scalar_lea.vmem %s3, 56
      %v1912 = vld [vmem:[%s1911] sm:$0xff]
      %1913 = vrot.lane.b32.xlu0 %v1279, 107
      %v1914 = vpop.permute.xlu0 %1913
      %1915 = vrot.lane.b32.xlu0 %v1280, 107
      %v1916 = vpop.permute.xlu0 %1915
      %1917 = vrot.lane.b32.xlu0 %v1281, 107
      %v1918 = vpop.permute.xlu0 %1917
      %1919 = vrot.lane.b32.xlu0 %v1282, 107
      %v1920 = vpop.permute.xlu0 %1919
      %v1921 = vsel %vm1026, %v1914, %v1916
      %v1922 = vsel %vm1026, %v1918, %v1920
      %v1928 = vsel %vm323, %v1912, 0
      %1930 = vmatprep.subr.mxu0 0.0
      %1931 = vmatpush1.msra.mxu0 0.0
      %1932 = vmatprep.subr.mxu0 0.0
      %1933 = vmatpush1.msra.mxu0 0.0
      %1934 = vmatprep.subr.mxu0 0.0
      %1935 = vmatpush1.msra.mxu0 0.0
      %1936 = vmatprep.subr.mxu0 0.0
      %1937 = vmatpush1.msra.mxu0 0.0
      %1938 = vmatprep.subr.mxu0 0.0
      %1939 = vmatpush1.msra.mxu0 0.0
      %1940 = vmatprep.subr.mxu0 0.0
      %1941 = vmatpush1.msra.mxu0 0.0
      %1942 = vmatprep.subr.mxu0 0.0
      %1943 = vmatpush1.msra.mxu0 0.0
      %1944 = vmatprep.subr.mxu0 0.0
      %1945 = vmatpush1.msra.mxu0 0.0
      %1946 = vmatprep.subr.mxu0 0.0
      %1947 = vmatpush1.msra.mxu0 0.0
      %1948 = vmatprep.subr.mxu0 0.0
      %1949 = vmatpush1.msra.mxu0 0.0
      %1950 = vmatprep.subr.mxu0 0.0
      %1951 = vmatpush1.msra.mxu0 0.0
      %1952 = vmatprep.subr.mxu0 0.0
      %1953 = vmatpush1.msra.mxu0 0.0
      %1954 = vmatprep.subr.mxu0 0.0
      %1955 = vmatpush1.msra.mxu0 0.0
      %1956 = vmatprep.subr.mxu0 0.0
      %1957 = vmatpush1.msra.mxu0 0.0
      %1958 = vmatprep.subr.mxu0 %v1920
      %1959 = vmatpush1.msra.mxu0 %v1922
      %1960 = vmatprep.subr.mxu0 %v1916
      %1961 = vmatpush1.msra.mxu0 %v1921
      %1962 = vmatprep.subr.mxu0 0.0
      %1963 = vmatpush2.msra.mxu0 0.0
      %1964 = vmatprep.subr.mxu0 0.0
      %1965 = vmatpush2.msra.mxu0 0.0
      %1966 = vmatprep.subr.mxu0 0.0
      %1967 = vmatpush2.msra.mxu0 0.0
      %1968 = vmatprep.subr.mxu0 0.0
      %1969 = vmatpush2.msra.mxu0 0.0
      %1970 = vmatprep.subr.mxu0 0.0
      %1971 = vmatpush2.msra.mxu0 0.0
      %1972 = vmatprep.subr.mxu0 0.0
      %1973 = vmatpush2.msra.mxu0 0.0
      %1974 = vmatprep.subr.mxu0 0.0
      %1975 = vmatpush2.msra.mxu0 0.0
      %1976 = vmatprep.subr.mxu0 0.0
      %1977 = vmatpush2.msra.mxu0 0.0
      %1978 = vmatprep.subr.mxu0 0.0
      %1979 = vmatpush2.msra.mxu0 0.0
      %1980 = vmatprep.subr.mxu0 0.0
      %1981 = vmatpush2.msra.mxu0 0.0
      %1982 = vmatprep.subr.mxu0 0.0
      %1983 = vmatpush2.msra.mxu0 0.0
      %1984 = vmatprep.subr.mxu0 0.0
      %1985 = vmatpush2.msra.mxu0 0.0
      %1986 = vmatprep.subr.mxu0 0.0
      %1987 = vmatpush2.msra.mxu0 0.0
      %1988 = vmatprep.subr.mxu0 0.0
      %1989 = vmatpush2.msra.mxu0 0.0
      %1990 = vmatprep.subr.mxu0 0.0
      %1991 = vmatpush2.msra.mxu0 0.0
      %1992 = vmatprep.subr.mxu0 0.0
      %1993 = vmatpush2.msra.mxu0 0.0
      %1994 = vmatprep.mubr.f32.mxu0 0.0
      %1995 = vmatmul.mubr.f32.gmra.mxu0 %v1928
      %v1996 = vpop.f32.mrf.mxu0
      %v1997 = vadd.f32 0.0, %v1996
      %v1998 = vpop.f32.mrf.mxu0
      %v1999 = vadd.f32 0.0, %v1998
      %2000 = vdwg.mxu0
      %v2001 = vadd.f32 %v1909, %v1997
      %v2002 = vadd.f32 %v1910, %v1999
      %s2003 = scalar_lea.vmem %s3, 64
      %v2004 = vld [vmem:[%s2003] sm:$0xff]
      %2005 = vrot.lane.b32.xlu0 %v1279, 106
      %v2006 = vpop.permute.xlu0 %2005
      %2007 = vrot.lane.b32.xlu0 %v1280, 106
      %v2008 = vpop.permute.xlu0 %2007
      %2009 = vrot.lane.b32.xlu0 %v1281, 106
      %v2010 = vpop.permute.xlu0 %2009
      %2011 = vrot.lane.b32.xlu0 %v1282, 106
      %v2012 = vpop.permute.xlu0 %2011
      %v2013 = vsel %vm1131, %v2006, %v2008
      %v2014 = vsel %vm1131, %v2010, %v2012
      %v2020 = vsel %vm323, %v2004, 0
      %2022 = vmatprep.subr.mxu0 0.0
      %2023 = vmatpush1.msra.mxu0 0.0
      %2024 = vmatprep.subr.mxu0 0.0
      %2025 = vmatpush1.msra.mxu0 0.0
      %2026 = vmatprep.subr.mxu0 0.0
      %2027 = vmatpush1.msra.mxu0 0.0
      %2028 = vmatprep.subr.mxu0 0.0
      %2029 = vmatpush1.msra.mxu0 0.0
      %2030 = vmatprep.subr.mxu0 0.0
      %2031 = vmatpush1.msra.mxu0 0.0
      %2032 = vmatprep.subr.mxu0 0.0
      %2033 = vmatpush1.msra.mxu0 0.0
      %2034 = vmatprep.subr.mxu0 0.0
      %2035 = vmatpush1.msra.mxu0 0.0
      %2036 = vmatprep.subr.mxu0 0.0
      %2037 = vmatpush1.msra.mxu0 0.0
      %2038 = vmatprep.subr.mxu0 0.0
      %2039 = vmatpush1.msra.mxu0 0.0
      %2040 = vmatprep.subr.mxu0 0.0
      %2041 = vmatpush1.msra.mxu0 0.0
      %2042 = vmatprep.subr.mxu0 0.0
      %2043 = vmatpush1.msra.mxu0 0.0
      %2044 = vmatprep.subr.mxu0 0.0
      %2045 = vmatpush1.msra.mxu0 0.0
      %2046 = vmatprep.subr.mxu0 0.0
      %2047 = vmatpush1.msra.mxu0 0.0
      %2048 = vmatprep.subr.mxu0 0.0
      %2049 = vmatpush1.msra.mxu0 0.0
      %2050 = vmatprep.subr.mxu0 %v2012
      %2051 = vmatpush1.msra.mxu0 %v2014
      %2052 = vmatprep.subr.mxu0 %v2008
      %2053 = vmatpush1.msra.mxu0 %v2013
      %2054 = vmatprep.subr.mxu0 0.0
      %2055 = vmatpush2.msra.mxu0 0.0
      %2056 = vmatprep.subr.mxu0 0.0
      %2057 = vmatpush2.msra.mxu0 0.0
      %2058 = vmatprep.subr.mxu0 0.0
      %2059 = vmatpush2.msra.mxu0 0.0
      %2060 = vmatprep.subr.mxu0 0.0
      %2061 = vmatpush2.msra.mxu0 0.0
      %2062 = vmatprep.subr.mxu0 0.0
      %2063 = vmatpush2.msra.mxu0 0.0
      %2064 = vmatprep.subr.mxu0 0.0
      %2065 = vmatpush2.msra.mxu0 0.0
      %2066 = vmatprep.subr.mxu0 0.0
      %2067 = vmatpush2.msra.mxu0 0.0
      %2068 = vmatprep.subr.mxu0 0.0
      %2069 = vmatpush2.msra.mxu0 0.0
      %2070 = vmatprep.subr.mxu0 0.0
      %2071 = vmatpush2.msra.mxu0 0.0
      %2072 = vmatprep.subr.mxu0 0.0
      %2073 = vmatpush2.msra.mxu0 0.0
      %2074 = vmatprep.subr.mxu0 0.0
      %2075 = vmatpush2.msra.mxu0 0.0
      %2076 = vmatprep.subr.mxu0 0.0
      %2077 = vmatpush2.msra.mxu0 0.0
      %2078 = vmatprep.subr.mxu0 0.0
      %2079 = vmatpush2.msra.mxu0 0.0
      %2080 = vmatprep.subr.mxu0 0.0
      %2081 = vmatpush2.msra.mxu0 0.0
      %2082 = vmatprep.subr.mxu0 0.0
      %2083 = vmatpush2.msra.mxu0 0.0
      %2084 = vmatprep.subr.mxu0 0.0
      %2085 = vmatpush2.msra.mxu0 0.0
      %2086 = vmatprep.mubr.f32.mxu0 0.0
      %2087 = vmatmul.mubr.f32.gmra.mxu0 %v2020
      %v2088 = vpop.f32.mrf.mxu0
      %v2089 = vadd.f32 0.0, %v2088
      %v2090 = vpop.f32.mrf.mxu0
      %v2091 = vadd.f32 0.0, %v2090
      %2092 = vdwg.mxu0
      %v2093 = vadd.f32 %v2001, %v2089
      %v2094 = vadd.f32 %v2002, %v2091
      %v2095 = vld [vmem:[%s4] sm:$0xff]
      %2097 = vset.pattern.permute.xlu0 0
      %2098 = vperm.xlu0 %2097, %v2095
      %v2099 = vpop.permute.xlu0 %2098
      %v2101 = vadd.f32 %v2093, %v2099
      %v2102 = vadd.f32 %v2094, %v2099
      %v2103 = vtanh.pop %v2101
      %v2104 = vtanh.pop %v2102
      %v2105 = vsub.f32 1.0, %v1262
      %v2106 = vsub.f32 1.0, %v1264
      %v2107 = vmul.f32 %v2105, %v2103
      %v2108 = vmul.f32 %v2106, %v2104
      %v2109 = vmul.f32 %v1262, %v276
      %v2110 = vmul.f32 %v1264, %v277
      %v2111 = vadd.f32 %v2107, %v2109
      %v2112 = vadd.f32 %v2108, %v2110
      %v2113 = vld [vmem:[%s5] sm:$0x3]
      %v2115 = vlaneseq
      %v2116 = vshrl.u32 %v2115, 7
      %v2117 = vsub.s32 0, %v2116
      %v2118 = vrot.slane %v2113, %v2117
      %v2119 = vlaneseq
      %v2120 = vshrl.u32 %v2119, 7
      %v2121 = vsub.s32 1, %v2120
      %v2122 = vrot.slane %v2113, %v2121
      %v2125 = vmul.f32 %v2111, %v2118
      %v2126 = vmul.f32 %v2112, %v2122
      %2127 = vst [vmem:[#allocation2] sm:$0xff] %v2125
      %vm2128 = vcmask 588800
      %2129 = vst.msk [vmem:[#allocation2 + $0x8] sm:$0xff] %vm2128, %v2126
      %2130 = vst [vmem:[%s251] sm:$0xff] %v2125
      %2131 = vst.msk [vmem:[%s251 + $0x8] sm:$0xff] %vm2128, %v2126
      %p2132 = scmp.lt.s32.totalorder %s17, 3
      %s2133 = scalar_select %p2132, %s17, 3
      %s2134 = smul.addr %s2133, 2
      %s2135 = smul.addr %s2134, 8
      %s2136 = scalar_lea.vmem %s6, %s2135
      // Predicated region
      $region49: #{biconvgru_forward.5} parent=43 // pred_check
        %p2137 = pneg %p166
      $region50: #{biconvgru_forward.5} parent=43 // pred_check_branch
        %2139 = sbr.rel (%p2137) target = $region52
      $region51: #{biconvgru_forward.5} parent=43 // pred_region
        _
      $region52: #{biconvgru_forward.5} parent=43 // pred_fallthru
        _
    $region44: #{biconvgru_forward.5} parent=5 // pred_fallthru
      _
    %p2140 = scmp.le.s32.totalorder 2, %s12
    // Predicated region
    $region53: #{biconvgru_forward.5} parent=5 // pred_check
      %p2141 = pneg %p2140
    $region54: #{biconvgru_forward.5} parent=5 // pred_check_branch
      %2143 = sbr.rel (%p2141) target = $region56
    $region55: #{biconvgru_forward.5} parent=5 // pred_region
      %s2144 = ssub.s32 %s12, 2
      // Predicated region
      $region57: #{biconvgru_forward.5} parent=55 // pred_check
        %p2145 = pneg %p172
      $region58: #{biconvgru_forward.5} parent=55 // pred_check_branch
        %2147 = sbr.rel (%p2145) target = $region60
      $region59: #{biconvgru_forward.5} parent=55 // pred_region
        %p2148 = scmp.lt.s32.totalorder %s18, 3
        %s2149 = scalar_select %p2148, %s18, 3
        %s2150 = smul.addr %s2149, 2
        %s2151 = smul.addr %s2150, 8
        %s2152 = scalar_lea.vmem %s6, %s2151
      $region60: #{biconvgru_forward.5} parent=55 // pred_fallthru
        _
    $region56: #{biconvgru_forward.5} parent=5 // pred_fallthru
      _
  $region6: #{biconvgru_forward.5} parent=0 // loop_footer
    %s16 = sadd.s32 1, %s12
  $region7: #{biconvgru_forward.5} parent=0 // loop_footer_branch
    %11 = sbr.rel target = $region3
  $region8: #{biconvgru_forward.5} parent=0 // loop_exit
    _

// kernel: biconvgru_forward.7
$region0: #{biconvgru_forward.7}
  #allocation0 [shape = 'u32[]', space=smem, size = 0x4, offset = 0x4, fixed_abs, tag = 'smem constant byte address 0x4 - core index']
  #allocation1 [shape = 'u32[144,128]{1,0:T(1,128)}', space=vmem, size = 0x12000, scoped, tag = 'internal scratch']
  #allocation2 [shape = 'f32[16,222]{1,0:T(8,128)}', space=vmem, size = 0x4000, scoped, tag = 'scratch operand']
  %s0 = inlined_call_operand.vmem [shape: f32[4,8,200], index: 0, kind: input, shape index: {}]
  %s1 = inlined_call_operand.vmem [shape: f32[4,8,200], index: 1, kind: input, shape index: {}]
  %s2 = inlined_call_operand.vmem [shape: f32[9,8,16], index: 2, kind: input, shape index: {}]
  %s3 = inlined_call_operand.vmem [shape: f32[8,1], index: 3, kind: input, shape index: {}]
  %s4 = inlined_call_operand.vmem [shape: f32[1,200], index: 4, kind: input, shape index: {}]
  %s5 = inlined_call_operand.vmem [shape: f32[4,8,200], index: 5, kind: output, shape index: {0}]
  %s6 = inlined_call_operand.vmem [shape: f32[8,200], index: 6, kind: output, shape index: {1}]
  %7 = xla_tuple %s5, %s6
  %s8 = sld [smem:[#allocation0]]
  $region73: #{biconvgru_forward.7} parent=0
    _
  %s10 = ssub.s32 1, %s8
  %s11 = scalar_select 0, %s10, %s8
  loop: start=0, step=1, limit=6
  $region2: #{biconvgru_forward.7} parent=0 // loop_pre_header
    _
  $region3: #{biconvgru_forward.7} parent=0 // loop_header
    %s13 = sphi 0, %s17
    %p14 = scmp.ge.s32.totalorder %s13, 6
    %s23 = sphi 0, %s25
    %s26 = sphi 0, %s23
    %s27 = sphi 0, %s26
    %s43 = sphi 0, %s27
    %s49 = sphi 0, %s51
    %s52 = sphi 0, %s49
    %s53 = sphi 0, %s52
    %s69 = sphi 0, %s53
    %s73 = sphi 0, %s73
    %s75 = sphi 0, %s73
    %s76 = sphi 0, %s75
    %s90 = sphi 0, %s76
    %s94 = sphi 0, %s94
    %s96 = sphi 0, %s94
    %s97 = sphi 0, %s96
    %s111 = sphi 0, %s97
    %s115 = sphi 0, %s115
    %s117 = sphi 0, %s115
    %s118 = sphi 0, %s117
    %s132 = sphi 0, %s118
    %s138 = sphi 0, %s140
    %s141 = sphi 0, %s138
    %s142 = sphi 0, %s141
    %s158 = sphi 0, %s142
    %s162 = sphi 0, %s162
    %s164 = sphi 0, %s162
    %s165 = sphi 0, %s164
    %s179 = sphi 0, %s165
  $region4: #{biconvgru_forward.7} parent=0 // loop_header_branch
    %16 = sbr.rel (%p14) target = $region8
  $region5: #{biconvgru_forward.7} parent=0 // loop_body
    %s18 = ssub.s32 %s13, 1
    %s19 = ssub.s32 %s13, 2
    %s20 = sadd.s32 %s13, 1
    %s21 = ssub.s32 %s13, %s20
    %p22 = scmp.eq.s32.totalorder %s21, 0
    %s24 = sadd.s32 %s23, 1
    %s25 = scalar_select %p22, %s23, %s24
    %p28 = pneg %p22
    %p29 = scmp.eq.s32.totalorder %s13, 3
    %p30 = por %p28, %p29
    %p31 = scmp.ne.s32.totalorder %s23, %s26
    %p32 = scmp.eq.s32.totalorder %s13, 0
    %p33 = por %p31, %p32
    %p34 = scmp.ne.s32.totalorder %s23, %s26
    %p35 = scmp.eq.s32.totalorder %s18, 3
    %p36 = por %p34, %p35
    %p37 = scmp.ne.s32.totalorder %s26, %s27
    %p38 = scmp.eq.s32.totalorder %s18, 0
    %p39 = por %p37, %p38
    %p40 = scmp.ne.s32.totalorder %s26, %s27
    %p41 = scmp.eq.s32.totalorder %s19, 3
    %p42 = por %p40, %p41
    %p44 = scmp.ne.s32.totalorder %s27, %s43
    %p45 = scmp.eq.s32.totalorder %s19, 0
    %p46 = por %p44, %p45
    %s47 = ssub.s32 %s13, %s20
    %p48 = scmp.eq.s32.totalorder %s47, 0
    %s50 = sadd.s32 %s49, 1
    %s51 = scalar_select %p48, %s49, %s50
    %p54 = pneg %p48
    %p55 = scmp.eq.s32.totalorder %s13, 3
    %p56 = por %p54, %p55
    %p57 = scmp.ne.s32.totalorder %s49, %s52
    %p58 = scmp.eq.s32.totalorder %s13, 0
    %p59 = por %p57, %p58
    %p60 = scmp.ne.s32.totalorder %s49, %s52
    %p61 = scmp.eq.s32.totalorder %s18, 3
    %p62 = por %p60, %p61
    %p63 = scmp.ne.s32.totalorder %s52, %s53
    %p64 = scmp.eq.s32.totalorder %s18, 0
    %p65 = por %p63, %p64
    %p66 = scmp.ne.s32.totalorder %s52, %s53
    %p67 = scmp.eq.s32.totalorder %s19, 3
    %p68 = por %p66, %p67
    %p70 = scmp.ne.s32.totalorder %s53, %s69
    %p71 = scmp.eq.s32.totalorder %s19, 0
    %p72 = por %p70, %p71
    %s74 = sadd.s32 %s73, 1
    %p77 = scmp.eq.s32.totalorder %s13, 3
    %p78 = scmp.ne.s32.totalorder %s73, %s75
    %p79 = scmp.eq.s32.totalorder %s13, 0
    %p80 = por %p78, %p79
    %p81 = scmp.ne.s32.totalorder %s73, %s75
    %p82 = scmp.eq.s32.totalorder %s18, 3
    %p83 = por %p81, %p82
    %p84 = scmp.ne.s32.totalorder %s75, %s76
    %p85 = scmp.eq.s32.totalorder %s18, 0
    %p86 = por %p84, %p85
    %p87 = scmp.ne.s32.totalorder %s75, %s76
    %p88 = scmp.eq.s32.totalorder %s19, 3
    %p89 = por %p87, %p88
    %p91 = scmp.ne.s32.totalorder %s76, %s90
    %p92 = scmp.eq.s32.totalorder %s19, 0
    %p93 = por %p91, %p92
    %s95 = sadd.s32 %s94, 1
    %p98 = scmp.eq.s32.totalorder %s13, 3
    %p99 = scmp.ne.s32.totalorder %s94, %s96
    %p100 = scmp.eq.s32.totalorder %s13, 0
    %p101 = por %p99, %p100
    %p102 = scmp.ne.s32.totalorder %s94, %s96
    %p103 = scmp.eq.s32.totalorder %s18, 3
    %p104 = por %p102, %p103
    %p105 = scmp.ne.s32.totalorder %s96, %s97
    %p106 = scmp.eq.s32.totalorder %s18, 0
    %p107 = por %p105, %p106
    %p108 = scmp.ne.s32.totalorder %s96, %s97
    %p109 = scmp.eq.s32.totalorder %s19, 3
    %p110 = por %p108, %p109
    %p112 = scmp.ne.s32.totalorder %s97, %s111
    %p113 = scmp.eq.s32.totalorder %s19, 0
    %p114 = por %p112, %p113
    %s116 = sadd.s32 %s115, 1
    %p119 = scmp.eq.s32.totalorder %s13, 3
    %p120 = scmp.ne.s32.totalorder %s115, %s117
    %p121 = scmp.eq.s32.totalorder %s13, 0
    %p122 = por %p120, %p121
    %p123 = scmp.ne.s32.totalorder %s115, %s117
    %p124 = scmp.eq.s32.totalorder %s18, 3
    %p125 = por %p123, %p124
    %p126 = scmp.ne.s32.totalorder %s117, %s118
    %p127 = scmp.eq.s32.totalorder %s18, 0
    %p128 = por %p126, %p127
    %p129 = scmp.ne.s32.totalorder %s117, %s118
    %p130 = scmp.eq.s32.totalorder %s19, 3
    %p131 = por %p129, %p130
    %p133 = scmp.ne.s32.totalorder %s118, %s132
    %p134 = scmp.eq.s32.totalorder %s19, 0
    %p135 = por %p133, %p134
    %s136 = ssub.s32 %s13, %s20
    %p137 = scmp.eq.s32.totalorder %s136, 0
    %s139 = sadd.s32 %s138, 1
    %s140 = scalar_select %p137, %s138, %s139
    %p143 = pneg %p137
    %p144 = scmp.eq.s32.totalorder %s13, 3
    %p145 = por %p143, %p144
    %p146 = scmp.ne.s32.totalorder %s138, %s141
    %p147 = scmp.eq.s32.totalorder %s13, 0
    %p148 = por %p146, %p147
    %p149 = scmp.ne.s32.totalorder %s138, %s141
    %p150 = scmp.eq.s32.totalorder %s18, 3
    %p151 = por %p149, %p150
    %p152 = scmp.ne.s32.totalorder %s141, %s142
    %p153 = scmp.eq.s32.totalorder %s18, 0
    %p154 = por %p152, %p153
    %p155 = scmp.ne.s32.totalorder %s141, %s142
    %p156 = scmp.eq.s32.totalorder %s19, 3
    %p157 = por %p155, %p156
    %p159 = scmp.ne.s32.totalorder %s142, %s158
    %p160 = scmp.eq.s32.totalorder %s19, 0
    %p161 = por %p159, %p160
    %s163 = sadd.s32 %s162, 1
    %p166 = scmp.eq.s32.totalorder %s13, 3
    %p167 = scmp.ne.s32.totalorder %s162, %s164
    %p168 = scmp.eq.s32.totalorder %s13, 0
    %p169 = por %p167, %p168
    %p170 = scmp.ne.s32.totalorder %s162, %s164
    %p171 = scmp.eq.s32.totalorder %s18, 3
    %p172 = por %p170, %p171
    %p173 = scmp.ne.s32.totalorder %s164, %s165
    %p174 = scmp.eq.s32.totalorder %s18, 0
    %p175 = por %p173, %p174
    %p176 = scmp.ne.s32.totalorder %s164, %s165
    %p177 = scmp.eq.s32.totalorder %s19, 3
    %p178 = por %p176, %p177
    %p180 = scmp.ne.s32.totalorder %s165, %s179
    %p181 = scmp.eq.s32.totalorder %s19, 0
    %p182 = por %p180, %p181
    %p183 = scmp.le.s32.totalorder 1, %s13
    %p184 = scmp.lt.s32.totalorder %s13, 5
    %p185 = pnand %p183, %p184
    %p186 = pneg %p185
    // Predicated region
    $region9: #{biconvgru_forward.7} parent=5 // pred_check
      _
    $region10: #{biconvgru_forward.7} parent=5 // pred_check_branch
      %188 = sbr.rel (%p185) target = $region12
    $region11: #{biconvgru_forward.7} parent=5 // pred_region
      %s189 = ssub.s32 %s13, 1
      // Predicated region
      $region13: #{biconvgru_forward.7} parent=11 // pred_check
        %p190 = pneg %p86
      $region14: #{biconvgru_forward.7} parent=11 // pred_check_branch
        %192 = sbr.rel (%p190) target = $region16
      $region15: #{biconvgru_forward.7} parent=11 // pred_region
        _
      $region16: #{biconvgru_forward.7} parent=11 // pred_fallthru
        _
      // Predicated region
      $region17: #{biconvgru_forward.7} parent=11 // pred_check
        %p193 = pneg %p107
      $region18: #{biconvgru_forward.7} parent=11 // pred_check_branch
        %195 = sbr.rel (%p193) target = $region20
      $region19: #{biconvgru_forward.7} parent=11 // pred_region
        _
      $region20: #{biconvgru_forward.7} parent=11 // pred_fallthru
        _
      // Predicated region
      $region21: #{biconvgru_forward.7} parent=11 // pred_check
        %p196 = pneg %p128
      $region22: #{biconvgru_forward.7} parent=11 // pred_check_branch
        %198 = sbr.rel (%p196) target = $region24
      $region23: #{biconvgru_forward.7} parent=11 // pred_region
        _
      $region24: #{biconvgru_forward.7} parent=11 // pred_fallthru
        _
    $region12: #{biconvgru_forward.7} parent=5 // pred_fallthru
      _
    %p199 = scmp.lt.s32.totalorder %s13, 4
    // Predicated region
    $region25: #{biconvgru_forward.7} parent=5 // pred_check
      %p200 = pneg %p199
    $region26: #{biconvgru_forward.7} parent=5 // pred_check_branch
      %202 = sbr.rel (%p200) target = $region28
    $region27: #{biconvgru_forward.7} parent=5 // pred_region
      // Predicated region
      $region29: #{biconvgru_forward.7} parent=27 // pred_check
        %p203 = pneg %p33
      $region30: #{biconvgru_forward.7} parent=27 // pred_check_branch
        %205 = sbr.rel (%p203) target = $region32
      $region31: #{biconvgru_forward.7} parent=27 // pred_region
        %p206 = scmp.lt.s32.totalorder %s13, 3
        %s207 = scalar_select %p206, %s13, 3
        %s208 = smul.addr %s207, 2
        %s209 = smul.addr %s208, 8
        %s210 = scalar_lea.vmem %s0, %s209
      $region32: #{biconvgru_forward.7} parent=27 // pred_fallthru
        _
      // Predicated region
      $region33: #{biconvgru_forward.7} parent=27 // pred_check
        %p211 = pneg %p59
      $region34: #{biconvgru_forward.7} parent=27 // pred_check_branch
        %213 = sbr.rel (%p211) target = $region36
      $region35: #{biconvgru_forward.7} parent=27 // pred_region
        %p214 = scmp.lt.s32.totalorder %s13, 3
        %s215 = scalar_select %p214, %s13, 3
        %s216 = smul.addr %s215, 2
        %s217 = smul.addr %s216, 8
        %s218 = scalar_lea.vmem %s1, %s217
      $region36: #{biconvgru_forward.7} parent=27 // pred_fallthru
        _
    $region28: #{biconvgru_forward.7} parent=5 // pred_fallthru
      _
    %p219 = scmp.le.s32.totalorder 1, %s13
    %p220 = scmp.lt.s32.totalorder %s13, 5
    %p221 = pnand %p219, %p220
    %p222 = pneg %p221
    // Predicated region
    $region37: #{biconvgru_forward.7} parent=5 // pred_check
      _
    $region38: #{biconvgru_forward.7} parent=5 // pred_check_branch
      %224 = sbr.rel (%p221) target = $region40
    $region39: #{biconvgru_forward.7} parent=5 // pred_region
      %s225 = ssub.s32 %s13, 1
      %p226 = scmp.lt.s32.totalorder %s18, 3
      %s227 = scalar_select %p226, %s18, 3
      %s228 = smul.addr %s227, 2
      %s229 = smul.addr %s228, 8
      %s230 = scalar_lea.vmem %s0, %s229
      %p231 = pneg %p39
      %p232 = pneg %p36
      %p233 = scmp.lt.s32.totalorder %s18, 3
      %s234 = scalar_select %p233, %s18, 3
      %s235 = smul.addr %s234, 2
      %s236 = smul.addr %s235, 8
      %s237 = scalar_lea.vmem %s1, %s236
      %p238 = pneg %p65
      %p239 = pneg %p62
      %p240 = pneg %p86
      %p241 = pneg %p83
      %p242 = pneg %p107
      %p243 = pneg %p104
      %p244 = pneg %p128
      %p245 = pneg %p125
      %p246 = pneg %p154
      %p247 = pneg %p151
      %p248 = scmp.lt.s32.totalorder %s18, 3
      %s249 = scalar_select %p248, %s18, 3
      %s250 = smul.addr %s249, 2
      %s251 = smul.addr %s250, 8
      %s252 = scalar_lea.vmem %s5, %s251
      %p253 = pneg %p175
      %p254 = pneg %p172
      %p255 = scmp.lt.s32.totalorder %s18, 3
      %s256 = scalar_select %p255, %s18, 3
      %s257 = smul.addr %s256, 2
      %s258 = smul.addr %s257, 8
      %s259 = scalar_lea.vmem %s0, %s258
      %p260 = scmp.lt.s32.totalorder %s18, 3
      %s261 = scalar_select %p260, %s18, 3
      %s262 = smul.addr %s261, 2
      %s263 = smul.addr %s262, 8
      %s264 = scalar_lea.vmem %s1, %s263
      %p265 = scmp.lt.s32.totalorder %s18, 3
      %s266 = scalar_select %p265, %s18, 3
      %s267 = smul.addr %s266, 2
      %s268 = smul.addr %s267, 8
      %s269 = scalar_lea.vmem %s5, %s268
      %p270 = scmp.eq.s32.totalorder %s18, 0
      // Predicated region
      $region41: #{biconvgru_forward.7} parent=39 // pred_check
        %p271 = pneg %p270
      $region42: #{biconvgru_forward.7} parent=39 // pred_check_branch
        %273 = sbr.rel (%p271) target = $region44
      $region43: #{biconvgru_forward.7} parent=39 // pred_region
        %274 = vst [vmem:[#allocation2] sm:$0xff] 0.0
        %vm275 = vcmask 769024
        %276 = vst.msk [vmem:[#allocation2 + $0x8] sm:$0xff] %vm275, 0.0
        %277 = vst [vmem:[#allocation2 + $0x10] sm:$0xff] 0.0
        %278 = vst.msk [vmem:[#allocation2 + $0x18] sm:$0xff] %vm275, 0.0
      $region44: #{biconvgru_forward.7} parent=39 // pred_fallthru
        _
      %v279 = vld [vmem:[%s259] sm:$0xff]
      %v280 = vld [vmem:[%s259 + $0x8] sm:$0xff]
      %283 = vrot.lane.b32.xlu0 %v279, 11
      %v284 = vpop.permute.xlu0 %283
      %285 = vrot.lane.b32.xlu0 %v280, 11
      %v286 = vpop.permute.xlu0 %285
      %vm287 = vcmask 89088
      %v288 = vsel %vm287, %v284, %v286
      %vm291 = vcmask 1047640
      %292 = vst.msk [vmem:[#allocation2] sm:$0xff] %vm291, %v284
      %vm293 = vcmask 678912
      %294 = vst.msk [vmem:[#allocation2 + $0x8] sm:$0xff] %vm293, %v288
      %v295 = vld [vmem:[%s264] sm:$0xff]
      %v296 = vld [vmem:[%s264 + $0x8] sm:$0xff]
      %299 = vrot.lane.b32.xlu0 %v295, 11
      %v300 = vpop.permute.xlu0 %299
      %301 = vrot.lane.b32.xlu0 %v296, 11
      %v302 = vpop.permute.xlu0 %301
      %v303 = vsel %vm287, %v300, %v302
      %306 = vst.msk [vmem:[#allocation2 + $0x10] sm:$0xff] %vm291, %v300
      %307 = vst.msk [vmem:[#allocation2 + $0x18] sm:$0xff] %vm293, %v303
      %v308 = vld [vmem:[%s2] sm:$0xff]
      %v309 = vld [vmem:[#allocation2] sm:$0xff]
      %v310 = vld [vmem:[#allocation2 + $0x8] sm:$0xff]
      %v311 = vld [vmem:[#allocation2 + $0x10] sm:$0xff]
      %v312 = vld [vmem:[#allocation2 + $0x18] sm:$0xff]
      %s313 = scalar_lea.vmem %s2, 8
      %v314 = vld [vmem:[%s313] sm:$0xff]
      %319 = vrot.lane.b32.xlu0 %v309, 127
      %v320 = vpop.permute.xlu0 %319
      %321 = vrot.lane.b32.xlu0 %v310, 127
      %v322 = vpop.permute.xlu0 %321
      %323 = vrot.lane.b32.xlu0 %v311, 127
      %v324 = vpop.permute.xlu0 %323
      %325 = vrot.lane.b32.xlu0 %v312, 127
      %v326 = vpop.permute.xlu0 %325
      %vm327 = vcmask 1039360
      %v328 = vsel %vm327, %v320, %v322
      %v329 = vsel %vm327, %v324, %v326
      %vm334 = vcmask 130048
      %v336 = vsel %vm334, %v314, 0
      %338 = vmatprep.subr.mxu0 0.0
      %339 = vmatpush1.msra.mxu0 0.0
      %340 = vmatprep.subr.mxu0 0.0
      %341 = vmatpush1.msra.mxu0 0.0
      %342 = vmatprep.subr.mxu0 0.0
      %343 = vmatpush1.msra.mxu0 0.0
      %344 = vmatprep.subr.mxu0 0.0
      %345 = vmatpush1.msra.mxu0 0.0
      %346 = vmatprep.subr.mxu0 0.0
      %347 = vmatpush1.msra.mxu0 0.0
      %348 = vmatprep.subr.mxu0 0.0
      %349 = vmatpush1.msra.mxu0 0.0
      %350 = vmatprep.subr.mxu0 0.0
      %351 = vmatpush1.msra.mxu0 0.0
      %352 = vmatprep.subr.mxu0 0.0
      %353 = vmatpush1.msra.mxu0 0.0
      %354 = vmatprep.subr.mxu0 0.0
      %355 = vmatpush1.msra.mxu0 0.0
      %356 = vmatprep.subr.mxu0 0.0
      %357 = vmatpush1.msra.mxu0 0.0
      %358 = vmatprep.subr.mxu0 0.0
      %359 = vmatpush1.msra.mxu0 0.0
      %360 = vmatprep.subr.mxu0 0.0
      %361 = vmatpush1.msra.mxu0 0.0
      %362 = vmatprep.subr.mxu0 0.0
      %363 = vmatpush1.msra.mxu0 0.0
      %364 = vmatprep.subr.mxu0 0.0
      %365 = vmatpush1.msra.mxu0 0.0
      %366 = vmatprep.subr.mxu0 %v326
      %367 = vmatpush1.msra.mxu0 %v329
      %368 = vmatprep.subr.mxu0 %v322
      %369 = vmatpush1.msra.mxu0 %v328
      %370 = vmatprep.subr.mxu0 0.0
      %371 = vmatpush2.msra.mxu0 0.0
      %372 = vmatprep.subr.mxu0 0.0
      %373 = vmatpush2.msra.mxu0 0.0
      %374 = vmatprep.subr.mxu0 0.0
      %375 = vmatpush2.msra.mxu0 0.0
      %376 = vmatprep.subr.mxu0 0.0
      %377 = vmatpush2.msra.mxu0 0.0
      %378 = vmatprep.subr.mxu0 0.0
      %379 = vmatpush2.msra.mxu0 0.0
      %380 = vmatprep.subr.mxu0 0.0
      %381 = vmatpush2.msra.mxu0 0.0
      %382 = vmatprep.subr.mxu0 0.0
      %383 = vmatpush2.msra.mxu0 0.0
      %384 = vmatprep.subr.mxu0 0.0
      %385 = vmatpush2.msra.mxu0 0.0
      %386 = vmatprep.subr.mxu0 0.0
      %387 = vmatpush2.msra.mxu0 0.0
      %388 = vmatprep.subr.mxu0 0.0
      %389 = vmatpush2.msra.mxu0 0.0
      %390 = vmatprep.subr.mxu0 0.0
      %391 = vmatpush2.msra.mxu0 0.0
      %392 = vmatprep.subr.mxu0 0.0
      %393 = vmatpush2.msra.mxu0 0.0
      %394 = vmatprep.subr.mxu0 0.0
      %395 = vmatpush2.msra.mxu0 0.0
      %396 = vmatprep.subr.mxu0 0.0
      %397 = vmatpush2.msra.mxu0 0.0
      %398 = vmatprep.subr.mxu0 0.0
      %399 = vmatpush2.msra.mxu0 0.0
      %400 = vmatprep.subr.mxu0 0.0
      %401 = vmatpush2.msra.mxu0 0.0
      %402 = vmatprep.mubr.f32.mxu0 0.0
      %403 = vmatmul.mubr.f32.gmra.mxu0 %v336
      %v404 = vpop.f32.mrf.mxu0
      %v405 = vadd.f32 0.0, %v404
      %v406 = vpop.f32.mrf.mxu0
      %v407 = vadd.f32 0.0, %v406
      %408 = vdwg.mxu0
      %v410 = vsel %vm334, %v308, 0
      %412 = vmatprep.subr.mxu0 0.0
      %413 = vmatpush1.msra.mxu0 0.0
      %414 = vmatprep.subr.mxu0 0.0
      %415 = vmatpush1.msra.mxu0 0.0
      %416 = vmatprep.subr.mxu0 0.0
      %417 = vmatpush1.msra.mxu0 0.0
      %418 = vmatprep.subr.mxu0 0.0
      %419 = vmatpush1.msra.mxu0 0.0
      %420 = vmatprep.subr.mxu0 0.0
      %421 = vmatpush1.msra.mxu0 0.0
      %422 = vmatprep.subr.mxu0 0.0
      %423 = vmatpush1.msra.mxu0 0.0
      %424 = vmatprep.subr.mxu0 0.0
      %425 = vmatpush1.msra.mxu0 0.0
      %426 = vmatprep.subr.mxu0 0.0
      %427 = vmatpush1.msra.mxu0 0.0
      %428 = vmatprep.subr.mxu0 0.0
      %429 = vmatpush1.msra.mxu0 0.0
      %430 = vmatprep.subr.mxu0 0.0
      %431 = vmatpush1.msra.mxu0 0.0
      %432 = vmatprep.subr.mxu0 0.0
      %433 = vmatpush1.msra.mxu0 0.0
      %434 = vmatprep.subr.mxu0 0.0
      %435 = vmatpush1.msra.mxu0 0.0
      %436 = vmatprep.subr.mxu0 0.0
      %437 = vmatpush1.msra.mxu0 0.0
      %438 = vmatprep.subr.mxu0 0.0
      %439 = vmatpush1.msra.mxu0 0.0
      %440 = vmatprep.subr.mxu0 %v312
      %441 = vmatpush1.msra.mxu0 %v311
      %442 = vmatprep.subr.mxu0 %v310
      %443 = vmatpush1.msra.mxu0 %v309
      %444 = vmatprep.subr.mxu0 0.0
      %445 = vmatpush2.msra.mxu0 0.0
      %446 = vmatprep.subr.mxu0 0.0
      %447 = vmatpush2.msra.mxu0 0.0
      %448 = vmatprep.subr.mxu0 0.0
      %449 = vmatpush2.msra.mxu0 0.0
      %450 = vmatprep.subr.mxu0 0.0
      %451 = vmatpush2.msra.mxu0 0.0
      %452 = vmatprep.subr.mxu0 0.0
      %453 = vmatpush2.msra.mxu0 0.0
      %454 = vmatprep.subr.mxu0 0.0
      %455 = vmatpush2.msra.mxu0 0.0
      %456 = vmatprep.subr.mxu0 0.0
      %457 = vmatpush2.msra.mxu0 0.0
      %458 = vmatprep.subr.mxu0 0.0
      %459 = vmatpush2.msra.mxu0 0.0
      %460 = vmatprep.subr.mxu0 0.0
      %461 = vmatpush2.msra.mxu0 0.0
      %462 = vmatprep.subr.mxu0 0.0
      %463 = vmatpush2.msra.mxu0 0.0
      %464 = vmatprep.subr.mxu0 0.0
      %465 = vmatpush2.msra.mxu0 0.0
      %466 = vmatprep.subr.mxu0 0.0
      %467 = vmatpush2.msra.mxu0 0.0
      %468 = vmatprep.subr.mxu0 0.0
      %469 = vmatpush2.msra.mxu0 0.0
      %470 = vmatprep.subr.mxu0 0.0
      %471 = vmatpush2.msra.mxu0 0.0
      %472 = vmatprep.subr.mxu0 0.0
      %473 = vmatpush2.msra.mxu0 0.0
      %474 = vmatprep.subr.mxu0 0.0
      %475 = vmatpush2.msra.mxu0 0.0
      %476 = vmatprep.mubr.f32.mxu0 0.0
      %477 = vmatmul.mubr.f32.gmra.mxu0 %v410
      %v478 = vpop.f32.mrf.mxu0
      %v479 = vadd.f32 %v405, %v478
      %v480 = vpop.f32.mrf.mxu0
      %v481 = vadd.f32 %v407, %v480
      %482 = vdwg.mxu0
      %s483 = scalar_lea.vmem %s2, 16
      %v484 = vld [vmem:[%s483] sm:$0xff]
      %485 = vrot.lane.b32.xlu0 %v309, 126
      %v486 = vpop.permute.xlu0 %485
      %487 = vrot.lane.b32.xlu0 %v310, 126
      %v488 = vpop.permute.xlu0 %487
      %489 = vrot.lane.b32.xlu0 %v311, 126
      %v490 = vpop.permute.xlu0 %489
      %491 = vrot.lane.b32.xlu0 %v312, 126
      %v492 = vpop.permute.xlu0 %491
      %vm493 = vcmask 1031168
      %v494 = vsel %vm493, %v486, %v488
      %v495 = vsel %vm493, %v490, %v492
      %v501 = vsel %vm334, %v484, 0
      %503 = vmatprep.subr.mxu0 0.0
      %504 = vmatpush1.msra.mxu0 0.0
      %505 = vmatprep.subr.mxu0 0.0
      %506 = vmatpush1.msra.mxu0 0.0
      %507 = vmatprep.subr.mxu0 0.0
      %508 = vmatpush1.msra.mxu0 0.0
      %509 = vmatprep.subr.mxu0 0.0
      %510 = vmatpush1.msra.mxu0 0.0
      %511 = vmatprep.subr.mxu0 0.0
      %512 = vmatpush1.msra.mxu0 0.0
      %513 = vmatprep.subr.mxu0 0.0
      %514 = vmatpush1.msra.mxu0 0.0
      %515 = vmatprep.subr.mxu0 0.0
      %516 = vmatpush1.msra.mxu0 0.0
      %517 = vmatprep.subr.mxu0 0.0
      %518 = vmatpush1.msra.mxu0 0.0
      %519 = vmatprep.subr.mxu0 0.0
      %520 = vmatpush1.msra.mxu0 0.0
      %521 = vmatprep.subr.mxu0 0.0
      %522 = vmatpush1.msra.mxu0 0.0
      %523 = vmatprep.subr.mxu0 0.0
      %524 = vmatpush1.msra.mxu0 0.0
      %525 = vmatprep.subr.mxu0 0.0
      %526 = vmatpush1.msra.mxu0 0.0
      %527 = vmatprep.subr.mxu0 0.0
      %528 = vmatpush1.msra.mxu0 0.0
      %529 = vmatprep.subr.mxu0 0.0
      %530 = vmatpush1.msra.mxu0 0.0
      %531 = vmatprep.subr.mxu0 %v492
      %532 = vmatpush1.msra.mxu0 %v495
      %533 = vmatprep.subr.mxu0 %v488
      %534 = vmatpush1.msra.mxu0 %v494
      %535 = vmatprep.subr.mxu0 0.0
      %536 = vmatpush2.msra.mxu0 0.0
      %537 = vmatprep.subr.mxu0 0.0
      %538 = vmatpush2.msra.mxu0 0.0
      %539 = vmatprep.subr.mxu0 0.0
      %540 = vmatpush2.msra.mxu0 0.0
      %541 = vmatprep.subr.mxu0 0.0
      %542 = vmatpush2.msra.mxu0 0.0
      %543 = vmatprep.subr.mxu0 0.0
      %544 = vmatpush2.msra.mxu0 0.0
      %545 = vmatprep.subr.mxu0 0.0
      %546 = vmatpush2.msra.mxu0 0.0
      %547 = vmatprep.subr.mxu0 0.0
      %548 = vmatpush2.msra.mxu0 0.0
      %549 = vmatprep.subr.mxu0 0.0
      %550 = vmatpush2.msra.mxu0 0.0
      %551 = vmatprep.subr.mxu0 0.0
      %552 = vmatpush2.msra.mxu0 0.0
      %553 = vmatprep.subr.mxu0 0.0
      %554 = vmatpush2.msra.mxu0 0.0
      %555 = vmatprep.subr.mxu0 0.0
      %556 = vmatpush2.msra.mxu0 0.0
      %557 = vmatprep.subr.mxu0 0.0
      %558 = vmatpush2.msra.mxu0 0.0
      %559 = vmatprep.subr.mxu0 0.0
      %560 = vmatpush2.msra.mxu0 0.0
      %561 = vmatprep.subr.mxu0 0.0
      %562 = vmatpush2.msra.mxu0 0.0
      %563 = vmatprep.subr.mxu0 0.0
      %564 = vmatpush2.msra.mxu0 0.0
      %565 = vmatprep.subr.mxu0 0.0
      %566 = vmatpush2.msra.mxu0 0.0
      %567 = vmatprep.mubr.f32.mxu0 0.0
      %568 = vmatmul.mubr.f32.gmra.mxu0 %v501
      %v569 = vpop.f32.mrf.mxu0
      %v570 = vadd.f32 0.0, %v569
      %v571 = vpop.f32.mrf.mxu0
      %v572 = vadd.f32 0.0, %v571
      %573 = vdwg.mxu0
      %v574 = vadd.f32 %v479, %v570
      %v575 = vadd.f32 %v481, %v572
      %s576 = scalar_lea.vmem %s2, 24
      %v577 = vld [vmem:[%s576] sm:$0xff]
      %578 = vrot.lane.b32.xlu0 %v309, 118
      %v579 = vpop.permute.xlu0 %578
      %580 = vrot.lane.b32.xlu0 %v310, 118
      %v581 = vpop.permute.xlu0 %580
      %582 = vrot.lane.b32.xlu0 %v311, 118
      %v583 = vpop.permute.xlu0 %582
      %584 = vrot.lane.b32.xlu0 %v312, 118
      %v585 = vpop.permute.xlu0 %584
      %vm586 = vcmask 965632
      %v587 = vsel %vm586, %v579, %v581
      %v588 = vsel %vm586, %v583, %v585
      %v594 = vsel %vm334, %v577, 0
      %596 = vmatprep.subr.mxu0 0.0
      %597 = vmatpush1.msra.mxu0 0.0
      %598 = vmatprep.subr.mxu0 0.0
      %599 = vmatpush1.msra.mxu0 0.0
      %600 = vmatprep.subr.mxu0 0.0
      %601 = vmatpush1.msra.mxu0 0.0
      %602 = vmatprep.subr.mxu0 0.0
      %603 = vmatpush1.msra.mxu0 0.0
      %604 = vmatprep.subr.mxu0 0.0
      %605 = vmatpush1.msra.mxu0 0.0
      %606 = vmatprep.subr.mxu0 0.0
      %607 = vmatpush1.msra.mxu0 0.0
      %608 = vmatprep.subr.mxu0 0.0
      %609 = vmatpush1.msra.mxu0 0.0
      %610 = vmatprep.subr.mxu0 0.0
      %611 = vmatpush1.msra.mxu0 0.0
      %612 = vmatprep.subr.mxu0 0.0
      %613 = vmatpush1.msra.mxu0 0.0
      %614 = vmatprep.subr.mxu0 0.0
      %615 = vmatpush1.msra.mxu0 0.0
      %616 = vmatprep.subr.mxu0 0.0
      %617 = vmatpush1.msra.mxu0 0.0
      %618 = vmatprep.subr.mxu0 0.0
      %619 = vmatpush1.msra.mxu0 0.0
      %620 = vmatprep.subr.mxu0 0.0
      %621 = vmatpush1.msra.mxu0 0.0
      %622 = vmatprep.subr.mxu0 0.0
      %623 = vmatpush1.msra.mxu0 0.0
      %624 = vmatprep.subr.mxu0 %v585
      %625 = vmatpush1.msra.mxu0 %v588
      %626 = vmatprep.subr.mxu0 %v581
      %627 = vmatpush1.msra.mxu0 %v587
      %628 = vmatprep.subr.mxu0 0.0
      %629 = vmatpush2.msra.mxu0 0.0
      %630 = vmatprep.subr.mxu0 0.0
      %631 = vmatpush2.msra.mxu0 0.0
      %632 = vmatprep.subr.mxu0 0.0
      %633 = vmatpush2.msra.mxu0 0.0
      %634 = vmatprep.subr.mxu0 0.0
      %635 = vmatpush2.msra.mxu0 0.0
      %636 = vmatprep.subr.mxu0 0.0
      %637 = vmatpush2.msra.mxu0 0.0
      %638 = vmatprep.subr.mxu0 0.0
      %639 = vmatpush2.msra.mxu0 0.0
      %640 = vmatprep.subr.mxu0 0.0
      %641 = vmatpush2.msra.mxu0 0.0
      %642 = vmatprep.subr.mxu0 0.0
      %643 = vmatpush2.msra.mxu0 0.0
      %644 = vmatprep.subr.mxu0 0.0
      %645 = vmatpush2.msra.mxu0 0.0
      %646 = vmatprep.subr.mxu0 0.0
      %647 = vmatpush2.msra.mxu0 0.0
      %648 = vmatprep.subr.mxu0 0.0
      %649 = vmatpush2.msra.mxu0 0.0
      %650 = vmatprep.subr.mxu0 0.0
      %651 = vmatpush2.msra.mxu0 0.0
      %652 = vmatprep.subr.mxu0 0.0
      %653 = vmatpush2.msra.mxu0 0.0
      %654 = vmatprep.subr.mxu0 0.0
      %655 = vmatpush2.msra.mxu0 0.0
      %656 = vmatprep.subr.mxu0 0.0
      %657 = vmatpush2.msra.mxu0 0.0
      %658 = vmatprep.subr.mxu0 0.0
      %659 = vmatpush2.msra.mxu0 0.0
      %660 = vmatprep.mubr.f32.mxu0 0.0
      %661 = vmatmul.mubr.f32.gmra.mxu0 %v594
      %v662 = vpop.f32.mrf.mxu0
      %v663 = vadd.f32 0.0, %v662
      %v664 = vpop.f32.mrf.mxu0
      %v665 = vadd.f32 0.0, %v664
      %666 = vdwg.mxu0
      %v667 = vadd.f32 %v574, %v663
      %v668 = vadd.f32 %v575, %v665
      %s669 = scalar_lea.vmem %s2, 32
      %v670 = vld [vmem:[%s669] sm:$0xff]
      %671 = vrot.lane.b32.xlu0 %v309, 117
      %v672 = vpop.permute.xlu0 %671
      %673 = vrot.lane.b32.xlu0 %v310, 117
      %v674 = vpop.permute.xlu0 %673
      %675 = vrot.lane.b32.xlu0 %v311, 117
      %v676 = vpop.permute.xlu0 %675
      %677 = vrot.lane.b32.xlu0 %v312, 117
      %v678 = vpop.permute.xlu0 %677
      %vm679 = vcmask 957440
      %v680 = vsel %vm679, %v672, %v674
      %v681 = vsel %vm679, %v676, %v678
      %v687 = vsel %vm334, %v670, 0
      %689 = vmatprep.subr.mxu0 0.0
      %690 = vmatpush1.msra.mxu0 0.0
      %691 = vmatprep.subr.mxu0 0.0
      %692 = vmatpush1.msra.mxu0 0.0
      %693 = vmatprep.subr.mxu0 0.0
      %694 = vmatpush1.msra.mxu0 0.0
      %695 = vmatprep.subr.mxu0 0.0
      %696 = vmatpush1.msra.mxu0 0.0
      %697 = vmatprep.subr.mxu0 0.0
      %698 = vmatpush1.msra.mxu0 0.0
      %699 = vmatprep.subr.mxu0 0.0
      %700 = vmatpush1.msra.mxu0 0.0
      %701 = vmatprep.subr.mxu0 0.0
      %702 = vmatpush1.msra.mxu0 0.0
      %703 = vmatprep.subr.mxu0 0.0
      %704 = vmatpush1.msra.mxu0 0.0
      %705 = vmatprep.subr.mxu0 0.0
      %706 = vmatpush1.msra.mxu0 0.0
      %707 = vmatprep.subr.mxu0 0.0
      %708 = vmatpush1.msra.mxu0 0.0
      %709 = vmatprep.subr.mxu0 0.0
      %710 = vmatpush1.msra.mxu0 0.0
      %711 = vmatprep.subr.mxu0 0.0
      %712 = vmatpush1.msra.mxu0 0.0
      %713 = vmatprep.subr.mxu0 0.0
      %714 = vmatpush1.msra.mxu0 0.0
      %715 = vmatprep.subr.mxu0 0.0
      %716 = vmatpush1.msra.mxu0 0.0
      %717 = vmatprep.subr.mxu0 %v678
      %718 = vmatpush1.msra.mxu0 %v681
      %719 = vmatprep.subr.mxu0 %v674
      %720 = vmatpush1.msra.mxu0 %v680
      %721 = vmatprep.subr.mxu0 0.0
      %722 = vmatpush2.msra.mxu0 0.0
      %723 = vmatprep.subr.mxu0 0.0
      %724 = vmatpush2.msra.mxu0 0.0
      %725 = vmatprep.subr.mxu0 0.0
      %726 = vmatpush2.msra.mxu0 0.0
      %727 = vmatprep.subr.mxu0 0.0
      %728 = vmatpush2.msra.mxu0 0.0
      %729 = vmatprep.subr.mxu0 0.0
      %730 = vmatpush2.msra.mxu0 0.0
      %731 = vmatprep.subr.mxu0 0.0
      %732 = vmatpush2.msra.mxu0 0.0
      %733 = vmatprep.subr.mxu0 0.0
      %734 = vmatpush2.msra.mxu0 0.0
      %735 = vmatprep.subr.mxu0 0.0
      %736 = vmatpush2.msra.mxu0 0.0
      %737 = vmatprep.subr.mxu0 0.0
      %738 = vmatpush2.msra.mxu0 0.0
      %739 = vmatprep.subr.mxu0 0.0
      %740 = vmatpush2.msra.mxu0 0.0
      %741 = vmatprep.subr.mxu0 0.0
      %742 = vmatpush2.msra.mxu0 0.0
      %743 = vmatprep.subr.mxu0 0.0
      %744 = vmatpush2.msra.mxu0 0.0
      %745 = vmatprep.subr.mxu0 0.0
      %746 = vmatpush2.msra.mxu0 0.0
      %747 = vmatprep.subr.mxu0 0.0
      %748 = vmatpush2.msra.mxu0 0.0
      %749 = vmatprep.subr.mxu0 0.0
      %750 = vmatpush2.msra.mxu0 0.0
      %751 = vmatprep.subr.mxu0 0.0
      %752 = vmatpush2.msra.mxu0 0.0
      %753 = vmatprep.mubr.f32.mxu0 0.0
      %754 = vmatmul.mubr.f32.gmra.mxu0 %v687
      %v755 = vpop.f32.mrf.mxu0
      %v756 = vadd.f32 0.0, %v755
      %v757 = vpop.f32.mrf.mxu0
      %v758 = vadd.f32 0.0, %v757
      %759 = vdwg.mxu0
      %v760 = vadd.f32 %v667, %v756
      %v761 = vadd.f32 %v668, %v758
      %s762 = scalar_lea.vmem %s2, 40
      %v763 = vld [vmem:[%s762] sm:$0xff]
      %764 = vrot.lane.b32.xlu0 %v309, 116
      %v765 = vpop.permute.xlu0 %764
      %766 = vrot.lane.b32.xlu0 %v310, 116
      %v767 = vpop.permute.xlu0 %766
      %768 = vrot.lane.b32.xlu0 %v311, 116
      %v769 = vpop.permute.xlu0 %768
      %770 = vrot.lane.b32.xlu0 %v312, 116
      %v771 = vpop.permute.xlu0 %770
      %vm772 = vcmask 949248
      %v773 = vsel %vm772, %v765, %v767
      %v774 = vsel %vm772, %v769, %v771
      %v780 = vsel %vm334, %v763, 0
      %782 = vmatprep.subr.mxu0 0.0
      %783 = vmatpush1.msra.mxu0 0.0
      %784 = vmatprep.subr.mxu0 0.0
      %785 = vmatpush1.msra.mxu0 0.0
      %786 = vmatprep.subr.mxu0 0.0
      %787 = vmatpush1.msra.mxu0 0.0
      %788 = vmatprep.subr.mxu0 0.0
      %789 = vmatpush1.msra.mxu0 0.0
      %790 = vmatprep.subr.mxu0 0.0
      %791 = vmatpush1.msra.mxu0 0.0
      %792 = vmatprep.subr.mxu0 0.0
      %793 = vmatpush1.msra.mxu0 0.0
      %794 = vmatprep.subr.mxu0 0.0
      %795 = vmatpush1.msra.mxu0 0.0
      %796 = vmatprep.subr.mxu0 0.0
      %797 = vmatpush1.msra.mxu0 0.0
      %798 = vmatprep.subr.mxu0 0.0
      %799 = vmatpush1.msra.mxu0 0.0
      %800 = vmatprep.subr.mxu0 0.0
      %801 = vmatpush1.msra.mxu0 0.0
      %802 = vmatprep.subr.mxu0 0.0
      %803 = vmatpush1.msra.mxu0 0.0
      %804 = vmatprep.subr.mxu0 0.0
      %805 = vmatpush1.msra.mxu0 0.0
      %806 = vmatprep.subr.mxu0 0.0
      %807 = vmatpush1.msra.mxu0 0.0
      %808 = vmatprep.subr.mxu0 0.0
      %809 = vmatpush1.msra.mxu0 0.0
      %810 = vmatprep.subr.mxu0 %v771
      %811 = vmatpush1.msra.mxu0 %v774
      %812 = vmatprep.subr.mxu0 %v767
      %813 = vmatpush1.msra.mxu0 %v773
      %814 = vmatprep.subr.mxu0 0.0
      %815 = vmatpush2.msra.mxu0 0.0
      %816 = vmatprep.subr.mxu0 0.0
      %817 = vmatpush2.msra.mxu0 0.0
      %818 = vmatprep.subr.mxu0 0.0
      %819 = vmatpush2.msra.mxu0 0.0
      %820 = vmatprep.subr.mxu0 0.0
      %821 = vmatpush2.msra.mxu0 0.0
      %822 = vmatprep.subr.mxu0 0.0
      %823 = vmatpush2.msra.mxu0 0.0
      %824 = vmatprep.subr.mxu0 0.0
      %825 = vmatpush2.msra.mxu0 0.0
      %826 = vmatprep.subr.mxu0 0.0
      %827 = vmatpush2.msra.mxu0 0.0
      %828 = vmatprep.subr.mxu0 0.0
      %829 = vmatpush2.msra.mxu0 0.0
      %830 = vmatprep.subr.mxu0 0.0
      %831 = vmatpush2.msra.mxu0 0.0
      %832 = vmatprep.subr.mxu0 0.0
      %833 = vmatpush2.msra.mxu0 0.0
      %834 = vmatprep.subr.mxu0 0.0
      %835 = vmatpush2.msra.mxu0 0.0
      %836 = vmatprep.subr.mxu0 0.0
      %837 = vmatpush2.msra.mxu0 0.0
      %838 = vmatprep.subr.mxu0 0.0
      %839 = vmatpush2.msra.mxu0 0.0
      %840 = vmatprep.subr.mxu0 0.0
      %841 = vmatpush2.msra.mxu0 0.0
      %842 = vmatprep.subr.mxu0 0.0
      %843 = vmatpush2.msra.mxu0 0.0
      %844 = vmatprep.subr.mxu0 0.0
      %845 = vmatpush2.msra.mxu0 0.0
      %846 = vmatprep.mubr.f32.mxu0 0.0
      %847 = vmatmul.mubr.f32.gmra.mxu0 %v780
      %v848 = vpop.f32.mrf.mxu0
      %v849 = vadd.f32 0.0, %v848
      %v850 = vpop.f32.mrf.mxu0
      %v851 = vadd.f32 0.0, %v850
      %852 = vdwg.mxu0
      %v853 = vadd.f32 %v760, %v849
      %v854 = vadd.f32 %v761, %v851
      %s855 = scalar_lea.vmem %s2, 48
      %v856 = vld [vmem:[%s855] sm:$0xff]
      %857 = vrot.lane.b32.xlu0 %v309, 108
      %v858 = vpop.permute.xlu0 %857
      %859 = vrot.lane.b32.xlu0 %v310, 108
      %v860 = vpop.permute.xlu0 %859
      %861 = vrot.lane.b32.xlu0 %v311, 108
      %v862 = vpop.permute.xlu0 %861
      %863 = vrot.lane.b32.xlu0 %v312, 108
      %v864 = vpop.permute.xlu0 %863
      %vm865 = vcmask 883712
      %v866 = vsel %vm865, %v858, %v860
      %v867 = vsel %vm865, %v862, %v864
      %v873 = vsel %vm334, %v856, 0
      %875 = vmatprep.subr.mxu0 0.0
      %876 = vmatpush1.msra.mxu0 0.0
      %877 = vmatprep.subr.mxu0 0.0
      %878 = vmatpush1.msra.mxu0 0.0
      %879 = vmatprep.subr.mxu0 0.0
      %880 = vmatpush1.msra.mxu0 0.0
      %881 = vmatprep.subr.mxu0 0.0
      %882 = vmatpush1.msra.mxu0 0.0
      %883 = vmatprep.subr.mxu0 0.0
      %884 = vmatpush1.msra.mxu0 0.0
      %885 = vmatprep.subr.mxu0 0.0
      %886 = vmatpush1.msra.mxu0 0.0
      %887 = vmatprep.subr.mxu0 0.0
      %888 = vmatpush1.msra.mxu0 0.0
      %889 = vmatprep.subr.mxu0 0.0
      %890 = vmatpush1.msra.mxu0 0.0
      %891 = vmatprep.subr.mxu0 0.0
      %892 = vmatpush1.msra.mxu0 0.0
      %893 = vmatprep.subr.mxu0 0.0
      %894 = vmatpush1.msra.mxu0 0.0
      %895 = vmatprep.subr.mxu0 0.0
      %896 = vmatpush1.msra.mxu0 0.0
      %897 = vmatprep.subr.mxu0 0.0
      %898 = vmatpush1.msra.mxu0 0.0
      %899 = vmatprep.subr.mxu0 0.0
      %900 = vmatpush1.msra.mxu0 0.0
      %901 = vmatprep.subr.mxu0 0.0
      %902 = vmatpush1.msra.mxu0 0.0
      %903 = vmatprep.subr.mxu0 %v864
      %904 = vmatpush1.msra.mxu0 %v867
      %905 = vmatprep.subr.mxu0 %v860
      %906 = vmatpush1.msra.mxu0 %v866
      %907 = vmatprep.subr.mxu0 0.0
      %908 = vmatpush2.msra.mxu0 0.0
      %909 = vmatprep.subr.mxu0 0.0
      %910 = vmatpush2.msra.mxu0 0.0
      %911 = vmatprep.subr.mxu0 0.0
      %912 = vmatpush2.msra.mxu0 0.0
      %913 = vmatprep.subr.mxu0 0.0
      %914 = vmatpush2.msra.mxu0 0.0
      %915 = vmatprep.subr.mxu0 0.0
      %916 = vmatpush2.msra.mxu0 0.0
      %917 = vmatprep.subr.mxu0 0.0
      %918 = vmatpush2.msra.mxu0 0.0
      %919 = vmatprep.subr.mxu0 0.0
      %920 = vmatpush2.msra.mxu0 0.0
      %921 = vmatprep.subr.mxu0 0.0
      %922 = vmatpush2.msra.mxu0 0.0
      %923 = vmatprep.subr.mxu0 0.0
      %924 = vmatpush2.msra.mxu0 0.0
      %925 = vmatprep.subr.mxu0 0.0
      %926 = vmatpush2.msra.mxu0 0.0
      %927 = vmatprep.subr.mxu0 0.0
      %928 = vmatpush2.msra.mxu0 0.0
      %929 = vmatprep.subr.mxu0 0.0
      %930 = vmatpush2.msra.mxu0 0.0
      %931 = vmatprep.subr.mxu0 0.0
      %932 = vmatpush2.msra.mxu0 0.0
      %933 = vmatprep.subr.mxu0 0.0
      %934 = vmatpush2.msra.mxu0 0.0
      %935 = vmatprep.subr.mxu0 0.0
      %936 = vmatpush2.msra.mxu0 0.0
      %937 = vmatprep.subr.mxu0 0.0
      %938 = vmatpush2.msra.mxu0 0.0
      %939 = vmatprep.mubr.f32.mxu0 0.0
      %940 = vmatmul.mubr.f32.gmra.mxu0 %v873
      %v941 = vpop.f32.mrf.mxu0
      %v942 = vadd.f32 0.0, %v941
      %v943 = vpop.f32.mrf.mxu0
      %v944 = vadd.f32 0.0, %v943
      %945 = vdwg.mxu0
      %v946 = vadd.f32 %v853, %v942
      %v947 = vadd.f32 %v854, %v944
      %s948 = scalar_lea.vmem %s2, 56
      %v949 = vld [vmem:[%s948] sm:$0xff]
      %950 = vrot.lane.b32.xlu0 %v309, 107
      %v951 = vpop.permute.xlu0 %950
      %952 = vrot.lane.b32.xlu0 %v310, 107
      %v953 = vpop.permute.xlu0 %952
      %954 = vrot.lane.b32.xlu0 %v311, 107
      %v955 = vpop.permute.xlu0 %954
      %956 = vrot.lane.b32.xlu0 %v312, 107
      %v957 = vpop.permute.xlu0 %956
      %vm958 = vcmask 875520
      %v959 = vsel %vm958, %v951, %v953
      %v960 = vsel %vm958, %v955, %v957
      %v966 = vsel %vm334, %v949, 0
      %968 = vmatprep.subr.mxu0 0.0
      %969 = vmatpush1.msra.mxu0 0.0
      %970 = vmatprep.subr.mxu0 0.0
      %971 = vmatpush1.msra.mxu0 0.0
      %972 = vmatprep.subr.mxu0 0.0
      %973 = vmatpush1.msra.mxu0 0.0
      %974 = vmatprep.subr.mxu0 0.0
      %975 = vmatpush1.msra.mxu0 0.0
      %976 = vmatprep.subr.mxu0 0.0
      %977 = vmatpush1.msra.mxu0 0.0
      %978 = vmatprep.subr.mxu0 0.0
      %979 = vmatpush1.msra.mxu0 0.0
      %980 = vmatprep.subr.mxu0 0.0
      %981 = vmatpush1.msra.mxu0 0.0
      %982 = vmatprep.subr.mxu0 0.0
      %983 = vmatpush1.msra.mxu0 0.0
      %984 = vmatprep.subr.mxu0 0.0
      %985 = vmatpush1.msra.mxu0 0.0
      %986 = vmatprep.subr.mxu0 0.0
      %987 = vmatpush1.msra.mxu0 0.0
      %988 = vmatprep.subr.mxu0 0.0
      %989 = vmatpush1.msra.mxu0 0.0
      %990 = vmatprep.subr.mxu0 0.0
      %991 = vmatpush1.msra.mxu0 0.0
      %992 = vmatprep.subr.mxu0 0.0
      %993 = vmatpush1.msra.mxu0 0.0
      %994 = vmatprep.subr.mxu0 0.0
      %995 = vmatpush1.msra.mxu0 0.0
      %996 = vmatprep.subr.mxu0 %v957
      %997 = vmatpush1.msra.mxu0 %v960
      %998 = vmatprep.subr.mxu0 %v953
      %999 = vmatpush1.msra.mxu0 %v959
      %1000 = vmatprep.subr.mxu0 0.0
      %1001 = vmatpush2.msra.mxu0 0.0
      %1002 = vmatprep.subr.mxu0 0.0
      %1003 = vmatpush2.msra.mxu0 0.0
      %1004 = vmatprep.subr.mxu0 0.0
      %1005 = vmatpush2.msra.mxu0 0.0
      %1006 = vmatprep.subr.mxu0 0.0
      %1007 = vmatpush2.msra.mxu0 0.0
      %1008 = vmatprep.subr.mxu0 0.0
      %1009 = vmatpush2.msra.mxu0 0.0
      %1010 = vmatprep.subr.mxu0 0.0
      %1011 = vmatpush2.msra.mxu0 0.0
      %1012 = vmatprep.subr.mxu0 0.0
      %1013 = vmatpush2.msra.mxu0 0.0
      %1014 = vmatprep.subr.mxu0 0.0
      %1015 = vmatpush2.msra.mxu0 0.0
      %1016 = vmatprep.subr.mxu0 0.0
      %1017 = vmatpush2.msra.mxu0 0.0
      %1018 = vmatprep.subr.mxu0 0.0
      %1019 = vmatpush2.msra.mxu0 0.0
      %1020 = vmatprep.subr.mxu0 0.0
      %1021 = vmatpush2.msra.mxu0 0.0
      %1022 = vmatprep.subr.mxu0 0.0
      %1023 = vmatpush2.msra.mxu0 0.0
      %1024 = vmatprep.subr.mxu0 0.0
      %1025 = vmatpush2.msra.mxu0 0.0
      %1026 = vmatprep.subr.mxu0 0.0
      %1027 = vmatpush2.msra.mxu0 0.0
      %1028 = vmatprep.subr.mxu0 0.0
      %1029 = vmatpush2.msra.mxu0 0.0
      %1030 = vmatprep.subr.mxu0 0.0
      %1031 = vmatpush2.msra.mxu0 0.0
      %1032 = vmatprep.mubr.f32.mxu0 0.0
      %1033 = vmatmul.mubr.f32.gmra.mxu0 %v966
      %v1034 = vpop.f32.mrf.mxu0
      %v1035 = vadd.f32 0.0, %v1034
      %v1036 = vpop.f32.mrf.mxu0
      %v1037 = vadd.f32 0.0, %v1036
      %1038 = vdwg.mxu0
      %v1039 = vadd.f32 %v946, %v1035
      %v1040 = vadd.f32 %v947, %v1037
      %s1041 = scalar_lea.vmem %s2, 64
      %v1042 = vld [vmem:[%s1041] sm:$0xff]
      %1043 = vrot.lane.b32.xlu0 %v309, 106
      %v1044 = vpop.permute.xlu0 %1043
      %1045 = vrot.lane.b32.xlu0 %v310, 106
      %v1046 = vpop.permute.xlu0 %1045
      %1047 = vrot.lane.b32.xlu0 %v311, 106
      %v1048 = vpop.permute.xlu0 %1047
      %1049 = vrot.lane.b32.xlu0 %v312, 106
      %v1050 = vpop.permute.xlu0 %1049
      %vm1051 = vcmask 867328
      %v1052 = vsel %vm1051, %v1044, %v1046
      %v1053 = vsel %vm1051, %v1048, %v1050
      %v1059 = vsel %vm334, %v1042, 0
      %1061 = vmatprep.subr.mxu0 0.0
      %1062 = vmatpush1.msra.mxu0 0.0
      %1063 = vmatprep.subr.mxu0 0.0
      %1064 = vmatpush1.msra.mxu0 0.0
      %1065 = vmatprep.subr.mxu0 0.0
      %1066 = vmatpush1.msra.mxu0 0.0
      %1067 = vmatprep.subr.mxu0 0.0
      %1068 = vmatpush1.msra.mxu0 0.0
      %1069 = vmatprep.subr.mxu0 0.0
      %1070 = vmatpush1.msra.mxu0 0.0
      %1071 = vmatprep.subr.mxu0 0.0
      %1072 = vmatpush1.msra.mxu0 0.0
      %1073 = vmatprep.subr.mxu0 0.0
      %1074 = vmatpush1.msra.mxu0 0.0
      %1075 = vmatprep.subr.mxu0 0.0
      %1076 = vmatpush1.msra.mxu0 0.0
      %1077 = vmatprep.subr.mxu0 0.0
      %1078 = vmatpush1.msra.mxu0 0.0
      %1079 = vmatprep.subr.mxu0 0.0
      %1080 = vmatpush1.msra.mxu0 0.0
      %1081 = vmatprep.subr.mxu0 0.0
      %1082 = vmatpush1.msra.mxu0 0.0
      %1083 = vmatprep.subr.mxu0 0.0
      %1084 = vmatpush1.msra.mxu0 0.0
      %1085 = vmatprep.subr.mxu0 0.0
      %1086 = vmatpush1.msra.mxu0 0.0
      %1087 = vmatprep.subr.mxu0 0.0
      %1088 = vmatpush1.msra.mxu0 0.0
      %1089 = vmatprep.subr.mxu0 %v1050
      %1090 = vmatpush1.msra.mxu0 %v1053
      %1091 = vmatprep.subr.mxu0 %v1046
      %1092 = vmatpush1.msra.mxu0 %v1052
      %1093 = vmatprep.subr.mxu0 0.0
      %1094 = vmatpush2.msra.mxu0 0.0
      %1095 = vmatprep.subr.mxu0 0.0
      %1096 = vmatpush2.msra.mxu0 0.0
      %1097 = vmatprep.subr.mxu0 0.0
      %1098 = vmatpush2.msra.mxu0 0.0
      %1099 = vmatprep.subr.mxu0 0.0
      %1100 = vmatpush2.msra.mxu0 0.0
      %1101 = vmatprep.subr.mxu0 0.0
      %1102 = vmatpush2.msra.mxu0 0.0
      %1103 = vmatprep.subr.mxu0 0.0
      %1104 = vmatpush2.msra.mxu0 0.0
      %1105 = vmatprep.subr.mxu0 0.0
      %1106 = vmatpush2.msra.mxu0 0.0
      %1107 = vmatprep.subr.mxu0 0.0
      %1108 = vmatpush2.msra.mxu0 0.0
      %1109 = vmatprep.subr.mxu0 0.0
      %1110 = vmatpush2.msra.mxu0 0.0
      %1111 = vmatprep.subr.mxu0 0.0
      %1112 = vmatpush2.msra.mxu0 0.0
      %1113 = vmatprep.subr.mxu0 0.0
      %1114 = vmatpush2.msra.mxu0 0.0
      %1115 = vmatprep.subr.mxu0 0.0
      %1116 = vmatpush2.msra.mxu0 0.0
      %1117 = vmatprep.subr.mxu0 0.0
      %1118 = vmatpush2.msra.mxu0 0.0
      %1119 = vmatprep.subr.mxu0 0.0
      %1120 = vmatpush2.msra.mxu0 0.0
      %1121 = vmatprep.subr.mxu0 0.0
      %1122 = vmatpush2.msra.mxu0 0.0
      %1123 = vmatprep.subr.mxu0 0.0
      %1124 = vmatpush2.msra.mxu0 0.0
      %1125 = vmatprep.mubr.f32.mxu0 0.0
      %1126 = vmatmul.mubr.f32.gmra.mxu0 %v1059
      %v1127 = vpop.f32.mrf.mxu0
      %v1128 = vadd.f32 0.0, %v1127
      %v1129 = vpop.f32.mrf.mxu0
      %v1130 = vadd.f32 0.0, %v1129
      %1131 = vdwg.mxu0
      %v1132 = vadd.f32 %v1039, %v1128
      %v1133 = vadd.f32 %v1040, %v1130
      %v1134 = vld [vmem:[%s3] sm:$0xff]
      %1136 = vset.pattern.permute.xlu0 0
      %1137 = vperm.xlu0 %1136, %v1134
      %v1138 = vpop.permute.xlu0 %1137
      %v1140 = vadd.f32 %v1132, %v1138
      %v1141 = vadd.f32 %v1133, %v1138
      %v1142 = vtanh.pop %v1140
      %v1143 = vtanh.pop %v1141
      %v1144 = vld [vmem:[%s4] sm:$0x3]
      %v1146 = vlaneseq
      %v1147 = vshrl.u32 %v1146, 7
      %v1148 = vsub.s32 0, %v1147
      %v1149 = vrot.slane %v1144, %v1148
      %v1150 = vlaneseq
      %v1151 = vshrl.u32 %v1150, 7
      %v1152 = vsub.s32 1, %v1151
      %v1153 = vrot.slane %v1144, %v1152
      %v1156 = vmul.f32 %v1142, %v1149
      %v1157 = vmul.f32 %v1143, %v1153
      %1158 = vst [vmem:[%s269] sm:$0xff] %v1156
      %vm1159 = vcmask 588800
      %1160 = vst.msk [vmem:[%s269 + $0x8] sm:$0xff] %vm1159, %v1157
      // Predicated region
      $region45: #{biconvgru_forward.7} parent=39 // pred_check
        %p1161 = pneg %p270
      $region46: #{biconvgru_forward.7} parent=39 // pred_check_branch
        %1163 = sbr.rel (%p1161) target = $region48
      $region47: #{biconvgru_forward.7} parent=39 // pred_region
        %1164 = vst [vmem:[%s6] sm:$0xff] %v1156
        %1165 = vst.msk [vmem:[%s6 + $0x8] sm:$0xff] %vm1159, %v1157
      $region48: #{biconvgru_forward.7} parent=39 // pred_fallthru
        _
      %p1166 = scmp.gt.s32.totalorder %s18, 0
      // Predicated region
      $region49: #{biconvgru_forward.7} parent=39 // pred_check
        %p1167 = pneg %p1166
      $region50: #{biconvgru_forward.7} parent=39 // pred_check_branch
        %1169 = sbr.rel (%p1167) target = $region52
      $region51: #{biconvgru_forward.7} parent=39 // pred_region
        %v1170 = vld [vmem:[%s6] sm:$0xff]
        %v1171 = vld [vmem:[%s6 + $0x8] sm:$0xff]
        %v1172 = vmax.f32 %v1170, %v1156
        %v1173 = vmax.f32 %v1171, %v1157
        %1174 = vst [vmem:[%s6] sm:$0xff] %v1172
        %1175 = vst.msk [vmem:[%s6 + $0x8] sm:$0xff] %vm1159, %v1173
      $region52: #{biconvgru_forward.7} parent=39 // pred_fallthru
        _
      %p1176 = scmp.lt.s32.totalorder %s18, 3
      %s1177 = scalar_select %p1176, %s18, 3
      %s1178 = smul.addr %s1177, 2
      %s1179 = smul.addr %s1178, 8
      %s1180 = scalar_lea.vmem %s5, %s1179
      // Predicated region
      $region53: #{biconvgru_forward.7} parent=39 // pred_check
        %p1181 = pneg %p151
      $region54: #{biconvgru_forward.7} parent=39 // pred_check_branch
        %1183 = sbr.rel (%p1181) target = $region56
      $region55: #{biconvgru_forward.7} parent=39 // pred_region
        _
      $region56: #{biconvgru_forward.7} parent=39 // pred_fallthru
        _
      // Predicated region
      $region57: #{biconvgru_forward.7} parent=39 // pred_check
        %p1184 = pneg %p172
      $region58: #{biconvgru_forward.7} parent=39 // pred_check_branch
        %1186 = sbr.rel (%p1184) target = $region60
      $region59: #{biconvgru_forward.7} parent=39 // pred_region
        _
      $region60: #{biconvgru_forward.7} parent=39 // pred_fallthru
        _
      // Predicated region
      $region61: #{biconvgru_forward.7} parent=39 // pred_check
        %p1187 = pneg %p172
      $region62: #{biconvgru_forward.7} parent=39 // pred_check_branch
        %1189 = sbr.rel (%p1187) target = $region64
      $region63: #{biconvgru_forward.7} parent=39 // pred_region
        _
      $region64: #{biconvgru_forward.7} parent=39 // pred_fallthru
        _
    $region40: #{biconvgru_forward.7} parent=5 // pred_fallthru
      _
    %p1190 = scmp.le.s32.totalorder 2, %s13
    // Predicated region
    $region65: #{biconvgru_forward.7} parent=5 // pred_check
      %p1191 = pneg %p1190
    $region66: #{biconvgru_forward.7} parent=5 // pred_check_branch
      %1193 = sbr.rel (%p1191) target = $region68
    $region67: #{biconvgru_forward.7} parent=5 // pred_region
      %s1194 = ssub.s32 %s13, 2
      // Predicated region
      $region69: #{biconvgru_forward.7} parent=67 // pred_check
        %p1195 = pneg %p157
      $region70: #{biconvgru_forward.7} parent=67 // pred_check_branch
        %1197 = sbr.rel (%p1195) target = $region72
      $region71: #{biconvgru_forward.7} parent=67 // pred_region
        %p1198 = scmp.lt.s32.totalorder %s19, 3
        %s1199 = scalar_select %p1198, %s19, 3
        %s1200 = smul.addr %s1199, 2
        %s1201 = smul.addr %s1200, 8
        %s1202 = scalar_lea.vmem %s5, %s1201
      $region72: #{biconvgru_forward.7} parent=67 // pred_fallthru
        _
    $region68: #{biconvgru_forward.7} parent=5 // pred_fallthru
      _
  $region6: #{biconvgru_forward.7} parent=0 // loop_footer
    %s17 = sadd.s32 1, %s13
  $region7: #{biconvgru_forward.7} parent=0 // loop_footer_branch
    %12 = sbr.rel target = $region3
  $region8: #{biconvgru_forward.7} parent=0 // loop_exit
    _

// kernel: biconvgru_forward.6
$region0: #{biconvgru_forward.6}
  #allocation0 [shape = 'u32[]', space=smem, size = 0x4, offset = 0x4, fixed_abs, tag = 'smem constant byte address 0x4 - core index']
  #allocation1 [shape = 'u32[144,128]{1,0:T(1,128)}', space=vmem, size = 0x12000, scoped, tag = 'internal scratch']
  #allocation2 [shape = 'f32[8,200]{1,0:T(8,128)}', space=vmem, size = 0x2000, scoped, tag = 'scratch operand']
  #allocation3 [shape = 'f32[16,222]{1,0:T(8,128)}', space=vmem, size = 0x4000, scoped, tag = 'scratch operand']
  %s0 = inlined_call_operand.vmem [shape: f32[4,8,222], index: 0, kind: input, shape index: {}]
  %s1 = inlined_call_operand.vmem [shape: f32[9,16,16], index: 1, kind: input, shape index: {}]
  %s2 = inlined_call_operand.vmem [shape: f32[16,1], index: 2, kind: input, shape index: {}]
  %s3 = inlined_call_operand.vmem [shape: f32[9,8,16], index: 3, kind: input, shape index: {}]
  %s4 = inlined_call_operand.vmem [shape: f32[8,1], index: 4, kind: input, shape index: {}]
  %s5 = inlined_call_operand.vmem [shape: f32[1,200], index: 5, kind: input, shape index: {}]
  %s6 = inlined_call_operand.vmem [shape: f32[4,8,200], index: 6, kind: output, shape index: {}]
  %s7 = sld [smem:[#allocation0]]
  $region61: #{biconvgru_forward.6} parent=0
    _
  %s9 = ssub.s32 1, %s7
  %s10 = scalar_select 0, %s9, %s7
  loop: start=0, step=1, limit=6
  $region2: #{biconvgru_forward.6} parent=0 // loop_pre_header
    _
  $region3: #{biconvgru_forward.6} parent=0 // loop_header
    %s12 = sphi 0, %s16
    %p13 = scmp.ge.s32.totalorder %s12, 6
    %s24 = sphi 0, %s26
    %s27 = sphi 0, %s24
    %s28 = sphi 0, %s27
    %s44 = sphi 0, %s28
    %s48 = sphi 0, %s48
    %s50 = sphi 0, %s48
    %s51 = sphi 0, %s50
    %s65 = sphi 0, %s51
    %s69 = sphi 0, %s69
    %s71 = sphi 0, %s69
    %s72 = sphi 0, %s71
    %s86 = sphi 0, %s72
    %s90 = sphi 0, %s90
    %s92 = sphi 0, %s90
    %s93 = sphi 0, %s92
    %s107 = sphi 0, %s93
    %s111 = sphi 0, %s111
    %s113 = sphi 0, %s111
    %s114 = sphi 0, %s113
    %s128 = sphi 0, %s114
    %s132 = sphi 0, %s132
    %s134 = sphi 0, %s132
    %s135 = sphi 0, %s134
    %s149 = sphi 0, %s135
    %s157 = sphi 0, %s159
    %s160 = sphi 0, %s157
    %s161 = sphi 0, %s160
    %s177 = sphi 0, %s161
  $region4: #{biconvgru_forward.6} parent=0 // loop_header_branch
    %15 = sbr.rel (%p13) target = $region8
  $region5: #{biconvgru_forward.6} parent=0 // loop_body
    %s17 = ssub.s32 %s12, 1
    %s18 = ssub.s32 %s12, 2
    %s19 = sadd.s32 %s12, 1
    %s20 = ssub.s32 3, %s12
    %s21 = ssub.s32 3, %s19
    %s22 = ssub.s32 %s20, %s21
    %p23 = scmp.eq.s32.totalorder %s22, 0
    %s25 = sadd.s32 %s24, 1
    %s26 = scalar_select %p23, %s24, %s25
    %p29 = pneg %p23
    %p30 = scmp.eq.s32.totalorder %s12, 3
    %p31 = por %p29, %p30
    %p32 = scmp.ne.s32.totalorder %s24, %s27
    %p33 = scmp.eq.s32.totalorder %s12, 0
    %p34 = por %p32, %p33
    %p35 = scmp.ne.s32.totalorder %s24, %s27
    %p36 = scmp.eq.s32.totalorder %s17, 3
    %p37 = por %p35, %p36
    %p38 = scmp.ne.s32.totalorder %s27, %s28
    %p39 = scmp.eq.s32.totalorder %s17, 0
    %p40 = por %p38, %p39
    %p41 = scmp.ne.s32.totalorder %s27, %s28
    %p42 = scmp.eq.s32.totalorder %s18, 3
    %p43 = por %p41, %p42
    %p45 = scmp.ne.s32.totalorder %s28, %s44
    %p46 = scmp.eq.s32.totalorder %s18, 0
    %p47 = por %p45, %p46
    %s49 = sadd.s32 %s48, 1
    %p52 = scmp.eq.s32.totalorder %s12, 3
    %p53 = scmp.ne.s32.totalorder %s48, %s50
    %p54 = scmp.eq.s32.totalorder %s12, 0
    %p55 = por %p53, %p54
    %p56 = scmp.ne.s32.totalorder %s48, %s50
    %p57 = scmp.eq.s32.totalorder %s17, 3
    %p58 = por %p56, %p57
    %p59 = scmp.ne.s32.totalorder %s50, %s51
    %p60 = scmp.eq.s32.totalorder %s17, 0
    %p61 = por %p59, %p60
    %p62 = scmp.ne.s32.totalorder %s50, %s51
    %p63 = scmp.eq.s32.totalorder %s18, 3
    %p64 = por %p62, %p63
    %p66 = scmp.ne.s32.totalorder %s51, %s65
    %p67 = scmp.eq.s32.totalorder %s18, 0
    %p68 = por %p66, %p67
    %s70 = sadd.s32 %s69, 1
    %p73 = scmp.eq.s32.totalorder %s12, 3
    %p74 = scmp.ne.s32.totalorder %s69, %s71
    %p75 = scmp.eq.s32.totalorder %s12, 0
    %p76 = por %p74, %p75
    %p77 = scmp.ne.s32.totalorder %s69, %s71
    %p78 = scmp.eq.s32.totalorder %s17, 3
    %p79 = por %p77, %p78
    %p80 = scmp.ne.s32.totalorder %s71, %s72
    %p81 = scmp.eq.s32.totalorder %s17, 0
    %p82 = por %p80, %p81
    %p83 = scmp.ne.s32.totalorder %s71, %s72
    %p84 = scmp.eq.s32.totalorder %s18, 3
    %p85 = por %p83, %p84
    %p87 = scmp.ne.s32.totalorder %s72, %s86
    %p88 = scmp.eq.s32.totalorder %s18, 0
    %p89 = por %p87, %p88
    %s91 = sadd.s32 %s90, 1
    %p94 = scmp.eq.s32.totalorder %s12, 3
    %p95 = scmp.ne.s32.totalorder %s90, %s92
    %p96 = scmp.eq.s32.totalorder %s12, 0
    %p97 = por %p95, %p96
    %p98 = scmp.ne.s32.totalorder %s90, %s92
    %p99 = scmp.eq.s32.totalorder %s17, 3
    %p100 = por %p98, %p99
    %p101 = scmp.ne.s32.totalorder %s92, %s93
    %p102 = scmp.eq.s32.totalorder %s17, 0
    %p103 = por %p101, %p102
    %p104 = scmp.ne.s32.totalorder %s92, %s93
    %p105 = scmp.eq.s32.totalorder %s18, 3
    %p106 = por %p104, %p105
    %p108 = scmp.ne.s32.totalorder %s93, %s107
    %p109 = scmp.eq.s32.totalorder %s18, 0
    %p110 = por %p108, %p109
    %s112 = sadd.s32 %s111, 1
    %p115 = scmp.eq.s32.totalorder %s12, 3
    %p116 = scmp.ne.s32.totalorder %s111, %s113
    %p117 = scmp.eq.s32.totalorder %s12, 0
    %p118 = por %p116, %p117
    %p119 = scmp.ne.s32.totalorder %s111, %s113
    %p120 = scmp.eq.s32.totalorder %s17, 3
    %p121 = por %p119, %p120
    %p122 = scmp.ne.s32.totalorder %s113, %s114
    %p123 = scmp.eq.s32.totalorder %s17, 0
    %p124 = por %p122, %p123
    %p125 = scmp.ne.s32.totalorder %s113, %s114
    %p126 = scmp.eq.s32.totalorder %s18, 3
    %p127 = por %p125, %p126
    %p129 = scmp.ne.s32.totalorder %s114, %s128
    %p130 = scmp.eq.s32.totalorder %s18, 0
    %p131 = por %p129, %p130
    %s133 = sadd.s32 %s132, 1
    %p136 = scmp.eq.s32.totalorder %s12, 3
    %p137 = scmp.ne.s32.totalorder %s132, %s134
    %p138 = scmp.eq.s32.totalorder %s12, 0
    %p139 = por %p137, %p138
    %p140 = scmp.ne.s32.totalorder %s132, %s134
    %p141 = scmp.eq.s32.totalorder %s17, 3
    %p142 = por %p140, %p141
    %p143 = scmp.ne.s32.totalorder %s134, %s135
    %p144 = scmp.eq.s32.totalorder %s17, 0
    %p145 = por %p143, %p144
    %p146 = scmp.ne.s32.totalorder %s134, %s135
    %p147 = scmp.eq.s32.totalorder %s18, 3
    %p148 = por %p146, %p147
    %p150 = scmp.ne.s32.totalorder %s135, %s149
    %p151 = scmp.eq.s32.totalorder %s18, 0
    %p152 = por %p150, %p151
    %s153 = ssub.s32 3, %s12
    %s154 = ssub.s32 3, %s19
    %s155 = ssub.s32 %s153, %s154
    %p156 = scmp.eq.s32.totalorder %s155, 0
    %s158 = sadd.s32 %s157, 1
    %s159 = scalar_select %p156, %s157, %s158
    %p162 = pneg %p156
    %p163 = scmp.eq.s32.totalorder %s12, 3
    %p164 = por %p162, %p163
    %p165 = scmp.ne.s32.totalorder %s157, %s160
    %p166 = scmp.eq.s32.totalorder %s12, 0
    %p167 = por %p165, %p166
    %p168 = scmp.ne.s32.totalorder %s157, %s160
    %p169 = scmp.eq.s32.totalorder %s17, 3
    %p170 = por %p168, %p169
    %p171 = scmp.ne.s32.totalorder %s160, %s161
    %p172 = scmp.eq.s32.totalorder %s17, 0
    %p173 = por %p171, %p172
    %p174 = scmp.ne.s32.totalorder %s160, %s161
    %p175 = scmp.eq.s32.totalorder %s18, 3
    %p176 = por %p174, %p175
    %p178 = scmp.ne.s32.totalorder %s161, %s177
    %p179 = scmp.eq.s32.totalorder %s18, 0
    %p180 = por %p178, %p179
    %p181 = scmp.le.s32.totalorder 1, %s12
    %p182 = scmp.lt.s32.totalorder %s12, 5
    %p183 = pnand %p181, %p182
    %p184 = pneg %p183
    // Predicated region
    $region9: #{biconvgru_forward.6} parent=5 // pred_check
      _
    $region10: #{biconvgru_forward.6} parent=5 // pred_check_branch
      %186 = sbr.rel (%p183) target = $region12
    $region11: #{biconvgru_forward.6} parent=5 // pred_region
      %s187 = ssub.s32 %s12, 1
      // Predicated region
      $region13: #{biconvgru_forward.6} parent=11 // pred_check
        %p188 = pneg %p61
      $region14: #{biconvgru_forward.6} parent=11 // pred_check_branch
        %190 = sbr.rel (%p188) target = $region16
      $region15: #{biconvgru_forward.6} parent=11 // pred_region
        _
      $region16: #{biconvgru_forward.6} parent=11 // pred_fallthru
        _
      // Predicated region
      $region17: #{biconvgru_forward.6} parent=11 // pred_check
        %p191 = pneg %p82
      $region18: #{biconvgru_forward.6} parent=11 // pred_check_branch
        %193 = sbr.rel (%p191) target = $region20
      $region19: #{biconvgru_forward.6} parent=11 // pred_region
        _
      $region20: #{biconvgru_forward.6} parent=11 // pred_fallthru
        _
      // Predicated region
      $region21: #{biconvgru_forward.6} parent=11 // pred_check
        %p194 = pneg %p103
      $region22: #{biconvgru_forward.6} parent=11 // pred_check_branch
        %196 = sbr.rel (%p194) target = $region24
      $region23: #{biconvgru_forward.6} parent=11 // pred_region
        _
      $region24: #{biconvgru_forward.6} parent=11 // pred_fallthru
        _
      // Predicated region
      $region25: #{biconvgru_forward.6} parent=11 // pred_check
        %p197 = pneg %p124
      $region26: #{biconvgru_forward.6} parent=11 // pred_check_branch
        %199 = sbr.rel (%p197) target = $region28
      $region27: #{biconvgru_forward.6} parent=11 // pred_region
        _
      $region28: #{biconvgru_forward.6} parent=11 // pred_fallthru
        _
      // Predicated region
      $region29: #{biconvgru_forward.6} parent=11 // pred_check
        %p200 = pneg %p145
      $region30: #{biconvgru_forward.6} parent=11 // pred_check_branch
        %202 = sbr.rel (%p200) target = $region32
      $region31: #{biconvgru_forward.6} parent=11 // pred_region
        _
      $region32: #{biconvgru_forward.6} parent=11 // pred_fallthru
        _
    $region12: #{biconvgru_forward.6} parent=5 // pred_fallthru
      _
    %p203 = scmp.lt.s32.totalorder %s12, 4
    // Predicated region
    $region33: #{biconvgru_forward.6} parent=5 // pred_check
      %p204 = pneg %p203
    $region34: #{biconvgru_forward.6} parent=5 // pred_check_branch
      %206 = sbr.rel (%p204) target = $region36
    $region35: #{biconvgru_forward.6} parent=5 // pred_region
      // Predicated region
      $region37: #{biconvgru_forward.6} parent=35 // pred_check
        %p207 = pneg %p34
      $region38: #{biconvgru_forward.6} parent=35 // pred_check_branch
        %209 = sbr.rel (%p207) target = $region40
      $region39: #{biconvgru_forward.6} parent=35 // pred_region
        %s210 = ssub.s32 3, %s12
        %p211 = scmp.lt.s32.totalorder %s210, 3
        %s212 = scalar_select %p211, %s210, 3
        %s213 = smul.addr %s212, 2
        %s214 = smul.addr %s213, 8
        %s215 = scalar_lea.vmem %s0, %s214
        %s216 = ssub.s32 3, %s12
      $region40: #{biconvgru_forward.6} parent=35 // pred_fallthru
        _
    $region36: #{biconvgru_forward.6} parent=5 // pred_fallthru
      _
    %p217 = scmp.le.s32.totalorder 1, %s12
    %p218 = scmp.lt.s32.totalorder %s12, 5
    %p219 = pnand %p217, %p218
    %p220 = pneg %p219
    // Predicated region
    $region41: #{biconvgru_forward.6} parent=5 // pred_check
      _
    $region42: #{biconvgru_forward.6} parent=5 // pred_check_branch
      %222 = sbr.rel (%p219) target = $region44
    $region43: #{biconvgru_forward.6} parent=5 // pred_region
      %s223 = ssub.s32 %s12, 1
      %s224 = ssub.s32 3, %s17
      %p225 = scmp.lt.s32.totalorder %s224, 3
      %s226 = scalar_select %p225, %s224, 3
      %s227 = smul.addr %s226, 2
      %s228 = smul.addr %s227, 8
      %s229 = scalar_lea.vmem %s0, %s228
      %p230 = pneg %p40
      %p231 = pneg %p37
      %p232 = pneg %p61
      %p233 = pneg %p58
      %p234 = pneg %p82
      %p235 = pneg %p79
      %p236 = pneg %p103
      %p237 = pneg %p100
      %p238 = pneg %p124
      %p239 = pneg %p121
      %p240 = pneg %p145
      %p241 = pneg %p142
      %p242 = pneg %p173
      %p243 = pneg %p170
      %s244 = ssub.s32 3, %s17
      %p245 = scmp.lt.s32.totalorder %s244, 3
      %s246 = scalar_select %p245, %s244, 3
      %s247 = smul.addr %s246, 2
      %s248 = smul.addr %s247, 8
      %s249 = scalar_lea.vmem %s6, %s248
      %s250 = ssub.s32 3, %s17
      %p251 = scmp.lt.s32.totalorder %s250, 3
      %s252 = scalar_select %p251, %s250, 3
      %s253 = smul.addr %s252, 2
      %s254 = smul.addr %s253, 8
      %s255 = scalar_lea.vmem %s0, %s254
      %s256 = ssub.s32 3, %s17
      %s257 = ssub.s32 3, %s17
      %p258 = scmp.lt.s32.totalorder %s257, 3
      %s259 = scalar_select %p258, %s257, 3
      %s260 = smul.addr %s259, 2
      %s261 = smul.addr %s260, 8
      %s262 = scalar_lea.vmem %s6, %s261
      %s263 = ssub.s32 3, %s17
      %v264 = vld [vmem:[%s255] sm:$0xff]
      %v265 = vld [vmem:[%s255 + $0x8] sm:$0xff]
      %p266 = scmp.eq.s32.totalorder %s17, 0
      // Predicated region
      $region45: #{biconvgru_forward.6} parent=43 // pred_check
        %p267 = pneg %p266
      $region46: #{biconvgru_forward.6} parent=43 // pred_check_branch
        %269 = sbr.rel (%p267) target = $region48
      $region47: #{biconvgru_forward.6} parent=43 // pred_region
        %272 = vrot.lane.b32.xlu0 %v264, 117
        %v273 = vpop.permute.xlu0 %272
        %274 = vrot.lane.b32.xlu0 %v265, 117
        %v275 = vpop.permute.xlu0 %274
        %vm276 = vcmask 957440
        %v277 = vsel %vm276, %v273, %v275
        %280 = vst [vmem:[#allocation2] sm:$0xff] %v277
        %vm281 = vcmask 588800
        %282 = vst.msk [vmem:[#allocation2 + $0x8] sm:$0xff] %vm281, %v275
        %283 = vst [vmem:[#allocation3] sm:$0xff] 0.0
        %vm284 = vcmask 769024
        %285 = vst.msk [vmem:[#allocation3 + $0x8] sm:$0xff] %vm284, 0.0
        %286 = vst [vmem:[#allocation3 + $0x10] sm:$0xff] 0.0
        %287 = vst.msk [vmem:[#allocation3 + $0x18] sm:$0xff] %vm284, 0.0
      $region48: #{biconvgru_forward.6} parent=43 // pred_fallthru
        _
      %v288 = vld [vmem:[#allocation2] sm:$0xff]
      %v289 = vld [vmem:[#allocation2 + $0x8] sm:$0xff]
      %290 = vst [vmem:[#allocation3] sm:$0xff] %v264
      %vm291 = vcmask 769024
      %292 = vst.msk [vmem:[#allocation3 + $0x8] sm:$0xff] %vm291, %v265
      %295 = vrot.lane.b32.xlu0 %v288, 11
      %v296 = vpop.permute.xlu0 %295
      %297 = vrot.lane.b32.xlu0 %v289, 11
      %v298 = vpop.permute.xlu0 %297
      %vm299 = vcmask 89088
      %v300 = vsel %vm299, %v296, %v298
      %vm303 = vcmask 1047640
      %304 = vst.msk [vmem:[#allocation3 + $0x10] sm:$0xff] %vm303, %v296
      %vm305 = vcmask 678912
      %306 = vst.msk [vmem:[#allocation3 + $0x18] sm:$0xff] %vm305, %v300
      %v307 = vld [vmem:[%s1] sm:$0xff]
      %v308 = vld [vmem:[%s1 + $0x8] sm:$0xff]
      %v309 = vld [vmem:[#allocation3] sm:$0xff]
      %v310 = vld [vmem:[#allocation3 + $0x8] sm:$0xff]
      %v311 = vld [vmem:[#allocation3 + $0x10] sm:$0xff]
      %v312 = vld [vmem:[#allocation3 + $0x18] sm:$0xff]
      %s313 = scalar_lea.vmem %s1, 16
      %v314 = vld [vmem:[%s313] sm:$0xff]
      %v315 = vld [vmem:[%s313 + $0x8] sm:$0xff]
      %320 = vrot.lane.b32.xlu0 %v309, 127
      %v321 = vpop.permute.xlu0 %320
      %322 = vrot.lane.b32.xlu0 %v310, 127
      %v323 = vpop.permute.xlu0 %322
      %324 = vrot.lane.b32.xlu0 %v311, 127
      %v325 = vpop.permute.xlu0 %324
      %326 = vrot.lane.b32.xlu0 %v312, 127
      %v327 = vpop.permute.xlu0 %326
      %vm328 = vcmask 1039360
      %v329 = vsel %vm328, %v321, %v323
      %v330 = vsel %vm328, %v325, %v327
      %vm335 = vcmask 130048
      %v337 = vsel %vm335, %v314, 0
      %v340 = vsel %vm335, %v315, 0
      %342 = vmatprep.subr.mxu0 0.0
      %343 = vmatpush1.msra.mxu0 0.0
      %344 = vmatprep.subr.mxu0 0.0
      %345 = vmatpush1.msra.mxu0 0.0
      %346 = vmatprep.subr.mxu0 0.0
      %347 = vmatpush1.msra.mxu0 0.0
      %348 = vmatprep.subr.mxu0 0.0
      %349 = vmatpush1.msra.mxu0 0.0
      %350 = vmatprep.subr.mxu0 0.0
      %351 = vmatpush1.msra.mxu0 0.0
      %352 = vmatprep.subr.mxu0 0.0
      %353 = vmatpush1.msra.mxu0 0.0
      %354 = vmatprep.subr.mxu0 0.0
      %355 = vmatpush1.msra.mxu0 0.0
      %356 = vmatprep.subr.mxu0 0.0
      %357 = vmatpush1.msra.mxu0 0.0
      %358 = vmatprep.subr.mxu0 0.0
      %359 = vmatpush1.msra.mxu0 0.0
      %360 = vmatprep.subr.mxu0 0.0
      %361 = vmatpush1.msra.mxu0 0.0
      %362 = vmatprep.subr.mxu0 0.0
      %363 = vmatpush1.msra.mxu0 0.0
      %364 = vmatprep.subr.mxu0 0.0
      %365 = vmatpush1.msra.mxu0 0.0
      %366 = vmatprep.subr.mxu0 0.0
      %367 = vmatpush1.msra.mxu0 0.0
      %368 = vmatprep.subr.mxu0 0.0
      %369 = vmatpush1.msra.mxu0 0.0
      %370 = vmatprep.subr.mxu0 %v327
      %371 = vmatpush1.msra.mxu0 %v330
      %372 = vmatprep.subr.mxu0 %v323
      %373 = vmatpush1.msra.mxu0 %v329
      %374 = vmatprep.subr.mxu0 0.0
      %375 = vmatpush2.msra.mxu0 0.0
      %376 = vmatprep.subr.mxu0 0.0
      %377 = vmatpush2.msra.mxu0 0.0
      %378 = vmatprep.subr.mxu0 0.0
      %379 = vmatpush2.msra.mxu0 0.0
      %380 = vmatprep.subr.mxu0 0.0
      %381 = vmatpush2.msra.mxu0 0.0
      %382 = vmatprep.subr.mxu0 0.0
      %383 = vmatpush2.msra.mxu0 0.0
      %384 = vmatprep.subr.mxu0 0.0
      %385 = vmatpush2.msra.mxu0 0.0
      %386 = vmatprep.subr.mxu0 0.0
      %387 = vmatpush2.msra.mxu0 0.0
      %388 = vmatprep.subr.mxu0 0.0
      %389 = vmatpush2.msra.mxu0 0.0
      %390 = vmatprep.subr.mxu0 0.0
      %391 = vmatpush2.msra.mxu0 0.0
      %392 = vmatprep.subr.mxu0 0.0
      %393 = vmatpush2.msra.mxu0 0.0
      %394 = vmatprep.subr.mxu0 0.0
      %395 = vmatpush2.msra.mxu0 0.0
      %396 = vmatprep.subr.mxu0 0.0
      %397 = vmatpush2.msra.mxu0 0.0
      %398 = vmatprep.subr.mxu0 0.0
      %399 = vmatpush2.msra.mxu0 0.0
      %400 = vmatprep.subr.mxu0 0.0
      %401 = vmatpush2.msra.mxu0 0.0
      %402 = vmatprep.subr.mxu0 0.0
      %403 = vmatpush2.msra.mxu0 0.0
      %404 = vmatprep.subr.mxu0 0.0
      %405 = vmatpush2.msra.mxu0 0.0
      %406 = vmatprep.mubr.f32.mxu0 0.0
      %407 = vmatmul.mubr.f32.gmra.mxu0 %v337
      %v408 = vpop.f32.mrf.mxu0
      %v409 = vadd.f32 0.0, %v408
      %v410 = vpop.f32.mrf.mxu0
      %v411 = vadd.f32 0.0, %v410
      %412 = vmatprep.mubr.f32.mxu0 0.0
      %413 = vmatmul.mubr.f32.gmra.mxu0 %v340
      %v414 = vpop.f32.mrf.mxu0
      %v415 = vadd.f32 0.0, %v414
      %v416 = vpop.f32.mrf.mxu0
      %v417 = vadd.f32 0.0, %v416
      %418 = vdwg.mxu0
      %v420 = vsel %vm335, %v307, 0
      %v423 = vsel %vm335, %v308, 0
      %425 = vmatprep.subr.mxu0 0.0
      %426 = vmatpush1.msra.mxu0 0.0
      %427 = vmatprep.subr.mxu0 0.0
      %428 = vmatpush1.msra.mxu0 0.0
      %429 = vmatprep.subr.mxu0 0.0
      %430 = vmatpush1.msra.mxu0 0.0
      %431 = vmatprep.subr.mxu0 0.0
      %432 = vmatpush1.msra.mxu0 0.0
      %433 = vmatprep.subr.mxu0 0.0
      %434 = vmatpush1.msra.mxu0 0.0
      %435 = vmatprep.subr.mxu0 0.0
      %436 = vmatpush1.msra.mxu0 0.0
      %437 = vmatprep.subr.mxu0 0.0
      %438 = vmatpush1.msra.mxu0 0.0
      %439 = vmatprep.subr.mxu0 0.0
      %440 = vmatpush1.msra.mxu0 0.0
      %441 = vmatprep.subr.mxu0 0.0
      %442 = vmatpush1.msra.mxu0 0.0
      %443 = vmatprep.subr.mxu0 0.0
      %444 = vmatpush1.msra.mxu0 0.0
      %445 = vmatprep.subr.mxu0 0.0
      %446 = vmatpush1.msra.mxu0 0.0
      %447 = vmatprep.subr.mxu0 0.0
      %448 = vmatpush1.msra.mxu0 0.0
      %449 = vmatprep.subr.mxu0 0.0
      %450 = vmatpush1.msra.mxu0 0.0
      %451 = vmatprep.subr.mxu0 0.0
      %452 = vmatpush1.msra.mxu0 0.0
      %453 = vmatprep.subr.mxu0 %v312
      %454 = vmatpush1.msra.mxu0 %v311
      %455 = vmatprep.subr.mxu0 %v310
      %456 = vmatpush1.msra.mxu0 %v309
      %457 = vmatprep.subr.mxu0 0.0
      %458 = vmatpush2.msra.mxu0 0.0
      %459 = vmatprep.subr.mxu0 0.0
      %460 = vmatpush2.msra.mxu0 0.0
      %461 = vmatprep.subr.mxu0 0.0
      %462 = vmatpush2.msra.mxu0 0.0
      %463 = vmatprep.subr.mxu0 0.0
      %464 = vmatpush2.msra.mxu0 0.0
      %465 = vmatprep.subr.mxu0 0.0
      %466 = vmatpush2.msra.mxu0 0.0
      %467 = vmatprep.subr.mxu0 0.0
      %468 = vmatpush2.msra.mxu0 0.0
      %469 = vmatprep.subr.mxu0 0.0
      %470 = vmatpush2.msra.mxu0 0.0
      %471 = vmatprep.subr.mxu0 0.0
      %472 = vmatpush2.msra.mxu0 0.0
      %473 = vmatprep.subr.mxu0 0.0
      %474 = vmatpush2.msra.mxu0 0.0
      %475 = vmatprep.subr.mxu0 0.0
      %476 = vmatpush2.msra.mxu0 0.0
      %477 = vmatprep.subr.mxu0 0.0
      %478 = vmatpush2.msra.mxu0 0.0
      %479 = vmatprep.subr.mxu0 0.0
      %480 = vmatpush2.msra.mxu0 0.0
      %481 = vmatprep.subr.mxu0 0.0
      %482 = vmatpush2.msra.mxu0 0.0
      %483 = vmatprep.subr.mxu0 0.0
      %484 = vmatpush2.msra.mxu0 0.0
      %485 = vmatprep.subr.mxu0 0.0
      %486 = vmatpush2.msra.mxu0 0.0
      %487 = vmatprep.subr.mxu0 0.0
      %488 = vmatpush2.msra.mxu0 0.0
      %489 = vmatprep.mubr.f32.mxu0 0.0
      %490 = vmatmul.mubr.f32.gmra.mxu0 %v420
      %v491 = vpop.f32.mrf.mxu0
      %v492 = vadd.f32 %v409, %v491
      %v493 = vpop.f32.mrf.mxu0
      %v494 = vadd.f32 %v411, %v493
      %495 = vmatprep.mubr.f32.mxu0 0.0
      %496 = vmatmul.mubr.f32.gmra.mxu0 %v423
      %v497 = vpop.f32.mrf.mxu0
      %v498 = vadd.f32 %v415, %v497
      %v499 = vpop.f32.mrf.mxu0
      %v500 = vadd.f32 %v417, %v499
      %501 = vdwg.mxu0
      %s502 = scalar_lea.vmem %s1, 32
      %v503 = vld [vmem:[%s502] sm:$0xff]
      %v504 = vld [vmem:[%s502 + $0x8] sm:$0xff]
      %505 = vrot.lane.b32.xlu0 %v309, 126
      %v506 = vpop.permute.xlu0 %505
      %507 = vrot.lane.b32.xlu0 %v310, 126
      %v508 = vpop.permute.xlu0 %507
      %509 = vrot.lane.b32.xlu0 %v311, 126
      %v510 = vpop.permute.xlu0 %509
      %511 = vrot.lane.b32.xlu0 %v312, 126
      %v512 = vpop.permute.xlu0 %511
      %vm513 = vcmask 1031168
      %v514 = vsel %vm513, %v506, %v508
      %v515 = vsel %vm513, %v510, %v512
      %v521 = vsel %vm335, %v503, 0
      %v524 = vsel %vm335, %v504, 0
      %526 = vmatprep.subr.mxu0 0.0
      %527 = vmatpush1.msra.mxu0 0.0
      %528 = vmatprep.subr.mxu0 0.0
      %529 = vmatpush1.msra.mxu0 0.0
      %530 = vmatprep.subr.mxu0 0.0
      %531 = vmatpush1.msra.mxu0 0.0
      %532 = vmatprep.subr.mxu0 0.0
      %533 = vmatpush1.msra.mxu0 0.0
      %534 = vmatprep.subr.mxu0 0.0
      %535 = vmatpush1.msra.mxu0 0.0
      %536 = vmatprep.subr.mxu0 0.0
      %537 = vmatpush1.msra.mxu0 0.0
      %538 = vmatprep.subr.mxu0 0.0
      %539 = vmatpush1.msra.mxu0 0.0
      %540 = vmatprep.subr.mxu0 0.0
      %541 = vmatpush1.msra.mxu0 0.0
      %542 = vmatprep.subr.mxu0 0.0
      %543 = vmatpush1.msra.mxu0 0.0
      %544 = vmatprep.subr.mxu0 0.0
      %545 = vmatpush1.msra.mxu0 0.0
      %546 = vmatprep.subr.mxu0 0.0
      %547 = vmatpush1.msra.mxu0 0.0
      %548 = vmatprep.subr.mxu0 0.0
      %549 = vmatpush1.msra.mxu0 0.0
      %550 = vmatprep.subr.mxu0 0.0
      %551 = vmatpush1.msra.mxu0 0.0
      %552 = vmatprep.subr.mxu0 0.0
      %553 = vmatpush1.msra.mxu0 0.0
      %554 = vmatprep.subr.mxu0 %v512
      %555 = vmatpush1.msra.mxu0 %v515
      %556 = vmatprep.subr.mxu0 %v508
      %557 = vmatpush1.msra.mxu0 %v514
      %558 = vmatprep.subr.mxu0 0.0
      %559 = vmatpush2.msra.mxu0 0.0
      %560 = vmatprep.subr.mxu0 0.0
      %561 = vmatpush2.msra.mxu0 0.0
      %562 = vmatprep.subr.mxu0 0.0
      %563 = vmatpush2.msra.mxu0 0.0
      %564 = vmatprep.subr.mxu0 0.0
      %565 = vmatpush2.msra.mxu0 0.0
      %566 = vmatprep.subr.mxu0 0.0
      %567 = vmatpush2.msra.mxu0 0.0
      %568 = vmatprep.subr.mxu0 0.0
      %569 = vmatpush2.msra.mxu0 0.0
      %570 = vmatprep.subr.mxu0 0.0
      %571 = vmatpush2.msra.mxu0 0.0
      %572 = vmatprep.subr.mxu0 0.0
      %573 = vmatpush2.msra.mxu0 0.0
      %574 = vmatprep.subr.mxu0 0.0
      %575 = vmatpush2.msra.mxu0 0.0
      %576 = vmatprep.subr.mxu0 0.0
      %577 = vmatpush2.msra.mxu0 0.0
      %578 = vmatprep.subr.mxu0 0.0
      %579 = vmatpush2.msra.mxu0 0.0
      %580 = vmatprep.subr.mxu0 0.0
      %581 = vmatpush2.msra.mxu0 0.0
      %582 = vmatprep.subr.mxu0 0.0
      %583 = vmatpush2.msra.mxu0 0.0
      %584 = vmatprep.subr.mxu0 0.0
      %585 = vmatpush2.msra.mxu0 0.0
      %586 = vmatprep.subr.mxu0 0.0
      %587 = vmatpush2.msra.mxu0 0.0
      %588 = vmatprep.subr.mxu0 0.0
      %589 = vmatpush2.msra.mxu0 0.0
      %590 = vmatprep.mubr.f32.mxu0 0.0
      %591 = vmatmul.mubr.f32.gmra.mxu0 %v521
      %v592 = vpop.f32.mrf.mxu0
      %v593 = vadd.f32 0.0, %v592
      %v594 = vpop.f32.mrf.mxu0
      %v595 = vadd.f32 0.0, %v594
      %596 = vmatprep.mubr.f32.mxu0 0.0
      %597 = vmatmul.mubr.f32.gmra.mxu0 %v524
      %v598 = vpop.f32.mrf.mxu0
      %v599 = vadd.f32 0.0, %v598
      %v600 = vpop.f32.mrf.mxu0
      %v601 = vadd.f32 0.0, %v600
      %602 = vdwg.mxu0
      %v603 = vadd.f32 %v492, %v593
      %v604 = vadd.f32 %v494, %v595
      %v605 = vadd.f32 %v498, %v599
      %v606 = vadd.f32 %v500, %v601
      %s607 = scalar_lea.vmem %s1, 48
      %v608 = vld [vmem:[%s607] sm:$0xff]
      %v609 = vld [vmem:[%s607 + $0x8] sm:$0xff]
      %610 = vrot.lane.b32.xlu0 %v309, 118
      %v611 = vpop.permute.xlu0 %610
      %612 = vrot.lane.b32.xlu0 %v310, 118
      %v613 = vpop.permute.xlu0 %612
      %614 = vrot.lane.b32.xlu0 %v311, 118
      %v615 = vpop.permute.xlu0 %614
      %616 = vrot.lane.b32.xlu0 %v312, 118
      %v617 = vpop.permute.xlu0 %616
      %vm618 = vcmask 965632
      %v619 = vsel %vm618, %v611, %v613
      %v620 = vsel %vm618, %v615, %v617
      %v626 = vsel %vm335, %v608, 0
      %v629 = vsel %vm335, %v609, 0
      %631 = vmatprep.subr.mxu0 0.0
      %632 = vmatpush1.msra.mxu0 0.0
      %633 = vmatprep.subr.mxu0 0.0
      %634 = vmatpush1.msra.mxu0 0.0
      %635 = vmatprep.subr.mxu0 0.0
      %636 = vmatpush1.msra.mxu0 0.0
      %637 = vmatprep.subr.mxu0 0.0
      %638 = vmatpush1.msra.mxu0 0.0
      %639 = vmatprep.subr.mxu0 0.0
      %640 = vmatpush1.msra.mxu0 0.0
      %641 = vmatprep.subr.mxu0 0.0
      %642 = vmatpush1.msra.mxu0 0.0
      %643 = vmatprep.subr.mxu0 0.0
      %644 = vmatpush1.msra.mxu0 0.0
      %645 = vmatprep.subr.mxu0 0.0
      %646 = vmatpush1.msra.mxu0 0.0
      %647 = vmatprep.subr.mxu0 0.0
      %648 = vmatpush1.msra.mxu0 0.0
      %649 = vmatprep.subr.mxu0 0.0
      %650 = vmatpush1.msra.mxu0 0.0
      %651 = vmatprep.subr.mxu0 0.0
      %652 = vmatpush1.msra.mxu0 0.0
      %653 = vmatprep.subr.mxu0 0.0
      %654 = vmatpush1.msra.mxu0 0.0
      %655 = vmatprep.subr.mxu0 0.0
      %656 = vmatpush1.msra.mxu0 0.0
      %657 = vmatprep.subr.mxu0 0.0
      %658 = vmatpush1.msra.mxu0 0.0
      %659 = vmatprep.subr.mxu0 %v617
      %660 = vmatpush1.msra.mxu0 %v620
      %661 = vmatprep.subr.mxu0 %v613
      %662 = vmatpush1.msra.mxu0 %v619
      %663 = vmatprep.subr.mxu0 0.0
      %664 = vmatpush2.msra.mxu0 0.0
      %665 = vmatprep.subr.mxu0 0.0
      %666 = vmatpush2.msra.mxu0 0.0
      %667 = vmatprep.subr.mxu0 0.0
      %668 = vmatpush2.msra.mxu0 0.0
      %669 = vmatprep.subr.mxu0 0.0
      %670 = vmatpush2.msra.mxu0 0.0
      %671 = vmatprep.subr.mxu0 0.0
      %672 = vmatpush2.msra.mxu0 0.0
      %673 = vmatprep.subr.mxu0 0.0
      %674 = vmatpush2.msra.mxu0 0.0
      %675 = vmatprep.subr.mxu0 0.0
      %676 = vmatpush2.msra.mxu0 0.0
      %677 = vmatprep.subr.mxu0 0.0
      %678 = vmatpush2.msra.mxu0 0.0
      %679 = vmatprep.subr.mxu0 0.0
      %680 = vmatpush2.msra.mxu0 0.0
      %681 = vmatprep.subr.mxu0 0.0
      %682 = vmatpush2.msra.mxu0 0.0
      %683 = vmatprep.subr.mxu0 0.0
      %684 = vmatpush2.msra.mxu0 0.0
      %685 = vmatprep.subr.mxu0 0.0
      %686 = vmatpush2.msra.mxu0 0.0
      %687 = vmatprep.subr.mxu0 0.0
      %688 = vmatpush2.msra.mxu0 0.0
      %689 = vmatprep.subr.mxu0 0.0
      %690 = vmatpush2.msra.mxu0 0.0
      %691 = vmatprep.subr.mxu0 0.0
      %692 = vmatpush2.msra.mxu0 0.0
      %693 = vmatprep.subr.mxu0 0.0
      %694 = vmatpush2.msra.mxu0 0.0
      %695 = vmatprep.mubr.f32.mxu0 0.0
      %696 = vmatmul.mubr.f32.gmra.mxu0 %v626
      %v697 = vpop.f32.mrf.mxu0
      %v698 = vadd.f32 0.0, %v697
      %v699 = vpop.f32.mrf.mxu0
      %v700 = vadd.f32 0.0, %v699
      %701 = vmatprep.mubr.f32.mxu0 0.0
      %702 = vmatmul.mubr.f32.gmra.mxu0 %v629
      %v703 = vpop.f32.mrf.mxu0
      %v704 = vadd.f32 0.0, %v703
      %v705 = vpop.f32.mrf.mxu0
      %v706 = vadd.f32 0.0, %v705
      %707 = vdwg.mxu0
      %v708 = vadd.f32 %v603, %v698
      %v709 = vadd.f32 %v604, %v700
      %v710 = vadd.f32 %v605, %v704
      %v711 = vadd.f32 %v606, %v706
      %s712 = scalar_lea.vmem %s1, 64
      %v713 = vld [vmem:[%s712] sm:$0xff]
      %v714 = vld [vmem:[%s712 + $0x8] sm:$0xff]
      %715 = vrot.lane.b32.xlu0 %v309, 117
      %v716 = vpop.permute.xlu0 %715
      %717 = vrot.lane.b32.xlu0 %v310, 117
      %v718 = vpop.permute.xlu0 %717
      %719 = vrot.lane.b32.xlu0 %v311, 117
      %v720 = vpop.permute.xlu0 %719
      %721 = vrot.lane.b32.xlu0 %v312, 117
      %v722 = vpop.permute.xlu0 %721
      %vm723 = vcmask 957440
      %v724 = vsel %vm723, %v716, %v718
      %v725 = vsel %vm723, %v720, %v722
      %v731 = vsel %vm335, %v713, 0
      %v734 = vsel %vm335, %v714, 0
      %736 = vmatprep.subr.mxu0 0.0
      %737 = vmatpush1.msra.mxu0 0.0
      %738 = vmatprep.subr.mxu0 0.0
      %739 = vmatpush1.msra.mxu0 0.0
      %740 = vmatprep.subr.mxu0 0.0
      %741 = vmatpush1.msra.mxu0 0.0
      %742 = vmatprep.subr.mxu0 0.0
      %743 = vmatpush1.msra.mxu0 0.0
      %744 = vmatprep.subr.mxu0 0.0
      %745 = vmatpush1.msra.mxu0 0.0
      %746 = vmatprep.subr.mxu0 0.0
      %747 = vmatpush1.msra.mxu0 0.0
      %748 = vmatprep.subr.mxu0 0.0
      %749 = vmatpush1.msra.mxu0 0.0
      %750 = vmatprep.subr.mxu0 0.0
      %751 = vmatpush1.msra.mxu0 0.0
      %752 = vmatprep.subr.mxu0 0.0
      %753 = vmatpush1.msra.mxu0 0.0
      %754 = vmatprep.subr.mxu0 0.0
      %755 = vmatpush1.msra.mxu0 0.0
      %756 = vmatprep.subr.mxu0 0.0
      %757 = vmatpush1.msra.mxu0 0.0
      %758 = vmatprep.subr.mxu0 0.0
      %759 = vmatpush1.msra.mxu0 0.0
      %760 = vmatprep.subr.mxu0 0.0
      %761 = vmatpush1.msra.mxu0 0.0
      %762 = vmatprep.subr.mxu0 0.0
      %763 = vmatpush1.msra.mxu0 0.0
      %764 = vmatprep.subr.mxu0 %v722
      %765 = vmatpush1.msra.mxu0 %v725
      %766 = vmatprep.subr.mxu0 %v718
      %767 = vmatpush1.msra.mxu0 %v724
      %768 = vmatprep.subr.mxu0 0.0
      %769 = vmatpush2.msra.mxu0 0.0
      %770 = vmatprep.subr.mxu0 0.0
      %771 = vmatpush2.msra.mxu0 0.0
      %772 = vmatprep.subr.mxu0 0.0
      %773 = vmatpush2.msra.mxu0 0.0
      %774 = vmatprep.subr.mxu0 0.0
      %775 = vmatpush2.msra.mxu0 0.0
      %776 = vmatprep.subr.mxu0 0.0
      %777 = vmatpush2.msra.mxu0 0.0
      %778 = vmatprep.subr.mxu0 0.0
      %779 = vmatpush2.msra.mxu0 0.0
      %780 = vmatprep.subr.mxu0 0.0
      %781 = vmatpush2.msra.mxu0 0.0
      %782 = vmatprep.subr.mxu0 0.0
      %783 = vmatpush2.msra.mxu0 0.0
      %784 = vmatprep.subr.mxu0 0.0
      %785 = vmatpush2.msra.mxu0 0.0
      %786 = vmatprep.subr.mxu0 0.0
      %787 = vmatpush2.msra.mxu0 0.0
      %788 = vmatprep.subr.mxu0 0.0
      %789 = vmatpush2.msra.mxu0 0.0
      %790 = vmatprep.subr.mxu0 0.0
      %791 = vmatpush2.msra.mxu0 0.0
      %792 = vmatprep.subr.mxu0 0.0
      %793 = vmatpush2.msra.mxu0 0.0
      %794 = vmatprep.subr.mxu0 0.0
      %795 = vmatpush2.msra.mxu0 0.0
      %796 = vmatprep.subr.mxu0 0.0
      %797 = vmatpush2.msra.mxu0 0.0
      %798 = vmatprep.subr.mxu0 0.0
      %799 = vmatpush2.msra.mxu0 0.0
      %800 = vmatprep.mubr.f32.mxu0 0.0
      %801 = vmatmul.mubr.f32.gmra.mxu0 %v731
      %v802 = vpop.f32.mrf.mxu0
      %v803 = vadd.f32 0.0, %v802
      %v804 = vpop.f32.mrf.mxu0
      %v805 = vadd.f32 0.0, %v804
      %806 = vmatprep.mubr.f32.mxu0 0.0
      %807 = vmatmul.mubr.f32.gmra.mxu0 %v734
      %v808 = vpop.f32.mrf.mxu0
      %v809 = vadd.f32 0.0, %v808
      %v810 = vpop.f32.mrf.mxu0
      %v811 = vadd.f32 0.0, %v810
      %812 = vdwg.mxu0
      %v813 = vadd.f32 %v708, %v803
      %v814 = vadd.f32 %v709, %v805
      %v815 = vadd.f32 %v710, %v809
      %v816 = vadd.f32 %v711, %v811
      %s817 = scalar_lea.vmem %s1, 80
      %v818 = vld [vmem:[%s817] sm:$0xff]
      %v819 = vld [vmem:[%s817 + $0x8] sm:$0xff]
      %820 = vrot.lane.b32.xlu0 %v309, 116
      %v821 = vpop.permute.xlu0 %820
      %822 = vrot.lane.b32.xlu0 %v310, 116
      %v823 = vpop.permute.xlu0 %822
      %824 = vrot.lane.b32.xlu0 %v311, 116
      %v825 = vpop.permute.xlu0 %824
      %826 = vrot.lane.b32.xlu0 %v312, 116
      %v827 = vpop.permute.xlu0 %826
      %vm828 = vcmask 949248
      %v829 = vsel %vm828, %v821, %v823
      %v830 = vsel %vm828, %v825, %v827
      %v836 = vsel %vm335, %v818, 0
      %v839 = vsel %vm335, %v819, 0
      %841 = vmatprep.subr.mxu0 0.0
      %842 = vmatpush1.msra.mxu0 0.0
      %843 = vmatprep.subr.mxu0 0.0
      %844 = vmatpush1.msra.mxu0 0.0
      %845 = vmatprep.subr.mxu0 0.0
      %846 = vmatpush1.msra.mxu0 0.0
      %847 = vmatprep.subr.mxu0 0.0
      %848 = vmatpush1.msra.mxu0 0.0
      %849 = vmatprep.subr.mxu0 0.0
      %850 = vmatpush1.msra.mxu0 0.0
      %851 = vmatprep.subr.mxu0 0.0
      %852 = vmatpush1.msra.mxu0 0.0
      %853 = vmatprep.subr.mxu0 0.0
      %854 = vmatpush1.msra.mxu0 0.0
      %855 = vmatprep.subr.mxu0 0.0
      %856 = vmatpush1.msra.mxu0 0.0
      %857 = vmatprep.subr.mxu0 0.0
      %858 = vmatpush1.msra.mxu0 0.0
      %859 = vmatprep.subr.mxu0 0.0
      %860 = vmatpush1.msra.mxu0 0.0
      %861 = vmatprep.subr.mxu0 0.0
      %862 = vmatpush1.msra.mxu0 0.0
      %863 = vmatprep.subr.mxu0 0.0
      %864 = vmatpush1.msra.mxu0 0.0
      %865 = vmatprep.subr.mxu0 0.0
      %866 = vmatpush1.msra.mxu0 0.0
      %867 = vmatprep.subr.mxu0 0.0
      %868 = vmatpush1.msra.mxu0 0.0
      %869 = vmatprep.subr.mxu0 %v827
      %870 = vmatpush1.msra.mxu0 %v830
      %871 = vmatprep.subr.mxu0 %v823
      %872 = vmatpush1.msra.mxu0 %v829
      %873 = vmatprep.subr.mxu0 0.0
      %874 = vmatpush2.msra.mxu0 0.0
      %875 = vmatprep.subr.mxu0 0.0
      %876 = vmatpush2.msra.mxu0 0.0
      %877 = vmatprep.subr.mxu0 0.0
      %878 = vmatpush2.msra.mxu0 0.0
      %879 = vmatprep.subr.mxu0 0.0
      %880 = vmatpush2.msra.mxu0 0.0
      %881 = vmatprep.subr.mxu0 0.0
      %882 = vmatpush2.msra.mxu0 0.0
      %883 = vmatprep.subr.mxu0 0.0
      %884 = vmatpush2.msra.mxu0 0.0
      %885 = vmatprep.subr.mxu0 0.0
      %886 = vmatpush2.msra.mxu0 0.0
      %887 = vmatprep.subr.mxu0 0.0
      %888 = vmatpush2.msra.mxu0 0.0
      %889 = vmatprep.subr.mxu0 0.0
      %890 = vmatpush2.msra.mxu0 0.0
      %891 = vmatprep.subr.mxu0 0.0
      %892 = vmatpush2.msra.mxu0 0.0
      %893 = vmatprep.subr.mxu0 0.0
      %894 = vmatpush2.msra.mxu0 0.0
      %895 = vmatprep.subr.mxu0 0.0
      %896 = vmatpush2.msra.mxu0 0.0
      %897 = vmatprep.subr.mxu0 0.0
      %898 = vmatpush2.msra.mxu0 0.0
      %899 = vmatprep.subr.mxu0 0.0
      %900 = vmatpush2.msra.mxu0 0.0
      %901 = vmatprep.subr.mxu0 0.0
      %902 = vmatpush2.msra.mxu0 0.0
      %903 = vmatprep.subr.mxu0 0.0
      %904 = vmatpush2.msra.mxu0 0.0
      %905 = vmatprep.mubr.f32.mxu0 0.0
      %906 = vmatmul.mubr.f32.gmra.mxu0 %v836
      %v907 = vpop.f32.mrf.mxu0
      %v908 = vadd.f32 0.0, %v907
      %v909 = vpop.f32.mrf.mxu0
      %v910 = vadd.f32 0.0, %v909
      %911 = vmatprep.mubr.f32.mxu0 0.0
      %912 = vmatmul.mubr.f32.gmra.mxu0 %v839
      %v913 = vpop.f32.mrf.mxu0
      %v914 = vadd.f32 0.0, %v913
      %v915 = vpop.f32.mrf.mxu0
      %v916 = vadd.f32 0.0, %v915
      %917 = vdwg.mxu0
      %v918 = vadd.f32 %v813, %v908
      %v919 = vadd.f32 %v814, %v910
      %v920 = vadd.f32 %v815, %v914
      %v921 = vadd.f32 %v816, %v916
      %s922 = scalar_lea.vmem %s1, 96
      %v923 = vld [vmem:[%s922] sm:$0xff]
      %v924 = vld [vmem:[%s922 + $0x8] sm:$0xff]
      %925 = vrot.lane.b32.xlu0 %v309, 108
      %v926 = vpop.permute.xlu0 %925
      %927 = vrot.lane.b32.xlu0 %v310, 108
      %v928 = vpop.permute.xlu0 %927
      %929 = vrot.lane.b32.xlu0 %v311, 108
      %v930 = vpop.permute.xlu0 %929
      %931 = vrot.lane.b32.xlu0 %v312, 108
      %v932 = vpop.permute.xlu0 %931
      %vm933 = vcmask 883712
      %v934 = vsel %vm933, %v926, %v928
      %v935 = vsel %vm933, %v930, %v932
      %v941 = vsel %vm335, %v923, 0
      %v944 = vsel %vm335, %v924, 0
      %946 = vmatprep.subr.mxu0 0.0
      %947 = vmatpush1.msra.mxu0 0.0
      %948 = vmatprep.subr.mxu0 0.0
      %949 = vmatpush1.msra.mxu0 0.0
      %950 = vmatprep.subr.mxu0 0.0
      %951 = vmatpush1.msra.mxu0 0.0
      %952 = vmatprep.subr.mxu0 0.0
      %953 = vmatpush1.msra.mxu0 0.0
      %954 = vmatprep.subr.mxu0 0.0
      %955 = vmatpush1.msra.mxu0 0.0
      %956 = vmatprep.subr.mxu0 0.0
      %957 = vmatpush1.msra.mxu0 0.0
      %958 = vmatprep.subr.mxu0 0.0
      %959 = vmatpush1.msra.mxu0 0.0
      %960 = vmatprep.subr.mxu0 0.0
      %961 = vmatpush1.msra.mxu0 0.0
      %962 = vmatprep.subr.mxu0 0.0
      %963 = vmatpush1.msra.mxu0 0.0
      %964 = vmatprep.subr.mxu0 0.0
      %965 = vmatpush1.msra.mxu0 0.0
      %966 = vmatprep.subr.mxu0 0.0
      %967 = vmatpush1.msra.mxu0 0.0
      %968 = vmatprep.subr.mxu0 0.0
      %969 = vmatpush1.msra.mxu0 0.0
      %970 = vmatprep.subr.mxu0 0.0
      %971 = vmatpush1.msra.mxu0 0.0
      %972 = vmatprep.subr.mxu0 0.0
      %973 = vmatpush1.msra.mxu0 0.0
      %974 = vmatprep.subr.mxu0 %v932
      %975 = vmatpush1.msra.mxu0 %v935
      %976 = vmatprep.subr.mxu0 %v928
      %977 = vmatpush1.msra.mxu0 %v934
      %978 = vmatprep.subr.mxu0 0.0
      %979 = vmatpush2.msra.mxu0 0.0
      %980 = vmatprep.subr.mxu0 0.0
      %981 = vmatpush2.msra.mxu0 0.0
      %982 = vmatprep.subr.mxu0 0.0
      %983 = vmatpush2.msra.mxu0 0.0
      %984 = vmatprep.subr.mxu0 0.0
      %985 = vmatpush2.msra.mxu0 0.0
      %986 = vmatprep.subr.mxu0 0.0
      %987 = vmatpush2.msra.mxu0 0.0
      %988 = vmatprep.subr.mxu0 0.0
      %989 = vmatpush2.msra.mxu0 0.0
      %990 = vmatprep.subr.mxu0 0.0
      %991 = vmatpush2.msra.mxu0 0.0
      %992 = vmatprep.subr.mxu0 0.0
      %993 = vmatpush2.msra.mxu0 0.0
      %994 = vmatprep.subr.mxu0 0.0
      %995 = vmatpush2.msra.mxu0 0.0
      %996 = vmatprep.subr.mxu0 0.0
      %997 = vmatpush2.msra.mxu0 0.0
      %998 = vmatprep.subr.mxu0 0.0
      %999 = vmatpush2.msra.mxu0 0.0
      %1000 = vmatprep.subr.mxu0 0.0
      %1001 = vmatpush2.msra.mxu0 0.0
      %1002 = vmatprep.subr.mxu0 0.0
      %1003 = vmatpush2.msra.mxu0 0.0
      %1004 = vmatprep.subr.mxu0 0.0
      %1005 = vmatpush2.msra.mxu0 0.0
      %1006 = vmatprep.subr.mxu0 0.0
      %1007 = vmatpush2.msra.mxu0 0.0
      %1008 = vmatprep.subr.mxu0 0.0
      %1009 = vmatpush2.msra.mxu0 0.0
      %1010 = vmatprep.mubr.f32.mxu0 0.0
      %1011 = vmatmul.mubr.f32.gmra.mxu0 %v941
      %v1012 = vpop.f32.mrf.mxu0
      %v1013 = vadd.f32 0.0, %v1012
      %v1014 = vpop.f32.mrf.mxu0
      %v1015 = vadd.f32 0.0, %v1014
      %1016 = vmatprep.mubr.f32.mxu0 0.0
      %1017 = vmatmul.mubr.f32.gmra.mxu0 %v944
      %v1018 = vpop.f32.mrf.mxu0
      %v1019 = vadd.f32 0.0, %v1018
      %v1020 = vpop.f32.mrf.mxu0
      %v1021 = vadd.f32 0.0, %v1020
      %1022 = vdwg.mxu0
      %v1023 = vadd.f32 %v918, %v1013
      %v1024 = vadd.f32 %v919, %v1015
      %v1025 = vadd.f32 %v920, %v1019
      %v1026 = vadd.f32 %v921, %v1021
      %s1027 = scalar_lea.vmem %s1, 112
      %v1028 = vld [vmem:[%s1027] sm:$0xff]
      %v1029 = vld [vmem:[%s1027 + $0x8] sm:$0xff]
      %1030 = vrot.lane.b32.xlu0 %v309, 107
      %v1031 = vpop.permute.xlu0 %1030
      %1032 = vrot.lane.b32.xlu0 %v310, 107
      %v1033 = vpop.permute.xlu0 %1032
      %1034 = vrot.lane.b32.xlu0 %v311, 107
      %v1035 = vpop.permute.xlu0 %1034
      %1036 = vrot.lane.b32.xlu0 %v312, 107
      %v1037 = vpop.permute.xlu0 %1036
      %vm1038 = vcmask 875520
      %v1039 = vsel %vm1038, %v1031, %v1033
      %v1040 = vsel %vm1038, %v1035, %v1037
      %v1046 = vsel %vm335, %v1028, 0
      %v1049 = vsel %vm335, %v1029, 0
      %1051 = vmatprep.subr.mxu0 0.0
      %1052 = vmatpush1.msra.mxu0 0.0
      %1053 = vmatprep.subr.mxu0 0.0
      %1054 = vmatpush1.msra.mxu0 0.0
      %1055 = vmatprep.subr.mxu0 0.0
      %1056 = vmatpush1.msra.mxu0 0.0
      %1057 = vmatprep.subr.mxu0 0.0
      %1058 = vmatpush1.msra.mxu0 0.0
      %1059 = vmatprep.subr.mxu0 0.0
      %1060 = vmatpush1.msra.mxu0 0.0
      %1061 = vmatprep.subr.mxu0 0.0
      %1062 = vmatpush1.msra.mxu0 0.0
      %1063 = vmatprep.subr.mxu0 0.0
      %1064 = vmatpush1.msra.mxu0 0.0
      %1065 = vmatprep.subr.mxu0 0.0
      %1066 = vmatpush1.msra.mxu0 0.0
      %1067 = vmatprep.subr.mxu0 0.0
      %1068 = vmatpush1.msra.mxu0 0.0
      %1069 = vmatprep.subr.mxu0 0.0
      %1070 = vmatpush1.msra.mxu0 0.0
      %1071 = vmatprep.subr.mxu0 0.0
      %1072 = vmatpush1.msra.mxu0 0.0
      %1073 = vmatprep.subr.mxu0 0.0
      %1074 = vmatpush1.msra.mxu0 0.0
      %1075 = vmatprep.subr.mxu0 0.0
      %1076 = vmatpush1.msra.mxu0 0.0
      %1077 = vmatprep.subr.mxu0 0.0
      %1078 = vmatpush1.msra.mxu0 0.0
      %1079 = vmatprep.subr.mxu0 %v1037
      %1080 = vmatpush1.msra.mxu0 %v1040
      %1081 = vmatprep.subr.mxu0 %v1033
      %1082 = vmatpush1.msra.mxu0 %v1039
      %1083 = vmatprep.subr.mxu0 0.0
      %1084 = vmatpush2.msra.mxu0 0.0
      %1085 = vmatprep.subr.mxu0 0.0
      %1086 = vmatpush2.msra.mxu0 0.0
      %1087 = vmatprep.subr.mxu0 0.0
      %1088 = vmatpush2.msra.mxu0 0.0
      %1089 = vmatprep.subr.mxu0 0.0
      %1090 = vmatpush2.msra.mxu0 0.0
      %1091 = vmatprep.subr.mxu0 0.0
      %1092 = vmatpush2.msra.mxu0 0.0
      %1093 = vmatprep.subr.mxu0 0.0
      %1094 = vmatpush2.msra.mxu0 0.0
      %1095 = vmatprep.subr.mxu0 0.0
      %1096 = vmatpush2.msra.mxu0 0.0
      %1097 = vmatprep.subr.mxu0 0.0
      %1098 = vmatpush2.msra.mxu0 0.0
      %1099 = vmatprep.subr.mxu0 0.0
      %1100 = vmatpush2.msra.mxu0 0.0
      %1101 = vmatprep.subr.mxu0 0.0
      %1102 = vmatpush2.msra.mxu0 0.0
      %1103 = vmatprep.subr.mxu0 0.0
      %1104 = vmatpush2.msra.mxu0 0.0
      %1105 = vmatprep.subr.mxu0 0.0
      %1106 = vmatpush2.msra.mxu0 0.0
      %1107 = vmatprep.subr.mxu0 0.0
      %1108 = vmatpush2.msra.mxu0 0.0
      %1109 = vmatprep.subr.mxu0 0.0
      %1110 = vmatpush2.msra.mxu0 0.0
      %1111 = vmatprep.subr.mxu0 0.0
      %1112 = vmatpush2.msra.mxu0 0.0
      %1113 = vmatprep.subr.mxu0 0.0
      %1114 = vmatpush2.msra.mxu0 0.0
      %1115 = vmatprep.mubr.f32.mxu0 0.0
      %1116 = vmatmul.mubr.f32.gmra.mxu0 %v1046
      %v1117 = vpop.f32.mrf.mxu0
      %v1118 = vadd.f32 0.0, %v1117
      %v1119 = vpop.f32.mrf.mxu0
      %v1120 = vadd.f32 0.0, %v1119
      %1121 = vmatprep.mubr.f32.mxu0 0.0
      %1122 = vmatmul.mubr.f32.gmra.mxu0 %v1049
      %v1123 = vpop.f32.mrf.mxu0
      %v1124 = vadd.f32 0.0, %v1123
      %v1125 = vpop.f32.mrf.mxu0
      %v1126 = vadd.f32 0.0, %v1125
      %1127 = vdwg.mxu0
      %v1128 = vadd.f32 %v1023, %v1118
      %v1129 = vadd.f32 %v1024, %v1120
      %v1130 = vadd.f32 %v1025, %v1124
      %v1131 = vadd.f32 %v1026, %v1126
      %s1132 = scalar_lea.vmem %s1, 128
      %v1133 = vld [vmem:[%s1132] sm:$0xff]
      %v1134 = vld [vmem:[%s1132 + $0x8] sm:$0xff]
      %1135 = vrot.lane.b32.xlu0 %v309, 106
      %v1136 = vpop.permute.xlu0 %1135
      %1137 = vrot.lane.b32.xlu0 %v310, 106
      %v1138 = vpop.permute.xlu0 %1137
      %1139 = vrot.lane.b32.xlu0 %v311, 106
      %v1140 = vpop.permute.xlu0 %1139
      %1141 = vrot.lane.b32.xlu0 %v312, 106
      %v1142 = vpop.permute.xlu0 %1141
      %vm1143 = vcmask 867328
      %v1144 = vsel %vm1143, %v1136, %v1138
      %v1145 = vsel %vm1143, %v1140, %v1142
      %v1151 = vsel %vm335, %v1133, 0
      %v1154 = vsel %vm335, %v1134, 0
      %1156 = vmatprep.subr.mxu0 0.0
      %1157 = vmatpush1.msra.mxu0 0.0
      %1158 = vmatprep.subr.mxu0 0.0
      %1159 = vmatpush1.msra.mxu0 0.0
      %1160 = vmatprep.subr.mxu0 0.0
      %1161 = vmatpush1.msra.mxu0 0.0
      %1162 = vmatprep.subr.mxu0 0.0
      %1163 = vmatpush1.msra.mxu0 0.0
      %1164 = vmatprep.subr.mxu0 0.0
      %1165 = vmatpush1.msra.mxu0 0.0
      %1166 = vmatprep.subr.mxu0 0.0
      %1167 = vmatpush1.msra.mxu0 0.0
      %1168 = vmatprep.subr.mxu0 0.0
      %1169 = vmatpush1.msra.mxu0 0.0
      %1170 = vmatprep.subr.mxu0 0.0
      %1171 = vmatpush1.msra.mxu0 0.0
      %1172 = vmatprep.subr.mxu0 0.0
      %1173 = vmatpush1.msra.mxu0 0.0
      %1174 = vmatprep.subr.mxu0 0.0
      %1175 = vmatpush1.msra.mxu0 0.0
      %1176 = vmatprep.subr.mxu0 0.0
      %1177 = vmatpush1.msra.mxu0 0.0
      %1178 = vmatprep.subr.mxu0 0.0
      %1179 = vmatpush1.msra.mxu0 0.0
      %1180 = vmatprep.subr.mxu0 0.0
      %1181 = vmatpush1.msra.mxu0 0.0
      %1182 = vmatprep.subr.mxu0 0.0
      %1183 = vmatpush1.msra.mxu0 0.0
      %1184 = vmatprep.subr.mxu0 %v1142
      %1185 = vmatpush1.msra.mxu0 %v1145
      %1186 = vmatprep.subr.mxu0 %v1138
      %1187 = vmatpush1.msra.mxu0 %v1144
      %1188 = vmatprep.subr.mxu0 0.0
      %1189 = vmatpush2.msra.mxu0 0.0
      %1190 = vmatprep.subr.mxu0 0.0
      %1191 = vmatpush2.msra.mxu0 0.0
      %1192 = vmatprep.subr.mxu0 0.0
      %1193 = vmatpush2.msra.mxu0 0.0
      %1194 = vmatprep.subr.mxu0 0.0
      %1195 = vmatpush2.msra.mxu0 0.0
      %1196 = vmatprep.subr.mxu0 0.0
      %1197 = vmatpush2.msra.mxu0 0.0
      %1198 = vmatprep.subr.mxu0 0.0
      %1199 = vmatpush2.msra.mxu0 0.0
      %1200 = vmatprep.subr.mxu0 0.0
      %1201 = vmatpush2.msra.mxu0 0.0
      %1202 = vmatprep.subr.mxu0 0.0
      %1203 = vmatpush2.msra.mxu0 0.0
      %1204 = vmatprep.subr.mxu0 0.0
      %1205 = vmatpush2.msra.mxu0 0.0
      %1206 = vmatprep.subr.mxu0 0.0
      %1207 = vmatpush2.msra.mxu0 0.0
      %1208 = vmatprep.subr.mxu0 0.0
      %1209 = vmatpush2.msra.mxu0 0.0
      %1210 = vmatprep.subr.mxu0 0.0
      %1211 = vmatpush2.msra.mxu0 0.0
      %1212 = vmatprep.subr.mxu0 0.0
      %1213 = vmatpush2.msra.mxu0 0.0
      %1214 = vmatprep.subr.mxu0 0.0
      %1215 = vmatpush2.msra.mxu0 0.0
      %1216 = vmatprep.subr.mxu0 0.0
      %1217 = vmatpush2.msra.mxu0 0.0
      %1218 = vmatprep.subr.mxu0 0.0
      %1219 = vmatpush2.msra.mxu0 0.0
      %1220 = vmatprep.mubr.f32.mxu0 0.0
      %1221 = vmatmul.mubr.f32.gmra.mxu0 %v1151
      %v1222 = vpop.f32.mrf.mxu0
      %v1223 = vadd.f32 0.0, %v1222
      %v1224 = vpop.f32.mrf.mxu0
      %v1225 = vadd.f32 0.0, %v1224
      %1226 = vmatprep.mubr.f32.mxu0 0.0
      %1227 = vmatmul.mubr.f32.gmra.mxu0 %v1154
      %v1228 = vpop.f32.mrf.mxu0
      %v1229 = vadd.f32 0.0, %v1228
      %v1230 = vpop.f32.mrf.mxu0
      %v1231 = vadd.f32 0.0, %v1230
      %1232 = vdwg.mxu0
      %v1233 = vadd.f32 %v1128, %v1223
      %v1234 = vadd.f32 %v1129, %v1225
      %v1235 = vadd.f32 %v1130, %v1229
      %v1236 = vadd.f32 %v1131, %v1231
      %v1237 = vld [vmem:[%s2] sm:$0xff]
      %v1238 = vld [vmem:[%s2 + $0x8] sm:$0xff]
      %1240 = vset.pattern.permute.xlu0 0
      %1241 = vperm.xlu0 %1240, %v1237
      %v1242 = vpop.permute.xlu0 %1241
      %1245 = vset.pattern.permute.xlu0 0
      %1246 = vperm.xlu0 %1245, %v1238
      %v1247 = vpop.permute.xlu0 %1246
      %v1249 = vadd.f32 %v1233, %v1242
      %v1250 = vadd.f32 %v1234, %v1242
      %v1251 = vadd.f32 %v1235, %v1247
      %v1252 = vadd.f32 %v1236, %v1247
      %v1253 = vxor.u32 %v1249, 2147483648
      %v1254 = vxor.u32 %v1250, 2147483648
      %v1255 = vxor.u32 %v1251, 2147483648
      %v1256 = vxor.u32 %v1252, 2147483648
      %v1257 = vmul.f32 %v1253, 1.442695
      %v1258 = vpow.pop %v1257
      %v1259 = vmul.f32 %v1254, 1.442695
      %v1260 = vpow.pop %v1259
      %v1261 = vmul.f32 %v1255, 1.442695
      %v1262 = vpow.pop %v1261
      %v1263 = vmul.f32 %v1256, 1.442695
      %v1264 = vpow.pop %v1263
      %v1265 = vadd.f32 %v1258, 1.0
      %v1266 = vadd.f32 %v1260, 1.0
      %v1267 = vadd.f32 %v1262, 1.0
      %v1268 = vadd.f32 %v1264, 1.0
      %v1269 = vrcp.pop %v1265
      %v1270 = vmul.f32 1.0, %v1269
      %v1271 = vrcp.pop %v1266
      %v1272 = vmul.f32 1.0, %v1271
      %v1273 = vrcp.pop %v1267
      %v1274 = vmul.f32 1.0, %v1273
      %v1275 = vrcp.pop %v1268
      %v1276 = vmul.f32 1.0, %v1275
      %v1277 = vmul.f32 %v1270, %v288
      %v1278 = vmul.f32 %v1272, %v289
      %1281 = vrot.lane.b32.xlu0 %v1277, 11
      %v1282 = vpop.permute.xlu0 %1281
      %1283 = vrot.lane.b32.xlu0 %v1278, 11
      %v1284 = vpop.permute.xlu0 %1283
      %v1285 = vsel %vm299, %v1282, %v1284
      %1288 = vst.msk [vmem:[#allocation3 + $0x10] sm:$0xff] %vm303, %v1282
      %1289 = vst.msk [vmem:[#allocation3 + $0x18] sm:$0xff] %vm305, %v1285
      %v1290 = vld [vmem:[%s3] sm:$0xff]
      %v1291 = vld [vmem:[#allocation3] sm:$0xff]
      %v1292 = vld [vmem:[#allocation3 + $0x8] sm:$0xff]
      %v1293 = vld [vmem:[#allocation3 + $0x10] sm:$0xff]
      %v1294 = vld [vmem:[#allocation3 + $0x18] sm:$0xff]
      %s1295 = scalar_lea.vmem %s3, 8
      %v1296 = vld [vmem:[%s1295] sm:$0xff]
      %1301 = vrot.lane.b32.xlu0 %v1291, 127
      %v1302 = vpop.permute.xlu0 %1301
      %1303 = vrot.lane.b32.xlu0 %v1292, 127
      %v1304 = vpop.permute.xlu0 %1303
      %1305 = vrot.lane.b32.xlu0 %v1293, 127
      %v1306 = vpop.permute.xlu0 %1305
      %1307 = vrot.lane.b32.xlu0 %v1294, 127
      %v1308 = vpop.permute.xlu0 %1307
      %v1309 = vsel %vm328, %v1302, %v1304
      %v1310 = vsel %vm328, %v1306, %v1308
      %v1316 = vsel %vm335, %v1296, 0
      %1318 = vmatprep.subr.mxu0 0.0
      %1319 = vmatpush1.msra.mxu0 0.0
      %1320 = vmatprep.subr.mxu0 0.0
      %1321 = vmatpush1.msra.mxu0 0.0
      %1322 = vmatprep.subr.mxu0 0.0
      %1323 = vmatpush1.msra.mxu0 0.0
      %1324 = vmatprep.subr.mxu0 0.0
      %1325 = vmatpush1.msra.mxu0 0.0
      %1326 = vmatprep.subr.mxu0 0.0
      %1327 = vmatpush1.msra.mxu0 0.0
      %1328 = vmatprep.subr.mxu0 0.0
      %1329 = vmatpush1.msra.mxu0 0.0
      %1330 = vmatprep.subr.mxu0 0.0
      %1331 = vmatpush1.msra.mxu0 0.0
      %1332 = vmatprep.subr.mxu0 0.0
      %1333 = vmatpush1.msra.mxu0 0.0
      %1334 = vmatprep.subr.mxu0 0.0
      %1335 = vmatpush1.msra.mxu0 0.0
      %1336 = vmatprep.subr.mxu0 0.0
      %1337 = vmatpush1.msra.mxu0 0.0
      %1338 = vmatprep.subr.mxu0 0.0
      %1339 = vmatpush1.msra.mxu0 0.0
      %1340 = vmatprep.subr.mxu0 0.0
      %1341 = vmatpush1.msra.mxu0 0.0
      %1342 = vmatprep.subr.mxu0 0.0
      %1343 = vmatpush1.msra.mxu0 0.0
      %1344 = vmatprep.subr.mxu0 0.0
      %1345 = vmatpush1.msra.mxu0 0.0
      %1346 = vmatprep.subr.mxu0 %v1308
      %1347 = vmatpush1.msra.mxu0 %v1310
      %1348 = vmatprep.subr.mxu0 %v1304
      %1349 = vmatpush1.msra.mxu0 %v1309
      %1350 = vmatprep.subr.mxu0 0.0
      %1351 = vmatpush2.msra.mxu0 0.0
      %1352 = vmatprep.subr.mxu0 0.0
      %1353 = vmatpush2.msra.mxu0 0.0
      %1354 = vmatprep.subr.mxu0 0.0
      %1355 = vmatpush2.msra.mxu0 0.0
      %1356 = vmatprep.subr.mxu0 0.0
      %1357 = vmatpush2.msra.mxu0 0.0
      %1358 = vmatprep.subr.mxu0 0.0
      %1359 = vmatpush2.msra.mxu0 0.0
      %1360 = vmatprep.subr.mxu0 0.0
      %1361 = vmatpush2.msra.mxu0 0.0
      %1362 = vmatprep.subr.mxu0 0.0
      %1363 = vmatpush2.msra.mxu0 0.0
      %1364 = vmatprep.subr.mxu0 0.0
      %1365 = vmatpush2.msra.mxu0 0.0
      %1366 = vmatprep.subr.mxu0 0.0
      %1367 = vmatpush2.msra.mxu0 0.0
      %1368 = vmatprep.subr.mxu0 0.0
      %1369 = vmatpush2.msra.mxu0 0.0
      %1370 = vmatprep.subr.mxu0 0.0
      %1371 = vmatpush2.msra.mxu0 0.0
      %1372 = vmatprep.subr.mxu0 0.0
      %1373 = vmatpush2.msra.mxu0 0.0
      %1374 = vmatprep.subr.mxu0 0.0
      %1375 = vmatpush2.msra.mxu0 0.0
      %1376 = vmatprep.subr.mxu0 0.0
      %1377 = vmatpush2.msra.mxu0 0.0
      %1378 = vmatprep.subr.mxu0 0.0
      %1379 = vmatpush2.msra.mxu0 0.0
      %1380 = vmatprep.subr.mxu0 0.0
      %1381 = vmatpush2.msra.mxu0 0.0
      %1382 = vmatprep.mubr.f32.mxu0 0.0
      %1383 = vmatmul.mubr.f32.gmra.mxu0 %v1316
      %v1384 = vpop.f32.mrf.mxu0
      %v1385 = vadd.f32 0.0, %v1384
      %v1386 = vpop.f32.mrf.mxu0
      %v1387 = vadd.f32 0.0, %v1386
      %1388 = vdwg.mxu0
      %v1390 = vsel %vm335, %v1290, 0
      %1392 = vmatprep.subr.mxu0 0.0
      %1393 = vmatpush1.msra.mxu0 0.0
      %1394 = vmatprep.subr.mxu0 0.0
      %1395 = vmatpush1.msra.mxu0 0.0
      %1396 = vmatprep.subr.mxu0 0.0
      %1397 = vmatpush1.msra.mxu0 0.0
      %1398 = vmatprep.subr.mxu0 0.0
      %1399 = vmatpush1.msra.mxu0 0.0
      %1400 = vmatprep.subr.mxu0 0.0
      %1401 = vmatpush1.msra.mxu0 0.0
      %1402 = vmatprep.subr.mxu0 0.0
      %1403 = vmatpush1.msra.mxu0 0.0
      %1404 = vmatprep.subr.mxu0 0.0
      %1405 = vmatpush1.msra.mxu0 0.0
      %1406 = vmatprep.subr.mxu0 0.0
      %1407 = vmatpush1.msra.mxu0 0.0
      %1408 = vmatprep.subr.mxu0 0.0
      %1409 = vmatpush1.msra.mxu0 0.0
      %1410 = vmatprep.subr.mxu0 0.0
      %1411 = vmatpush1.msra.mxu0 0.0
      %1412 = vmatprep.subr.mxu0 0.0
      %1413 = vmatpush1.msra.mxu0 0.0
      %1414 = vmatprep.subr.mxu0 0.0
      %1415 = vmatpush1.msra.mxu0 0.0
      %1416 = vmatprep.subr.mxu0 0.0
      %1417 = vmatpush1.msra.mxu0 0.0
      %1418 = vmatprep.subr.mxu0 0.0
      %1419 = vmatpush1.msra.mxu0 0.0
      %1420 = vmatprep.subr.mxu0 %v1294
      %1421 = vmatpush1.msra.mxu0 %v1293
      %1422 = vmatprep.subr.mxu0 %v1292
      %1423 = vmatpush1.msra.mxu0 %v1291
      %1424 = vmatprep.subr.mxu0 0.0
      %1425 = vmatpush2.msra.mxu0 0.0
      %1426 = vmatprep.subr.mxu0 0.0
      %1427 = vmatpush2.msra.mxu0 0.0
      %1428 = vmatprep.subr.mxu0 0.0
      %1429 = vmatpush2.msra.mxu0 0.0
      %1430 = vmatprep.subr.mxu0 0.0
      %1431 = vmatpush2.msra.mxu0 0.0
      %1432 = vmatprep.subr.mxu0 0.0
      %1433 = vmatpush2.msra.mxu0 0.0
      %1434 = vmatprep.subr.mxu0 0.0
      %1435 = vmatpush2.msra.mxu0 0.0
      %1436 = vmatprep.subr.mxu0 0.0
      %1437 = vmatpush2.msra.mxu0 0.0
      %1438 = vmatprep.subr.mxu0 0.0
      %1439 = vmatpush2.msra.mxu0 0.0
      %1440 = vmatprep.subr.mxu0 0.0
      %1441 = vmatpush2.msra.mxu0 0.0
      %1442 = vmatprep.subr.mxu0 0.0
      %1443 = vmatpush2.msra.mxu0 0.0
      %1444 = vmatprep.subr.mxu0 0.0
      %1445 = vmatpush2.msra.mxu0 0.0
      %1446 = vmatprep.subr.mxu0 0.0
      %1447 = vmatpush2.msra.mxu0 0.0
      %1448 = vmatprep.subr.mxu0 0.0
      %1449 = vmatpush2.msra.mxu0 0.0
      %1450 = vmatprep.subr.mxu0 0.0
      %1451 = vmatpush2.msra.mxu0 0.0
      %1452 = vmatprep.subr.mxu0 0.0
      %1453 = vmatpush2.msra.mxu0 0.0
      %1454 = vmatprep.subr.mxu0 0.0
      %1455 = vmatpush2.msra.mxu0 0.0
      %1456 = vmatprep.mubr.f32.mxu0 0.0
      %1457 = vmatmul.mubr.f32.gmra.mxu0 %v1390
      %v1458 = vpop.f32.mrf.mxu0
      %v1459 = vadd.f32 %v1385, %v1458
      %v1460 = vpop.f32.mrf.mxu0
      %v1461 = vadd.f32 %v1387, %v1460
      %1462 = vdwg.mxu0
      %s1463 = scalar_lea.vmem %s3, 16
      %v1464 = vld [vmem:[%s1463] sm:$0xff]
      %1465 = vrot.lane.b32.xlu0 %v1291, 126
      %v1466 = vpop.permute.xlu0 %1465
      %1467 = vrot.lane.b32.xlu0 %v1292, 126
      %v1468 = vpop.permute.xlu0 %1467
      %1469 = vrot.lane.b32.xlu0 %v1293, 126
      %v1470 = vpop.permute.xlu0 %1469
      %1471 = vrot.lane.b32.xlu0 %v1294, 126
      %v1472 = vpop.permute.xlu0 %1471
      %v1473 = vsel %vm513, %v1466, %v1468
      %v1474 = vsel %vm513, %v1470, %v1472
      %v1480 = vsel %vm335, %v1464, 0
      %1482 = vmatprep.subr.mxu0 0.0
      %1483 = vmatpush1.msra.mxu0 0.0
      %1484 = vmatprep.subr.mxu0 0.0
      %1485 = vmatpush1.msra.mxu0 0.0
      %1486 = vmatprep.subr.mxu0 0.0
      %1487 = vmatpush1.msra.mxu0 0.0
      %1488 = vmatprep.subr.mxu0 0.0
      %1489 = vmatpush1.msra.mxu0 0.0
      %1490 = vmatprep.subr.mxu0 0.0
      %1491 = vmatpush1.msra.mxu0 0.0
      %1492 = vmatprep.subr.mxu0 0.0
      %1493 = vmatpush1.msra.mxu0 0.0
      %1494 = vmatprep.subr.mxu0 0.0
      %1495 = vmatpush1.msra.mxu0 0.0
      %1496 = vmatprep.subr.mxu0 0.0
      %1497 = vmatpush1.msra.mxu0 0.0
      %1498 = vmatprep.subr.mxu0 0.0
      %1499 = vmatpush1.msra.mxu0 0.0
      %1500 = vmatprep.subr.mxu0 0.0
      %1501 = vmatpush1.msra.mxu0 0.0
      %1502 = vmatprep.subr.mxu0 0.0
      %1503 = vmatpush1.msra.mxu0 0.0
      %1504 = vmatprep.subr.mxu0 0.0
      %1505 = vmatpush1.msra.mxu0 0.0
      %1506 = vmatprep.subr.mxu0 0.0
      %1507 = vmatpush1.msra.mxu0 0.0
      %1508 = vmatprep.subr.mxu0 0.0
      %1509 = vmatpush1.msra.mxu0 0.0
      %1510 = vmatprep.subr.mxu0 %v1472
      %1511 = vmatpush1.msra.mxu0 %v1474
      %1512 = vmatprep.subr.mxu0 %v1468
      %1513 = vmatpush1.msra.mxu0 %v1473
      %1514 = vmatprep.subr.mxu0 0.0
      %1515 = vmatpush2.msra.mxu0 0.0
      %1516 = vmatprep.subr.mxu0 0.0
      %1517 = vmatpush2.msra.mxu0 0.0
      %1518 = vmatprep.subr.mxu0 0.0
      %1519 = vmatpush2.msra.mxu0 0.0
      %1520 = vmatprep.subr.mxu0 0.0
      %1521 = vmatpush2.msra.mxu0 0.0
      %1522 = vmatprep.subr.mxu0 0.0
      %1523 = vmatpush2.msra.mxu0 0.0
      %1524 = vmatprep.subr.mxu0 0.0
      %1525 = vmatpush2.msra.mxu0 0.0
      %1526 = vmatprep.subr.mxu0 0.0
      %1527 = vmatpush2.msra.mxu0 0.0
      %1528 = vmatprep.subr.mxu0 0.0
      %1529 = vmatpush2.msra.mxu0 0.0
      %1530 = vmatprep.subr.mxu0 0.0
      %1531 = vmatpush2.msra.mxu0 0.0
      %1532 = vmatprep.subr.mxu0 0.0
      %1533 = vmatpush2.msra.mxu0 0.0
      %1534 = vmatprep.subr.mxu0 0.0
      %1535 = vmatpush2.msra.mxu0 0.0
      %1536 = vmatprep.subr.mxu0 0.0
      %1537 = vmatpush2.msra.mxu0 0.0
      %1538 = vmatprep.subr.mxu0 0.0
      %1539 = vmatpush2.msra.mxu0 0.0
      %1540 = vmatprep.subr.mxu0 0.0
      %1541 = vmatpush2.msra.mxu0 0.0
      %1542 = vmatprep.subr.mxu0 0.0
      %1543 = vmatpush2.msra.mxu0 0.0
      %1544 = vmatprep.subr.mxu0 0.0
      %1545 = vmatpush2.msra.mxu0 0.0
      %1546 = vmatprep.mubr.f32.mxu0 0.0
      %1547 = vmatmul.mubr.f32.gmra.mxu0 %v1480
      %v1548 = vpop.f32.mrf.mxu0
      %v1549 = vadd.f32 0.0, %v1548
      %v1550 = vpop.f32.mrf.mxu0
      %v1551 = vadd.f32 0.0, %v1550
      %1552 = vdwg.mxu0
      %v1553 = vadd.f32 %v1459, %v1549
      %v1554 = vadd.f32 %v1461, %v1551
      %s1555 = scalar_lea.vmem %s3, 24
      %v1556 = vld [vmem:[%s1555] sm:$0xff]
      %1557 = vrot.lane.b32.xlu0 %v1291, 118
      %v1558 = vpop.permute.xlu0 %1557
      %1559 = vrot.lane.b32.xlu0 %v1292, 118
      %v1560 = vpop.permute.xlu0 %1559
      %1561 = vrot.lane.b32.xlu0 %v1293, 118
      %v1562 = vpop.permute.xlu0 %1561
      %1563 = vrot.lane.b32.xlu0 %v1294, 118
      %v1564 = vpop.permute.xlu0 %1563
      %v1565 = vsel %vm618, %v1558, %v1560
      %v1566 = vsel %vm618, %v1562, %v1564
      %v1572 = vsel %vm335, %v1556, 0
      %1574 = vmatprep.subr.mxu0 0.0
      %1575 = vmatpush1.msra.mxu0 0.0
      %1576 = vmatprep.subr.mxu0 0.0
      %1577 = vmatpush1.msra.mxu0 0.0
      %1578 = vmatprep.subr.mxu0 0.0
      %1579 = vmatpush1.msra.mxu0 0.0
      %1580 = vmatprep.subr.mxu0 0.0
      %1581 = vmatpush1.msra.mxu0 0.0
      %1582 = vmatprep.subr.mxu0 0.0
      %1583 = vmatpush1.msra.mxu0 0.0
      %1584 = vmatprep.subr.mxu0 0.0
      %1585 = vmatpush1.msra.mxu0 0.0
      %1586 = vmatprep.subr.mxu0 0.0
      %1587 = vmatpush1.msra.mxu0 0.0
      %1588 = vmatprep.subr.mxu0 0.0
      %1589 = vmatpush1.msra.mxu0 0.0
      %1590 = vmatprep.subr.mxu0 0.0
      %1591 = vmatpush1.msra.mxu0 0.0
      %1592 = vmatprep.subr.mxu0 0.0
      %1593 = vmatpush1.msra.mxu0 0.0
      %1594 = vmatprep.subr.mxu0 0.0
      %1595 = vmatpush1.msra.mxu0 0.0
      %1596 = vmatprep.subr.mxu0 0.0
      %1597 = vmatpush1.msra.mxu0 0.0
      %1598 = vmatprep.subr.mxu0 0.0
      %1599 = vmatpush1.msra.mxu0 0.0
      %1600 = vmatprep.subr.mxu0 0.0
      %1601 = vmatpush1.msra.mxu0 0.0
      %1602 = vmatprep.subr.mxu0 %v1564
      %1603 = vmatpush1.msra.mxu0 %v1566
      %1604 = vmatprep.subr.mxu0 %v1560
      %1605 = vmatpush1.msra.mxu0 %v1565
      %1606 = vmatprep.subr.mxu0 0.0
      %1607 = vmatpush2.msra.mxu0 0.0
      %1608 = vmatprep.subr.mxu0 0.0
      %1609 = vmatpush2.msra.mxu0 0.0
      %1610 = vmatprep.subr.mxu0 0.0
      %1611 = vmatpush2.msra.mxu0 0.0
      %1612 = vmatprep.subr.mxu0 0.0
      %1613 = vmatpush2.msra.mxu0 0.0
      %1614 = vmatprep.subr.mxu0 0.0
      %1615 = vmatpush2.msra.mxu0 0.0
      %1616 = vmatprep.subr.mxu0 0.0
      %1617 = vmatpush2.msra.mxu0 0.0
      %1618 = vmatprep.subr.mxu0 0.0
      %1619 = vmatpush2.msra.mxu0 0.0
      %1620 = vmatprep.subr.mxu0 0.0
      %1621 = vmatpush2.msra.mxu0 0.0
      %1622 = vmatprep.subr.mxu0 0.0
      %1623 = vmatpush2.msra.mxu0 0.0
      %1624 = vmatprep.subr.mxu0 0.0
      %1625 = vmatpush2.msra.mxu0 0.0
      %1626 = vmatprep.subr.mxu0 0.0
      %1627 = vmatpush2.msra.mxu0 0.0
      %1628 = vmatprep.subr.mxu0 0.0
      %1629 = vmatpush2.msra.mxu0 0.0
      %1630 = vmatprep.subr.mxu0 0.0
      %1631 = vmatpush2.msra.mxu0 0.0
      %1632 = vmatprep.subr.mxu0 0.0
      %1633 = vmatpush2.msra.mxu0 0.0
      %1634 = vmatprep.subr.mxu0 0.0
      %1635 = vmatpush2.msra.mxu0 0.0
      %1636 = vmatprep.subr.mxu0 0.0
      %1637 = vmatpush2.msra.mxu0 0.0
      %1638 = vmatprep.mubr.f32.mxu0 0.0
      %1639 = vmatmul.mubr.f32.gmra.mxu0 %v1572
      %v1640 = vpop.f32.mrf.mxu0
      %v1641 = vadd.f32 0.0, %v1640
      %v1642 = vpop.f32.mrf.mxu0
      %v1643 = vadd.f32 0.0, %v1642
      %1644 = vdwg.mxu0
      %v1645 = vadd.f32 %v1553, %v1641
      %v1646 = vadd.f32 %v1554, %v1643
      %s1647 = scalar_lea.vmem %s3, 32
      %v1648 = vld [vmem:[%s1647] sm:$0xff]
      %1649 = vrot.lane.b32.xlu0 %v1291, 117
      %v1650 = vpop.permute.xlu0 %1649
      %1651 = vrot.lane.b32.xlu0 %v1292, 117
      %v1652 = vpop.permute.xlu0 %1651
      %1653 = vrot.lane.b32.xlu0 %v1293, 117
      %v1654 = vpop.permute.xlu0 %1653
      %1655 = vrot.lane.b32.xlu0 %v1294, 117
      %v1656 = vpop.permute.xlu0 %1655
      %v1657 = vsel %vm723, %v1650, %v1652
      %v1658 = vsel %vm723, %v1654, %v1656
      %v1664 = vsel %vm335, %v1648, 0
      %1666 = vmatprep.subr.mxu0 0.0
      %1667 = vmatpush1.msra.mxu0 0.0
      %1668 = vmatprep.subr.mxu0 0.0
      %1669 = vmatpush1.msra.mxu0 0.0
      %1670 = vmatprep.subr.mxu0 0.0
      %1671 = vmatpush1.msra.mxu0 0.0
      %1672 = vmatprep.subr.mxu0 0.0
      %1673 = vmatpush1.msra.mxu0 0.0
      %1674 = vmatprep.subr.mxu0 0.0
      %1675 = vmatpush1.msra.mxu0 0.0
      %1676 = vmatprep.subr.mxu0 0.0
      %1677 = vmatpush1.msra.mxu0 0.0
      %1678 = vmatprep.subr.mxu0 0.0
      %1679 = vmatpush1.msra.mxu0 0.0
      %1680 = vmatprep.subr.mxu0 0.0
      %1681 = vmatpush1.msra.mxu0 0.0
      %1682 = vmatprep.subr.mxu0 0.0
      %1683 = vmatpush1.msra.mxu0 0.0
      %1684 = vmatprep.subr.mxu0 0.0
      %1685 = vmatpush1.msra.mxu0 0.0
      %1686 = vmatprep.subr.mxu0 0.0
      %1687 = vmatpush1.msra.mxu0 0.0
      %1688 = vmatprep.subr.mxu0 0.0
      %1689 = vmatpush1.msra.mxu0 0.0
      %1690 = vmatprep.subr.mxu0 0.0
      %1691 = vmatpush1.msra.mxu0 0.0
      %1692 = vmatprep.subr.mxu0 0.0
      %1693 = vmatpush1.msra.mxu0 0.0
      %1694 = vmatprep.subr.mxu0 %v1656
      %1695 = vmatpush1.msra.mxu0 %v1658
      %1696 = vmatprep.subr.mxu0 %v1652
      %1697 = vmatpush1.msra.mxu0 %v1657
      %1698 = vmatprep.subr.mxu0 0.0
      %1699 = vmatpush2.msra.mxu0 0.0
      %1700 = vmatprep.subr.mxu0 0.0
      %1701 = vmatpush2.msra.mxu0 0.0
      %1702 = vmatprep.subr.mxu0 0.0
      %1703 = vmatpush2.msra.mxu0 0.0
      %1704 = vmatprep.subr.mxu0 0.0
      %1705 = vmatpush2.msra.mxu0 0.0
      %1706 = vmatprep.subr.mxu0 0.0
      %1707 = vmatpush2.msra.mxu0 0.0
      %1708 = vmatprep.subr.mxu0 0.0
      %1709 = vmatpush2.msra.mxu0 0.0
      %1710 = vmatprep.subr.mxu0 0.0
      %1711 = vmatpush2.msra.mxu0 0.0
      %1712 = vmatprep.subr.mxu0 0.0
      %1713 = vmatpush2.msra.mxu0 0.0
      %1714 = vmatprep.subr.mxu0 0.0
      %1715 = vmatpush2.msra.mxu0 0.0
      %1716 = vmatprep.subr.mxu0 0.0
      %1717 = vmatpush2.msra.mxu0 0.0
      %1718 = vmatprep.subr.mxu0 0.0
      %1719 = vmatpush2.msra.mxu0 0.0
      %1720 = vmatprep.subr.mxu0 0.0
      %1721 = vmatpush2.msra.mxu0 0.0
      %1722 = vmatprep.subr.mxu0 0.0
      %1723 = vmatpush2.msra.mxu0 0.0
      %1724 = vmatprep.subr.mxu0 0.0
      %1725 = vmatpush2.msra.mxu0 0.0
      %1726 = vmatprep.subr.mxu0 0.0
      %1727 = vmatpush2.msra.mxu0 0.0
      %1728 = vmatprep.subr.mxu0 0.0
      %1729 = vmatpush2.msra.mxu0 0.0
      %1730 = vmatprep.mubr.f32.mxu0 0.0
      %1731 = vmatmul.mubr.f32.gmra.mxu0 %v1664
      %v1732 = vpop.f32.mrf.mxu0
      %v1733 = vadd.f32 0.0, %v1732
      %v1734 = vpop.f32.mrf.mxu0
      %v1735 = vadd.f32 0.0, %v1734
      %1736 = vdwg.mxu0
      %v1737 = vadd.f32 %v1645, %v1733
      %v1738 = vadd.f32 %v1646, %v1735
      %s1739 = scalar_lea.vmem %s3, 40
      %v1740 = vld [vmem:[%s1739] sm:$0xff]
      %1741 = vrot.lane.b32.xlu0 %v1291, 116
      %v1742 = vpop.permute.xlu0 %1741
      %1743 = vrot.lane.b32.xlu0 %v1292, 116
      %v1744 = vpop.permute.xlu0 %1743
      %1745 = vrot.lane.b32.xlu0 %v1293, 116
      %v1746 = vpop.permute.xlu0 %1745
      %1747 = vrot.lane.b32.xlu0 %v1294, 116
      %v1748 = vpop.permute.xlu0 %1747
      %v1749 = vsel %vm828, %v1742, %v1744
      %v1750 = vsel %vm828, %v1746, %v1748
      %v1756 = vsel %vm335, %v1740, 0
      %1758 = vmatprep.subr.mxu0 0.0
      %1759 = vmatpush1.msra.mxu0 0.0
      %1760 = vmatprep.subr.mxu0 0.0
      %1761 = vmatpush1.msra.mxu0 0.0
      %1762 = vmatprep.subr.mxu0 0.0
      %1763 = vmatpush1.msra.mxu0 0.0
      %1764 = vmatprep.subr.mxu0 0.0
      %1765 = vmatpush1.msra.mxu0 0.0
      %1766 = vmatprep.subr.mxu0 0.0
      %1767 = vmatpush1.msra.mxu0 0.0
      %1768 = vmatprep.subr.mxu0 0.0
      %1769 = vmatpush1.msra.mxu0 0.0
      %1770 = vmatprep.subr.mxu0 0.0
      %1771 = vmatpush1.msra.mxu0 0.0
      %1772 = vmatprep.subr.mxu0 0.0
      %1773 = vmatpush1.msra.mxu0 0.0
      %1774 = vmatprep.subr.mxu0 0.0
      %1775 = vmatpush1.msra.mxu0 0.0
      %1776 = vmatprep.subr.mxu0 0.0
      %1777 = vmatpush1.msra.mxu0 0.0
      %1778 = vmatprep.subr.mxu0 0.0
      %1779 = vmatpush1.msra.mxu0 0.0
      %1780 = vmatprep.subr.mxu0 0.0
      %1781 = vmatpush1.msra.mxu0 0.0
      %1782 = vmatprep.subr.mxu0 0.0
      %1783 = vmatpush1.msra.mxu0 0.0
      %1784 = vmatprep.subr.mxu0 0.0
      %1785 = vmatpush1.msra.mxu0 0.0
      %1786 = vmatprep.subr.mxu0 %v1748
      %1787 = vmatpush1.msra.mxu0 %v1750
      %1788 = vmatprep.subr.mxu0 %v1744
      %1789 = vmatpush1.msra.mxu0 %v1749
      %1790 = vmatprep.subr.mxu0 0.0
      %1791 = vmatpush2.msra.mxu0 0.0
      %1792 = vmatprep.subr.mxu0 0.0
      %1793 = vmatpush2.msra.mxu0 0.0
      %1794 = vmatprep.subr.mxu0 0.0
      %1795 = vmatpush2.msra.mxu0 0.0
      %1796 = vmatprep.subr.mxu0 0.0
      %1797 = vmatpush2.msra.mxu0 0.0
      %1798 = vmatprep.subr.mxu0 0.0
      %1799 = vmatpush2.msra.mxu0 0.0
      %1800 = vmatprep.subr.mxu0 0.0
      %1801 = vmatpush2.msra.mxu0 0.0
      %1802 = vmatprep.subr.mxu0 0.0
      %1803 = vmatpush2.msra.mxu0 0.0
      %1804 = vmatprep.subr.mxu0 0.0
      %1805 = vmatpush2.msra.mxu0 0.0
      %1806 = vmatprep.subr.mxu0 0.0
      %1807 = vmatpush2.msra.mxu0 0.0
      %1808 = vmatprep.subr.mxu0 0.0
      %1809 = vmatpush2.msra.mxu0 0.0
      %1810 = vmatprep.subr.mxu0 0.0
      %1811 = vmatpush2.msra.mxu0 0.0
      %1812 = vmatprep.subr.mxu0 0.0
      %1813 = vmatpush2.msra.mxu0 0.0
      %1814 = vmatprep.subr.mxu0 0.0
      %1815 = vmatpush2.msra.mxu0 0.0
      %1816 = vmatprep.subr.mxu0 0.0
      %1817 = vmatpush2.msra.mxu0 0.0
      %1818 = vmatprep.subr.mxu0 0.0
      %1819 = vmatpush2.msra.mxu0 0.0
      %1820 = vmatprep.subr.mxu0 0.0
      %1821 = vmatpush2.msra.mxu0 0.0
      %1822 = vmatprep.mubr.f32.mxu0 0.0
      %1823 = vmatmul.mubr.f32.gmra.mxu0 %v1756
      %v1824 = vpop.f32.mrf.mxu0
      %v1825 = vadd.f32 0.0, %v1824
      %v1826 = vpop.f32.mrf.mxu0
      %v1827 = vadd.f32 0.0, %v1826
      %1828 = vdwg.mxu0
      %v1829 = vadd.f32 %v1737, %v1825
      %v1830 = vadd.f32 %v1738, %v1827
      %s1831 = scalar_lea.vmem %s3, 48
      %v1832 = vld [vmem:[%s1831] sm:$0xff]
      %1833 = vrot.lane.b32.xlu0 %v1291, 108
      %v1834 = vpop.permute.xlu0 %1833
      %1835 = vrot.lane.b32.xlu0 %v1292, 108
      %v1836 = vpop.permute.xlu0 %1835
      %1837 = vrot.lane.b32.xlu0 %v1293, 108
      %v1838 = vpop.permute.xlu0 %1837
      %1839 = vrot.lane.b32.xlu0 %v1294, 108
      %v1840 = vpop.permute.xlu0 %1839
      %v1841 = vsel %vm933, %v1834, %v1836
      %v1842 = vsel %vm933, %v1838, %v1840
      %v1848 = vsel %vm335, %v1832, 0
      %1850 = vmatprep.subr.mxu0 0.0
      %1851 = vmatpush1.msra.mxu0 0.0
      %1852 = vmatprep.subr.mxu0 0.0
      %1853 = vmatpush1.msra.mxu0 0.0
      %1854 = vmatprep.subr.mxu0 0.0
      %1855 = vmatpush1.msra.mxu0 0.0
      %1856 = vmatprep.subr.mxu0 0.0
      %1857 = vmatpush1.msra.mxu0 0.0
      %1858 = vmatprep.subr.mxu0 0.0
      %1859 = vmatpush1.msra.mxu0 0.0
      %1860 = vmatprep.subr.mxu0 0.0
      %1861 = vmatpush1.msra.mxu0 0.0
      %1862 = vmatprep.subr.mxu0 0.0
      %1863 = vmatpush1.msra.mxu0 0.0
      %1864 = vmatprep.subr.mxu0 0.0
      %1865 = vmatpush1.msra.mxu0 0.0
      %1866 = vmatprep.subr.mxu0 0.0
      %1867 = vmatpush1.msra.mxu0 0.0
      %1868 = vmatprep.subr.mxu0 0.0
      %1869 = vmatpush1.msra.mxu0 0.0
      %1870 = vmatprep.subr.mxu0 0.0
      %1871 = vmatpush1.msra.mxu0 0.0
      %1872 = vmatprep.subr.mxu0 0.0
      %1873 = vmatpush1.msra.mxu0 0.0
      %1874 = vmatprep.subr.mxu0 0.0
      %1875 = vmatpush1.msra.mxu0 0.0
      %1876 = vmatprep.subr.mxu0 0.0
      %1877 = vmatpush1.msra.mxu0 0.0
      %1878 = vmatprep.subr.mxu0 %v1840
      %1879 = vmatpush1.msra.mxu0 %v1842
      %1880 = vmatprep.subr.mxu0 %v1836
      %1881 = vmatpush1.msra.mxu0 %v1841
      %1882 = vmatprep.subr.mxu0 0.0
      %1883 = vmatpush2.msra.mxu0 0.0
      %1884 = vmatprep.subr.mxu0 0.0
      %1885 = vmatpush2.msra.mxu0 0.0
      %1886 = vmatprep.subr.mxu0 0.0
      %1887 = vmatpush2.msra.mxu0 0.0
      %1888 = vmatprep.subr.mxu0 0.0
      %1889 = vmatpush2.msra.mxu0 0.0
      %1890 = vmatprep.subr.mxu0 0.0
      %1891 = vmatpush2.msra.mxu0 0.0
      %1892 = vmatprep.subr.mxu0 0.0
      %1893 = vmatpush2.msra.mxu0 0.0
      %1894 = vmatprep.subr.mxu0 0.0
      %1895 = vmatpush2.msra.mxu0 0.0
      %1896 = vmatprep.subr.mxu0 0.0
      %1897 = vmatpush2.msra.mxu0 0.0
      %1898 = vmatprep.subr.mxu0 0.0
      %1899 = vmatpush2.msra.mxu0 0.0
      %1900 = vmatprep.subr.mxu0 0.0
      %1901 = vmatpush2.msra.mxu0 0.0
      %1902 = vmatprep.subr.mxu0 0.0
      %1903 = vmatpush2.msra.mxu0 0.0
      %1904 = vmatprep.subr.mxu0 0.0
      %1905 = vmatpush2.msra.mxu0 0.0
      %1906 = vmatprep.subr.mxu0 0.0
      %1907 = vmatpush2.msra.mxu0 0.0
      %1908 = vmatprep.subr.mxu0 0.0
      %1909 = vmatpush2.msra.mxu0 0.0
      %1910 = vmatprep.subr.mxu0 0.0
      %1911 = vmatpush2.msra.mxu0 0.0
      %1912 = vmatprep.subr.mxu0 0.0
      %1913 = vmatpush2.msra.mxu0 0.0
      %1914 = vmatprep.mubr.f32.mxu0 0.0
      %1915 = vmatmul.mubr.f32.gmra.mxu0 %v1848
      %v1916 = vpop.f32.mrf.mxu0
      %v1917 = vadd.f32 0.0, %v1916
      %v1918 = vpop.f32.mrf.mxu0
      %v1919 = vadd.f32 0.0, %v1918
      %1920 = vdwg.mxu0
      %v1921 = vadd.f32 %v1829, %v1917
      %v1922 = vadd.f32 %v1830, %v1919
      %s1923 = scalar_lea.vmem %s3, 56
      %v1924 = vld [vmem:[%s1923] sm:$0xff]
      %1925 = vrot.lane.b32.xlu0 %v1291, 107
      %v1926 = vpop.permute.xlu0 %1925
      %1927 = vrot.lane.b32.xlu0 %v1292, 107
      %v1928 = vpop.permute.xlu0 %1927
      %1929 = vrot.lane.b32.xlu0 %v1293, 107
      %v1930 = vpop.permute.xlu0 %1929
      %1931 = vrot.lane.b32.xlu0 %v1294, 107
      %v1932 = vpop.permute.xlu0 %1931
      %v1933 = vsel %vm1038, %v1926, %v1928
      %v1934 = vsel %vm1038, %v1930, %v1932
      %v1940 = vsel %vm335, %v1924, 0
      %1942 = vmatprep.subr.mxu0 0.0
      %1943 = vmatpush1.msra.mxu0 0.0
      %1944 = vmatprep.subr.mxu0 0.0
      %1945 = vmatpush1.msra.mxu0 0.0
      %1946 = vmatprep.subr.mxu0 0.0
      %1947 = vmatpush1.msra.mxu0 0.0
      %1948 = vmatprep.subr.mxu0 0.0
      %1949 = vmatpush1.msra.mxu0 0.0
      %1950 = vmatprep.subr.mxu0 0.0
      %1951 = vmatpush1.msra.mxu0 0.0
      %1952 = vmatprep.subr.mxu0 0.0
      %1953 = vmatpush1.msra.mxu0 0.0
      %1954 = vmatprep.subr.mxu0 0.0
      %1955 = vmatpush1.msra.mxu0 0.0
      %1956 = vmatprep.subr.mxu0 0.0
      %1957 = vmatpush1.msra.mxu0 0.0
      %1958 = vmatprep.subr.mxu0 0.0
      %1959 = vmatpush1.msra.mxu0 0.0
      %1960 = vmatprep.subr.mxu0 0.0
      %1961 = vmatpush1.msra.mxu0 0.0
      %1962 = vmatprep.subr.mxu0 0.0
      %1963 = vmatpush1.msra.mxu0 0.0
      %1964 = vmatprep.subr.mxu0 0.0
      %1965 = vmatpush1.msra.mxu0 0.0
      %1966 = vmatprep.subr.mxu0 0.0
      %1967 = vmatpush1.msra.mxu0 0.0
      %1968 = vmatprep.subr.mxu0 0.0
      %1969 = vmatpush1.msra.mxu0 0.0
      %1970 = vmatprep.subr.mxu0 %v1932
      %1971 = vmatpush1.msra.mxu0 %v1934
      %1972 = vmatprep.subr.mxu0 %v1928
      %1973 = vmatpush1.msra.mxu0 %v1933
      %1974 = vmatprep.subr.mxu0 0.0
      %1975 = vmatpush2.msra.mxu0 0.0
      %1976 = vmatprep.subr.mxu0 0.0
      %1977 = vmatpush2.msra.mxu0 0.0
      %1978 = vmatprep.subr.mxu0 0.0
      %1979 = vmatpush2.msra.mxu0 0.0
      %1980 = vmatprep.subr.mxu0 0.0
      %1981 = vmatpush2.msra.mxu0 0.0
      %1982 = vmatprep.subr.mxu0 0.0
      %1983 = vmatpush2.msra.mxu0 0.0
      %1984 = vmatprep.subr.mxu0 0.0
      %1985 = vmatpush2.msra.mxu0 0.0
      %1986 = vmatprep.subr.mxu0 0.0
      %1987 = vmatpush2.msra.mxu0 0.0
      %1988 = vmatprep.subr.mxu0 0.0
      %1989 = vmatpush2.msra.mxu0 0.0
      %1990 = vmatprep.subr.mxu0 0.0
      %1991 = vmatpush2.msra.mxu0 0.0
      %1992 = vmatprep.subr.mxu0 0.0
      %1993 = vmatpush2.msra.mxu0 0.0
      %1994 = vmatprep.subr.mxu0 0.0
      %1995 = vmatpush2.msra.mxu0 0.0
      %1996 = vmatprep.subr.mxu0 0.0
      %1997 = vmatpush2.msra.mxu0 0.0
      %1998 = vmatprep.subr.mxu0 0.0
      %1999 = vmatpush2.msra.mxu0 0.0
      %2000 = vmatprep.subr.mxu0 0.0
      %2001 = vmatpush2.msra.mxu0 0.0
      %2002 = vmatprep.subr.mxu0 0.0
      %2003 = vmatpush2.msra.mxu0 0.0
      %2004 = vmatprep.subr.mxu0 0.0
      %2005 = vmatpush2.msra.mxu0 0.0
      %2006 = vmatprep.mubr.f32.mxu0 0.0
      %2007 = vmatmul.mubr.f32.gmra.mxu0 %v1940
      %v2008 = vpop.f32.mrf.mxu0
      %v2009 = vadd.f32 0.0, %v2008
      %v2010 = vpop.f32.mrf.mxu0
      %v2011 = vadd.f32 0.0, %v2010
      %2012 = vdwg.mxu0
      %v2013 = vadd.f32 %v1921, %v2009
      %v2014 = vadd.f32 %v1922, %v2011
      %s2015 = scalar_lea.vmem %s3, 64
      %v2016 = vld [vmem:[%s2015] sm:$0xff]
      %2017 = vrot.lane.b32.xlu0 %v1291, 106
      %v2018 = vpop.permute.xlu0 %2017
      %2019 = vrot.lane.b32.xlu0 %v1292, 106
      %v2020 = vpop.permute.xlu0 %2019
      %2021 = vrot.lane.b32.xlu0 %v1293, 106
      %v2022 = vpop.permute.xlu0 %2021
      %2023 = vrot.lane.b32.xlu0 %v1294, 106
      %v2024 = vpop.permute.xlu0 %2023
      %v2025 = vsel %vm1143, %v2018, %v2020
      %v2026 = vsel %vm1143, %v2022, %v2024
      %v2032 = vsel %vm335, %v2016, 0
      %2034 = vmatprep.subr.mxu0 0.0
      %2035 = vmatpush1.msra.mxu0 0.0
      %2036 = vmatprep.subr.mxu0 0.0
      %2037 = vmatpush1.msra.mxu0 0.0
      %2038 = vmatprep.subr.mxu0 0.0
      %2039 = vmatpush1.msra.mxu0 0.0
      %2040 = vmatprep.subr.mxu0 0.0
      %2041 = vmatpush1.msra.mxu0 0.0
      %2042 = vmatprep.subr.mxu0 0.0
      %2043 = vmatpush1.msra.mxu0 0.0
      %2044 = vmatprep.subr.mxu0 0.0
      %2045 = vmatpush1.msra.mxu0 0.0
      %2046 = vmatprep.subr.mxu0 0.0
      %2047 = vmatpush1.msra.mxu0 0.0
      %2048 = vmatprep.subr.mxu0 0.0
      %2049 = vmatpush1.msra.mxu0 0.0
      %2050 = vmatprep.subr.mxu0 0.0
      %2051 = vmatpush1.msra.mxu0 0.0
      %2052 = vmatprep.subr.mxu0 0.0
      %2053 = vmatpush1.msra.mxu0 0.0
      %2054 = vmatprep.subr.mxu0 0.0
      %2055 = vmatpush1.msra.mxu0 0.0
      %2056 = vmatprep.subr.mxu0 0.0
      %2057 = vmatpush1.msra.mxu0 0.0
      %2058 = vmatprep.subr.mxu0 0.0
      %2059 = vmatpush1.msra.mxu0 0.0
      %2060 = vmatprep.subr.mxu0 0.0
      %2061 = vmatpush1.msra.mxu0 0.0
      %2062 = vmatprep.subr.mxu0 %v2024
      %2063 = vmatpush1.msra.mxu0 %v2026
      %2064 = vmatprep.subr.mxu0 %v2020
      %2065 = vmatpush1.msra.mxu0 %v2025
      %2066 = vmatprep.subr.mxu0 0.0
      %2067 = vmatpush2.msra.mxu0 0.0
      %2068 = vmatprep.subr.mxu0 0.0
      %2069 = vmatpush2.msra.mxu0 0.0
      %2070 = vmatprep.subr.mxu0 0.0
      %2071 = vmatpush2.msra.mxu0 0.0
      %2072 = vmatprep.subr.mxu0 0.0
      %2073 = vmatpush2.msra.mxu0 0.0
      %2074 = vmatprep.subr.mxu0 0.0
      %2075 = vmatpush2.msra.mxu0 0.0
      %2076 = vmatprep.subr.mxu0 0.0
      %2077 = vmatpush2.msra.mxu0 0.0
      %2078 = vmatprep.subr.mxu0 0.0
      %2079 = vmatpush2.msra.mxu0 0.0
      %2080 = vmatprep.subr.mxu0 0.0
      %2081 = vmatpush2.msra.mxu0 0.0
      %2082 = vmatprep.subr.mxu0 0.0
      %2083 = vmatpush2.msra.mxu0 0.0
      %2084 = vmatprep.subr.mxu0 0.0
      %2085 = vmatpush2.msra.mxu0 0.0
      %2086 = vmatprep.subr.mxu0 0.0
      %2087 = vmatpush2.msra.mxu0 0.0
      %2088 = vmatprep.subr.mxu0 0.0
      %2089 = vmatpush2.msra.mxu0 0.0
      %2090 = vmatprep.subr.mxu0 0.0
      %2091 = vmatpush2.msra.mxu0 0.0
      %2092 = vmatprep.subr.mxu0 0.0
      %2093 = vmatpush2.msra.mxu0 0.0
      %2094 = vmatprep.subr.mxu0 0.0
      %2095 = vmatpush2.msra.mxu0 0.0
      %2096 = vmatprep.subr.mxu0 0.0
      %2097 = vmatpush2.msra.mxu0 0.0
      %2098 = vmatprep.mubr.f32.mxu0 0.0
      %2099 = vmatmul.mubr.f32.gmra.mxu0 %v2032
      %v2100 = vpop.f32.mrf.mxu0
      %v2101 = vadd.f32 0.0, %v2100
      %v2102 = vpop.f32.mrf.mxu0
      %v2103 = vadd.f32 0.0, %v2102
      %2104 = vdwg.mxu0
      %v2105 = vadd.f32 %v2013, %v2101
      %v2106 = vadd.f32 %v2014, %v2103
      %v2107 = vld [vmem:[%s4] sm:$0xff]
      %2109 = vset.pattern.permute.xlu0 0
      %2110 = vperm.xlu0 %2109, %v2107
      %v2111 = vpop.permute.xlu0 %2110
      %v2113 = vadd.f32 %v2105, %v2111
      %v2114 = vadd.f32 %v2106, %v2111
      %v2115 = vtanh.pop %v2113
      %v2116 = vtanh.pop %v2114
      %v2117 = vsub.f32 1.0, %v1274
      %v2118 = vsub.f32 1.0, %v1276
      %v2119 = vmul.f32 %v2117, %v2115
      %v2120 = vmul.f32 %v2118, %v2116
      %v2121 = vmul.f32 %v1274, %v288
      %v2122 = vmul.f32 %v1276, %v289
      %v2123 = vadd.f32 %v2119, %v2121
      %v2124 = vadd.f32 %v2120, %v2122
      %v2125 = vld [vmem:[%s5] sm:$0x3]
      %v2127 = vlaneseq
      %v2128 = vshrl.u32 %v2127, 7
      %v2129 = vsub.s32 0, %v2128
      %v2130 = vrot.slane %v2125, %v2129
      %v2131 = vlaneseq
      %v2132 = vshrl.u32 %v2131, 7
      %v2133 = vsub.s32 1, %v2132
      %v2134 = vrot.slane %v2125, %v2133
      %v2137 = vmul.f32 %v2123, %v2130
      %v2138 = vmul.f32 %v2124, %v2134
      %2139 = vst [vmem:[#allocation2] sm:$0xff] %v2137
      %vm2140 = vcmask 588800
      %2141 = vst.msk [vmem:[#allocation2 + $0x8] sm:$0xff] %vm2140, %v2138
      %2142 = vst [vmem:[%s262] sm:$0xff] %v2137
      %2143 = vst.msk [vmem:[%s262 + $0x8] sm:$0xff] %vm2140, %v2138
      %s2144 = ssub.s32 3, %s17
      %p2145 = scmp.lt.s32.totalorder %s2144, 3
      %s2146 = scalar_select %p2145, %s2144, 3
      %s2147 = smul.addr %s2146, 2
      %s2148 = smul.addr %s2147, 8
      %s2149 = scalar_lea.vmem %s6, %s2148
      // Predicated region
      $region49: #{biconvgru_forward.6} parent=43 // pred_check
        %p2150 = pneg %p170
      $region50: #{biconvgru_forward.6} parent=43 // pred_check_branch
        %2152 = sbr.rel (%p2150) target = $region52
      $region51: #{biconvgru_forward.6} parent=43 // pred_region
        %s2153 = ssub.s32 3, %s17
      $region52: #{biconvgru_forward.6} parent=43 // pred_fallthru
        _
    $region44: #{biconvgru_forward.6} parent=5 // pred_fallthru
      _
    %p2154 = scmp.le.s32.totalorder 2, %s12
    // Predicated region
    $region53: #{biconvgru_forward.6} parent=5 // pred_check
      %p2155 = pneg %p2154
    $region54: #{biconvgru_forward.6} parent=5 // pred_check_branch
      %2157 = sbr.rel (%p2155) target = $region56
    $region55: #{biconvgru_forward.6} parent=5 // pred_region
      %s2158 = ssub.s32 %s12, 2
      // Predicated region
      $region57: #{biconvgru_forward.6} parent=55 // pred_check
        %p2159 = pneg %p176
      $region58: #{biconvgru_forward.6} parent=55 // pred_check_branch
        %2161 = sbr.rel (%p2159) target = $region60
      $region59: #{biconvgru_forward.6} parent=55 // pred_region
        %s2162 = ssub.s32 3, %s18
        %p2163 = scmp.lt.s32.totalorder %s2162, 3
        %s2164 = scalar_select %p2163, %s2162, 3
        %s2165 = smul.addr %s2164, 2
        %s2166 = smul.addr %s2165, 8
        %s2167 = scalar_lea.vmem %s6, %s2166
      $region60: #{biconvgru_forward.6} parent=55 // pred_fallthru
        _
    $region56: #{biconvgru_forward.6} parent=5 // pred_fallthru
      _
  $region6: #{biconvgru_forward.6} parent=0 // loop_footer
    %s16 = sadd.s32 1, %s12
  $region7: #{biconvgru_forward.6} parent=0 // loop_footer_branch
    %11 = sbr.rel target = $region3
  $region8: #{biconvgru_forward.6} parent=0 // loop_exit
    _

</llo_original>
